<compile_context>
chip_gen: v6e
topology: v6e:2x2x1
jax: 0.10.0
libtpu: 0.0.40
codegen_flags: <defaults>
</compile_context>

<pallas_src>
import functools

import jax
import jax.numpy as jnp
from jax import lax
from jax.experimental import pallas as pl
from jax.experimental.pallas import tpu as pltpu

# Make the pure-JAX reference use full-f32 matmuls so it matches the in-kernel
# f32 MXU math (does not affect the Pallas kernel).
jax.config.update("jax_default_matmul_precision", "highest")


def _round_up(x, m):
    return (x + m - 1) // m * m


def megnet_kernel(bonds_ref, ba1_ref, ba2_ref, ba2l_ref, atoms_ref,
                  w1_ref, b1_ref, w2_ref, b2_ref, w3_ref, b3_ref,
                  v1_ref, c1_ref, v2_ref, c2_ref, v3_ref, c3_ref,
                  atoms_out_ref, bonds_out_ref,
                  sum_ref, cnt_ref, aw1a_ref, aw1b_ref):
    """One grid step == one tile of edges (sequential 'arbitrary' axis)."""
    i = pl.program_id(0)
    n_tiles = pl.num_programs(0)

    te, F = bonds_ref.shape
    N = sum_ref.shape[0]

    # --- first tile: init scatter accumulators and fold atoms @ W1 ---------
    @pl.when(i == 0)
    def _():
        sum_ref[...] = jnp.zeros_like(sum_ref)
        cnt_ref[...] = jnp.zeros_like(cnt_ref)
        atoms0 = atoms_ref[...]                               # only vreg-load here
        aw1a_ref[...] = jnp.dot(atoms0, w1_ref[0:F, :],
                                preferred_element_type=jnp.float32)   # [N, 128]
        aw1b_ref[...] = jnp.dot(atoms0, w1_ref[F:2 * F, :],
                                preferred_element_type=jnp.float32)   # [N, 128]

    bonds = bonds_ref[...]                                    # [te, F]

    # --- EdgeUpdate (phi_e) -------------------------------------------------
    # One-hot gather matrices on the MXU; padded edges carry index -1 so their
    # rows are all-zero (gather zeros, contribute nothing to the scatter).
    idx_sub = lax.broadcasted_iota(jnp.int32, (te, N), 1)
    g1 = (ba1_ref[...] == idx_sub).astype(jnp.float32)        # [te, N]
    g2 = (ba2_ref[...] == idx_sub).astype(jnp.float32)        # [te, N]

    # gather + first linear layer fused: g @ (atoms @ W1_slice) == atoms[idx] @ W1_slice
    h = (jnp.dot(g1, aw1a_ref[...], preferred_element_type=jnp.float32)
         + jnp.dot(g2, aw1b_ref[...], preferred_element_type=jnp.float32)
         + jnp.dot(bonds, w1_ref[2 * F:3 * F, :], preferred_element_type=jnp.float32)
         + b1_ref[...])
    h = jnp.maximum(h, 0.0)
    h = jnp.maximum(
        jnp.dot(h, w2_ref[...], preferred_element_type=jnp.float32) + b2_ref[...], 0.0)
    bonds_new = jnp.dot(h, w3_ref[...], preferred_element_type=jnp.float32) + b3_ref[...]

    # Residual edge output for this tile (pipelined write-back).
    bonds_out_ref[...] = bonds + bonds_new

    # --- scatter-mean accumulation at bond_atom_2 ---------------------------
    # Transposed one-hot built directly (atoms on sublanes, edges on lanes):
    # avoids any XLU relayout of g2, and counts fall out of a lane reduce.
    idx_lane = lax.broadcasted_iota(jnp.int32, (N, te), 0)
    g2t = (ba2l_ref[0] == idx_lane).astype(jnp.float32)       # [N, te]
    sum_ref[...] += jnp.dot(g2t, bonds_new, preferred_element_type=jnp.float32)
    cnt_ref[...] += jnp.sum(g2t, axis=1, keepdims=True)       # XLU lane reduce

    # --- NodeUpdate (phi_v) + residual, once all edge tiles are accumulated -
    @pl.when(i == n_tiles - 1)
    def _():
        atoms = atoms_ref[...]
        counts = jnp.maximum(cnt_ref[...], 1.0)
        mean = sum_ref[...] / counts                          # [N, F]
        hv = (jnp.dot(mean, v1_ref[0:F, :], preferred_element_type=jnp.float32)
              + jnp.dot(atoms, v1_ref[F:2 * F, :], preferred_element_type=jnp.float32)
              + c1_ref[...])
        hv = jnp.maximum(hv, 0.0)
        hv = jnp.maximum(
            jnp.dot(hv, v2_ref[...], preferred_element_type=jnp.float32) + c2_ref[...], 0.0)
        atoms_new = jnp.dot(hv, v3_ref[...], preferred_element_type=jnp.float32) + c3_ref[...]
        atoms_out_ref[...] = atoms + atoms_new


@functools.partial(jax.jit, static_argnames=("block_e",))
def first_megnet_block(bonds, bond_atom_1, bond_atom_2, atoms,
                       batch_mark_for_atoms, batch_mark_for_bonds, params,
                       *, block_e=512):
    # batch marks are unused by the PyTorch forward.
    del batch_mark_for_atoms, batch_mark_for_bonds
    E, F = bonds.shape
    N = atoms.shape[0]

    N_pad = _round_up(max(N, 8), 8)

    # Edge tile: large enough to amortize per-step overhead, capped so the
    # three [te, N_pad] f32 one-hot intermediates stay ~12 MiB (v7x VMEM = 64 MiB).
    te = min(block_e, _round_up(E, 8))
    cap = max(8, ((12 * 1024 * 1024) // (3 * 4 * N_pad)) // 8 * 8)
    te = max(8, min(te, cap) // 8 * 8)
    E_pad = _round_up(E, te)
    n_tiles = E_pad // te

    bonds_p = jnp.pad(bonds.astype(jnp.float32), ((0, E_pad - E), (0, 0)))
    atoms_p = jnp.pad(atoms.astype(jnp.float32), ((0, N_pad - N), (0, 0)))
    # Padded edges get sentinel index -1 -> all-zero one-hot rows/columns.
    ba1_flat = jnp.pad(bond_atom_1.astype(jnp.int32), (0, E_pad - E), constant_values=-1)
    ba2_flat = jnp.pad(bond_atom_2.astype(jnp.int32), (0, E_pad - E), constant_values=-1)
    ba1_col = ba1_flat.reshape(E_pad, 1)        # sublane layout (edges on sublanes)
    ba2_col = ba2_flat.reshape(E_pad, 1)
    ba2_lane = ba2_flat.reshape(n_tiles, 1, te)  # lane layout (edges on lanes)

    grid = (n_tiles,)
    tile_map = lambda i: (i, 0)
    res_map = lambda i: (0, 0)          # resident across all edge tiles

    in_specs = [
        pl.BlockSpec((te, F), tile_map),              # bonds (pipelined edge tiles)
        pl.BlockSpec((te, 1), tile_map),              # bond_atom_1 (sublane layout)
        pl.BlockSpec((te, 1), tile_map),              # bond_atom_2 (sublane layout)
        pl.BlockSpec((1, 1, te), lambda i: (i, 0, 0)),  # bond_atom_2 (lane layout)
        pl.BlockSpec((N_pad, F), res_map),            # atoms (resident)
    ] + [pl.BlockSpec(p.shape, res_map) for p in params]   # weights resident (<100 KB)

    out_specs = (
        pl.BlockSpec((N_pad, F), res_map),    # atoms_out (written on last tile)
        pl.BlockSpec((te, F), tile_map),      # bonds_out (written per tile)
    )
    out_shape = (jax.ShapeDtypeStruct((N_pad, F), jnp.float32),
                 jax.ShapeDtypeStruct((E_pad, F), jnp.float32))

    # --- VMEM budget (computed, not guessed; v7x physical VMEM is 64 MiB) ---
    param_bytes = 4 * sum(int(p.size) for p in params)
    per_tile_blocks = 4 * (2 * te * F + 2 * te + te)          # bonds in/out, ba1, ba2, ba2_lane
    resident_bytes = 4 * (2 * N_pad * F) + param_bytes        # atoms in/out + weights
    scratch_bytes = 4 * (N_pad * F + N_pad + 2 * N_pad * 128)  # sum, cnt, AW1a, AW1b
    interm_bytes = 4 * (3 * te * N_pad + 2 * te * 128 + te * 64)
    footprint = 2 * per_tile_blocks + resident_bytes + scratch_bytes + interm_bytes
    vmem_limit = int(min(64 * 1024 * 1024,
                         max(16 * 1024 * 1024, 2 * footprint + 4 * 1024 * 1024)))

    flops = int(2 * 2 * N_pad * F * 128                        # AW1a/AW1b precompute
                + 2 * 2 * E_pad * N_pad * 128                  # folded one-hot gathers
                + 2 * E_pad * (F * 128 + 128 * 64 + 64 * F)    # bonds@W1c + phi_e L2/L3
                + 2 * E_pad * N_pad * F                        # scatter-sum dot
                + 2 * N_pad * (2 * F * 128 + 128 * 64 + 64 * F))  # phi_v
    bytes_accessed = int(4 * (2 * E_pad * F + 2 * N_pad * F + 3 * E_pad) + param_bytes)

    atoms_out, bonds_out = pl.pallas_call(
        megnet_kernel,
        grid=grid,
        in_specs=in_specs,
        out_specs=out_specs,
        out_shape=out_shape,
        scratch_shapes=[
            pltpu.VMEM((N_pad, F), jnp.float32),     # scatter sums accumulator
            pltpu.VMEM((N_pad, 1), jnp.float32),     # scatter counts accumulator
            pltpu.VMEM((N_pad, 128), jnp.float32),   # AW1a = atoms @ W1[:F]
            pltpu.VMEM((N_pad, 128), jnp.float32),   # AW1b = atoms @ W1[F:2F]
        ],
        # bonds -> bonds_out, atoms -> atoms_out (residual add is the only reader).
        input_output_aliases={0: 1, 4: 0},
        compiler_params=pltpu.CompilerParams(
            # Single edge-tile axis is a reduction for the scatter -> 'arbitrary'.
            dimension_semantics=("arbitrary",),
            vmem_limit_bytes=vmem_limit,
        ),
        cost_estimate=pl.CostEstimate(flops=flops, transcendentals=0,
                                      bytes_accessed=bytes_accessed),
    )(bonds_p, ba1_col, ba2_col, ba2_lane, atoms_p, *params)

    return atoms_out[:N], bonds_out[:E]


def init_params(key):
    """Deterministic synthetic weights, shapes match fff(96) / fff(64)."""
    def lin(k, fan_in, fan_out):
        kw, kb = jax.random.split(k)
        scale = 1.0 / jnp.sqrt(fan_in)
        w = jax.random.uniform(kw, (fan_in, fan_out), jnp.float32, -scale, scale)
        b = jax.random.uniform(kb, (1, fan_out), jnp.float32, -scale, scale)
        return w, b

    keys = jax.random.split(key, 6)
    w1, b1 = lin(keys[0], 96, 128)   # phi_e
    w2, b2 = lin(keys[1], 128, 64)
    w3, b3 = lin(keys[2], 64, 32)
    v1, c1 = lin(keys[3], 64, 128)   # phi_v
    v2, c2 = lin(keys[4], 128, 64)
    v3, c3 = lin(keys[5], 64, 32)
    return (w1, b1, w2, b2, w3, b3, v1, c1, v2, c2, v3, c3)


def reference_forward(bonds, ba1, ba2, atoms, params):
    """Pure-JAX reference of the PyTorch forward, for verification."""
    (w1, b1, w2, b2, w3, b3, v1, c1, v2, c2, v3, c3) = params
    N = atoms.shape[0]
    # EdgeUpdate
    a1 = atoms[ba1]
    a2 = atoms[ba2]
    x = jnp.concatenate([a1, a2, bonds], axis=1)
    h = jnp.maximum(x @ w1 + b1, 0.0)
    h = jnp.maximum(h @ w2 + b2, 0.0)
    bonds_new = h @ w3 + b3
    # NodeUpdate (mean aggregation at bond_atom_2; nodes with no bonds get 0)
    sums = jax.ops.segment_sum(bonds_new, ba2, num_segments=N)
    counts = jax.ops.segment_sum(jnp.ones((bonds_new.shape[0],), jnp.float32),
                                 ba2, num_segments=N)
    mean = sums / jnp.maximum(counts, 1.0)[:, None]
    xv = jnp.concatenate([mean, atoms], axis=1)
    hv = jnp.maximum(xv @ v1 + c1, 0.0)
    hv = jnp.maximum(hv @ v2 + c2, 0.0)
    atoms_new = hv @ v3 + c3
    return atoms + atoms_new, bonds + bonds_new


if __name__ == "__main__":
    key = jax.random.PRNGKey(0)
    k_param, k_bonds, k_atoms, k_i1, k_i2 = jax.random.split(key, 5)

    N = 30    # atoms (padded to 32 internally)
    E = 90    # bonds (padded to 96 -> 3 edge tiles of 32)
    F = 32    # feature width (fff(96)=32+32+32 and the residual add require 32)

    params = init_params(k_param)
    bonds = jax.random.normal(k_bonds, (E, F), jnp.float32)
    atoms = jax.random.normal(k_atoms, (N, F), jnp.float32)
    bond_atom_1 = jax.random.randint(k_i1, (E,), 0, N, jnp.int32)
    bond_atom_2 = jax.random.randint(k_i2, (E,), 0, N, jnp.int32)
    batch_mark_for_atoms = jnp.zeros((N,), jnp.int32)   # unused by forward
    batch_mark_for_bonds = jnp.zeros((E,), jnp.int32)   # unused by forward

    # block_e=32 exercises the multi-tile accumulation path; real workloads
    # should use the default block_e=512.
    atoms_out, bonds_out = first_megnet_block(
        bonds, bond_atom_1, bond_atom_2, atoms,
        batch_mark_for_atoms, batch_mark_for_bonds, params, block_e=32)
    jax.block_until_ready((atoms_out, bonds_out))

    atoms_ref_v, bonds_ref_v = reference_forward(bonds, bond_atom_1, bond_atom_2,
                                                 atoms, params)
    assert atoms_out.shape == (N, F) and bonds_out.shape == (E, F)
    assert jnp.allclose(atoms_out, atoms_ref_v, atol=5e-4, rtol=1e-4), \
        float(jnp.max(jnp.abs(atoms_out - atoms_ref_v)))
    assert jnp.allclose(bonds_out, bonds_ref_v, atol=5e-4, rtol=1e-4), \
        float(jnp.max(jnp.abs(bonds_out - bonds_ref_v)))

    print("KERNEL_OK")
</pallas_src>

<mosaic_0001>
module attributes {stable_mosaic.version = 11 : i64} {
  func.func @megnet_kernel(%arg0: i32, %arg1: memref<32x32xf32, #tpu.memory_space<vmem>>, %arg2: memref<32x1xi32, #tpu.memory_space<vmem>>, %arg3: memref<32x1xi32, #tpu.memory_space<vmem>>, %arg4: memref<1x1x32xi32, #tpu.memory_space<vmem>>, %arg5: memref<32x32xf32, #tpu.memory_space<vmem>>, %arg6: memref<96x128xf32, #tpu.memory_space<vmem>>, %arg7: memref<1x128xf32, #tpu.memory_space<vmem>>, %arg8: memref<128x64xf32, #tpu.memory_space<vmem>>, %arg9: memref<1x64xf32, #tpu.memory_space<vmem>>, %arg10: memref<64x32xf32, #tpu.memory_space<vmem>>, %arg11: memref<1x32xf32, #tpu.memory_space<vmem>>, %arg12: memref<64x128xf32, #tpu.memory_space<vmem>>, %arg13: memref<1x128xf32, #tpu.memory_space<vmem>>, %arg14: memref<128x64xf32, #tpu.memory_space<vmem>>, %arg15: memref<1x64xf32, #tpu.memory_space<vmem>>, %arg16: memref<64x32xf32, #tpu.memory_space<vmem>>, %arg17: memref<1x32xf32, #tpu.memory_space<vmem>>, %arg18: memref<32x32xf32, #tpu.memory_space<vmem>>, %arg19: memref<32x32xf32, #tpu.memory_space<vmem>>, %arg20: memref<32x32xf32, #tpu.memory_space<vmem>>, %arg21: memref<32x1xf32, #tpu.memory_space<vmem>>, %arg22: memref<32x128xf32, #tpu.memory_space<vmem>>, %arg23: memref<32x128xf32, #tpu.memory_space<vmem>>) attributes {dimension_semantics = [#tpu.dimension_semantics<arbitrary>], iteration_bounds = array<i64: 3>, scalar_prefetch = 0 : i64, scratch_operands = 4 : i64, tpu.core_type = #tpu.core_type<tc>, window_params = [{transform_indices = @transform_0, window_bounds = array<i64: 32, 32>}, {transform_indices = @transform_1, window_bounds = array<i64: 32, 1>}, {transform_indices = @transform_2, window_bounds = array<i64: 32, 1>}, {transform_indices = @transform_3, window_bounds = array<i64: 1, 1, 32>}, {pipeline_mode = #tpu.pipeline_mode<synchronous>, transform_indices = @transform_4, window_bounds = array<i64: 32, 32>}, {pipeline_mode = #tpu.pipeline_mode<synchronous>, transform_indices = @transform_5, window_bounds = array<i64: 96, 128>}, {pipeline_mode = #tpu.pipeline_mode<synchronous>, transform_indices = @transform_6, window_bounds = array<i64: 1, 128>}, {pipeline_mode = #tpu.pipeline_mode<synchronous>, transform_indices = @transform_7, window_bounds = array<i64: 128, 64>}, {pipeline_mode = #tpu.pipeline_mode<synchronous>, transform_indices = @transform_8, window_bounds = array<i64: 1, 64>}, {pipeline_mode = #tpu.pipeline_mode<synchronous>, transform_indices = @transform_9, window_bounds = array<i64: 64, 32>}, {pipeline_mode = #tpu.pipeline_mode<synchronous>, transform_indices = @transform_10, window_bounds = array<i64: 1, 32>}, {pipeline_mode = #tpu.pipeline_mode<synchronous>, transform_indices = @transform_11, window_bounds = array<i64: 64, 128>}, {pipeline_mode = #tpu.pipeline_mode<synchronous>, transform_indices = @transform_12, window_bounds = array<i64: 1, 128>}, {pipeline_mode = #tpu.pipeline_mode<synchronous>, transform_indices = @transform_13, window_bounds = array<i64: 128, 64>}, {pipeline_mode = #tpu.pipeline_mode<synchronous>, transform_indices = @transform_14, window_bounds = array<i64: 1, 64>}, {pipeline_mode = #tpu.pipeline_mode<synchronous>, transform_indices = @transform_15, window_bounds = array<i64: 64, 32>}, {pipeline_mode = #tpu.pipeline_mode<synchronous>, transform_indices = @transform_16, window_bounds = array<i64: 1, 32>}, {pipeline_mode = #tpu.pipeline_mode<synchronous>, transform_indices = @transform_17, window_bounds = array<i64: 32, 32>}, {transform_indices = @transform_18, window_bounds = array<i64: 32, 32>}]} {
    %c0_i32 = arith.constant 0 : i32
    %0 = arith.cmpi eq, %arg0, %c0_i32 : i32
    %1 = arith.extui %0 : i1 to i32
    %c0_i32_0 = arith.constant 0 : i32
    %2 = arith.cmpi ne, %1, %c0_i32_0 : i32
    scf.if %2 {
      %cst_43 = arith.constant 0.000000e+00 : f32
      %61 = vector.broadcast %cst_43 : f32 to vector<32x32xf32>
      %c0_44 = arith.constant 0 : index
      %c0_45 = arith.constant 0 : index
      %62 = vector.load %arg20[%c0_44, %c0_45] : memref<32x32xf32, #tpu.memory_space<vmem>>, vector<32x32xf32>
      tpu.vector_store %arg20[%c0_44, %c0_45], %61 {strides = array<i32>} : memref<32x32xf32, #tpu.memory_space<vmem>>, vector<32x32xf32>,
      %cst_46 = arith.constant 0.000000e+00 : f32
      %63 = vector.broadcast %cst_46 : f32 to vector<32x1xf32>
      %c0_47 = arith.constant 0 : index
      %c0_48 = arith.constant 0 : index
      %64 = vector.load %arg21[%c0_47, %c0_48] : memref<32x1xf32, #tpu.memory_space<vmem>>, vector<32x1xf32>
      tpu.vector_store %arg21[%c0_47, %c0_48], %63 {strides = array<i32>} : memref<32x1xf32, #tpu.memory_space<vmem>>, vector<32x1xf32>,
      %c0_49 = arith.constant 0 : index
      %c0_50 = arith.constant 0 : index
      %65 = vector.load %arg5[%c0_49, %c0_50] : memref<32x32xf32, #tpu.memory_space<vmem>>, vector<32x32xf32>
      %c0_51 = arith.constant 0 : index
      %c0_52 = arith.constant 0 : index
      %66 = vector.load %arg6[%c0_51, %c0_52] : memref<96x128xf32, #tpu.memory_space<vmem>>, vector<32x128xf32>
      %cst_53 = arith.constant dense<0.000000e+00> : vector<32x128xf32>
      %67 = tpu.matmul %65, %66, %cst_53 {dimension_numbers = #tpu.dot_dimension_numbers<[1], [0], [0], [1], [0, 0, 1, 1], [], []>, precision = #tpu.contract_precision<fp32>} : vector<32x32xf32>, vector<32x128xf32>, vector<32x128xf32> -> vector<32x128xf32>
      %c0_54 = arith.constant 0 : index
      %c0_55 = arith.constant 0 : index
      %68 = vector.load %arg22[%c0_54, %c0_55] : memref<32x128xf32, #tpu.memory_space<vmem>>, vector<32x128xf32>
      tpu.vector_store %arg22[%c0_54, %c0_55], %67 {strides = array<i32>} : memref<32x128xf32, #tpu.memory_space<vmem>>, vector<32x128xf32>,
      %c32 = arith.constant 32 : index
      %c0_56 = arith.constant 0 : index
      %69 = vector.load %arg6[%c32, %c0_56] : memref<96x128xf32, #tpu.memory_space<vmem>>, vector<32x128xf32>
      %cst_57 = arith.constant dense<0.000000e+00> : vector<32x128xf32>
      %70 = tpu.matmul %65, %69, %cst_57 {dimension_numbers = #tpu.dot_dimension_numbers<[1], [0], [0], [1], [0, 0, 1, 1], [], []>, precision = #tpu.contract_precision<fp32>} : vector<32x32xf32>, vector<32x128xf32>, vector<32x128xf32> -> vector<32x128xf32>
      %c0_58 = arith.constant 0 : index
      %c0_59 = arith.constant 0 : index
      %71 = vector.load %arg23[%c0_58, %c0_59] : memref<32x128xf32, #tpu.memory_space<vmem>>, vector<32x128xf32>
      tpu.vector_store %arg23[%c0_58, %c0_59], %70 {strides = array<i32>} : memref<32x128xf32, #tpu.memory_space<vmem>>, vector<32x128xf32>,
    } else {
    }
    %c0 = arith.constant 0 : index
    %c0_1 = arith.constant 0 : index
    %3 = vector.load %arg1[%c0, %c0_1] : memref<32x32xf32, #tpu.memory_space<vmem>>, vector<32x32xf32>
    %4 = tpu.iota {dimensions = array<i32: 1>} : vector<32x32xi32>
    %c0_2 = arith.constant 0 : index
    %c0_3 = arith.constant 0 : index
    %5 = vector.load %arg2[%c0_2, %c0_3] : memref<32x1xi32, #tpu.memory_space<vmem>>, vector<32x1xi32>
    %6 = vector.broadcast %5 : vector<32x1xi32> to vector<32x32xi32>
    %7 = arith.cmpi eq, %6, %4 : vector<32x32xi32>
    %8 = arith.extui %7 : vector<32x32xi1> to vector<32x32xi32>
    %9 = arith.sitofp %8 : vector<32x32xi32> to vector<32x32xf32>
    %c0_4 = arith.constant 0 : index
    %c0_5 = arith.constant 0 : index
    %10 = vector.load %arg3[%c0_4, %c0_5] : memref<32x1xi32, #tpu.memory_space<vmem>>, vector<32x1xi32>
    %11 = vector.broadcast %10 : vector<32x1xi32> to vector<32x32xi32>
    %12 = arith.cmpi eq, %11, %4 : vector<32x32xi32>
    %13 = arith.extui %12 : vector<32x32xi1> to vector<32x32xi32>
    %14 = arith.sitofp %13 : vector<32x32xi32> to vector<32x32xf32>
    %c0_6 = arith.constant 0 : index
    %c0_7 = arith.constant 0 : index
    %15 = vector.load %arg22[%c0_6, %c0_7] : memref<32x128xf32, #tpu.memory_space<vmem>>, vector<32x128xf32>
    %cst = arith.constant dense<0.000000e+00> : vector<32x128xf32>
    %16 = tpu.matmul %9, %15, %cst {dimension_numbers = #tpu.dot_dimension_numbers<[1], [0], [0], [1], [0, 0, 1, 1], [], []>, precision = #tpu.contract_precision<fp32>} : vector<32x32xf32>, vector<32x128xf32>, vector<32x128xf32> -> vector<32x128xf32>
    %c0_8 = arith.constant 0 : index
    %c0_9 = arith.constant 0 : index
    %17 = vector.load %arg23[%c0_8, %c0_9] : memref<32x128xf32, #tpu.memory_space<vmem>>, vector<32x128xf32>
    %cst_10 = arith.constant dense<0.000000e+00> : vector<32x128xf32>
    %18 = tpu.matmul %14, %17, %cst_10 {dimension_numbers = #tpu.dot_dimension_numbers<[1], [0], [0], [1], [0, 0, 1, 1], [], []>, precision = #tpu.contract_precision<fp32>} : vector<32x32xf32>, vector<32x128xf32>, vector<32x128xf32> -> vector<32x128xf32>
    %19 = arith.addf %16, %18 : vector<32x128xf32>
    %c64 = arith.constant 64 : index
    %c0_11 = arith.constant 0 : index
    %20 = vector.load %arg6[%c64, %c0_11] : memref<96x128xf32, #tpu.memory_space<vmem>>, vector<32x128xf32>
    %cst_12 = arith.constant dense<0.000000e+00> : vector<32x128xf32>
    %21 = tpu.matmul %3, %20, %cst_12 {dimension_numbers = #tpu.dot_dimension_numbers<[1], [0], [0], [1], [0, 0, 1, 1], [], []>, precision = #tpu.contract_precision<fp32>} : vector<32x32xf32>, vector<32x128xf32>, vector<32x128xf32> -> vector<32x128xf32>
    %22 = arith.addf %19, %21 : vector<32x128xf32>
    %c0_13 = arith.constant 0 : index
    %c0_14 = arith.constant 0 : index
    %23 = vector.load %arg7[%c0_13, %c0_14] : memref<1x128xf32, #tpu.memory_space<vmem>>, vector<1x128xf32>
    %24 = vector.broadcast %23 : vector<1x128xf32> to vector<32x128xf32>
    %25 = arith.addf %22, %24 : vector<32x128xf32>
    %cst_15 = arith.constant 0.000000e+00 : f32
    %26 = vector.broadcast %cst_15 : f32 to vector<32x128xf32>
    %27 = arith.maximumf %25, %26 : vector<32x128xf32>
    %c0_16 = arith.constant 0 : index
    %c0_17 = arith.constant 0 : index
    %28 = vector.load %arg8[%c0_16, %c0_17] : memref<128x64xf32, #tpu.memory_space<vmem>>, vector<128x64xf32>
    %cst_18 = arith.constant dense<0.000000e+00> : vector<32x64xf32>
    %29 = tpu.matmul %27, %28, %cst_18 {dimension_numbers = #tpu.dot_dimension_numbers<[1], [0], [0], [1], [0, 0, 1, 1], [], []>, precision = #tpu.contract_precision<fp32>} : vector<32x128xf32>, vector<128x64xf32>, vector<32x64xf32> -> vector<32x64xf32>
    %c0_19 = arith.constant 0 : index
    %c0_20 = arith.constant 0 : index
    %30 = vector.load %arg9[%c0_19, %c0_20] : memref<1x64xf32, #tpu.memory_space<vmem>>, vector<1x64xf32>
    %31 = vector.broadcast %30 : vector<1x64xf32> to vector<32x64xf32>
    %32 = arith.addf %29, %31 : vector<32x64xf32>
    %cst_21 = arith.constant 0.000000e+00 : f32
    %33 = vector.broadcast %cst_21 : f32 to vector<32x64xf32>
    %34 = arith.maximumf %32, %33 : vector<32x64xf32>
    %c0_22 = arith.constant 0 : index
    %c0_23 = arith.constant 0 : index
    %35 = vector.load %arg10[%c0_22, %c0_23] : memref<64x32xf32, #tpu.memory_space<vmem>>, vector<64x32xf32>
    %cst_24 = arith.constant dense<0.000000e+00> : vector<32x32xf32>
    %36 = tpu.matmul %34, %35, %cst_24 {dimension_numbers = #tpu.dot_dimension_numbers<[1], [0], [0], [1], [0, 0, 1, 1], [], []>, precision = #tpu.contract_precision<fp32>} : vector<32x64xf32>, vector<64x32xf32>, vector<32x32xf32> -> vector<32x32xf32>
    %c0_25 = arith.constant 0 : index
    %c0_26 = arith.constant 0 : index
    %37 = vector.load %arg11[%c0_25, %c0_26] : memref<1x32xf32, #tpu.memory_space<vmem>>, vector<1x32xf32>
    %38 = vector.broadcast %37 : vector<1x32xf32> to vector<32x32xf32>
    %39 = arith.addf %36, %38 : vector<32x32xf32>
    %40 = arith.addf %3, %39 : vector<32x32xf32>
    %c0_27 = arith.constant 0 : index
    %c0_28 = arith.constant 0 : index
    %41 = vector.load %arg19[%c0_27, %c0_28] : memref<32x32xf32, #tpu.memory_space<vmem>>, vector<32x32xf32>
    tpu.vector_store %arg19[%c0_27, %c0_28], %40 {strides = array<i32>} : memref<32x32xf32, #tpu.memory_space<vmem>>, vector<32x32xf32>,
    %42 = tpu.iota {dimensions = array<i32: 0>} : vector<32x32xi32>
    %c0_29 = arith.constant 0 : index
    %c0_30 = arith.constant 0 : index
    %c0_31 = arith.constant 0 : index
    %43 = vector.load %arg4[%c0_29, %c0_30, %c0_31] : memref<1x1x32xi32, #tpu.memory_space<vmem>>, vector<1x1x32xi32>
    %44 = vector.shape_cast %43 : vector<1x1x32xi32> to vector<1x32xi32>
    %45 = vector.broadcast %44 : vector<1x32xi32> to vector<32x32xi32>
    %46 = arith.cmpi eq, %45, %42 : vector<32x32xi32>
    %47 = arith.extui %46 : vector<32x32xi1> to vector<32x32xi32>
    %48 = arith.sitofp %47 : vector<32x32xi32> to vector<32x32xf32>
    %c0_32 = arith.constant 0 : index
    %c0_33 = arith.constant 0 : index
    %49 = vector.load %arg20[%c0_32, %c0_33] : memref<32x32xf32, #tpu.memory_space<vmem>>, vector<32x32xf32>
    %cst_34 = arith.constant dense<0.000000e+00> : vector<32x32xf32>
    %50 = tpu.matmul %48, %39, %cst_34 {dimension_numbers = #tpu.dot_dimension_numbers<[1], [0], [0], [1], [0, 0, 1, 1], [], []>, precision = #tpu.contract_precision<fp32>} : vector<32x32xf32>, vector<32x32xf32>, vector<32x32xf32> -> vector<32x32xf32>
    %51 = arith.addf %49, %50 : vector<32x32xf32>
    %c0_35 = arith.constant 0 : index
    %c0_36 = arith.constant 0 : index
    %52 = vector.load %arg20[%c0_35, %c0_36] : memref<32x32xf32, #tpu.memory_space<vmem>>, vector<32x32xf32>
    tpu.vector_store %arg20[%c0_35, %c0_36], %51 {strides = array<i32>} : memref<32x32xf32, #tpu.memory_space<vmem>>, vector<32x32xf32>,
    %c0_37 = arith.constant 0 : index
    %c0_38 = arith.constant 0 : index
    %53 = vector.load %arg21[%c0_37, %c0_38] : memref<32x1xf32, #tpu.memory_space<vmem>>, vector<32x1xf32>
    %cst_39 = arith.constant dense<0.000000e+00> : vector<32xf32>
    %54 = vector.multi_reduction <add>, %48, %cst_39 [1] : vector<32x32xf32> to vector<32xf32>
    %55 = vector.shape_cast %54 : vector<32xf32> to vector<32x1xf32>
    %56 = arith.addf %53, %55 : vector<32x1xf32>
    %c0_40 = arith.constant 0 : index
    %c0_41 = arith.constant 0 : index
    %57 = vector.load %arg21[%c0_40, %c0_41] : memref<32x1xf32, #tpu.memory_space<vmem>>, vector<32x1xf32>
    tpu.vector_store %arg21[%c0_40, %c0_41], %56 {strides = array<i32>} : memref<32x1xf32, #tpu.memory_space<vmem>>, vector<32x1xf32>,
    %c2_i32 = arith.constant 2 : i32
    %58 = arith.cmpi eq, %arg0, %c2_i32 : i32
    %59 = arith.extui %58 : i1 to i32
    %c0_i32_42 = arith.constant 0 : i32
    %60 = arith.cmpi ne, %59, %c0_i32_42 : i32
    scf.if %60 {
      %c0_43 = arith.constant 0 : index
      %c0_44 = arith.constant 0 : index
      %61 = vector.load %arg5[%c0_43, %c0_44] : memref<32x32xf32, #tpu.memory_space<vmem>>, vector<32x32xf32>
      %c0_45 = arith.constant 0 : index
      %c0_46 = arith.constant 0 : index
      %62 = vector.load %arg21[%c0_45, %c0_46] : memref<32x1xf32, #tpu.memory_space<vmem>>, vector<32x1xf32>
      %cst_47 = arith.constant 1.000000e+00 : f32
      %63 = vector.broadcast %cst_47 : f32 to vector<32x1xf32>
      %64 = arith.maximumf %62, %63 : vector<32x1xf32>
      %c0_48 = arith.constant 0 : index
      %c0_49 = arith.constant 0 : index
      %65 = vector.load %arg20[%c0_48, %c0_49] : memref<32x32xf32, #tpu.memory_space<vmem>>, vector<32x32xf32>
      %66 = vector.broadcast %64 : vector<32x1xf32> to vector<32x32xf32>
      %67 = arith.divf %65, %66 : vector<32x32xf32>
      %c0_50 = arith.constant 0 : index
      %c0_51 = arith.constant 0 : index
      %68 = vector.load %arg12[%c0_50, %c0_51] : memref<64x128xf32, #tpu.memory_space<vmem>>, vector<32x128xf32>
      %cst_52 = arith.constant dense<0.000000e+00> : vector<32x128xf32>
      %69 = tpu.matmul %67, %68, %cst_52 {dimension_numbers = #tpu.dot_dimension_numbers<[1], [0], [0], [1], [0, 0, 1, 1], [], []>, precision = #tpu.contract_precision<fp32>} : vector<32x32xf32>, vector<32x128xf32>, vector<32x128xf32> -> vector<32x128xf32>
      %c32 = arith.constant 32 : index
      %c0_53 = arith.constant 0 : index
      %70 = vector.load %arg12[%c32, %c0_53] : memref<64x128xf32, #tpu.memory_space<vmem>>, vector<32x128xf32>
      %cst_54 = arith.constant dense<0.000000e+00> : vector<32x128xf32>
      %71 = tpu.matmul %61, %70, %cst_54 {dimension_numbers = #tpu.dot_dimension_numbers<[1], [0], [0], [1], [0, 0, 1, 1], [], []>, precision = #tpu.contract_precision<fp32>} : vector<32x32xf32>, vector<32x128xf32>, vector<32x128xf32> -> vector<32x128xf32>
      %72 = arith.addf %69, %71 : vector<32x128xf32>
      %c0_55 = arith.constant 0 : index
      %c0_56 = arith.constant 0 : index
      %73 = vector.load %arg13[%c0_55, %c0_56] : memref<1x128xf32, #tpu.memory_space<vmem>>, vector<1x128xf32>
      %74 = vector.broadcast %73 : vector<1x128xf32> to vector<32x128xf32>
      %75 = arith.addf %72, %74 : vector<32x128xf32>
      %cst_57 = arith.constant 0.000000e+00 : f32
      %76 = vector.broadcast %cst_57 : f32 to vector<32x128xf32>
      %77 = arith.maximumf %75, %76 : vector<32x128xf32>
      %c0_58 = arith.constant 0 : index
      %c0_59 = arith.constant 0 : index
      %78 = vector.load %arg14[%c0_58, %c0_59] : memref<128x64xf32, #tpu.memory_space<vmem>>, vector<128x64xf32>
      %cst_60 = arith.constant dense<0.000000e+00> : vector<32x64xf32>
      %79 = tpu.matmul %77, %78, %cst_60 {dimension_numbers = #tpu.dot_dimension_numbers<[1], [0], [0], [1], [0, 0, 1, 1], [], []>, precision = #tpu.contract_precision<fp32>} : vector<32x128xf32>, vector<128x64xf32>, vector<32x64xf32> -> vector<32x64xf32>
      %c0_61 = arith.constant 0 : index
      %c0_62 = arith.constant 0 : index
      %80 = vector.load %arg15[%c0_61, %c0_62] : memref<1x64xf32, #tpu.memory_space<vmem>>, vector<1x64xf32>
      %81 = vector.broadcast %80 : vector<1x64xf32> to vector<32x64xf32>
      %82 = arith.addf %79, %81 : vector<32x64xf32>
      %cst_63 = arith.constant 0.000000e+00 : f32
      %83 = vector.broadcast %cst_63 : f32 to vector<32x64xf32>
      %84 = arith.maximumf %82, %83 : vector<32x64xf32>
      %c0_64 = arith.constant 0 : index
      %c0_65 = arith.constant 0 : index
      %85 = vector.load %arg16[%c0_64, %c0_65] : memref<64x32xf32, #tpu.memory_space<vmem>>, vector<64x32xf32>
      %cst_66 = arith.constant dense<0.000000e+00> : vector<32x32xf32>
      %86 = tpu.matmul %84, %85, %cst_66 {dimension_numbers = #tpu.dot_dimension_numbers<[1], [0], [0], [1], [0, 0, 1, 1], [], []>, precision = #tpu.contract_precision<fp32>} : vector<32x64xf32>, vector<64x32xf32>, vector<32x32xf32> -> vector<32x32xf32>
      %c0_67 = arith.constant 0 : index
      %c0_68 = arith.constant 0 : index
      %87 = vector.load %arg17[%c0_67, %c0_68] : memref<1x32xf32, #tpu.memory_space<vmem>>, vector<1x32xf32>
      %88 = vector.broadcast %87 : vector<1x32xf32> to vector<32x32xf32>
      %89 = arith.addf %86, %88 : vector<32x32xf32>
      %90 = arith.addf %61, %89 : vector<32x32xf32>
      %c0_69 = arith.constant 0 : index
      %c0_70 = arith.constant 0 : index
      %91 = vector.load %arg18[%c0_69, %c0_70] : memref<32x32xf32, #tpu.memory_space<vmem>>, vector<32x32xf32>
      tpu.vector_store %arg18[%c0_69, %c0_70], %90 {strides = array<i32>} : memref<32x32xf32, #tpu.memory_space<vmem>>, vector<32x32xf32>,
    } else {
    }
    return
  }
  func.func @transform_0(%arg0: i32) -> (i32, i32) {
    %c0_i32 = arith.constant 0 : i32
    %c0_i32_0 = arith.constant 0 : i32
    return %arg0, %c0_i32 : i32, i32
  }
  func.func @transform_1(%arg0: i32) -> (i32, i32) {
    %c0_i32 = arith.constant 0 : i32
    %c0_i32_0 = arith.constant 0 : i32
    return %arg0, %c0_i32 : i32, i32
  }
  func.func @transform_2(%arg0: i32) -> (i32, i32) {
    %c0_i32 = arith.constant 0 : i32
    %c0_i32_0 = arith.constant 0 : i32
    return %arg0, %c0_i32 : i32, i32
  }
  func.func @transform_3(%arg0: i32) -> (i32, i32, i32) {
    %c0_i32 = arith.constant 0 : i32
    %c0_i32_0 = arith.constant 0 : i32
    %c0_i32_1 = arith.constant 0 : i32
    return %arg0, %c0_i32, %c0_i32_0 : i32, i32, i32
  }
  func.func @transform_4(%arg0: i32) -> (i32, i32) {
    %c0_i32 = arith.constant 0 : i32
    %c0_i32_0 = arith.constant 0 : i32
    %c0_i32_1 = arith.constant 0 : i32
    return %c0_i32, %c0_i32_0 : i32, i32
  }
  func.func @transform_5(%arg0: i32) -> (i32, i32) {
    %c0_i32 = arith.constant 0 : i32
    %c0_i32_0 = arith.constant 0 : i32
    %c0_i32_1 = arith.constant 0 : i32
    return %c0_i32, %c0_i32_0 : i32, i32
  }
  func.func @transform_6(%arg0: i32) -> (i32, i32) {
    %c0_i32 = arith.constant 0 : i32
    %c0_i32_0 = arith.constant 0 : i32
    %c0_i32_1 = arith.constant 0 : i32
    return %c0_i32, %c0_i32_0 : i32, i32
  }
  func.func @transform_7(%arg0: i32) -> (i32, i32) {
    %c0_i32 = arith.constant 0 : i32
    %c0_i32_0 = arith.constant 0 : i32
    %c0_i32_1 = arith.constant 0 : i32
    return %c0_i32, %c0_i32_0 : i32, i32
  }
  func.func @transform_8(%arg0: i32) -> (i32, i32) {
    %c0_i32 = arith.constant 0 : i32
    %c0_i32_0 = arith.constant 0 : i32
    %c0_i32_1 = arith.constant 0 : i32
    return %c0_i32, %c0_i32_0 : i32, i32
  }
  func.func @transform_9(%arg0: i32) -> (i32, i32) {
    %c0_i32 = arith.constant 0 : i32
    %c0_i32_0 = arith.constant 0 : i32
    %c0_i32_1 = arith.constant 0 : i32
    return %c0_i32, %c0_i32_0 : i32, i32
  }
  func.func @transform_10(%arg0: i32) -> (i32, i32) {
    %c0_i32 = arith.constant 0 : i32
    %c0_i32_0 = arith.constant 0 : i32
    %c0_i32_1 = arith.constant 0 : i32
    return %c0_i32, %c0_i32_0 : i32, i32
  }
  func.func @transform_11(%arg0: i32) -> (i32, i32) {
    %c0_i32 = arith.constant 0 : i32
    %c0_i32_0 = arith.constant 0 : i32
    %c0_i32_1 = arith.constant 0 : i32
    return %c0_i32, %c0_i32_0 : i32, i32
  }
  func.func @transform_12(%arg0: i32) -> (i32, i32) {
    %c0_i32 = arith.constant 0 : i32
    %c0_i32_0 = arith.constant 0 : i32
    %c0_i32_1 = arith.constant 0 : i32
    return %c0_i32, %c0_i32_0 : i32, i32
  }
  func.func @transform_13(%arg0: i32) -> (i32, i32) {
    %c0_i32 = arith.constant 0 : i32
    %c0_i32_0 = arith.constant 0 : i32
    %c0_i32_1 = arith.constant 0 : i32
    return %c0_i32, %c0_i32_0 : i32, i32
  }
  func.func @transform_14(%arg0: i32) -> (i32, i32) {
    %c0_i32 = arith.constant 0 : i32
    %c0_i32_0 = arith.constant 0 : i32
    %c0_i32_1 = arith.constant 0 : i32
    return %c0_i32, %c0_i32_0 : i32, i32
  }
  func.func @transform_15(%arg0: i32) -> (i32, i32) {
    %c0_i32 = arith.constant 0 : i32
    %c0_i32_0 = arith.constant 0 : i32
    %c0_i32_1 = arith.constant 0 : i32
    return %c0_i32, %c0_i32_0 : i32, i32
  }
  func.func @transform_16(%arg0: i32) -> (i32, i32) {
    %c0_i32 = arith.constant 0 : i32
    %c0_i32_0 = arith.constant 0 : i32
    %c0_i32_1 = arith.constant 0 : i32
    return %c0_i32, %c0_i32_0 : i32, i32
  }
  func.func @transform_17(%arg0: i32) -> (i32, i32) {
    %c0_i32 = arith.constant 0 : i32
    %c0_i32_0 = arith.constant 0 : i32
    %c0_i32_1 = arith.constant 0 : i32
    return %c0_i32, %c0_i32_0 : i32, i32
  }
  func.func @transform_18(%arg0: i32) -> (i32, i32) {
    %c0_i32 = arith.constant 0 : i32
    %c0_i32_0 = arith.constant 0 : i32
    return %arg0, %c0_i32 : i32, i32
  }
}

</mosaic_0001>

<llo_original>
// kernel: first_megnet_block.1
$region0: #{first_megnet_block.1}
  #allocation0 [shape = 'u32[]', space=smem, size = 0x4, offset = 0x4, fixed_abs, tag = 'smem constant byte address 0x4 - core index']
  #allocation1 [shape = 'u32[144,128]{1,0:T(1,128)}', space=vmem, size = 0x12000, scoped, tag = 'internal scratch']
  #allocation2 [shape = 'f32[32,32]{1,0:T(8,128)}', space=vmem, size = 0x4000, scoped, tag = 'scratch operand']
  #allocation3 [shape = 'f32[32,1]{1,0:T(8,128)}', space=vmem, size = 0x4000, scoped, tag = 'scratch operand']
  #allocation4 [shape = 'f32[32,128]{1,0:T(8,128)}', space=vmem, size = 0x4000, scoped, tag = 'scratch operand']
  #allocation5 [shape = 'f32[32,128]{1,0:T(8,128)}', space=vmem, size = 0x4000, scoped, tag = 'scratch operand']
  %s0 = inlined_call_operand.vmem [shape: f32[96,32], index: 0, kind: input, shape index: {}, may-alias: {0,18}]
  %s1 = inlined_call_operand.vmem [shape: s32[96,1], index: 1, kind: input, shape index: {}]
  %s2 = inlined_call_operand.vmem [shape: s32[96,1], index: 2, kind: input, shape index: {}]
  %s3 = inlined_call_operand.vmem [shape: s32[3,1,32], index: 3, kind: input, shape index: {}]
  %s4 = inlined_call_operand.vmem [shape: f32[32,32], index: 4, kind: input, shape index: {}, may-alias: {4,17}]
  %s5 = inlined_call_operand.vmem [shape: f32[96,128], index: 5, kind: input, shape index: {}]
  %s6 = inlined_call_operand.vmem [shape: f32[1,128], index: 6, kind: input, shape index: {}]
  %s7 = inlined_call_operand.vmem [shape: f32[128,64], index: 7, kind: input, shape index: {}]
  %s8 = inlined_call_operand.vmem [shape: f32[1,64], index: 8, kind: input, shape index: {}]
  %s9 = inlined_call_operand.vmem [shape: f32[64,32], index: 9, kind: input, shape index: {}]
  %s10 = inlined_call_operand.vmem [shape: f32[1,32], index: 10, kind: input, shape index: {}]
  %s11 = inlined_call_operand.vmem [shape: f32[64,128], index: 11, kind: input, shape index: {}]
  %s12 = inlined_call_operand.vmem [shape: f32[1,128], index: 12, kind: input, shape index: {}]
  %s13 = inlined_call_operand.vmem [shape: f32[128,64], index: 13, kind: input, shape index: {}]
  %s14 = inlined_call_operand.vmem [shape: f32[1,64], index: 14, kind: input, shape index: {}]
  %s15 = inlined_call_operand.vmem [shape: f32[64,32], index: 15, kind: input, shape index: {}]
  %s16 = inlined_call_operand.vmem [shape: f32[1,32], index: 16, kind: input, shape index: {}]
  %s17 = inlined_call_operand.vmem [shape: f32[32,32], index: 17, kind: output, shape index: {0}, may-alias: {4,17}]
  %s18 = inlined_call_operand.vmem [shape: f32[96,32], index: 18, kind: output, shape index: {1}, may-alias: {0,18}]
  %19 = xla_tuple %s17, %s18
  %s20 = sld [smem:[#allocation0]]
  $region117: #{first_megnet_block.1} parent=0
    _
  %s22 = ssub.s32 1, %s20
  %s23 = scalar_select 0, %s22, %s20
  loop: start=0, step=1, limit=5
  $region2: #{first_megnet_block.1} parent=0 // loop_pre_header
    _
  $region3: #{first_megnet_block.1} parent=0 // loop_header
    %s25 = sphi 0, %s29
    %p26 = scmp.ge.s32.totalorder %s25, 5
    %s35 = sphi 0, %s37
    %s38 = sphi 0, %s35
    %s39 = sphi 0, %s38
    %s55 = sphi 0, %s39
    %s61 = sphi 0, %s63
    %s64 = sphi 0, %s61
    %s65 = sphi 0, %s64
    %s81 = sphi 0, %s65
    %s87 = sphi 0, %s89
    %s90 = sphi 0, %s87
    %s91 = sphi 0, %s90
    %s107 = sphi 0, %s91
    %s113 = sphi 0, %s115
    %s116 = sphi 0, %s113
    %s117 = sphi 0, %s116
    %s133 = sphi 0, %s117
    %s137 = sphi 0, %s137
    %s139 = sphi 0, %s137
    %s140 = sphi 0, %s139
    %s154 = sphi 0, %s140
    %s158 = sphi 0, %s158
    %s160 = sphi 0, %s158
    %s161 = sphi 0, %s160
    %s175 = sphi 0, %s161
    %s179 = sphi 0, %s179
    %s181 = sphi 0, %s179
    %s182 = sphi 0, %s181
    %s196 = sphi 0, %s182
    %s200 = sphi 0, %s200
    %s202 = sphi 0, %s200
    %s203 = sphi 0, %s202
    %s217 = sphi 0, %s203
    %s221 = sphi 0, %s221
    %s223 = sphi 0, %s221
    %s224 = sphi 0, %s223
    %s238 = sphi 0, %s224
    %s242 = sphi 0, %s242
    %s244 = sphi 0, %s242
    %s245 = sphi 0, %s244
    %s259 = sphi 0, %s245
    %s263 = sphi 0, %s263
    %s265 = sphi 0, %s263
    %s266 = sphi 0, %s265
    %s280 = sphi 0, %s266
    %s284 = sphi 0, %s284
    %s286 = sphi 0, %s284
    %s287 = sphi 0, %s286
    %s301 = sphi 0, %s287
    %s305 = sphi 0, %s305
    %s307 = sphi 0, %s305
    %s308 = sphi 0, %s307
    %s322 = sphi 0, %s308
    %s326 = sphi 0, %s326
    %s328 = sphi 0, %s326
    %s329 = sphi 0, %s328
    %s343 = sphi 0, %s329
    %s347 = sphi 0, %s347
    %s349 = sphi 0, %s347
    %s350 = sphi 0, %s349
    %s364 = sphi 0, %s350
    %s368 = sphi 0, %s368
    %s370 = sphi 0, %s368
    %s371 = sphi 0, %s370
    %s385 = sphi 0, %s371
    %s389 = sphi 0, %s389
    %s391 = sphi 0, %s389
    %s392 = sphi 0, %s391
    %s406 = sphi 0, %s392
    %s410 = sphi 0, %s410
    %s412 = sphi 0, %s410
    %s413 = sphi 0, %s412
    %s427 = sphi 0, %s413
    %s433 = sphi 0, %s435
    %s436 = sphi 0, %s433
    %s437 = sphi 0, %s436
    %s453 = sphi 0, %s437
  $region4: #{first_megnet_block.1} parent=0 // loop_header_branch
    %28 = sbr.rel (%p26) target = $region8
  $region5: #{first_megnet_block.1} parent=0 // loop_body
    %s30 = ssub.s32 %s25, 1
    %s31 = ssub.s32 %s25, 2
    %s32 = sadd.s32 %s25, 1
    %s33 = ssub.s32 %s25, %s32
    %p34 = scmp.eq.s32.totalorder %s33, 0
    %s36 = sadd.s32 %s35, 1
    %s37 = scalar_select %p34, %s35, %s36
    %p40 = pneg %p34
    %p41 = scmp.eq.s32.totalorder %s25, 2
    %p42 = por %p40, %p41
    %p43 = scmp.ne.s32.totalorder %s35, %s38
    %p44 = scmp.eq.s32.totalorder %s25, 0
    %p45 = por %p43, %p44
    %p46 = scmp.ne.s32.totalorder %s35, %s38
    %p47 = scmp.eq.s32.totalorder %s30, 2
    %p48 = por %p46, %p47
    %p49 = scmp.ne.s32.totalorder %s38, %s39
    %p50 = scmp.eq.s32.totalorder %s30, 0
    %p51 = por %p49, %p50
    %p52 = scmp.ne.s32.totalorder %s38, %s39
    %p53 = scmp.eq.s32.totalorder %s31, 2
    %p54 = por %p52, %p53
    %p56 = scmp.ne.s32.totalorder %s39, %s55
    %p57 = scmp.eq.s32.totalorder %s31, 0
    %p58 = por %p56, %p57
    %s59 = ssub.s32 %s25, %s32
    %p60 = scmp.eq.s32.totalorder %s59, 0
    %s62 = sadd.s32 %s61, 1
    %s63 = scalar_select %p60, %s61, %s62
    %p66 = pneg %p60
    %p67 = scmp.eq.s32.totalorder %s25, 2
    %p68 = por %p66, %p67
    %p69 = scmp.ne.s32.totalorder %s61, %s64
    %p70 = scmp.eq.s32.totalorder %s25, 0
    %p71 = por %p69, %p70
    %p72 = scmp.ne.s32.totalorder %s61, %s64
    %p73 = scmp.eq.s32.totalorder %s30, 2
    %p74 = por %p72, %p73
    %p75 = scmp.ne.s32.totalorder %s64, %s65
    %p76 = scmp.eq.s32.totalorder %s30, 0
    %p77 = por %p75, %p76
    %p78 = scmp.ne.s32.totalorder %s64, %s65
    %p79 = scmp.eq.s32.totalorder %s31, 2
    %p80 = por %p78, %p79
    %p82 = scmp.ne.s32.totalorder %s65, %s81
    %p83 = scmp.eq.s32.totalorder %s31, 0
    %p84 = por %p82, %p83
    %s85 = ssub.s32 %s25, %s32
    %p86 = scmp.eq.s32.totalorder %s85, 0
    %s88 = sadd.s32 %s87, 1
    %s89 = scalar_select %p86, %s87, %s88
    %p92 = pneg %p86
    %p93 = scmp.eq.s32.totalorder %s25, 2
    %p94 = por %p92, %p93
    %p95 = scmp.ne.s32.totalorder %s87, %s90
    %p96 = scmp.eq.s32.totalorder %s25, 0
    %p97 = por %p95, %p96
    %p98 = scmp.ne.s32.totalorder %s87, %s90
    %p99 = scmp.eq.s32.totalorder %s30, 2
    %p100 = por %p98, %p99
    %p101 = scmp.ne.s32.totalorder %s90, %s91
    %p102 = scmp.eq.s32.totalorder %s30, 0
    %p103 = por %p101, %p102
    %p104 = scmp.ne.s32.totalorder %s90, %s91
    %p105 = scmp.eq.s32.totalorder %s31, 2
    %p106 = por %p104, %p105
    %p108 = scmp.ne.s32.totalorder %s91, %s107
    %p109 = scmp.eq.s32.totalorder %s31, 0
    %p110 = por %p108, %p109
    %s111 = ssub.s32 %s25, %s32
    %p112 = scmp.eq.s32.totalorder %s111, 0
    %s114 = sadd.s32 %s113, 1
    %s115 = scalar_select %p112, %s113, %s114
    %p118 = pneg %p112
    %p119 = scmp.eq.s32.totalorder %s25, 2
    %p120 = por %p118, %p119
    %p121 = scmp.ne.s32.totalorder %s113, %s116
    %p122 = scmp.eq.s32.totalorder %s25, 0
    %p123 = por %p121, %p122
    %p124 = scmp.ne.s32.totalorder %s113, %s116
    %p125 = scmp.eq.s32.totalorder %s30, 2
    %p126 = por %p124, %p125
    %p127 = scmp.ne.s32.totalorder %s116, %s117
    %p128 = scmp.eq.s32.totalorder %s30, 0
    %p129 = por %p127, %p128
    %p130 = scmp.ne.s32.totalorder %s116, %s117
    %p131 = scmp.eq.s32.totalorder %s31, 2
    %p132 = por %p130, %p131
    %p134 = scmp.ne.s32.totalorder %s117, %s133
    %p135 = scmp.eq.s32.totalorder %s31, 0
    %p136 = por %p134, %p135
    %s138 = sadd.s32 %s137, 1
    %p141 = scmp.eq.s32.totalorder %s25, 2
    %p142 = scmp.ne.s32.totalorder %s137, %s139
    %p143 = scmp.eq.s32.totalorder %s25, 0
    %p144 = por %p142, %p143
    %p145 = scmp.ne.s32.totalorder %s137, %s139
    %p146 = scmp.eq.s32.totalorder %s30, 2
    %p147 = por %p145, %p146
    %p148 = scmp.ne.s32.totalorder %s139, %s140
    %p149 = scmp.eq.s32.totalorder %s30, 0
    %p150 = por %p148, %p149
    %p151 = scmp.ne.s32.totalorder %s139, %s140
    %p152 = scmp.eq.s32.totalorder %s31, 2
    %p153 = por %p151, %p152
    %p155 = scmp.ne.s32.totalorder %s140, %s154
    %p156 = scmp.eq.s32.totalorder %s31, 0
    %p157 = por %p155, %p156
    %s159 = sadd.s32 %s158, 1
    %p162 = scmp.eq.s32.totalorder %s25, 2
    %p163 = scmp.ne.s32.totalorder %s158, %s160
    %p164 = scmp.eq.s32.totalorder %s25, 0
    %p165 = por %p163, %p164
    %p166 = scmp.ne.s32.totalorder %s158, %s160
    %p167 = scmp.eq.s32.totalorder %s30, 2
    %p168 = por %p166, %p167
    %p169 = scmp.ne.s32.totalorder %s160, %s161
    %p170 = scmp.eq.s32.totalorder %s30, 0
    %p171 = por %p169, %p170
    %p172 = scmp.ne.s32.totalorder %s160, %s161
    %p173 = scmp.eq.s32.totalorder %s31, 2
    %p174 = por %p172, %p173
    %p176 = scmp.ne.s32.totalorder %s161, %s175
    %p177 = scmp.eq.s32.totalorder %s31, 0
    %p178 = por %p176, %p177
    %s180 = sadd.s32 %s179, 1
    %p183 = scmp.eq.s32.totalorder %s25, 2
    %p184 = scmp.ne.s32.totalorder %s179, %s181
    %p185 = scmp.eq.s32.totalorder %s25, 0
    %p186 = por %p184, %p185
    %p187 = scmp.ne.s32.totalorder %s179, %s181
    %p188 = scmp.eq.s32.totalorder %s30, 2
    %p189 = por %p187, %p188
    %p190 = scmp.ne.s32.totalorder %s181, %s182
    %p191 = scmp.eq.s32.totalorder %s30, 0
    %p192 = por %p190, %p191
    %p193 = scmp.ne.s32.totalorder %s181, %s182
    %p194 = scmp.eq.s32.totalorder %s31, 2
    %p195 = por %p193, %p194
    %p197 = scmp.ne.s32.totalorder %s182, %s196
    %p198 = scmp.eq.s32.totalorder %s31, 0
    %p199 = por %p197, %p198
    %s201 = sadd.s32 %s200, 1
    %p204 = scmp.eq.s32.totalorder %s25, 2
    %p205 = scmp.ne.s32.totalorder %s200, %s202
    %p206 = scmp.eq.s32.totalorder %s25, 0
    %p207 = por %p205, %p206
    %p208 = scmp.ne.s32.totalorder %s200, %s202
    %p209 = scmp.eq.s32.totalorder %s30, 2
    %p210 = por %p208, %p209
    %p211 = scmp.ne.s32.totalorder %s202, %s203
    %p212 = scmp.eq.s32.totalorder %s30, 0
    %p213 = por %p211, %p212
    %p214 = scmp.ne.s32.totalorder %s202, %s203
    %p215 = scmp.eq.s32.totalorder %s31, 2
    %p216 = por %p214, %p215
    %p218 = scmp.ne.s32.totalorder %s203, %s217
    %p219 = scmp.eq.s32.totalorder %s31, 0
    %p220 = por %p218, %p219
    %s222 = sadd.s32 %s221, 1
    %p225 = scmp.eq.s32.totalorder %s25, 2
    %p226 = scmp.ne.s32.totalorder %s221, %s223
    %p227 = scmp.eq.s32.totalorder %s25, 0
    %p228 = por %p226, %p227
    %p229 = scmp.ne.s32.totalorder %s221, %s223
    %p230 = scmp.eq.s32.totalorder %s30, 2
    %p231 = por %p229, %p230
    %p232 = scmp.ne.s32.totalorder %s223, %s224
    %p233 = scmp.eq.s32.totalorder %s30, 0
    %p234 = por %p232, %p233
    %p235 = scmp.ne.s32.totalorder %s223, %s224
    %p236 = scmp.eq.s32.totalorder %s31, 2
    %p237 = por %p235, %p236
    %p239 = scmp.ne.s32.totalorder %s224, %s238
    %p240 = scmp.eq.s32.totalorder %s31, 0
    %p241 = por %p239, %p240
    %s243 = sadd.s32 %s242, 1
    %p246 = scmp.eq.s32.totalorder %s25, 2
    %p247 = scmp.ne.s32.totalorder %s242, %s244
    %p248 = scmp.eq.s32.totalorder %s25, 0
    %p249 = por %p247, %p248
    %p250 = scmp.ne.s32.totalorder %s242, %s244
    %p251 = scmp.eq.s32.totalorder %s30, 2
    %p252 = por %p250, %p251
    %p253 = scmp.ne.s32.totalorder %s244, %s245
    %p254 = scmp.eq.s32.totalorder %s30, 0
    %p255 = por %p253, %p254
    %p256 = scmp.ne.s32.totalorder %s244, %s245
    %p257 = scmp.eq.s32.totalorder %s31, 2
    %p258 = por %p256, %p257
    %p260 = scmp.ne.s32.totalorder %s245, %s259
    %p261 = scmp.eq.s32.totalorder %s31, 0
    %p262 = por %p260, %p261
    %s264 = sadd.s32 %s263, 1
    %p267 = scmp.eq.s32.totalorder %s25, 2
    %p268 = scmp.ne.s32.totalorder %s263, %s265
    %p269 = scmp.eq.s32.totalorder %s25, 0
    %p270 = por %p268, %p269
    %p271 = scmp.ne.s32.totalorder %s263, %s265
    %p272 = scmp.eq.s32.totalorder %s30, 2
    %p273 = por %p271, %p272
    %p274 = scmp.ne.s32.totalorder %s265, %s266
    %p275 = scmp.eq.s32.totalorder %s30, 0
    %p276 = por %p274, %p275
    %p277 = scmp.ne.s32.totalorder %s265, %s266
    %p278 = scmp.eq.s32.totalorder %s31, 2
    %p279 = por %p277, %p278
    %p281 = scmp.ne.s32.totalorder %s266, %s280
    %p282 = scmp.eq.s32.totalorder %s31, 0
    %p283 = por %p281, %p282
    %s285 = sadd.s32 %s284, 1
    %p288 = scmp.eq.s32.totalorder %s25, 2
    %p289 = scmp.ne.s32.totalorder %s284, %s286
    %p290 = scmp.eq.s32.totalorder %s25, 0
    %p291 = por %p289, %p290
    %p292 = scmp.ne.s32.totalorder %s284, %s286
    %p293 = scmp.eq.s32.totalorder %s30, 2
    %p294 = por %p292, %p293
    %p295 = scmp.ne.s32.totalorder %s286, %s287
    %p296 = scmp.eq.s32.totalorder %s30, 0
    %p297 = por %p295, %p296
    %p298 = scmp.ne.s32.totalorder %s286, %s287
    %p299 = scmp.eq.s32.totalorder %s31, 2
    %p300 = por %p298, %p299
    %p302 = scmp.ne.s32.totalorder %s287, %s301
    %p303 = scmp.eq.s32.totalorder %s31, 0
    %p304 = por %p302, %p303
    %s306 = sadd.s32 %s305, 1
    %p309 = scmp.eq.s32.totalorder %s25, 2
    %p310 = scmp.ne.s32.totalorder %s305, %s307
    %p311 = scmp.eq.s32.totalorder %s25, 0
    %p312 = por %p310, %p311
    %p313 = scmp.ne.s32.totalorder %s305, %s307
    %p314 = scmp.eq.s32.totalorder %s30, 2
    %p315 = por %p313, %p314
    %p316 = scmp.ne.s32.totalorder %s307, %s308
    %p317 = scmp.eq.s32.totalorder %s30, 0
    %p318 = por %p316, %p317
    %p319 = scmp.ne.s32.totalorder %s307, %s308
    %p320 = scmp.eq.s32.totalorder %s31, 2
    %p321 = por %p319, %p320
    %p323 = scmp.ne.s32.totalorder %s308, %s322
    %p324 = scmp.eq.s32.totalorder %s31, 0
    %p325 = por %p323, %p324
    %s327 = sadd.s32 %s326, 1
    %p330 = scmp.eq.s32.totalorder %s25, 2
    %p331 = scmp.ne.s32.totalorder %s326, %s328
    %p332 = scmp.eq.s32.totalorder %s25, 0
    %p333 = por %p331, %p332
    %p334 = scmp.ne.s32.totalorder %s326, %s328
    %p335 = scmp.eq.s32.totalorder %s30, 2
    %p336 = por %p334, %p335
    %p337 = scmp.ne.s32.totalorder %s328, %s329
    %p338 = scmp.eq.s32.totalorder %s30, 0
    %p339 = por %p337, %p338
    %p340 = scmp.ne.s32.totalorder %s328, %s329
    %p341 = scmp.eq.s32.totalorder %s31, 2
    %p342 = por %p340, %p341
    %p344 = scmp.ne.s32.totalorder %s329, %s343
    %p345 = scmp.eq.s32.totalorder %s31, 0
    %p346 = por %p344, %p345
    %s348 = sadd.s32 %s347, 1
    %p351 = scmp.eq.s32.totalorder %s25, 2
    %p352 = scmp.ne.s32.totalorder %s347, %s349
    %p353 = scmp.eq.s32.totalorder %s25, 0
    %p354 = por %p352, %p353
    %p355 = scmp.ne.s32.totalorder %s347, %s349
    %p356 = scmp.eq.s32.totalorder %s30, 2
    %p357 = por %p355, %p356
    %p358 = scmp.ne.s32.totalorder %s349, %s350
    %p359 = scmp.eq.s32.totalorder %s30, 0
    %p360 = por %p358, %p359
    %p361 = scmp.ne.s32.totalorder %s349, %s350
    %p362 = scmp.eq.s32.totalorder %s31, 2
    %p363 = por %p361, %p362
    %p365 = scmp.ne.s32.totalorder %s350, %s364
    %p366 = scmp.eq.s32.totalorder %s31, 0
    %p367 = por %p365, %p366
    %s369 = sadd.s32 %s368, 1
    %p372 = scmp.eq.s32.totalorder %s25, 2
    %p373 = scmp.ne.s32.totalorder %s368, %s370
    %p374 = scmp.eq.s32.totalorder %s25, 0
    %p375 = por %p373, %p374
    %p376 = scmp.ne.s32.totalorder %s368, %s370
    %p377 = scmp.eq.s32.totalorder %s30, 2
    %p378 = por %p376, %p377
    %p379 = scmp.ne.s32.totalorder %s370, %s371
    %p380 = scmp.eq.s32.totalorder %s30, 0
    %p381 = por %p379, %p380
    %p382 = scmp.ne.s32.totalorder %s370, %s371
    %p383 = scmp.eq.s32.totalorder %s31, 2
    %p384 = por %p382, %p383
    %p386 = scmp.ne.s32.totalorder %s371, %s385
    %p387 = scmp.eq.s32.totalorder %s31, 0
    %p388 = por %p386, %p387
    %s390 = sadd.s32 %s389, 1
    %p393 = scmp.eq.s32.totalorder %s25, 2
    %p394 = scmp.ne.s32.totalorder %s389, %s391
    %p395 = scmp.eq.s32.totalorder %s25, 0
    %p396 = por %p394, %p395
    %p397 = scmp.ne.s32.totalorder %s389, %s391
    %p398 = scmp.eq.s32.totalorder %s30, 2
    %p399 = por %p397, %p398
    %p400 = scmp.ne.s32.totalorder %s391, %s392
    %p401 = scmp.eq.s32.totalorder %s30, 0
    %p402 = por %p400, %p401
    %p403 = scmp.ne.s32.totalorder %s391, %s392
    %p404 = scmp.eq.s32.totalorder %s31, 2
    %p405 = por %p403, %p404
    %p407 = scmp.ne.s32.totalorder %s392, %s406
    %p408 = scmp.eq.s32.totalorder %s31, 0
    %p409 = por %p407, %p408
    %s411 = sadd.s32 %s410, 1
    %p414 = scmp.eq.s32.totalorder %s25, 2
    %p415 = scmp.ne.s32.totalorder %s410, %s412
    %p416 = scmp.eq.s32.totalorder %s25, 0
    %p417 = por %p415, %p416
    %p418 = scmp.ne.s32.totalorder %s410, %s412
    %p419 = scmp.eq.s32.totalorder %s30, 2
    %p420 = por %p418, %p419
    %p421 = scmp.ne.s32.totalorder %s412, %s413
    %p422 = scmp.eq.s32.totalorder %s30, 0
    %p423 = por %p421, %p422
    %p424 = scmp.ne.s32.totalorder %s412, %s413
    %p425 = scmp.eq.s32.totalorder %s31, 2
    %p426 = por %p424, %p425
    %p428 = scmp.ne.s32.totalorder %s413, %s427
    %p429 = scmp.eq.s32.totalorder %s31, 0
    %p430 = por %p428, %p429
    %s431 = ssub.s32 %s25, %s32
    %p432 = scmp.eq.s32.totalorder %s431, 0
    %s434 = sadd.s32 %s433, 1
    %s435 = scalar_select %p432, %s433, %s434
    %p438 = pneg %p432
    %p439 = scmp.eq.s32.totalorder %s25, 2
    %p440 = por %p438, %p439
    %p441 = scmp.ne.s32.totalorder %s433, %s436
    %p442 = scmp.eq.s32.totalorder %s25, 0
    %p443 = por %p441, %p442
    %p444 = scmp.ne.s32.totalorder %s433, %s436
    %p445 = scmp.eq.s32.totalorder %s30, 2
    %p446 = por %p444, %p445
    %p447 = scmp.ne.s32.totalorder %s436, %s437
    %p448 = scmp.eq.s32.totalorder %s30, 0
    %p449 = por %p447, %p448
    %p450 = scmp.ne.s32.totalorder %s436, %s437
    %p451 = scmp.eq.s32.totalorder %s31, 2
    %p452 = por %p450, %p451
    %p454 = scmp.ne.s32.totalorder %s437, %s453
    %p455 = scmp.eq.s32.totalorder %s31, 0
    %p456 = por %p454, %p455
    %p457 = scmp.le.s32.totalorder 1, %s25
    %p458 = scmp.lt.s32.totalorder %s25, 4
    %p459 = pnand %p457, %p458
    %p460 = pneg %p459
    // Predicated region
    $region9: #{first_megnet_block.1} parent=5 // pred_check
      _
    $region10: #{first_megnet_block.1} parent=5 // pred_check_branch
      %462 = sbr.rel (%p459) target = $region12
    $region11: #{first_megnet_block.1} parent=5 // pred_region
      %s463 = ssub.s32 %s25, 1
      // Predicated region
      $region13: #{first_megnet_block.1} parent=11 // pred_check
        %p464 = pneg %p150
      $region14: #{first_megnet_block.1} parent=11 // pred_check_branch
        %466 = sbr.rel (%p464) target = $region16
      $region15: #{first_megnet_block.1} parent=11 // pred_region
        _
      $region16: #{first_megnet_block.1} parent=11 // pred_fallthru
        _
      // Predicated region
      $region17: #{first_megnet_block.1} parent=11 // pred_check
        %p467 = pneg %p171
      $region18: #{first_megnet_block.1} parent=11 // pred_check_branch
        %469 = sbr.rel (%p467) target = $region20
      $region19: #{first_megnet_block.1} parent=11 // pred_region
        _
      $region20: #{first_megnet_block.1} parent=11 // pred_fallthru
        _
      // Predicated region
      $region21: #{first_megnet_block.1} parent=11 // pred_check
        %p470 = pneg %p192
      $region22: #{first_megnet_block.1} parent=11 // pred_check_branch
        %472 = sbr.rel (%p470) target = $region24
      $region23: #{first_megnet_block.1} parent=11 // pred_region
        _
      $region24: #{first_megnet_block.1} parent=11 // pred_fallthru
        _
      // Predicated region
      $region25: #{first_megnet_block.1} parent=11 // pred_check
        %p473 = pneg %p213
      $region26: #{first_megnet_block.1} parent=11 // pred_check_branch
        %475 = sbr.rel (%p473) target = $region28
      $region27: #{first_megnet_block.1} parent=11 // pred_region
        _
      $region28: #{first_megnet_block.1} parent=11 // pred_fallthru
        _
      // Predicated region
      $region29: #{first_megnet_block.1} parent=11 // pred_check
        %p476 = pneg %p234
      $region30: #{first_megnet_block.1} parent=11 // pred_check_branch
        %478 = sbr.rel (%p476) target = $region32
      $region31: #{first_megnet_block.1} parent=11 // pred_region
        _
      $region32: #{first_megnet_block.1} parent=11 // pred_fallthru
        _
      // Predicated region
      $region33: #{first_megnet_block.1} parent=11 // pred_check
        %p479 = pneg %p255
      $region34: #{first_megnet_block.1} parent=11 // pred_check_branch
        %481 = sbr.rel (%p479) target = $region36
      $region35: #{first_megnet_block.1} parent=11 // pred_region
        _
      $region36: #{first_megnet_block.1} parent=11 // pred_fallthru
        _
      // Predicated region
      $region37: #{first_megnet_block.1} parent=11 // pred_check
        %p482 = pneg %p276
      $region38: #{first_megnet_block.1} parent=11 // pred_check_branch
        %484 = sbr.rel (%p482) target = $region40
      $region39: #{first_megnet_block.1} parent=11 // pred_region
        _
      $region40: #{first_megnet_block.1} parent=11 // pred_fallthru
        _
      // Predicated region
      $region41: #{first_megnet_block.1} parent=11 // pred_check
        %p485 = pneg %p297
      $region42: #{first_megnet_block.1} parent=11 // pred_check_branch
        %487 = sbr.rel (%p485) target = $region44
      $region43: #{first_megnet_block.1} parent=11 // pred_region
        _
      $region44: #{first_megnet_block.1} parent=11 // pred_fallthru
        _
      // Predicated region
      $region45: #{first_megnet_block.1} parent=11 // pred_check
        %p488 = pneg %p318
      $region46: #{first_megnet_block.1} parent=11 // pred_check_branch
        %490 = sbr.rel (%p488) target = $region48
      $region47: #{first_megnet_block.1} parent=11 // pred_region
        _
      $region48: #{first_megnet_block.1} parent=11 // pred_fallthru
        _
      // Predicated region
      $region49: #{first_megnet_block.1} parent=11 // pred_check
        %p491 = pneg %p339
      $region50: #{first_megnet_block.1} parent=11 // pred_check_branch
        %493 = sbr.rel (%p491) target = $region52
      $region51: #{first_megnet_block.1} parent=11 // pred_region
        _
      $region52: #{first_megnet_block.1} parent=11 // pred_fallthru
        _
      // Predicated region
      $region53: #{first_megnet_block.1} parent=11 // pred_check
        %p494 = pneg %p360
      $region54: #{first_megnet_block.1} parent=11 // pred_check_branch
        %496 = sbr.rel (%p494) target = $region56
      $region55: #{first_megnet_block.1} parent=11 // pred_region
        _
      $region56: #{first_megnet_block.1} parent=11 // pred_fallthru
        _
      // Predicated region
      $region57: #{first_megnet_block.1} parent=11 // pred_check
        %p497 = pneg %p381
      $region58: #{first_megnet_block.1} parent=11 // pred_check_branch
        %499 = sbr.rel (%p497) target = $region60
      $region59: #{first_megnet_block.1} parent=11 // pred_region
        _
      $region60: #{first_megnet_block.1} parent=11 // pred_fallthru
        _
      // Predicated region
      $region61: #{first_megnet_block.1} parent=11 // pred_check
        %p500 = pneg %p402
      $region62: #{first_megnet_block.1} parent=11 // pred_check_branch
        %502 = sbr.rel (%p500) target = $region64
      $region63: #{first_megnet_block.1} parent=11 // pred_region
        _
      $region64: #{first_megnet_block.1} parent=11 // pred_fallthru
        _
    $region12: #{first_megnet_block.1} parent=5 // pred_fallthru
      _
    %p503 = scmp.lt.s32.totalorder %s25, 3
    // Predicated region
    $region65: #{first_megnet_block.1} parent=5 // pred_check
      %p504 = pneg %p503
    $region66: #{first_megnet_block.1} parent=5 // pred_check_branch
      %506 = sbr.rel (%p504) target = $region68
    $region67: #{first_megnet_block.1} parent=5 // pred_region
      // Predicated region
      $region69: #{first_megnet_block.1} parent=67 // pred_check
        %p507 = pneg %p45
      $region70: #{first_megnet_block.1} parent=67 // pred_check_branch
        %509 = sbr.rel (%p507) target = $region72
      $region71: #{first_megnet_block.1} parent=67 // pred_region
        %s510 = smul.u32 4, %s25
        %p511 = scmp.lt.s32.totalorder %s510, 11
        %s512 = scalar_select %p511, %s510, 11
        %s513 = smul.addr %s512, 8
        %s514 = scalar_lea.vmem %s0, %s513
        %s515 = smul.u32 4, %s25
      $region72: #{first_megnet_block.1} parent=67 // pred_fallthru
        _
      // Predicated region
      $region73: #{first_megnet_block.1} parent=67 // pred_check
        %p516 = pneg %p71
      $region74: #{first_megnet_block.1} parent=67 // pred_check_branch
        %518 = sbr.rel (%p516) target = $region76
      $region75: #{first_megnet_block.1} parent=67 // pred_region
        %s519 = smul.u32 4, %s25
        %p520 = scmp.lt.s32.totalorder %s519, 11
        %s521 = scalar_select %p520, %s519, 11
        %s522 = smul.addr %s521, 8
        %s523 = scalar_lea.vmem %s1, %s522
        %s524 = smul.u32 4, %s25
      $region76: #{first_megnet_block.1} parent=67 // pred_fallthru
        _
      // Predicated region
      $region77: #{first_megnet_block.1} parent=67 // pred_check
        %p525 = pneg %p97
      $region78: #{first_megnet_block.1} parent=67 // pred_check_branch
        %527 = sbr.rel (%p525) target = $region80
      $region79: #{first_megnet_block.1} parent=67 // pred_region
        %s528 = smul.u32 4, %s25
        %p529 = scmp.lt.s32.totalorder %s528, 11
        %s530 = scalar_select %p529, %s528, 11
        %s531 = smul.addr %s530, 8
        %s532 = scalar_lea.vmem %s2, %s531
        %s533 = smul.u32 4, %s25
      $region80: #{first_megnet_block.1} parent=67 // pred_fallthru
        _
      // Predicated region
      $region81: #{first_megnet_block.1} parent=67 // pred_check
        %p534 = pneg %p123
      $region82: #{first_megnet_block.1} parent=67 // pred_check_branch
        %536 = sbr.rel (%p534) target = $region84
      $region83: #{first_megnet_block.1} parent=67 // pred_region
        %p537 = scmp.lt.s32.totalorder %s25, 2
        %s538 = scalar_select %p537, %s25, 2
        %s539 = scalar_lea.vmem %s3, %s538
      $region84: #{first_megnet_block.1} parent=67 // pred_fallthru
        _
    $region68: #{first_megnet_block.1} parent=5 // pred_fallthru
      _
    %p540 = scmp.le.s32.totalorder 1, %s25
    %p541 = scmp.lt.s32.totalorder %s25, 4
    %p542 = pnand %p540, %p541
    %p543 = pneg %p542
    // Predicated region
    $region85: #{first_megnet_block.1} parent=5 // pred_check
      _
    $region86: #{first_megnet_block.1} parent=5 // pred_check_branch
      %545 = sbr.rel (%p542) target = $region88
    $region87: #{first_megnet_block.1} parent=5 // pred_region
      %s546 = ssub.s32 %s25, 1
      %s547 = smul.u32 4, %s30
      %p548 = scmp.lt.s32.totalorder %s547, 11
      %s549 = scalar_select %p548, %s547, 11
      %s550 = smul.addr %s549, 8
      %s551 = scalar_lea.vmem %s0, %s550
      %p552 = pneg %p51
      %p553 = pneg %p48
      %s554 = smul.u32 4, %s30
      %p555 = scmp.lt.s32.totalorder %s554, 11
      %s556 = scalar_select %p555, %s554, 11
      %s557 = smul.addr %s556, 8
      %s558 = scalar_lea.vmem %s1, %s557
      %p559 = pneg %p77
      %p560 = pneg %p74
      %s561 = smul.u32 4, %s30
      %p562 = scmp.lt.s32.totalorder %s561, 11
      %s563 = scalar_select %p562, %s561, 11
      %s564 = smul.addr %s563, 8
      %s565 = scalar_lea.vmem %s2, %s564
      %p566 = pneg %p103
      %p567 = pneg %p100
      %p568 = scmp.lt.s32.totalorder %s30, 2
      %s569 = scalar_select %p568, %s30, 2
      %s570 = scalar_lea.vmem %s3, %s569
      %p571 = pneg %p129
      %p572 = pneg %p126
      %p573 = pneg %p150
      %p574 = pneg %p147
      %p575 = pneg %p171
      %p576 = pneg %p168
      %p577 = pneg %p192
      %p578 = pneg %p189
      %p579 = pneg %p213
      %p580 = pneg %p210
      %p581 = pneg %p234
      %p582 = pneg %p231
      %p583 = pneg %p255
      %p584 = pneg %p252
      %p585 = pneg %p276
      %p586 = pneg %p273
      %p587 = pneg %p297
      %p588 = pneg %p294
      %p589 = pneg %p318
      %p590 = pneg %p315
      %p591 = pneg %p339
      %p592 = pneg %p336
      %p593 = pneg %p360
      %p594 = pneg %p357
      %p595 = pneg %p381
      %p596 = pneg %p378
      %p597 = pneg %p402
      %p598 = pneg %p399
      %p599 = pneg %p423
      %p600 = pneg %p420
      %p601 = pneg %p449
      %p602 = pneg %p446
      %s603 = smul.u32 4, %s30
      %p604 = scmp.lt.s32.totalorder %s603, 11
      %s605 = scalar_select %p604, %s603, 11
      %s606 = smul.addr %s605, 8
      %s607 = scalar_lea.vmem %s18, %s606
      %s608 = smul.u32 4, %s30
      %p609 = scmp.lt.s32.totalorder %s608, 11
      %s610 = scalar_select %p609, %s608, 11
      %s611 = smul.addr %s610, 8
      %s612 = scalar_lea.vmem %s0, %s611
      %s613 = smul.u32 4, %s30
      %s614 = smul.u32 4, %s30
      %p615 = scmp.lt.s32.totalorder %s614, 11
      %s616 = scalar_select %p615, %s614, 11
      %s617 = smul.addr %s616, 8
      %s618 = scalar_lea.vmem %s1, %s617
      %s619 = smul.u32 4, %s30
      %s620 = smul.u32 4, %s30
      %p621 = scmp.lt.s32.totalorder %s620, 11
      %s622 = scalar_select %p621, %s620, 11
      %s623 = smul.addr %s622, 8
      %s624 = scalar_lea.vmem %s2, %s623
      %s625 = smul.u32 4, %s30
      %p626 = scmp.lt.s32.totalorder %s30, 2
      %s627 = scalar_select %p626, %s30, 2
      %s628 = scalar_lea.vmem %s3, %s627
      %s629 = smul.u32 4, %s30
      %p630 = scmp.lt.s32.totalorder %s629, 11
      %s631 = scalar_select %p630, %s629, 11
      %s632 = smul.addr %s631, 8
      %s633 = scalar_lea.vmem %s18, %s632
      %s634 = smul.u32 4, %s30
      %p635 = scmp.eq.s32.totalorder %s30, 0
      // Predicated region
      $region89: #{first_megnet_block.1} parent=87 // pred_check
        %p636 = pneg %p635
      $region90: #{first_megnet_block.1} parent=87 // pred_check_branch
        %638 = sbr.rel (%p636) target = $region92
      $region91: #{first_megnet_block.1} parent=87 // pred_region
        %vm639 = vcmask 261120
        %640 = vst.msk [vmem:[#allocation2] sm:$0xff] %vm639, 0.0
        %641 = vst.msk [vmem:[#allocation2 + $0x8] sm:$0xff] %vm639, 0.0
        %642 = vst.msk [vmem:[#allocation2 + $0x10] sm:$0xff] %vm639, 0.0
        %643 = vst.msk [vmem:[#allocation2 + $0x18] sm:$0xff] %vm639, 0.0
        %vm644 = vcmask 7168
        %645 = vst.msk [vmem:[#allocation3] sm:$0xff] %vm644, 0.0
        %646 = vst.msk [vmem:[#allocation3 + $0x8] sm:$0xff] %vm644, 0.0
        %647 = vst.msk [vmem:[#allocation3 + $0x10] sm:$0xff] %vm644, 0.0
        %648 = vst.msk [vmem:[#allocation3 + $0x18] sm:$0xff] %vm644, 0.0
        %v649 = vld [vmem:[%s4] sm:$0xff]
        %v650 = vld [vmem:[%s4 + $0x8] sm:$0xff]
        %v651 = vld [vmem:[%s4 + $0x10] sm:$0xff]
        %v652 = vld [vmem:[%s4 + $0x18] sm:$0xff]
        %v653 = vld [vmem:[%s5] sm:$0xff]
        %v654 = vld [vmem:[%s5 + $0x8] sm:$0xff]
        %v655 = vld [vmem:[%s5 + $0x10] sm:$0xff]
        %v656 = vld [vmem:[%s5 + $0x18] sm:$0xff]
        %v658 = vsel %vm639, %v649, 0
        %v661 = vsel %vm639, %v650, 0
        %v664 = vsel %vm639, %v651, 0
        %v667 = vsel %vm639, %v652, 0
        %669 = vmatprep.subr.mxu0 0.0
        %670 = vmatpush1.msra.mxu0 0.0
        %671 = vmatprep.subr.mxu0 0.0
        %672 = vmatpush1.msra.mxu0 0.0
        %673 = vmatprep.subr.mxu0 0.0
        %674 = vmatpush1.msra.mxu0 0.0
        %675 = vmatprep.subr.mxu0 0.0
        %676 = vmatpush1.msra.mxu0 0.0
        %677 = vmatprep.subr.mxu0 0.0
        %678 = vmatpush1.msra.mxu0 0.0
        %679 = vmatprep.subr.mxu0 0.0
        %680 = vmatpush1.msra.mxu0 0.0
        %681 = vmatprep.subr.mxu0 0.0
        %682 = vmatpush1.msra.mxu0 0.0
        %683 = vmatprep.subr.mxu0 0.0
        %684 = vmatpush1.msra.mxu0 0.0
        %685 = vmatprep.subr.mxu0 0.0
        %686 = vmatpush1.msra.mxu0 0.0
        %687 = vmatprep.subr.mxu0 0.0
        %688 = vmatpush1.msra.mxu0 0.0
        %689 = vmatprep.subr.mxu0 0.0
        %690 = vmatpush1.msra.mxu0 0.0
        %691 = vmatprep.subr.mxu0 0.0
        %692 = vmatpush1.msra.mxu0 0.0
        %693 = vmatprep.subr.mxu0 0.0
        %v694 = vand.u32 %v656, 4294901760
        %695 = vmatpush1.msra.mxu0 %v694
        %696 = vmatprep.subr.mxu0 0.0
        %v697 = vand.u32 %v655, 4294901760
        %698 = vmatpush1.msra.mxu0 %v697
        %699 = vmatprep.subr.mxu0 0.0
        %v700 = vand.u32 %v654, 4294901760
        %701 = vmatpush1.msra.mxu0 %v700
        %702 = vmatprep.subr.mxu0 0.0
        %v703 = vand.u32 %v653, 4294901760
        %704 = vmatpush1.msra.mxu0 %v703
        %705 = vmatprep.subr.mxu0 0.0
        %706 = vmatpush2.msra.mxu0 0.0
        %707 = vmatprep.subr.mxu0 0.0
        %708 = vmatpush2.msra.mxu0 0.0
        %709 = vmatprep.subr.mxu0 0.0
        %710 = vmatpush2.msra.mxu0 0.0
        %711 = vmatprep.subr.mxu0 0.0
        %712 = vmatpush2.msra.mxu0 0.0
        %713 = vmatprep.subr.mxu0 0.0
        %714 = vmatpush2.msra.mxu0 0.0
        %715 = vmatprep.subr.mxu0 0.0
        %716 = vmatpush2.msra.mxu0 0.0
        %717 = vmatprep.subr.mxu0 0.0
        %718 = vmatpush2.msra.mxu0 0.0
        %719 = vmatprep.subr.mxu0 0.0
        %720 = vmatpush2.msra.mxu0 0.0
        %721 = vmatprep.subr.mxu0 0.0
        %722 = vmatpush2.msra.mxu0 0.0
        %723 = vmatprep.subr.mxu0 0.0
        %724 = vmatpush2.msra.mxu0 0.0
        %725 = vmatprep.subr.mxu0 0.0
        %726 = vmatpush2.msra.mxu0 0.0
        %727 = vmatprep.subr.mxu0 0.0
        %728 = vmatpush2.msra.mxu0 0.0
        %729 = vmatprep.subr.mxu0 0.0
        %730 = vmatpush2.msra.mxu0 0.0
        %731 = vmatprep.subr.mxu0 0.0
        %732 = vmatpush2.msra.mxu0 0.0
        %733 = vmatprep.subr.mxu0 0.0
        %734 = vmatpush2.msra.mxu0 0.0
        %735 = vmatprep.subr.mxu0 0.0
        %736 = vmatpush2.msra.mxu0 0.0
        %737 = vmatprep.mubr.f32.mxu0 0.0
        %v738 = vand.u32 %v658, 4294901760
        %v739 = vsub.f32 %v658, %v738
        %v740 = vand.u32 %v739, 4294901760
        %v741 = vsub.f32 %v739, %v740
        %v742 = vand.u32 %v741, 4294901760
        %743 = vmatmul.mubr.f32.gmra.mxu0 %v742
        %v744 = vpop.f32.mrf.mxu0
        %v745 = vadd.f32 0.0, %v744
        %v746 = vpop.f32.mrf.mxu0
        %747 = vmatprep.mubr.f32.mxu0 0.0
        %v748 = vand.u32 %v661, 4294901760
        %v749 = vsub.f32 %v661, %v748
        %v750 = vand.u32 %v749, 4294901760
        %v751 = vsub.f32 %v749, %v750
        %v752 = vand.u32 %v751, 4294901760
        %753 = vmatmul.mubr.f32.gmra.mxu0 %v752
        %v754 = vpop.f32.mrf.mxu0
        %v755 = vadd.f32 0.0, %v754
        %v756 = vpop.f32.mrf.mxu0
        %757 = vmatprep.mubr.f32.mxu0 0.0
        %v758 = vand.u32 %v664, 4294901760
        %v759 = vsub.f32 %v664, %v758
        %v760 = vand.u32 %v759, 4294901760
        %v761 = vsub.f32 %v759, %v760
        %v762 = vand.u32 %v761, 4294901760
        %763 = vmatmul.mubr.f32.gmra.mxu0 %v762
        %v764 = vpop.f32.mrf.mxu0
        %v765 = vadd.f32 0.0, %v764
        %v766 = vpop.f32.mrf.mxu0
        %767 = vmatprep.mubr.f32.mxu0 0.0
        %v768 = vand.u32 %v667, 4294901760
        %v769 = vsub.f32 %v667, %v768
        %v770 = vand.u32 %v769, 4294901760
        %v771 = vsub.f32 %v769, %v770
        %v772 = vand.u32 %v771, 4294901760
        %773 = vmatmul.mubr.f32.gmra.mxu0 %v772
        %v774 = vpop.f32.mrf.mxu0
        %v775 = vadd.f32 0.0, %v774
        %v776 = vpop.f32.mrf.mxu0
        %777 = vdwg.mxu0
        %778 = vmatprep.subr.mxu0 0.0
        %779 = vmatpush1.msra.mxu0 0.0
        %780 = vmatprep.subr.mxu0 0.0
        %781 = vmatpush1.msra.mxu0 0.0
        %782 = vmatprep.subr.mxu0 0.0
        %783 = vmatpush1.msra.mxu0 0.0
        %784 = vmatprep.subr.mxu0 0.0
        %785 = vmatpush1.msra.mxu0 0.0
        %786 = vmatprep.subr.mxu0 0.0
        %787 = vmatpush1.msra.mxu0 0.0
        %788 = vmatprep.subr.mxu0 0.0
        %789 = vmatpush1.msra.mxu0 0.0
        %790 = vmatprep.subr.mxu0 0.0
        %791 = vmatpush1.msra.mxu0 0.0
        %792 = vmatprep.subr.mxu0 0.0
        %793 = vmatpush1.msra.mxu0 0.0
        %794 = vmatprep.subr.mxu0 0.0
        %795 = vmatpush1.msra.mxu0 0.0
        %796 = vmatprep.subr.mxu0 0.0
        %797 = vmatpush1.msra.mxu0 0.0
        %798 = vmatprep.subr.mxu0 0.0
        %799 = vmatpush1.msra.mxu0 0.0
        %800 = vmatprep.subr.mxu0 0.0
        %801 = vmatpush1.msra.mxu0 0.0
        %802 = vmatprep.subr.mxu0 0.0
        %v803 = vand.u32 %v656, 4294901760
        %v804 = vsub.f32 %v656, %v803
        %v805 = vand.u32 %v804, 4294901760
        %v806 = vsub.f32 %v804, %v805
        %v807 = vand.u32 %v806, 4294901760
        %808 = vmatpush1.msra.mxu0 %v807
        %809 = vmatprep.subr.mxu0 0.0
        %v810 = vand.u32 %v655, 4294901760
        %v811 = vsub.f32 %v655, %v810
        %v812 = vand.u32 %v811, 4294901760
        %v813 = vsub.f32 %v811, %v812
        %v814 = vand.u32 %v813, 4294901760
        %815 = vmatpush1.msra.mxu0 %v814
        %816 = vmatprep.subr.mxu0 0.0
        %v817 = vand.u32 %v654, 4294901760
        %v818 = vsub.f32 %v654, %v817
        %v819 = vand.u32 %v818, 4294901760
        %v820 = vsub.f32 %v818, %v819
        %v821 = vand.u32 %v820, 4294901760
        %822 = vmatpush1.msra.mxu0 %v821
        %823 = vmatprep.subr.mxu0 0.0
        %v824 = vand.u32 %v653, 4294901760
        %v825 = vsub.f32 %v653, %v824
        %v826 = vand.u32 %v825, 4294901760
        %v827 = vsub.f32 %v825, %v826
        %v828 = vand.u32 %v827, 4294901760
        %829 = vmatpush1.msra.mxu0 %v828
        %830 = vmatprep.subr.mxu0 0.0
        %831 = vmatpush2.msra.mxu0 0.0
        %832 = vmatprep.subr.mxu0 0.0
        %833 = vmatpush2.msra.mxu0 0.0
        %834 = vmatprep.subr.mxu0 0.0
        %835 = vmatpush2.msra.mxu0 0.0
        %836 = vmatprep.subr.mxu0 0.0
        %837 = vmatpush2.msra.mxu0 0.0
        %838 = vmatprep.subr.mxu0 0.0
        %839 = vmatpush2.msra.mxu0 0.0
        %840 = vmatprep.subr.mxu0 0.0
        %841 = vmatpush2.msra.mxu0 0.0
        %842 = vmatprep.subr.mxu0 0.0
        %843 = vmatpush2.msra.mxu0 0.0
        %844 = vmatprep.subr.mxu0 0.0
        %845 = vmatpush2.msra.mxu0 0.0
        %846 = vmatprep.subr.mxu0 0.0
        %847 = vmatpush2.msra.mxu0 0.0
        %848 = vmatprep.subr.mxu0 0.0
        %849 = vmatpush2.msra.mxu0 0.0
        %850 = vmatprep.subr.mxu0 0.0
        %851 = vmatpush2.msra.mxu0 0.0
        %852 = vmatprep.subr.mxu0 0.0
        %853 = vmatpush2.msra.mxu0 0.0
        %854 = vmatprep.subr.mxu0 0.0
        %855 = vmatpush2.msra.mxu0 0.0
        %856 = vmatprep.subr.mxu0 0.0
        %857 = vmatpush2.msra.mxu0 0.0
        %858 = vmatprep.subr.mxu0 0.0
        %859 = vmatpush2.msra.mxu0 0.0
        %860 = vmatprep.subr.mxu0 0.0
        %861 = vmatpush2.msra.mxu0 0.0
        %862 = vmatprep.mubr.f32.mxu0 0.0
        %v863 = vand.u32 %v658, 4294901760
        %864 = vmatmul.mubr.f32.gmra.mxu0 %v863
        %v865 = vpop.f32.mrf.mxu0
        %v866 = vadd.f32 %v745, %v865
        %v867 = vpop.f32.mrf.mxu0
        %868 = vmatprep.mubr.f32.mxu0 0.0
        %v869 = vand.u32 %v661, 4294901760
        %870 = vmatmul.mubr.f32.gmra.mxu0 %v869
        %v871 = vpop.f32.mrf.mxu0
        %v872 = vadd.f32 %v755, %v871
        %v873 = vpop.f32.mrf.mxu0
        %874 = vmatprep.mubr.f32.mxu0 0.0
        %v875 = vand.u32 %v664, 4294901760
        %876 = vmatmul.mubr.f32.gmra.mxu0 %v875
        %v877 = vpop.f32.mrf.mxu0
        %v878 = vadd.f32 %v765, %v877
        %v879 = vpop.f32.mrf.mxu0
        %880 = vmatprep.mubr.f32.mxu0 0.0
        %v881 = vand.u32 %v667, 4294901760
        %882 = vmatmul.mubr.f32.gmra.mxu0 %v881
        %v883 = vpop.f32.mrf.mxu0
        %v884 = vadd.f32 %v775, %v883
        %v885 = vpop.f32.mrf.mxu0
        %886 = vdwg.mxu0
        %887 = vmatprep.subr.mxu0 0.0
        %888 = vmatpush1.msra.mxu0 0.0
        %889 = vmatprep.subr.mxu0 0.0
        %890 = vmatpush1.msra.mxu0 0.0
        %891 = vmatprep.subr.mxu0 0.0
        %892 = vmatpush1.msra.mxu0 0.0
        %893 = vmatprep.subr.mxu0 0.0
        %894 = vmatpush1.msra.mxu0 0.0
        %895 = vmatprep.subr.mxu0 0.0
        %896 = vmatpush1.msra.mxu0 0.0
        %897 = vmatprep.subr.mxu0 0.0
        %898 = vmatpush1.msra.mxu0 0.0
        %899 = vmatprep.subr.mxu0 0.0
        %900 = vmatpush1.msra.mxu0 0.0
        %901 = vmatprep.subr.mxu0 0.0
        %902 = vmatpush1.msra.mxu0 0.0
        %903 = vmatprep.subr.mxu0 0.0
        %904 = vmatpush1.msra.mxu0 0.0
        %905 = vmatprep.subr.mxu0 0.0
        %906 = vmatpush1.msra.mxu0 0.0
        %907 = vmatprep.subr.mxu0 0.0
        %908 = vmatpush1.msra.mxu0 0.0
        %909 = vmatprep.subr.mxu0 0.0
        %910 = vmatpush1.msra.mxu0 0.0
        %911 = vmatprep.subr.mxu0 0.0
        %v912 = vand.u32 %v656, 4294901760
        %v913 = vsub.f32 %v656, %v912
        %914 = vmatpush1.msra.mxu0 %v913
        %915 = vmatprep.subr.mxu0 0.0
        %v916 = vand.u32 %v655, 4294901760
        %v917 = vsub.f32 %v655, %v916
        %918 = vmatpush1.msra.mxu0 %v917
        %919 = vmatprep.subr.mxu0 0.0
        %v920 = vand.u32 %v654, 4294901760
        %v921 = vsub.f32 %v654, %v920
        %922 = vmatpush1.msra.mxu0 %v921
        %923 = vmatprep.subr.mxu0 0.0
        %v924 = vand.u32 %v653, 4294901760
        %v925 = vsub.f32 %v653, %v924
        %926 = vmatpush1.msra.mxu0 %v925
        %927 = vmatprep.subr.mxu0 0.0
        %928 = vmatpush2.msra.mxu0 0.0
        %929 = vmatprep.subr.mxu0 0.0
        %930 = vmatpush2.msra.mxu0 0.0
        %931 = vmatprep.subr.mxu0 0.0
        %932 = vmatpush2.msra.mxu0 0.0
        %933 = vmatprep.subr.mxu0 0.0
        %934 = vmatpush2.msra.mxu0 0.0
        %935 = vmatprep.subr.mxu0 0.0
        %936 = vmatpush2.msra.mxu0 0.0
        %937 = vmatprep.subr.mxu0 0.0
        %938 = vmatpush2.msra.mxu0 0.0
        %939 = vmatprep.subr.mxu0 0.0
        %940 = vmatpush2.msra.mxu0 0.0
        %941 = vmatprep.subr.mxu0 0.0
        %942 = vmatpush2.msra.mxu0 0.0
        %943 = vmatprep.subr.mxu0 0.0
        %944 = vmatpush2.msra.mxu0 0.0
        %945 = vmatprep.subr.mxu0 0.0
        %946 = vmatpush2.msra.mxu0 0.0
        %947 = vmatprep.subr.mxu0 0.0
        %948 = vmatpush2.msra.mxu0 0.0
        %949 = vmatprep.subr.mxu0 0.0
        %950 = vmatpush2.msra.mxu0 0.0
        %951 = vmatprep.subr.mxu0 0.0
        %952 = vmatpush2.msra.mxu0 0.0
        %953 = vmatprep.subr.mxu0 0.0
        %954 = vmatpush2.msra.mxu0 0.0
        %955 = vmatprep.subr.mxu0 0.0
        %956 = vmatpush2.msra.mxu0 0.0
        %957 = vmatprep.subr.mxu0 0.0
        %958 = vmatpush2.msra.mxu0 0.0
        %959 = vmatprep.mubr.f32.mxu0 0.0
        %v960 = vand.u32 %v658, 4294901760
        %v961 = vsub.f32 %v658, %v960
        %962 = vmatmul.mubr.f32.gmra.mxu0 %v961
        %v963 = vpop.f32.mrf.mxu0
        %v964 = vadd.f32 %v866, %v963
        %v965 = vpop.f32.mrf.mxu0
        %966 = vmatprep.mubr.f32.mxu0 0.0
        %v967 = vand.u32 %v661, 4294901760
        %v968 = vsub.f32 %v661, %v967
        %969 = vmatmul.mubr.f32.gmra.mxu0 %v968
        %v970 = vpop.f32.mrf.mxu0
        %v971 = vadd.f32 %v872, %v970
        %v972 = vpop.f32.mrf.mxu0
        %973 = vmatprep.mubr.f32.mxu0 0.0
        %v974 = vand.u32 %v664, 4294901760
        %v975 = vsub.f32 %v664, %v974
        %976 = vmatmul.mubr.f32.gmra.mxu0 %v975
        %v977 = vpop.f32.mrf.mxu0
        %v978 = vadd.f32 %v878, %v977
        %v979 = vpop.f32.mrf.mxu0
        %980 = vmatprep.mubr.f32.mxu0 0.0
        %v981 = vand.u32 %v667, 4294901760
        %v982 = vsub.f32 %v667, %v981
        %983 = vmatmul.mubr.f32.gmra.mxu0 %v982
        %v984 = vpop.f32.mrf.mxu0
        %v985 = vadd.f32 %v884, %v984
        %v986 = vpop.f32.mrf.mxu0
        %987 = vdwg.mxu0
        %988 = vmatprep.subr.mxu0 0.0
        %989 = vmatpush1.msra.mxu0 0.0
        %990 = vmatprep.subr.mxu0 0.0
        %991 = vmatpush1.msra.mxu0 0.0
        %992 = vmatprep.subr.mxu0 0.0
        %993 = vmatpush1.msra.mxu0 0.0
        %994 = vmatprep.subr.mxu0 0.0
        %995 = vmatpush1.msra.mxu0 0.0
        %996 = vmatprep.subr.mxu0 0.0
        %997 = vmatpush1.msra.mxu0 0.0
        %998 = vmatprep.subr.mxu0 0.0
        %999 = vmatpush1.msra.mxu0 0.0
        %1000 = vmatprep.subr.mxu0 0.0
        %1001 = vmatpush1.msra.mxu0 0.0
        %1002 = vmatprep.subr.mxu0 0.0
        %1003 = vmatpush1.msra.mxu0 0.0
        %1004 = vmatprep.subr.mxu0 0.0
        %1005 = vmatpush1.msra.mxu0 0.0
        %1006 = vmatprep.subr.mxu0 0.0
        %1007 = vmatpush1.msra.mxu0 0.0
        %1008 = vmatprep.subr.mxu0 0.0
        %1009 = vmatpush1.msra.mxu0 0.0
        %1010 = vmatprep.subr.mxu0 0.0
        %1011 = vmatpush1.msra.mxu0 0.0
        %1012 = vmatprep.subr.mxu0 0.0
        %v1013 = vand.u32 %v656, 4294901760
        %1014 = vmatpush1.msra.mxu0 %v1013
        %1015 = vmatprep.subr.mxu0 0.0
        %v1016 = vand.u32 %v655, 4294901760
        %1017 = vmatpush1.msra.mxu0 %v1016
        %1018 = vmatprep.subr.mxu0 0.0
        %v1019 = vand.u32 %v654, 4294901760
        %1020 = vmatpush1.msra.mxu0 %v1019
        %1021 = vmatprep.subr.mxu0 0.0
        %v1022 = vand.u32 %v653, 4294901760
        %1023 = vmatpush1.msra.mxu0 %v1022
        %1024 = vmatprep.subr.mxu0 0.0
        %1025 = vmatpush2.msra.mxu0 0.0
        %1026 = vmatprep.subr.mxu0 0.0
        %1027 = vmatpush2.msra.mxu0 0.0
        %1028 = vmatprep.subr.mxu0 0.0
        %1029 = vmatpush2.msra.mxu0 0.0
        %1030 = vmatprep.subr.mxu0 0.0
        %1031 = vmatpush2.msra.mxu0 0.0
        %1032 = vmatprep.subr.mxu0 0.0
        %1033 = vmatpush2.msra.mxu0 0.0
        %1034 = vmatprep.subr.mxu0 0.0
        %1035 = vmatpush2.msra.mxu0 0.0
        %1036 = vmatprep.subr.mxu0 0.0
        %1037 = vmatpush2.msra.mxu0 0.0
        %1038 = vmatprep.subr.mxu0 0.0
        %1039 = vmatpush2.msra.mxu0 0.0
        %1040 = vmatprep.subr.mxu0 0.0
        %1041 = vmatpush2.msra.mxu0 0.0
        %1042 = vmatprep.subr.mxu0 0.0
        %1043 = vmatpush2.msra.mxu0 0.0
        %1044 = vmatprep.subr.mxu0 0.0
        %1045 = vmatpush2.msra.mxu0 0.0
        %1046 = vmatprep.subr.mxu0 0.0
        %1047 = vmatpush2.msra.mxu0 0.0
        %1048 = vmatprep.subr.mxu0 0.0
        %1049 = vmatpush2.msra.mxu0 0.0
        %1050 = vmatprep.subr.mxu0 0.0
        %1051 = vmatpush2.msra.mxu0 0.0
        %1052 = vmatprep.subr.mxu0 0.0
        %1053 = vmatpush2.msra.mxu0 0.0
        %1054 = vmatprep.subr.mxu0 0.0
        %1055 = vmatpush2.msra.mxu0 0.0
        %1056 = vmatprep.mubr.f32.mxu0 0.0
        %v1057 = vand.u32 %v658, 4294901760
        %v1058 = vsub.f32 %v658, %v1057
        %v1059 = vand.u32 %v1058, 4294901760
        %1060 = vmatmul.mubr.f32.gmra.mxu0 %v1059
        %v1061 = vpop.f32.mrf.mxu0
        %v1062 = vadd.f32 %v964, %v1061
        %v1063 = vpop.f32.mrf.mxu0
        %1064 = vmatprep.mubr.f32.mxu0 0.0
        %v1065 = vand.u32 %v661, 4294901760
        %v1066 = vsub.f32 %v661, %v1065
        %v1067 = vand.u32 %v1066, 4294901760
        %1068 = vmatmul.mubr.f32.gmra.mxu0 %v1067
        %v1069 = vpop.f32.mrf.mxu0
        %v1070 = vadd.f32 %v971, %v1069
        %v1071 = vpop.f32.mrf.mxu0
        %1072 = vmatprep.mubr.f32.mxu0 0.0
        %v1073 = vand.u32 %v664, 4294901760
        %v1074 = vsub.f32 %v664, %v1073
        %v1075 = vand.u32 %v1074, 4294901760
        %1076 = vmatmul.mubr.f32.gmra.mxu0 %v1075
        %v1077 = vpop.f32.mrf.mxu0
        %v1078 = vadd.f32 %v978, %v1077
        %v1079 = vpop.f32.mrf.mxu0
        %1080 = vmatprep.mubr.f32.mxu0 0.0
        %v1081 = vand.u32 %v667, 4294901760
        %v1082 = vsub.f32 %v667, %v1081
        %v1083 = vand.u32 %v1082, 4294901760
        %1084 = vmatmul.mubr.f32.gmra.mxu0 %v1083
        %v1085 = vpop.f32.mrf.mxu0
        %v1086 = vadd.f32 %v985, %v1085
        %v1087 = vpop.f32.mrf.mxu0
        %1088 = vdwg.mxu0
        %1089 = vmatprep.subr.mxu0 0.0
        %1090 = vmatpush1.msra.mxu0 0.0
        %1091 = vmatprep.subr.mxu0 0.0
        %1092 = vmatpush1.msra.mxu0 0.0
        %1093 = vmatprep.subr.mxu0 0.0
        %1094 = vmatpush1.msra.mxu0 0.0
        %1095 = vmatprep.subr.mxu0 0.0
        %1096 = vmatpush1.msra.mxu0 0.0
        %1097 = vmatprep.subr.mxu0 0.0
        %1098 = vmatpush1.msra.mxu0 0.0
        %1099 = vmatprep.subr.mxu0 0.0
        %1100 = vmatpush1.msra.mxu0 0.0
        %1101 = vmatprep.subr.mxu0 0.0
        %1102 = vmatpush1.msra.mxu0 0.0
        %1103 = vmatprep.subr.mxu0 0.0
        %1104 = vmatpush1.msra.mxu0 0.0
        %1105 = vmatprep.subr.mxu0 0.0
        %1106 = vmatpush1.msra.mxu0 0.0
        %1107 = vmatprep.subr.mxu0 0.0
        %1108 = vmatpush1.msra.mxu0 0.0
        %1109 = vmatprep.subr.mxu0 0.0
        %1110 = vmatpush1.msra.mxu0 0.0
        %1111 = vmatprep.subr.mxu0 0.0
        %1112 = vmatpush1.msra.mxu0 0.0
        %1113 = vmatprep.subr.mxu0 0.0
        %v1114 = vand.u32 %v656, 4294901760
        %v1115 = vsub.f32 %v656, %v1114
        %v1116 = vand.u32 %v1115, 4294901760
        %1117 = vmatpush1.msra.mxu0 %v1116
        %1118 = vmatprep.subr.mxu0 0.0
        %v1119 = vand.u32 %v655, 4294901760
        %v1120 = vsub.f32 %v655, %v1119
        %v1121 = vand.u32 %v1120, 4294901760
        %1122 = vmatpush1.msra.mxu0 %v1121
        %1123 = vmatprep.subr.mxu0 0.0
        %v1124 = vand.u32 %v654, 4294901760
        %v1125 = vsub.f32 %v654, %v1124
        %v1126 = vand.u32 %v1125, 4294901760
        %1127 = vmatpush1.msra.mxu0 %v1126
        %1128 = vmatprep.subr.mxu0 0.0
        %v1129 = vand.u32 %v653, 4294901760
        %v1130 = vsub.f32 %v653, %v1129
        %v1131 = vand.u32 %v1130, 4294901760
        %1132 = vmatpush1.msra.mxu0 %v1131
        %1133 = vmatprep.subr.mxu0 0.0
        %1134 = vmatpush2.msra.mxu0 0.0
        %1135 = vmatprep.subr.mxu0 0.0
        %1136 = vmatpush2.msra.mxu0 0.0
        %1137 = vmatprep.subr.mxu0 0.0
        %1138 = vmatpush2.msra.mxu0 0.0
        %1139 = vmatprep.subr.mxu0 0.0
        %1140 = vmatpush2.msra.mxu0 0.0
        %1141 = vmatprep.subr.mxu0 0.0
        %1142 = vmatpush2.msra.mxu0 0.0
        %1143 = vmatprep.subr.mxu0 0.0
        %1144 = vmatpush2.msra.mxu0 0.0
        %1145 = vmatprep.subr.mxu0 0.0
        %1146 = vmatpush2.msra.mxu0 0.0
        %1147 = vmatprep.subr.mxu0 0.0
        %1148 = vmatpush2.msra.mxu0 0.0
        %1149 = vmatprep.subr.mxu0 0.0
        %1150 = vmatpush2.msra.mxu0 0.0
        %1151 = vmatprep.subr.mxu0 0.0
        %1152 = vmatpush2.msra.mxu0 0.0
        %1153 = vmatprep.subr.mxu0 0.0
        %1154 = vmatpush2.msra.mxu0 0.0
        %1155 = vmatprep.subr.mxu0 0.0
        %1156 = vmatpush2.msra.mxu0 0.0
        %1157 = vmatprep.subr.mxu0 0.0
        %1158 = vmatpush2.msra.mxu0 0.0
        %1159 = vmatprep.subr.mxu0 0.0
        %1160 = vmatpush2.msra.mxu0 0.0
        %1161 = vmatprep.subr.mxu0 0.0
        %1162 = vmatpush2.msra.mxu0 0.0
        %1163 = vmatprep.subr.mxu0 0.0
        %1164 = vmatpush2.msra.mxu0 0.0
        %1165 = vmatprep.mubr.f32.mxu0 0.0
        %v1166 = vand.u32 %v658, 4294901760
        %1167 = vmatmul.mubr.f32.gmra.mxu0 %v1166
        %v1168 = vpop.f32.mrf.mxu0
        %v1169 = vadd.f32 %v1062, %v1168
        %v1170 = vpop.f32.mrf.mxu0
        %1171 = vmatprep.mubr.f32.mxu0 0.0
        %v1172 = vand.u32 %v661, 4294901760
        %1173 = vmatmul.mubr.f32.gmra.mxu0 %v1172
        %v1174 = vpop.f32.mrf.mxu0
        %v1175 = vadd.f32 %v1070, %v1174
        %v1176 = vpop.f32.mrf.mxu0
        %1177 = vmatprep.mubr.f32.mxu0 0.0
        %v1178 = vand.u32 %v664, 4294901760
        %1179 = vmatmul.mubr.f32.gmra.mxu0 %v1178
        %v1180 = vpop.f32.mrf.mxu0
        %v1181 = vadd.f32 %v1078, %v1180
        %v1182 = vpop.f32.mrf.mxu0
        %1183 = vmatprep.mubr.f32.mxu0 0.0
        %v1184 = vand.u32 %v667, 4294901760
        %1185 = vmatmul.mubr.f32.gmra.mxu0 %v1184
        %v1186 = vpop.f32.mrf.mxu0
        %v1187 = vadd.f32 %v1086, %v1186
        %v1188 = vpop.f32.mrf.mxu0
        %1189 = vdwg.mxu0
        %1190 = vmatprep.subr.mxu0 0.0
        %1191 = vmatpush1.msra.mxu0 0.0
        %1192 = vmatprep.subr.mxu0 0.0
        %1193 = vmatpush1.msra.mxu0 0.0
        %1194 = vmatprep.subr.mxu0 0.0
        %1195 = vmatpush1.msra.mxu0 0.0
        %1196 = vmatprep.subr.mxu0 0.0
        %1197 = vmatpush1.msra.mxu0 0.0
        %1198 = vmatprep.subr.mxu0 0.0
        %1199 = vmatpush1.msra.mxu0 0.0
        %1200 = vmatprep.subr.mxu0 0.0
        %1201 = vmatpush1.msra.mxu0 0.0
        %1202 = vmatprep.subr.mxu0 0.0
        %1203 = vmatpush1.msra.mxu0 0.0
        %1204 = vmatprep.subr.mxu0 0.0
        %1205 = vmatpush1.msra.mxu0 0.0
        %1206 = vmatprep.subr.mxu0 0.0
        %1207 = vmatpush1.msra.mxu0 0.0
        %1208 = vmatprep.subr.mxu0 0.0
        %1209 = vmatpush1.msra.mxu0 0.0
        %1210 = vmatprep.subr.mxu0 0.0
        %1211 = vmatpush1.msra.mxu0 0.0
        %1212 = vmatprep.subr.mxu0 0.0
        %1213 = vmatpush1.msra.mxu0 0.0
        %1214 = vmatprep.subr.mxu0 0.0
        %v1215 = vand.u32 %v656, 4294901760
        %1216 = vmatpush1.msra.mxu0 %v1215
        %1217 = vmatprep.subr.mxu0 0.0
        %v1218 = vand.u32 %v655, 4294901760
        %1219 = vmatpush1.msra.mxu0 %v1218
        %1220 = vmatprep.subr.mxu0 0.0
        %v1221 = vand.u32 %v654, 4294901760
        %1222 = vmatpush1.msra.mxu0 %v1221
        %1223 = vmatprep.subr.mxu0 0.0
        %v1224 = vand.u32 %v653, 4294901760
        %1225 = vmatpush1.msra.mxu0 %v1224
        %1226 = vmatprep.subr.mxu0 0.0
        %1227 = vmatpush2.msra.mxu0 0.0
        %1228 = vmatprep.subr.mxu0 0.0
        %1229 = vmatpush2.msra.mxu0 0.0
        %1230 = vmatprep.subr.mxu0 0.0
        %1231 = vmatpush2.msra.mxu0 0.0
        %1232 = vmatprep.subr.mxu0 0.0
        %1233 = vmatpush2.msra.mxu0 0.0
        %1234 = vmatprep.subr.mxu0 0.0
        %1235 = vmatpush2.msra.mxu0 0.0
        %1236 = vmatprep.subr.mxu0 0.0
        %1237 = vmatpush2.msra.mxu0 0.0
        %1238 = vmatprep.subr.mxu0 0.0
        %1239 = vmatpush2.msra.mxu0 0.0
        %1240 = vmatprep.subr.mxu0 0.0
        %1241 = vmatpush2.msra.mxu0 0.0
        %1242 = vmatprep.subr.mxu0 0.0
        %1243 = vmatpush2.msra.mxu0 0.0
        %1244 = vmatprep.subr.mxu0 0.0
        %1245 = vmatpush2.msra.mxu0 0.0
        %1246 = vmatprep.subr.mxu0 0.0
        %1247 = vmatpush2.msra.mxu0 0.0
        %1248 = vmatprep.subr.mxu0 0.0
        %1249 = vmatpush2.msra.mxu0 0.0
        %1250 = vmatprep.subr.mxu0 0.0
        %1251 = vmatpush2.msra.mxu0 0.0
        %1252 = vmatprep.subr.mxu0 0.0
        %1253 = vmatpush2.msra.mxu0 0.0
        %1254 = vmatprep.subr.mxu0 0.0
        %1255 = vmatpush2.msra.mxu0 0.0
        %1256 = vmatprep.subr.mxu0 0.0
        %1257 = vmatpush2.msra.mxu0 0.0
        %1258 = vmatprep.mubr.f32.mxu0 0.0
        %v1259 = vand.u32 %v658, 4294901760
        %1260 = vmatmul.mubr.f32.gmra.mxu0 %v1259
        %v1261 = vpop.f32.mrf.mxu0
        %v1262 = vadd.f32 %v1169, %v1261
        %v1263 = vpop.f32.mrf.mxu0
        %1264 = vmatprep.mubr.f32.mxu0 0.0
        %v1265 = vand.u32 %v661, 4294901760
        %1266 = vmatmul.mubr.f32.gmra.mxu0 %v1265
        %v1267 = vpop.f32.mrf.mxu0
        %v1268 = vadd.f32 %v1175, %v1267
        %v1269 = vpop.f32.mrf.mxu0
        %1270 = vmatprep.mubr.f32.mxu0 0.0
        %v1271 = vand.u32 %v664, 4294901760
        %1272 = vmatmul.mubr.f32.gmra.mxu0 %v1271
        %v1273 = vpop.f32.mrf.mxu0
        %v1274 = vadd.f32 %v1181, %v1273
        %v1275 = vpop.f32.mrf.mxu0
        %1276 = vmatprep.mubr.f32.mxu0 0.0
        %v1277 = vand.u32 %v667, 4294901760
        %1278 = vmatmul.mubr.f32.gmra.mxu0 %v1277
        %v1279 = vpop.f32.mrf.mxu0
        %v1280 = vadd.f32 %v1187, %v1279
        %v1281 = vpop.f32.mrf.mxu0
        %1282 = vdwg.mxu0
        %1283 = vst [vmem:[#allocation4] sm:$0xff] %v1262
        %1284 = vst [vmem:[#allocation4 + $0x8] sm:$0xff] %v1268
        %1285 = vst [vmem:[#allocation4 + $0x10] sm:$0xff] %v1274
        %1286 = vst [vmem:[#allocation4 + $0x18] sm:$0xff] %v1280
        %v1287 = vld [vmem:[%s5 + $0x20] sm:$0xff]
        %v1288 = vld [vmem:[%s5 + $0x28] sm:$0xff]
        %v1289 = vld [vmem:[%s5 + $0x30] sm:$0xff]
        %v1290 = vld [vmem:[%s5 + $0x38] sm:$0xff]
        %1291 = vmatprep.subr.mxu0 0.0
        %1292 = vmatpush1.msra.mxu0 0.0
        %1293 = vmatprep.subr.mxu0 0.0
        %1294 = vmatpush1.msra.mxu0 0.0
        %1295 = vmatprep.subr.mxu0 0.0
        %1296 = vmatpush1.msra.mxu0 0.0
        %1297 = vmatprep.subr.mxu0 0.0
        %1298 = vmatpush1.msra.mxu0 0.0
        %1299 = vmatprep.subr.mxu0 0.0
        %1300 = vmatpush1.msra.mxu0 0.0
        %1301 = vmatprep.subr.mxu0 0.0
        %1302 = vmatpush1.msra.mxu0 0.0
        %1303 = vmatprep.subr.mxu0 0.0
        %1304 = vmatpush1.msra.mxu0 0.0
        %1305 = vmatprep.subr.mxu0 0.0
        %1306 = vmatpush1.msra.mxu0 0.0
        %1307 = vmatprep.subr.mxu0 0.0
        %1308 = vmatpush1.msra.mxu0 0.0
        %1309 = vmatprep.subr.mxu0 0.0
        %1310 = vmatpush1.msra.mxu0 0.0
        %1311 = vmatprep.subr.mxu0 0.0
        %1312 = vmatpush1.msra.mxu0 0.0
        %1313 = vmatprep.subr.mxu0 0.0
        %1314 = vmatpush1.msra.mxu0 0.0
        %1315 = vmatprep.subr.mxu0 0.0
        %v1316 = vand.u32 %v1290, 4294901760
        %1317 = vmatpush1.msra.mxu0 %v1316
        %1318 = vmatprep.subr.mxu0 0.0
        %v1319 = vand.u32 %v1289, 4294901760
        %1320 = vmatpush1.msra.mxu0 %v1319
        %1321 = vmatprep.subr.mxu0 0.0
        %v1322 = vand.u32 %v1288, 4294901760
        %1323 = vmatpush1.msra.mxu0 %v1322
        %1324 = vmatprep.subr.mxu0 0.0
        %v1325 = vand.u32 %v1287, 4294901760
        %1326 = vmatpush1.msra.mxu0 %v1325
        %1327 = vmatprep.subr.mxu0 0.0
        %1328 = vmatpush2.msra.mxu0 0.0
        %1329 = vmatprep.subr.mxu0 0.0
        %1330 = vmatpush2.msra.mxu0 0.0
        %1331 = vmatprep.subr.mxu0 0.0
        %1332 = vmatpush2.msra.mxu0 0.0
        %1333 = vmatprep.subr.mxu0 0.0
        %1334 = vmatpush2.msra.mxu0 0.0
        %1335 = vmatprep.subr.mxu0 0.0
        %1336 = vmatpush2.msra.mxu0 0.0
        %1337 = vmatprep.subr.mxu0 0.0
        %1338 = vmatpush2.msra.mxu0 0.0
        %1339 = vmatprep.subr.mxu0 0.0
        %1340 = vmatpush2.msra.mxu0 0.0
        %1341 = vmatprep.subr.mxu0 0.0
        %1342 = vmatpush2.msra.mxu0 0.0
        %1343 = vmatprep.subr.mxu0 0.0
        %1344 = vmatpush2.msra.mxu0 0.0
        %1345 = vmatprep.subr.mxu0 0.0
        %1346 = vmatpush2.msra.mxu0 0.0
        %1347 = vmatprep.subr.mxu0 0.0
        %1348 = vmatpush2.msra.mxu0 0.0
        %1349 = vmatprep.subr.mxu0 0.0
        %1350 = vmatpush2.msra.mxu0 0.0
        %1351 = vmatprep.subr.mxu0 0.0
        %1352 = vmatpush2.msra.mxu0 0.0
        %1353 = vmatprep.subr.mxu0 0.0
        %1354 = vmatpush2.msra.mxu0 0.0
        %1355 = vmatprep.subr.mxu0 0.0
        %1356 = vmatpush2.msra.mxu0 0.0
        %1357 = vmatprep.subr.mxu0 0.0
        %1358 = vmatpush2.msra.mxu0 0.0
        %1359 = vmatprep.mubr.f32.mxu0 0.0
        %v1360 = vand.u32 %v658, 4294901760
        %v1361 = vsub.f32 %v658, %v1360
        %v1362 = vand.u32 %v1361, 4294901760
        %v1363 = vsub.f32 %v1361, %v1362
        %v1364 = vand.u32 %v1363, 4294901760
        %1365 = vmatmul.mubr.f32.gmra.mxu0 %v1364
        %v1366 = vpop.f32.mrf.mxu0
        %v1367 = vadd.f32 0.0, %v1366
        %v1368 = vpop.f32.mrf.mxu0
        %1369 = vmatprep.mubr.f32.mxu0 0.0
        %v1370 = vand.u32 %v661, 4294901760
        %v1371 = vsub.f32 %v661, %v1370
        %v1372 = vand.u32 %v1371, 4294901760
        %v1373 = vsub.f32 %v1371, %v1372
        %v1374 = vand.u32 %v1373, 4294901760
        %1375 = vmatmul.mubr.f32.gmra.mxu0 %v1374
        %v1376 = vpop.f32.mrf.mxu0
        %v1377 = vadd.f32 0.0, %v1376
        %v1378 = vpop.f32.mrf.mxu0
        %1379 = vmatprep.mubr.f32.mxu0 0.0
        %v1380 = vand.u32 %v664, 4294901760
        %v1381 = vsub.f32 %v664, %v1380
        %v1382 = vand.u32 %v1381, 4294901760
        %v1383 = vsub.f32 %v1381, %v1382
        %v1384 = vand.u32 %v1383, 4294901760
        %1385 = vmatmul.mubr.f32.gmra.mxu0 %v1384
        %v1386 = vpop.f32.mrf.mxu0
        %v1387 = vadd.f32 0.0, %v1386
        %v1388 = vpop.f32.mrf.mxu0
        %1389 = vmatprep.mubr.f32.mxu0 0.0
        %v1390 = vand.u32 %v667, 4294901760
        %v1391 = vsub.f32 %v667, %v1390
        %v1392 = vand.u32 %v1391, 4294901760
        %v1393 = vsub.f32 %v1391, %v1392
        %v1394 = vand.u32 %v1393, 4294901760
        %1395 = vmatmul.mubr.f32.gmra.mxu0 %v1394
        %v1396 = vpop.f32.mrf.mxu0
        %v1397 = vadd.f32 0.0, %v1396
        %v1398 = vpop.f32.mrf.mxu0
        %1399 = vdwg.mxu0
        %1400 = vmatprep.subr.mxu0 0.0
        %1401 = vmatpush1.msra.mxu0 0.0
        %1402 = vmatprep.subr.mxu0 0.0
        %1403 = vmatpush1.msra.mxu0 0.0
        %1404 = vmatprep.subr.mxu0 0.0
        %1405 = vmatpush1.msra.mxu0 0.0
        %1406 = vmatprep.subr.mxu0 0.0
        %1407 = vmatpush1.msra.mxu0 0.0
        %1408 = vmatprep.subr.mxu0 0.0
        %1409 = vmatpush1.msra.mxu0 0.0
        %1410 = vmatprep.subr.mxu0 0.0
        %1411 = vmatpush1.msra.mxu0 0.0
        %1412 = vmatprep.subr.mxu0 0.0
        %1413 = vmatpush1.msra.mxu0 0.0
        %1414 = vmatprep.subr.mxu0 0.0
        %1415 = vmatpush1.msra.mxu0 0.0
        %1416 = vmatprep.subr.mxu0 0.0
        %1417 = vmatpush1.msra.mxu0 0.0
        %1418 = vmatprep.subr.mxu0 0.0
        %1419 = vmatpush1.msra.mxu0 0.0
        %1420 = vmatprep.subr.mxu0 0.0
        %1421 = vmatpush1.msra.mxu0 0.0
        %1422 = vmatprep.subr.mxu0 0.0
        %1423 = vmatpush1.msra.mxu0 0.0
        %1424 = vmatprep.subr.mxu0 0.0
        %v1425 = vand.u32 %v1290, 4294901760
        %v1426 = vsub.f32 %v1290, %v1425
        %v1427 = vand.u32 %v1426, 4294901760
        %v1428 = vsub.f32 %v1426, %v1427
        %v1429 = vand.u32 %v1428, 4294901760
        %1430 = vmatpush1.msra.mxu0 %v1429
        %1431 = vmatprep.subr.mxu0 0.0
        %v1432 = vand.u32 %v1289, 4294901760
        %v1433 = vsub.f32 %v1289, %v1432
        %v1434 = vand.u32 %v1433, 4294901760
        %v1435 = vsub.f32 %v1433, %v1434
        %v1436 = vand.u32 %v1435, 4294901760
        %1437 = vmatpush1.msra.mxu0 %v1436
        %1438 = vmatprep.subr.mxu0 0.0
        %v1439 = vand.u32 %v1288, 4294901760
        %v1440 = vsub.f32 %v1288, %v1439
        %v1441 = vand.u32 %v1440, 4294901760
        %v1442 = vsub.f32 %v1440, %v1441
        %v1443 = vand.u32 %v1442, 4294901760
        %1444 = vmatpush1.msra.mxu0 %v1443
        %1445 = vmatprep.subr.mxu0 0.0
        %v1446 = vand.u32 %v1287, 4294901760
        %v1447 = vsub.f32 %v1287, %v1446
        %v1448 = vand.u32 %v1447, 4294901760
        %v1449 = vsub.f32 %v1447, %v1448
        %v1450 = vand.u32 %v1449, 4294901760
        %1451 = vmatpush1.msra.mxu0 %v1450
        %1452 = vmatprep.subr.mxu0 0.0
        %1453 = vmatpush2.msra.mxu0 0.0
        %1454 = vmatprep.subr.mxu0 0.0
        %1455 = vmatpush2.msra.mxu0 0.0
        %1456 = vmatprep.subr.mxu0 0.0
        %1457 = vmatpush2.msra.mxu0 0.0
        %1458 = vmatprep.subr.mxu0 0.0
        %1459 = vmatpush2.msra.mxu0 0.0
        %1460 = vmatprep.subr.mxu0 0.0
        %1461 = vmatpush2.msra.mxu0 0.0
        %1462 = vmatprep.subr.mxu0 0.0
        %1463 = vmatpush2.msra.mxu0 0.0
        %1464 = vmatprep.subr.mxu0 0.0
        %1465 = vmatpush2.msra.mxu0 0.0
        %1466 = vmatprep.subr.mxu0 0.0
        %1467 = vmatpush2.msra.mxu0 0.0
        %1468 = vmatprep.subr.mxu0 0.0
        %1469 = vmatpush2.msra.mxu0 0.0
        %1470 = vmatprep.subr.mxu0 0.0
        %1471 = vmatpush2.msra.mxu0 0.0
        %1472 = vmatprep.subr.mxu0 0.0
        %1473 = vmatpush2.msra.mxu0 0.0
        %1474 = vmatprep.subr.mxu0 0.0
        %1475 = vmatpush2.msra.mxu0 0.0
        %1476 = vmatprep.subr.mxu0 0.0
        %1477 = vmatpush2.msra.mxu0 0.0
        %1478 = vmatprep.subr.mxu0 0.0
        %1479 = vmatpush2.msra.mxu0 0.0
        %1480 = vmatprep.subr.mxu0 0.0
        %1481 = vmatpush2.msra.mxu0 0.0
        %1482 = vmatprep.subr.mxu0 0.0
        %1483 = vmatpush2.msra.mxu0 0.0
        %1484 = vmatprep.mubr.f32.mxu0 0.0
        %v1485 = vand.u32 %v658, 4294901760
        %1486 = vmatmul.mubr.f32.gmra.mxu0 %v1485
        %v1487 = vpop.f32.mrf.mxu0
        %v1488 = vadd.f32 %v1367, %v1487
        %v1489 = vpop.f32.mrf.mxu0
        %1490 = vmatprep.mubr.f32.mxu0 0.0
        %v1491 = vand.u32 %v661, 4294901760
        %1492 = vmatmul.mubr.f32.gmra.mxu0 %v1491
        %v1493 = vpop.f32.mrf.mxu0
        %v1494 = vadd.f32 %v1377, %v1493
        %v1495 = vpop.f32.mrf.mxu0
        %1496 = vmatprep.mubr.f32.mxu0 0.0
        %v1497 = vand.u32 %v664, 4294901760
        %1498 = vmatmul.mubr.f32.gmra.mxu0 %v1497
        %v1499 = vpop.f32.mrf.mxu0
        %v1500 = vadd.f32 %v1387, %v1499
        %v1501 = vpop.f32.mrf.mxu0
        %1502 = vmatprep.mubr.f32.mxu0 0.0
        %v1503 = vand.u32 %v667, 4294901760
        %1504 = vmatmul.mubr.f32.gmra.mxu0 %v1503
        %v1505 = vpop.f32.mrf.mxu0
        %v1506 = vadd.f32 %v1397, %v1505
        %v1507 = vpop.f32.mrf.mxu0
        %1508 = vdwg.mxu0
        %1509 = vmatprep.subr.mxu0 0.0
        %1510 = vmatpush1.msra.mxu0 0.0
        %1511 = vmatprep.subr.mxu0 0.0
        %1512 = vmatpush1.msra.mxu0 0.0
        %1513 = vmatprep.subr.mxu0 0.0
        %1514 = vmatpush1.msra.mxu0 0.0
        %1515 = vmatprep.subr.mxu0 0.0
        %1516 = vmatpush1.msra.mxu0 0.0
        %1517 = vmatprep.subr.mxu0 0.0
        %1518 = vmatpush1.msra.mxu0 0.0
        %1519 = vmatprep.subr.mxu0 0.0
        %1520 = vmatpush1.msra.mxu0 0.0
        %1521 = vmatprep.subr.mxu0 0.0
        %1522 = vmatpush1.msra.mxu0 0.0
        %1523 = vmatprep.subr.mxu0 0.0
        %1524 = vmatpush1.msra.mxu0 0.0
        %1525 = vmatprep.subr.mxu0 0.0
        %1526 = vmatpush1.msra.mxu0 0.0
        %1527 = vmatprep.subr.mxu0 0.0
        %1528 = vmatpush1.msra.mxu0 0.0
        %1529 = vmatprep.subr.mxu0 0.0
        %1530 = vmatpush1.msra.mxu0 0.0
        %1531 = vmatprep.subr.mxu0 0.0
        %1532 = vmatpush1.msra.mxu0 0.0
        %1533 = vmatprep.subr.mxu0 0.0
        %v1534 = vand.u32 %v1290, 4294901760
        %v1535 = vsub.f32 %v1290, %v1534
        %1536 = vmatpush1.msra.mxu0 %v1535
        %1537 = vmatprep.subr.mxu0 0.0
        %v1538 = vand.u32 %v1289, 4294901760
        %v1539 = vsub.f32 %v1289, %v1538
        %1540 = vmatpush1.msra.mxu0 %v1539
        %1541 = vmatprep.subr.mxu0 0.0
        %v1542 = vand.u32 %v1288, 4294901760
        %v1543 = vsub.f32 %v1288, %v1542
        %1544 = vmatpush1.msra.mxu0 %v1543
        %1545 = vmatprep.subr.mxu0 0.0
        %v1546 = vand.u32 %v1287, 4294901760
        %v1547 = vsub.f32 %v1287, %v1546
        %1548 = vmatpush1.msra.mxu0 %v1547
        %1549 = vmatprep.subr.mxu0 0.0
        %1550 = vmatpush2.msra.mxu0 0.0
        %1551 = vmatprep.subr.mxu0 0.0
        %1552 = vmatpush2.msra.mxu0 0.0
        %1553 = vmatprep.subr.mxu0 0.0
        %1554 = vmatpush2.msra.mxu0 0.0
        %1555 = vmatprep.subr.mxu0 0.0
        %1556 = vmatpush2.msra.mxu0 0.0
        %1557 = vmatprep.subr.mxu0 0.0
        %1558 = vmatpush2.msra.mxu0 0.0
        %1559 = vmatprep.subr.mxu0 0.0
        %1560 = vmatpush2.msra.mxu0 0.0
        %1561 = vmatprep.subr.mxu0 0.0
        %1562 = vmatpush2.msra.mxu0 0.0
        %1563 = vmatprep.subr.mxu0 0.0
        %1564 = vmatpush2.msra.mxu0 0.0
        %1565 = vmatprep.subr.mxu0 0.0
        %1566 = vmatpush2.msra.mxu0 0.0
        %1567 = vmatprep.subr.mxu0 0.0
        %1568 = vmatpush2.msra.mxu0 0.0
        %1569 = vmatprep.subr.mxu0 0.0
        %1570 = vmatpush2.msra.mxu0 0.0
        %1571 = vmatprep.subr.mxu0 0.0
        %1572 = vmatpush2.msra.mxu0 0.0
        %1573 = vmatprep.subr.mxu0 0.0
        %1574 = vmatpush2.msra.mxu0 0.0
        %1575 = vmatprep.subr.mxu0 0.0
        %1576 = vmatpush2.msra.mxu0 0.0
        %1577 = vmatprep.subr.mxu0 0.0
        %1578 = vmatpush2.msra.mxu0 0.0
        %1579 = vmatprep.subr.mxu0 0.0
        %1580 = vmatpush2.msra.mxu0 0.0
        %1581 = vmatprep.mubr.f32.mxu0 0.0
        %v1582 = vand.u32 %v658, 4294901760
        %v1583 = vsub.f32 %v658, %v1582
        %1584 = vmatmul.mubr.f32.gmra.mxu0 %v1583
        %v1585 = vpop.f32.mrf.mxu0
        %v1586 = vadd.f32 %v1488, %v1585
        %v1587 = vpop.f32.mrf.mxu0
        %1588 = vmatprep.mubr.f32.mxu0 0.0
        %v1589 = vand.u32 %v661, 4294901760
        %v1590 = vsub.f32 %v661, %v1589
        %1591 = vmatmul.mubr.f32.gmra.mxu0 %v1590
        %v1592 = vpop.f32.mrf.mxu0
        %v1593 = vadd.f32 %v1494, %v1592
        %v1594 = vpop.f32.mrf.mxu0
        %1595 = vmatprep.mubr.f32.mxu0 0.0
        %v1596 = vand.u32 %v664, 4294901760
        %v1597 = vsub.f32 %v664, %v1596
        %1598 = vmatmul.mubr.f32.gmra.mxu0 %v1597
        %v1599 = vpop.f32.mrf.mxu0
        %v1600 = vadd.f32 %v1500, %v1599
        %v1601 = vpop.f32.mrf.mxu0
        %1602 = vmatprep.mubr.f32.mxu0 0.0
        %v1603 = vand.u32 %v667, 4294901760
        %v1604 = vsub.f32 %v667, %v1603
        %1605 = vmatmul.mubr.f32.gmra.mxu0 %v1604
        %v1606 = vpop.f32.mrf.mxu0
        %v1607 = vadd.f32 %v1506, %v1606
        %v1608 = vpop.f32.mrf.mxu0
        %1609 = vdwg.mxu0
        %1610 = vmatprep.subr.mxu0 0.0
        %1611 = vmatpush1.msra.mxu0 0.0
        %1612 = vmatprep.subr.mxu0 0.0
        %1613 = vmatpush1.msra.mxu0 0.0
        %1614 = vmatprep.subr.mxu0 0.0
        %1615 = vmatpush1.msra.mxu0 0.0
        %1616 = vmatprep.subr.mxu0 0.0
        %1617 = vmatpush1.msra.mxu0 0.0
        %1618 = vmatprep.subr.mxu0 0.0
        %1619 = vmatpush1.msra.mxu0 0.0
        %1620 = vmatprep.subr.mxu0 0.0
        %1621 = vmatpush1.msra.mxu0 0.0
        %1622 = vmatprep.subr.mxu0 0.0
        %1623 = vmatpush1.msra.mxu0 0.0
        %1624 = vmatprep.subr.mxu0 0.0
        %1625 = vmatpush1.msra.mxu0 0.0
        %1626 = vmatprep.subr.mxu0 0.0
        %1627 = vmatpush1.msra.mxu0 0.0
        %1628 = vmatprep.subr.mxu0 0.0
        %1629 = vmatpush1.msra.mxu0 0.0
        %1630 = vmatprep.subr.mxu0 0.0
        %1631 = vmatpush1.msra.mxu0 0.0
        %1632 = vmatprep.subr.mxu0 0.0
        %1633 = vmatpush1.msra.mxu0 0.0
        %1634 = vmatprep.subr.mxu0 0.0
        %v1635 = vand.u32 %v1290, 4294901760
        %1636 = vmatpush1.msra.mxu0 %v1635
        %1637 = vmatprep.subr.mxu0 0.0
        %v1638 = vand.u32 %v1289, 4294901760
        %1639 = vmatpush1.msra.mxu0 %v1638
        %1640 = vmatprep.subr.mxu0 0.0
        %v1641 = vand.u32 %v1288, 4294901760
        %1642 = vmatpush1.msra.mxu0 %v1641
        %1643 = vmatprep.subr.mxu0 0.0
        %v1644 = vand.u32 %v1287, 4294901760
        %1645 = vmatpush1.msra.mxu0 %v1644
        %1646 = vmatprep.subr.mxu0 0.0
        %1647 = vmatpush2.msra.mxu0 0.0
        %1648 = vmatprep.subr.mxu0 0.0
        %1649 = vmatpush2.msra.mxu0 0.0
        %1650 = vmatprep.subr.mxu0 0.0
        %1651 = vmatpush2.msra.mxu0 0.0
        %1652 = vmatprep.subr.mxu0 0.0
        %1653 = vmatpush2.msra.mxu0 0.0
        %1654 = vmatprep.subr.mxu0 0.0
        %1655 = vmatpush2.msra.mxu0 0.0
        %1656 = vmatprep.subr.mxu0 0.0
        %1657 = vmatpush2.msra.mxu0 0.0
        %1658 = vmatprep.subr.mxu0 0.0
        %1659 = vmatpush2.msra.mxu0 0.0
        %1660 = vmatprep.subr.mxu0 0.0
        %1661 = vmatpush2.msra.mxu0 0.0
        %1662 = vmatprep.subr.mxu0 0.0
        %1663 = vmatpush2.msra.mxu0 0.0
        %1664 = vmatprep.subr.mxu0 0.0
        %1665 = vmatpush2.msra.mxu0 0.0
        %1666 = vmatprep.subr.mxu0 0.0
        %1667 = vmatpush2.msra.mxu0 0.0
        %1668 = vmatprep.subr.mxu0 0.0
        %1669 = vmatpush2.msra.mxu0 0.0
        %1670 = vmatprep.subr.mxu0 0.0
        %1671 = vmatpush2.msra.mxu0 0.0
        %1672 = vmatprep.subr.mxu0 0.0
        %1673 = vmatpush2.msra.mxu0 0.0
        %1674 = vmatprep.subr.mxu0 0.0
        %1675 = vmatpush2.msra.mxu0 0.0
        %1676 = vmatprep.subr.mxu0 0.0
        %1677 = vmatpush2.msra.mxu0 0.0
        %1678 = vmatprep.mubr.f32.mxu0 0.0
        %v1679 = vand.u32 %v658, 4294901760
        %v1680 = vsub.f32 %v658, %v1679
        %v1681 = vand.u32 %v1680, 4294901760
        %1682 = vmatmul.mubr.f32.gmra.mxu0 %v1681
        %v1683 = vpop.f32.mrf.mxu0
        %v1684 = vadd.f32 %v1586, %v1683
        %v1685 = vpop.f32.mrf.mxu0
        %1686 = vmatprep.mubr.f32.mxu0 0.0
        %v1687 = vand.u32 %v661, 4294901760
        %v1688 = vsub.f32 %v661, %v1687
        %v1689 = vand.u32 %v1688, 4294901760
        %1690 = vmatmul.mubr.f32.gmra.mxu0 %v1689
        %v1691 = vpop.f32.mrf.mxu0
        %v1692 = vadd.f32 %v1593, %v1691
        %v1693 = vpop.f32.mrf.mxu0
        %1694 = vmatprep.mubr.f32.mxu0 0.0
        %v1695 = vand.u32 %v664, 4294901760
        %v1696 = vsub.f32 %v664, %v1695
        %v1697 = vand.u32 %v1696, 4294901760
        %1698 = vmatmul.mubr.f32.gmra.mxu0 %v1697
        %v1699 = vpop.f32.mrf.mxu0
        %v1700 = vadd.f32 %v1600, %v1699
        %v1701 = vpop.f32.mrf.mxu0
        %1702 = vmatprep.mubr.f32.mxu0 0.0
        %v1703 = vand.u32 %v667, 4294901760
        %v1704 = vsub.f32 %v667, %v1703
        %v1705 = vand.u32 %v1704, 4294901760
        %1706 = vmatmul.mubr.f32.gmra.mxu0 %v1705
        %v1707 = vpop.f32.mrf.mxu0
        %v1708 = vadd.f32 %v1607, %v1707
        %v1709 = vpop.f32.mrf.mxu0
        %1710 = vdwg.mxu0
        %1711 = vmatprep.subr.mxu0 0.0
        %1712 = vmatpush1.msra.mxu0 0.0
        %1713 = vmatprep.subr.mxu0 0.0
        %1714 = vmatpush1.msra.mxu0 0.0
        %1715 = vmatprep.subr.mxu0 0.0
        %1716 = vmatpush1.msra.mxu0 0.0
        %1717 = vmatprep.subr.mxu0 0.0
        %1718 = vmatpush1.msra.mxu0 0.0
        %1719 = vmatprep.subr.mxu0 0.0
        %1720 = vmatpush1.msra.mxu0 0.0
        %1721 = vmatprep.subr.mxu0 0.0
        %1722 = vmatpush1.msra.mxu0 0.0
        %1723 = vmatprep.subr.mxu0 0.0
        %1724 = vmatpush1.msra.mxu0 0.0
        %1725 = vmatprep.subr.mxu0 0.0
        %1726 = vmatpush1.msra.mxu0 0.0
        %1727 = vmatprep.subr.mxu0 0.0
        %1728 = vmatpush1.msra.mxu0 0.0
        %1729 = vmatprep.subr.mxu0 0.0
        %1730 = vmatpush1.msra.mxu0 0.0
        %1731 = vmatprep.subr.mxu0 0.0
        %1732 = vmatpush1.msra.mxu0 0.0
        %1733 = vmatprep.subr.mxu0 0.0
        %1734 = vmatpush1.msra.mxu0 0.0
        %1735 = vmatprep.subr.mxu0 0.0
        %v1736 = vand.u32 %v1290, 4294901760
        %v1737 = vsub.f32 %v1290, %v1736
        %v1738 = vand.u32 %v1737, 4294901760
        %1739 = vmatpush1.msra.mxu0 %v1738
        %1740 = vmatprep.subr.mxu0 0.0
        %v1741 = vand.u32 %v1289, 4294901760
        %v1742 = vsub.f32 %v1289, %v1741
        %v1743 = vand.u32 %v1742, 4294901760
        %1744 = vmatpush1.msra.mxu0 %v1743
        %1745 = vmatprep.subr.mxu0 0.0
        %v1746 = vand.u32 %v1288, 4294901760
        %v1747 = vsub.f32 %v1288, %v1746
        %v1748 = vand.u32 %v1747, 4294901760
        %1749 = vmatpush1.msra.mxu0 %v1748
        %1750 = vmatprep.subr.mxu0 0.0
        %v1751 = vand.u32 %v1287, 4294901760
        %v1752 = vsub.f32 %v1287, %v1751
        %v1753 = vand.u32 %v1752, 4294901760
        %1754 = vmatpush1.msra.mxu0 %v1753
        %1755 = vmatprep.subr.mxu0 0.0
        %1756 = vmatpush2.msra.mxu0 0.0
        %1757 = vmatprep.subr.mxu0 0.0
        %1758 = vmatpush2.msra.mxu0 0.0
        %1759 = vmatprep.subr.mxu0 0.0
        %1760 = vmatpush2.msra.mxu0 0.0
        %1761 = vmatprep.subr.mxu0 0.0
        %1762 = vmatpush2.msra.mxu0 0.0
        %1763 = vmatprep.subr.mxu0 0.0
        %1764 = vmatpush2.msra.mxu0 0.0
        %1765 = vmatprep.subr.mxu0 0.0
        %1766 = vmatpush2.msra.mxu0 0.0
        %1767 = vmatprep.subr.mxu0 0.0
        %1768 = vmatpush2.msra.mxu0 0.0
        %1769 = vmatprep.subr.mxu0 0.0
        %1770 = vmatpush2.msra.mxu0 0.0
        %1771 = vmatprep.subr.mxu0 0.0
        %1772 = vmatpush2.msra.mxu0 0.0
        %1773 = vmatprep.subr.mxu0 0.0
        %1774 = vmatpush2.msra.mxu0 0.0
        %1775 = vmatprep.subr.mxu0 0.0
        %1776 = vmatpush2.msra.mxu0 0.0
        %1777 = vmatprep.subr.mxu0 0.0
        %1778 = vmatpush2.msra.mxu0 0.0
        %1779 = vmatprep.subr.mxu0 0.0
        %1780 = vmatpush2.msra.mxu0 0.0
        %1781 = vmatprep.subr.mxu0 0.0
        %1782 = vmatpush2.msra.mxu0 0.0
        %1783 = vmatprep.subr.mxu0 0.0
        %1784 = vmatpush2.msra.mxu0 0.0
        %1785 = vmatprep.subr.mxu0 0.0
        %1786 = vmatpush2.msra.mxu0 0.0
        %1787 = vmatprep.mubr.f32.mxu0 0.0
        %v1788 = vand.u32 %v658, 4294901760
        %1789 = vmatmul.mubr.f32.gmra.mxu0 %v1788
        %v1790 = vpop.f32.mrf.mxu0
        %v1791 = vadd.f32 %v1684, %v1790
        %v1792 = vpop.f32.mrf.mxu0
        %1793 = vmatprep.mubr.f32.mxu0 0.0
        %v1794 = vand.u32 %v661, 4294901760
        %1795 = vmatmul.mubr.f32.gmra.mxu0 %v1794
        %v1796 = vpop.f32.mrf.mxu0
        %v1797 = vadd.f32 %v1692, %v1796
        %v1798 = vpop.f32.mrf.mxu0
        %1799 = vmatprep.mubr.f32.mxu0 0.0
        %v1800 = vand.u32 %v664, 4294901760
        %1801 = vmatmul.mubr.f32.gmra.mxu0 %v1800
        %v1802 = vpop.f32.mrf.mxu0
        %v1803 = vadd.f32 %v1700, %v1802
        %v1804 = vpop.f32.mrf.mxu0
        %1805 = vmatprep.mubr.f32.mxu0 0.0
        %v1806 = vand.u32 %v667, 4294901760
        %1807 = vmatmul.mubr.f32.gmra.mxu0 %v1806
        %v1808 = vpop.f32.mrf.mxu0
        %v1809 = vadd.f32 %v1708, %v1808
        %v1810 = vpop.f32.mrf.mxu0
        %1811 = vdwg.mxu0
        %1812 = vmatprep.subr.mxu0 0.0
        %1813 = vmatpush1.msra.mxu0 0.0
        %1814 = vmatprep.subr.mxu0 0.0
        %1815 = vmatpush1.msra.mxu0 0.0
        %1816 = vmatprep.subr.mxu0 0.0
        %1817 = vmatpush1.msra.mxu0 0.0
        %1818 = vmatprep.subr.mxu0 0.0
        %1819 = vmatpush1.msra.mxu0 0.0
        %1820 = vmatprep.subr.mxu0 0.0
        %1821 = vmatpush1.msra.mxu0 0.0
        %1822 = vmatprep.subr.mxu0 0.0
        %1823 = vmatpush1.msra.mxu0 0.0
        %1824 = vmatprep.subr.mxu0 0.0
        %1825 = vmatpush1.msra.mxu0 0.0
        %1826 = vmatprep.subr.mxu0 0.0
        %1827 = vmatpush1.msra.mxu0 0.0
        %1828 = vmatprep.subr.mxu0 0.0
        %1829 = vmatpush1.msra.mxu0 0.0
        %1830 = vmatprep.subr.mxu0 0.0
        %1831 = vmatpush1.msra.mxu0 0.0
        %1832 = vmatprep.subr.mxu0 0.0
        %1833 = vmatpush1.msra.mxu0 0.0
        %1834 = vmatprep.subr.mxu0 0.0
        %1835 = vmatpush1.msra.mxu0 0.0
        %1836 = vmatprep.subr.mxu0 0.0
        %v1837 = vand.u32 %v1290, 4294901760
        %1838 = vmatpush1.msra.mxu0 %v1837
        %1839 = vmatprep.subr.mxu0 0.0
        %v1840 = vand.u32 %v1289, 4294901760
        %1841 = vmatpush1.msra.mxu0 %v1840
        %1842 = vmatprep.subr.mxu0 0.0
        %v1843 = vand.u32 %v1288, 4294901760
        %1844 = vmatpush1.msra.mxu0 %v1843
        %1845 = vmatprep.subr.mxu0 0.0
        %v1846 = vand.u32 %v1287, 4294901760
        %1847 = vmatpush1.msra.mxu0 %v1846
        %1848 = vmatprep.subr.mxu0 0.0
        %1849 = vmatpush2.msra.mxu0 0.0
        %1850 = vmatprep.subr.mxu0 0.0
        %1851 = vmatpush2.msra.mxu0 0.0
        %1852 = vmatprep.subr.mxu0 0.0
        %1853 = vmatpush2.msra.mxu0 0.0
        %1854 = vmatprep.subr.mxu0 0.0
        %1855 = vmatpush2.msra.mxu0 0.0
        %1856 = vmatprep.subr.mxu0 0.0
        %1857 = vmatpush2.msra.mxu0 0.0
        %1858 = vmatprep.subr.mxu0 0.0
        %1859 = vmatpush2.msra.mxu0 0.0
        %1860 = vmatprep.subr.mxu0 0.0
        %1861 = vmatpush2.msra.mxu0 0.0
        %1862 = vmatprep.subr.mxu0 0.0
        %1863 = vmatpush2.msra.mxu0 0.0
        %1864 = vmatprep.subr.mxu0 0.0
        %1865 = vmatpush2.msra.mxu0 0.0
        %1866 = vmatprep.subr.mxu0 0.0
        %1867 = vmatpush2.msra.mxu0 0.0
        %1868 = vmatprep.subr.mxu0 0.0
        %1869 = vmatpush2.msra.mxu0 0.0
        %1870 = vmatprep.subr.mxu0 0.0
        %1871 = vmatpush2.msra.mxu0 0.0
        %1872 = vmatprep.subr.mxu0 0.0
        %1873 = vmatpush2.msra.mxu0 0.0
        %1874 = vmatprep.subr.mxu0 0.0
        %1875 = vmatpush2.msra.mxu0 0.0
        %1876 = vmatprep.subr.mxu0 0.0
        %1877 = vmatpush2.msra.mxu0 0.0
        %1878 = vmatprep.subr.mxu0 0.0
        %1879 = vmatpush2.msra.mxu0 0.0
        %1880 = vmatprep.mubr.f32.mxu0 0.0
        %v1881 = vand.u32 %v658, 4294901760
        %1882 = vmatmul.mubr.f32.gmra.mxu0 %v1881
        %v1883 = vpop.f32.mrf.mxu0
        %v1884 = vadd.f32 %v1791, %v1883
        %v1885 = vpop.f32.mrf.mxu0
        %1886 = vmatprep.mubr.f32.mxu0 0.0
        %v1887 = vand.u32 %v661, 4294901760
        %1888 = vmatmul.mubr.f32.gmra.mxu0 %v1887
        %v1889 = vpop.f32.mrf.mxu0
        %v1890 = vadd.f32 %v1797, %v1889
        %v1891 = vpop.f32.mrf.mxu0
        %1892 = vmatprep.mubr.f32.mxu0 0.0
        %v1893 = vand.u32 %v664, 4294901760
        %1894 = vmatmul.mubr.f32.gmra.mxu0 %v1893
        %v1895 = vpop.f32.mrf.mxu0
        %v1896 = vadd.f32 %v1803, %v1895
        %v1897 = vpop.f32.mrf.mxu0
        %1898 = vmatprep.mubr.f32.mxu0 0.0
        %v1899 = vand.u32 %v667, 4294901760
        %1900 = vmatmul.mubr.f32.gmra.mxu0 %v1899
        %v1901 = vpop.f32.mrf.mxu0
        %v1902 = vadd.f32 %v1809, %v1901
        %v1903 = vpop.f32.mrf.mxu0
        %1904 = vdwg.mxu0
        %1905 = vst [vmem:[#allocation5] sm:$0xff] %v1884
        %1906 = vst [vmem:[#allocation5 + $0x8] sm:$0xff] %v1890
        %1907 = vst [vmem:[#allocation5 + $0x10] sm:$0xff] %v1896
        %1908 = vst [vmem:[#allocation5 + $0x18] sm:$0xff] %v1902
      $region92: #{first_megnet_block.1} parent=87 // pred_fallthru
        _
      %v1909 = vld [vmem:[%s612] sm:$0xff]
      %v1910 = vld [vmem:[%s612 + $0x8] sm:$0xff]
      %v1911 = vld [vmem:[%s612 + $0x10] sm:$0xff]
      %v1912 = vld [vmem:[%s612 + $0x18] sm:$0xff]
      %v1913 = vlaneseq
      %v1914 = vand.u32 %v1913, 127
      %v1915 = vld [vmem:[%s618] sm:$0xff]
      %v1916 = vld [vmem:[%s618 + $0x8] sm:$0xff]
      %v1917 = vld [vmem:[%s618 + $0x10] sm:$0xff]
      %v1918 = vld [vmem:[%s618 + $0x18] sm:$0xff]
      %1919 = vset.pattern.permute.xlu0 0
      %1920 = vperm.xlu0 %1919, %v1915
      %v1921 = vpop.permute.xlu0 %1920
      %1922 = vset.pattern.permute.xlu0 0
      %1923 = vperm.xlu0 %1922, %v1916
      %v1924 = vpop.permute.xlu0 %1923
      %1925 = vset.pattern.permute.xlu0 0
      %1926 = vperm.xlu0 %1925, %v1917
      %v1927 = vpop.permute.xlu0 %1926
      %1928 = vset.pattern.permute.xlu0 0
      %1929 = vperm.xlu0 %1928, %v1918
      %v1930 = vpop.permute.xlu0 %1929
      %vm1931 = vcmp.eq.s32.totalorder %v1921, %v1914
      %vm1932 = vcmp.eq.s32.totalorder %v1924, %v1914
      %vm1933 = vcmp.eq.s32.totalorder %v1927, %v1914
      %vm1934 = vcmp.eq.s32.totalorder %v1930, %v1914
      %v1935 = vsel %vm1931, 1, 0
      %v1936 = vsel %vm1932, 1, 0
      %v1937 = vsel %vm1933, 1, 0
      %v1938 = vsel %vm1934, 1, 0
      %v1939 = vcvt.s32.f32 %v1935
      %v1940 = vcvt.s32.f32 %v1936
      %v1941 = vcvt.s32.f32 %v1937
      %v1942 = vcvt.s32.f32 %v1938
      %v1943 = vld [vmem:[%s624] sm:$0xff]
      %v1944 = vld [vmem:[%s624 + $0x8] sm:$0xff]
      %v1945 = vld [vmem:[%s624 + $0x10] sm:$0xff]
      %v1946 = vld [vmem:[%s624 + $0x18] sm:$0xff]
      %1947 = vset.pattern.permute.xlu0 0
      %1948 = vperm.xlu0 %1947, %v1943
      %v1949 = vpop.permute.xlu0 %1948
      %1950 = vset.pattern.permute.xlu0 0
      %1951 = vperm.xlu0 %1950, %v1944
      %v1952 = vpop.permute.xlu0 %1951
      %1953 = vset.pattern.permute.xlu0 0
      %1954 = vperm.xlu0 %1953, %v1945
      %v1955 = vpop.permute.xlu0 %1954
      %1956 = vset.pattern.permute.xlu0 0
      %1957 = vperm.xlu0 %1956, %v1946
      %v1958 = vpop.permute.xlu0 %1957
      %vm1959 = vcmp.eq.s32.totalorder %v1949, %v1914
      %vm1960 = vcmp.eq.s32.totalorder %v1952, %v1914
      %vm1961 = vcmp.eq.s32.totalorder %v1955, %v1914
      %vm1962 = vcmp.eq.s32.totalorder %v1958, %v1914
      %v1963 = vsel %vm1959, 1, 0
      %v1964 = vsel %vm1960, 1, 0
      %v1965 = vsel %vm1961, 1, 0
      %v1966 = vsel %vm1962, 1, 0
      %v1967 = vcvt.s32.f32 %v1963
      %v1968 = vcvt.s32.f32 %v1964
      %v1969 = vcvt.s32.f32 %v1965
      %v1970 = vcvt.s32.f32 %v1966
      %v1971 = vld [vmem:[#allocation4] sm:$0xff]
      %v1972 = vld [vmem:[#allocation4 + $0x8] sm:$0xff]
      %v1973 = vld [vmem:[#allocation4 + $0x10] sm:$0xff]
      %v1974 = vld [vmem:[#allocation4 + $0x18] sm:$0xff]
      %v1975 = vld [vmem:[#allocation5] sm:$0xff]
      %v1976 = vld [vmem:[#allocation5 + $0x8] sm:$0xff]
      %v1977 = vld [vmem:[#allocation5 + $0x10] sm:$0xff]
      %v1978 = vld [vmem:[#allocation5 + $0x18] sm:$0xff]
      %vm1979 = vcmask 261120
      %v1981 = vsel %vm1979, %v1967, 0
      %v1984 = vsel %vm1979, %v1968, 0
      %v1987 = vsel %vm1979, %v1969, 0
      %v1990 = vsel %vm1979, %v1970, 0
      %1992 = vmatprep.subr.mxu0 0.0
      %1993 = vmatpush1.msra.mxu0 0.0
      %1994 = vmatprep.subr.mxu0 0.0
      %1995 = vmatpush1.msra.mxu0 0.0
      %1996 = vmatprep.subr.mxu0 0.0
      %1997 = vmatpush1.msra.mxu0 0.0
      %1998 = vmatprep.subr.mxu0 0.0
      %1999 = vmatpush1.msra.mxu0 0.0
      %2000 = vmatprep.subr.mxu0 0.0
      %2001 = vmatpush1.msra.mxu0 0.0
      %2002 = vmatprep.subr.mxu0 0.0
      %2003 = vmatpush1.msra.mxu0 0.0
      %2004 = vmatprep.subr.mxu0 0.0
      %2005 = vmatpush1.msra.mxu0 0.0
      %2006 = vmatprep.subr.mxu0 0.0
      %2007 = vmatpush1.msra.mxu0 0.0
      %2008 = vmatprep.subr.mxu0 0.0
      %2009 = vmatpush1.msra.mxu0 0.0
      %2010 = vmatprep.subr.mxu0 0.0
      %2011 = vmatpush1.msra.mxu0 0.0
      %2012 = vmatprep.subr.mxu0 0.0
      %2013 = vmatpush1.msra.mxu0 0.0
      %2014 = vmatprep.subr.mxu0 0.0
      %2015 = vmatpush1.msra.mxu0 0.0
      %2016 = vmatprep.subr.mxu0 0.0
      %v2017 = vand.u32 %v1978, 4294901760
      %2018 = vmatpush1.msra.mxu0 %v2017
      %2019 = vmatprep.subr.mxu0 0.0
      %v2020 = vand.u32 %v1977, 4294901760
      %2021 = vmatpush1.msra.mxu0 %v2020
      %2022 = vmatprep.subr.mxu0 0.0
      %v2023 = vand.u32 %v1976, 4294901760
      %2024 = vmatpush1.msra.mxu0 %v2023
      %2025 = vmatprep.subr.mxu0 0.0
      %v2026 = vand.u32 %v1975, 4294901760
      %2027 = vmatpush1.msra.mxu0 %v2026
      %2028 = vmatprep.subr.mxu0 0.0
      %2029 = vmatpush2.msra.mxu0 0.0
      %2030 = vmatprep.subr.mxu0 0.0
      %2031 = vmatpush2.msra.mxu0 0.0
      %2032 = vmatprep.subr.mxu0 0.0
      %2033 = vmatpush2.msra.mxu0 0.0
      %2034 = vmatprep.subr.mxu0 0.0
      %2035 = vmatpush2.msra.mxu0 0.0
      %2036 = vmatprep.subr.mxu0 0.0
      %2037 = vmatpush2.msra.mxu0 0.0
      %2038 = vmatprep.subr.mxu0 0.0
      %2039 = vmatpush2.msra.mxu0 0.0
      %2040 = vmatprep.subr.mxu0 0.0
      %2041 = vmatpush2.msra.mxu0 0.0
      %2042 = vmatprep.subr.mxu0 0.0
      %2043 = vmatpush2.msra.mxu0 0.0
      %2044 = vmatprep.subr.mxu0 0.0
      %2045 = vmatpush2.msra.mxu0 0.0
      %2046 = vmatprep.subr.mxu0 0.0
      %2047 = vmatpush2.msra.mxu0 0.0
      %2048 = vmatprep.subr.mxu0 0.0
      %2049 = vmatpush2.msra.mxu0 0.0
      %2050 = vmatprep.subr.mxu0 0.0
      %2051 = vmatpush2.msra.mxu0 0.0
      %2052 = vmatprep.subr.mxu0 0.0
      %2053 = vmatpush2.msra.mxu0 0.0
      %2054 = vmatprep.subr.mxu0 0.0
      %2055 = vmatpush2.msra.mxu0 0.0
      %2056 = vmatprep.subr.mxu0 0.0
      %2057 = vmatpush2.msra.mxu0 0.0
      %2058 = vmatprep.subr.mxu0 0.0
      %2059 = vmatpush2.msra.mxu0 0.0
      %2060 = vmatprep.mubr.f32.mxu0 0.0
      %v2061 = vand.u32 %v1981, 4294901760
      %v2062 = vsub.f32 %v1981, %v2061
      %v2063 = vand.u32 %v2062, 4294901760
      %v2064 = vsub.f32 %v2062, %v2063
      %v2065 = vand.u32 %v2064, 4294901760
      %2066 = vmatmul.mubr.f32.gmra.mxu0 %v2065
      %v2067 = vpop.f32.mrf.mxu0
      %v2068 = vadd.f32 0.0, %v2067
      %v2069 = vpop.f32.mrf.mxu0
      %2070 = vmatprep.mubr.f32.mxu0 0.0
      %v2071 = vand.u32 %v1984, 4294901760
      %v2072 = vsub.f32 %v1984, %v2071
      %v2073 = vand.u32 %v2072, 4294901760
      %v2074 = vsub.f32 %v2072, %v2073
      %v2075 = vand.u32 %v2074, 4294901760
      %2076 = vmatmul.mubr.f32.gmra.mxu0 %v2075
      %v2077 = vpop.f32.mrf.mxu0
      %v2078 = vadd.f32 0.0, %v2077
      %v2079 = vpop.f32.mrf.mxu0
      %2080 = vmatprep.mubr.f32.mxu0 0.0
      %v2081 = vand.u32 %v1987, 4294901760
      %v2082 = vsub.f32 %v1987, %v2081
      %v2083 = vand.u32 %v2082, 4294901760
      %v2084 = vsub.f32 %v2082, %v2083
      %v2085 = vand.u32 %v2084, 4294901760
      %2086 = vmatmul.mubr.f32.gmra.mxu0 %v2085
      %v2087 = vpop.f32.mrf.mxu0
      %v2088 = vadd.f32 0.0, %v2087
      %v2089 = vpop.f32.mrf.mxu0
      %2090 = vmatprep.mubr.f32.mxu0 0.0
      %v2091 = vand.u32 %v1990, 4294901760
      %v2092 = vsub.f32 %v1990, %v2091
      %v2093 = vand.u32 %v2092, 4294901760
      %v2094 = vsub.f32 %v2092, %v2093
      %v2095 = vand.u32 %v2094, 4294901760
      %2096 = vmatmul.mubr.f32.gmra.mxu0 %v2095
      %v2097 = vpop.f32.mrf.mxu0
      %v2098 = vadd.f32 0.0, %v2097
      %v2099 = vpop.f32.mrf.mxu0
      %2100 = vdwg.mxu0
      %2101 = vmatprep.subr.mxu0 0.0
      %2102 = vmatpush1.msra.mxu0 0.0
      %2103 = vmatprep.subr.mxu0 0.0
      %2104 = vmatpush1.msra.mxu0 0.0
      %2105 = vmatprep.subr.mxu0 0.0
      %2106 = vmatpush1.msra.mxu0 0.0
      %2107 = vmatprep.subr.mxu0 0.0
      %2108 = vmatpush1.msra.mxu0 0.0
      %2109 = vmatprep.subr.mxu0 0.0
      %2110 = vmatpush1.msra.mxu0 0.0
      %2111 = vmatprep.subr.mxu0 0.0
      %2112 = vmatpush1.msra.mxu0 0.0
      %2113 = vmatprep.subr.mxu0 0.0
      %2114 = vmatpush1.msra.mxu0 0.0
      %2115 = vmatprep.subr.mxu0 0.0
      %2116 = vmatpush1.msra.mxu0 0.0
      %2117 = vmatprep.subr.mxu0 0.0
      %2118 = vmatpush1.msra.mxu0 0.0
      %2119 = vmatprep.subr.mxu0 0.0
      %2120 = vmatpush1.msra.mxu0 0.0
      %2121 = vmatprep.subr.mxu0 0.0
      %2122 = vmatpush1.msra.mxu0 0.0
      %2123 = vmatprep.subr.mxu0 0.0
      %2124 = vmatpush1.msra.mxu0 0.0
      %2125 = vmatprep.subr.mxu0 0.0
      %v2126 = vand.u32 %v1978, 4294901760
      %v2127 = vsub.f32 %v1978, %v2126
      %v2128 = vand.u32 %v2127, 4294901760
      %v2129 = vsub.f32 %v2127, %v2128
      %v2130 = vand.u32 %v2129, 4294901760
      %2131 = vmatpush1.msra.mxu0 %v2130
      %2132 = vmatprep.subr.mxu0 0.0
      %v2133 = vand.u32 %v1977, 4294901760
      %v2134 = vsub.f32 %v1977, %v2133
      %v2135 = vand.u32 %v2134, 4294901760
      %v2136 = vsub.f32 %v2134, %v2135
      %v2137 = vand.u32 %v2136, 4294901760
      %2138 = vmatpush1.msra.mxu0 %v2137
      %2139 = vmatprep.subr.mxu0 0.0
      %v2140 = vand.u32 %v1976, 4294901760
      %v2141 = vsub.f32 %v1976, %v2140
      %v2142 = vand.u32 %v2141, 4294901760
      %v2143 = vsub.f32 %v2141, %v2142
      %v2144 = vand.u32 %v2143, 4294901760
      %2145 = vmatpush1.msra.mxu0 %v2144
      %2146 = vmatprep.subr.mxu0 0.0
      %v2147 = vand.u32 %v1975, 4294901760
      %v2148 = vsub.f32 %v1975, %v2147
      %v2149 = vand.u32 %v2148, 4294901760
      %v2150 = vsub.f32 %v2148, %v2149
      %v2151 = vand.u32 %v2150, 4294901760
      %2152 = vmatpush1.msra.mxu0 %v2151
      %2153 = vmatprep.subr.mxu0 0.0
      %2154 = vmatpush2.msra.mxu0 0.0
      %2155 = vmatprep.subr.mxu0 0.0
      %2156 = vmatpush2.msra.mxu0 0.0
      %2157 = vmatprep.subr.mxu0 0.0
      %2158 = vmatpush2.msra.mxu0 0.0
      %2159 = vmatprep.subr.mxu0 0.0
      %2160 = vmatpush2.msra.mxu0 0.0
      %2161 = vmatprep.subr.mxu0 0.0
      %2162 = vmatpush2.msra.mxu0 0.0
      %2163 = vmatprep.subr.mxu0 0.0
      %2164 = vmatpush2.msra.mxu0 0.0
      %2165 = vmatprep.subr.mxu0 0.0
      %2166 = vmatpush2.msra.mxu0 0.0
      %2167 = vmatprep.subr.mxu0 0.0
      %2168 = vmatpush2.msra.mxu0 0.0
      %2169 = vmatprep.subr.mxu0 0.0
      %2170 = vmatpush2.msra.mxu0 0.0
      %2171 = vmatprep.subr.mxu0 0.0
      %2172 = vmatpush2.msra.mxu0 0.0
      %2173 = vmatprep.subr.mxu0 0.0
      %2174 = vmatpush2.msra.mxu0 0.0
      %2175 = vmatprep.subr.mxu0 0.0
      %2176 = vmatpush2.msra.mxu0 0.0
      %2177 = vmatprep.subr.mxu0 0.0
      %2178 = vmatpush2.msra.mxu0 0.0
      %2179 = vmatprep.subr.mxu0 0.0
      %2180 = vmatpush2.msra.mxu0 0.0
      %2181 = vmatprep.subr.mxu0 0.0
      %2182 = vmatpush2.msra.mxu0 0.0
      %2183 = vmatprep.subr.mxu0 0.0
      %2184 = vmatpush2.msra.mxu0 0.0
      %2185 = vmatprep.mubr.f32.mxu0 0.0
      %v2186 = vand.u32 %v1981, 4294901760
      %2187 = vmatmul.mubr.f32.gmra.mxu0 %v2186
      %v2188 = vpop.f32.mrf.mxu0
      %v2189 = vadd.f32 %v2068, %v2188
      %v2190 = vpop.f32.mrf.mxu0
      %2191 = vmatprep.mubr.f32.mxu0 0.0
      %v2192 = vand.u32 %v1984, 4294901760
      %2193 = vmatmul.mubr.f32.gmra.mxu0 %v2192
      %v2194 = vpop.f32.mrf.mxu0
      %v2195 = vadd.f32 %v2078, %v2194
      %v2196 = vpop.f32.mrf.mxu0
      %2197 = vmatprep.mubr.f32.mxu0 0.0
      %v2198 = vand.u32 %v1987, 4294901760
      %2199 = vmatmul.mubr.f32.gmra.mxu0 %v2198
      %v2200 = vpop.f32.mrf.mxu0
      %v2201 = vadd.f32 %v2088, %v2200
      %v2202 = vpop.f32.mrf.mxu0
      %2203 = vmatprep.mubr.f32.mxu0 0.0
      %v2204 = vand.u32 %v1990, 4294901760
      %2205 = vmatmul.mubr.f32.gmra.mxu0 %v2204
      %v2206 = vpop.f32.mrf.mxu0
      %v2207 = vadd.f32 %v2098, %v2206
      %v2208 = vpop.f32.mrf.mxu0
      %2209 = vdwg.mxu0
      %2210 = vmatprep.subr.mxu0 0.0
      %2211 = vmatpush1.msra.mxu0 0.0
      %2212 = vmatprep.subr.mxu0 0.0
      %2213 = vmatpush1.msra.mxu0 0.0
      %2214 = vmatprep.subr.mxu0 0.0
      %2215 = vmatpush1.msra.mxu0 0.0
      %2216 = vmatprep.subr.mxu0 0.0
      %2217 = vmatpush1.msra.mxu0 0.0
      %2218 = vmatprep.subr.mxu0 0.0
      %2219 = vmatpush1.msra.mxu0 0.0
      %2220 = vmatprep.subr.mxu0 0.0
      %2221 = vmatpush1.msra.mxu0 0.0
      %2222 = vmatprep.subr.mxu0 0.0
      %2223 = vmatpush1.msra.mxu0 0.0
      %2224 = vmatprep.subr.mxu0 0.0
      %2225 = vmatpush1.msra.mxu0 0.0
      %2226 = vmatprep.subr.mxu0 0.0
      %2227 = vmatpush1.msra.mxu0 0.0
      %2228 = vmatprep.subr.mxu0 0.0
      %2229 = vmatpush1.msra.mxu0 0.0
      %2230 = vmatprep.subr.mxu0 0.0
      %2231 = vmatpush1.msra.mxu0 0.0
      %2232 = vmatprep.subr.mxu0 0.0
      %2233 = vmatpush1.msra.mxu0 0.0
      %2234 = vmatprep.subr.mxu0 0.0
      %v2235 = vand.u32 %v1978, 4294901760
      %v2236 = vsub.f32 %v1978, %v2235
      %2237 = vmatpush1.msra.mxu0 %v2236
      %2238 = vmatprep.subr.mxu0 0.0
      %v2239 = vand.u32 %v1977, 4294901760
      %v2240 = vsub.f32 %v1977, %v2239
      %2241 = vmatpush1.msra.mxu0 %v2240
      %2242 = vmatprep.subr.mxu0 0.0
      %v2243 = vand.u32 %v1976, 4294901760
      %v2244 = vsub.f32 %v1976, %v2243
      %2245 = vmatpush1.msra.mxu0 %v2244
      %2246 = vmatprep.subr.mxu0 0.0
      %v2247 = vand.u32 %v1975, 4294901760
      %v2248 = vsub.f32 %v1975, %v2247
      %2249 = vmatpush1.msra.mxu0 %v2248
      %2250 = vmatprep.subr.mxu0 0.0
      %2251 = vmatpush2.msra.mxu0 0.0
      %2252 = vmatprep.subr.mxu0 0.0
      %2253 = vmatpush2.msra.mxu0 0.0
      %2254 = vmatprep.subr.mxu0 0.0
      %2255 = vmatpush2.msra.mxu0 0.0
      %2256 = vmatprep.subr.mxu0 0.0
      %2257 = vmatpush2.msra.mxu0 0.0
      %2258 = vmatprep.subr.mxu0 0.0
      %2259 = vmatpush2.msra.mxu0 0.0
      %2260 = vmatprep.subr.mxu0 0.0
      %2261 = vmatpush2.msra.mxu0 0.0
      %2262 = vmatprep.subr.mxu0 0.0
      %2263 = vmatpush2.msra.mxu0 0.0
      %2264 = vmatprep.subr.mxu0 0.0
      %2265 = vmatpush2.msra.mxu0 0.0
      %2266 = vmatprep.subr.mxu0 0.0
      %2267 = vmatpush2.msra.mxu0 0.0
      %2268 = vmatprep.subr.mxu0 0.0
      %2269 = vmatpush2.msra.mxu0 0.0
      %2270 = vmatprep.subr.mxu0 0.0
      %2271 = vmatpush2.msra.mxu0 0.0
      %2272 = vmatprep.subr.mxu0 0.0
      %2273 = vmatpush2.msra.mxu0 0.0
      %2274 = vmatprep.subr.mxu0 0.0
      %2275 = vmatpush2.msra.mxu0 0.0
      %2276 = vmatprep.subr.mxu0 0.0
      %2277 = vmatpush2.msra.mxu0 0.0
      %2278 = vmatprep.subr.mxu0 0.0
      %2279 = vmatpush2.msra.mxu0 0.0
      %2280 = vmatprep.subr.mxu0 0.0
      %2281 = vmatpush2.msra.mxu0 0.0
      %2282 = vmatprep.mubr.f32.mxu0 0.0
      %v2283 = vand.u32 %v1981, 4294901760
      %v2284 = vsub.f32 %v1981, %v2283
      %2285 = vmatmul.mubr.f32.gmra.mxu0 %v2284
      %v2286 = vpop.f32.mrf.mxu0
      %v2287 = vadd.f32 %v2189, %v2286
      %v2288 = vpop.f32.mrf.mxu0
      %2289 = vmatprep.mubr.f32.mxu0 0.0
      %v2290 = vand.u32 %v1984, 4294901760
      %v2291 = vsub.f32 %v1984, %v2290
      %2292 = vmatmul.mubr.f32.gmra.mxu0 %v2291
      %v2293 = vpop.f32.mrf.mxu0
      %v2294 = vadd.f32 %v2195, %v2293
      %v2295 = vpop.f32.mrf.mxu0
      %2296 = vmatprep.mubr.f32.mxu0 0.0
      %v2297 = vand.u32 %v1987, 4294901760
      %v2298 = vsub.f32 %v1987, %v2297
      %2299 = vmatmul.mubr.f32.gmra.mxu0 %v2298
      %v2300 = vpop.f32.mrf.mxu0
      %v2301 = vadd.f32 %v2201, %v2300
      %v2302 = vpop.f32.mrf.mxu0
      %2303 = vmatprep.mubr.f32.mxu0 0.0
      %v2304 = vand.u32 %v1990, 4294901760
      %v2305 = vsub.f32 %v1990, %v2304
      %2306 = vmatmul.mubr.f32.gmra.mxu0 %v2305
      %v2307 = vpop.f32.mrf.mxu0
      %v2308 = vadd.f32 %v2207, %v2307
      %v2309 = vpop.f32.mrf.mxu0
      %2310 = vdwg.mxu0
      %2311 = vmatprep.subr.mxu0 0.0
      %2312 = vmatpush1.msra.mxu0 0.0
      %2313 = vmatprep.subr.mxu0 0.0
      %2314 = vmatpush1.msra.mxu0 0.0
      %2315 = vmatprep.subr.mxu0 0.0
      %2316 = vmatpush1.msra.mxu0 0.0
      %2317 = vmatprep.subr.mxu0 0.0
      %2318 = vmatpush1.msra.mxu0 0.0
      %2319 = vmatprep.subr.mxu0 0.0
      %2320 = vmatpush1.msra.mxu0 0.0
      %2321 = vmatprep.subr.mxu0 0.0
      %2322 = vmatpush1.msra.mxu0 0.0
      %2323 = vmatprep.subr.mxu0 0.0
      %2324 = vmatpush1.msra.mxu0 0.0
      %2325 = vmatprep.subr.mxu0 0.0
      %2326 = vmatpush1.msra.mxu0 0.0
      %2327 = vmatprep.subr.mxu0 0.0
      %2328 = vmatpush1.msra.mxu0 0.0
      %2329 = vmatprep.subr.mxu0 0.0
      %2330 = vmatpush1.msra.mxu0 0.0
      %2331 = vmatprep.subr.mxu0 0.0
      %2332 = vmatpush1.msra.mxu0 0.0
      %2333 = vmatprep.subr.mxu0 0.0
      %2334 = vmatpush1.msra.mxu0 0.0
      %2335 = vmatprep.subr.mxu0 0.0
      %v2336 = vand.u32 %v1978, 4294901760
      %2337 = vmatpush1.msra.mxu0 %v2336
      %2338 = vmatprep.subr.mxu0 0.0
      %v2339 = vand.u32 %v1977, 4294901760
      %2340 = vmatpush1.msra.mxu0 %v2339
      %2341 = vmatprep.subr.mxu0 0.0
      %v2342 = vand.u32 %v1976, 4294901760
      %2343 = vmatpush1.msra.mxu0 %v2342
      %2344 = vmatprep.subr.mxu0 0.0
      %v2345 = vand.u32 %v1975, 4294901760
      %2346 = vmatpush1.msra.mxu0 %v2345
      %2347 = vmatprep.subr.mxu0 0.0
      %2348 = vmatpush2.msra.mxu0 0.0
      %2349 = vmatprep.subr.mxu0 0.0
      %2350 = vmatpush2.msra.mxu0 0.0
      %2351 = vmatprep.subr.mxu0 0.0
      %2352 = vmatpush2.msra.mxu0 0.0
      %2353 = vmatprep.subr.mxu0 0.0
      %2354 = vmatpush2.msra.mxu0 0.0
      %2355 = vmatprep.subr.mxu0 0.0
      %2356 = vmatpush2.msra.mxu0 0.0
      %2357 = vmatprep.subr.mxu0 0.0
      %2358 = vmatpush2.msra.mxu0 0.0
      %2359 = vmatprep.subr.mxu0 0.0
      %2360 = vmatpush2.msra.mxu0 0.0
      %2361 = vmatprep.subr.mxu0 0.0
      %2362 = vmatpush2.msra.mxu0 0.0
      %2363 = vmatprep.subr.mxu0 0.0
      %2364 = vmatpush2.msra.mxu0 0.0
      %2365 = vmatprep.subr.mxu0 0.0
      %2366 = vmatpush2.msra.mxu0 0.0
      %2367 = vmatprep.subr.mxu0 0.0
      %2368 = vmatpush2.msra.mxu0 0.0
      %2369 = vmatprep.subr.mxu0 0.0
      %2370 = vmatpush2.msra.mxu0 0.0
      %2371 = vmatprep.subr.mxu0 0.0
      %2372 = vmatpush2.msra.mxu0 0.0
      %2373 = vmatprep.subr.mxu0 0.0
      %2374 = vmatpush2.msra.mxu0 0.0
      %2375 = vmatprep.subr.mxu0 0.0
      %2376 = vmatpush2.msra.mxu0 0.0
      %2377 = vmatprep.subr.mxu0 0.0
      %2378 = vmatpush2.msra.mxu0 0.0
      %2379 = vmatprep.mubr.f32.mxu0 0.0
      %v2380 = vand.u32 %v1981, 4294901760
      %v2381 = vsub.f32 %v1981, %v2380
      %v2382 = vand.u32 %v2381, 4294901760
      %2383 = vmatmul.mubr.f32.gmra.mxu0 %v2382
      %v2384 = vpop.f32.mrf.mxu0
      %v2385 = vadd.f32 %v2287, %v2384
      %v2386 = vpop.f32.mrf.mxu0
      %2387 = vmatprep.mubr.f32.mxu0 0.0
      %v2388 = vand.u32 %v1984, 4294901760
      %v2389 = vsub.f32 %v1984, %v2388
      %v2390 = vand.u32 %v2389, 4294901760
      %2391 = vmatmul.mubr.f32.gmra.mxu0 %v2390
      %v2392 = vpop.f32.mrf.mxu0
      %v2393 = vadd.f32 %v2294, %v2392
      %v2394 = vpop.f32.mrf.mxu0
      %2395 = vmatprep.mubr.f32.mxu0 0.0
      %v2396 = vand.u32 %v1987, 4294901760
      %v2397 = vsub.f32 %v1987, %v2396
      %v2398 = vand.u32 %v2397, 4294901760
      %2399 = vmatmul.mubr.f32.gmra.mxu0 %v2398
      %v2400 = vpop.f32.mrf.mxu0
      %v2401 = vadd.f32 %v2301, %v2400
      %v2402 = vpop.f32.mrf.mxu0
      %2403 = vmatprep.mubr.f32.mxu0 0.0
      %v2404 = vand.u32 %v1990, 4294901760
      %v2405 = vsub.f32 %v1990, %v2404
      %v2406 = vand.u32 %v2405, 4294901760
      %2407 = vmatmul.mubr.f32.gmra.mxu0 %v2406
      %v2408 = vpop.f32.mrf.mxu0
      %v2409 = vadd.f32 %v2308, %v2408
      %v2410 = vpop.f32.mrf.mxu0
      %2411 = vdwg.mxu0
      %2412 = vmatprep.subr.mxu0 0.0
      %2413 = vmatpush1.msra.mxu0 0.0
      %2414 = vmatprep.subr.mxu0 0.0
      %2415 = vmatpush1.msra.mxu0 0.0
      %2416 = vmatprep.subr.mxu0 0.0
      %2417 = vmatpush1.msra.mxu0 0.0
      %2418 = vmatprep.subr.mxu0 0.0
      %2419 = vmatpush1.msra.mxu0 0.0
      %2420 = vmatprep.subr.mxu0 0.0
      %2421 = vmatpush1.msra.mxu0 0.0
      %2422 = vmatprep.subr.mxu0 0.0
      %2423 = vmatpush1.msra.mxu0 0.0
      %2424 = vmatprep.subr.mxu0 0.0
      %2425 = vmatpush1.msra.mxu0 0.0
      %2426 = vmatprep.subr.mxu0 0.0
      %2427 = vmatpush1.msra.mxu0 0.0
      %2428 = vmatprep.subr.mxu0 0.0
      %2429 = vmatpush1.msra.mxu0 0.0
      %2430 = vmatprep.subr.mxu0 0.0
      %2431 = vmatpush1.msra.mxu0 0.0
      %2432 = vmatprep.subr.mxu0 0.0
      %2433 = vmatpush1.msra.mxu0 0.0
      %2434 = vmatprep.subr.mxu0 0.0
      %2435 = vmatpush1.msra.mxu0 0.0
      %2436 = vmatprep.subr.mxu0 0.0
      %v2437 = vand.u32 %v1978, 4294901760
      %v2438 = vsub.f32 %v1978, %v2437
      %v2439 = vand.u32 %v2438, 4294901760
      %2440 = vmatpush1.msra.mxu0 %v2439
      %2441 = vmatprep.subr.mxu0 0.0
      %v2442 = vand.u32 %v1977, 4294901760
      %v2443 = vsub.f32 %v1977, %v2442
      %v2444 = vand.u32 %v2443, 4294901760
      %2445 = vmatpush1.msra.mxu0 %v2444
      %2446 = vmatprep.subr.mxu0 0.0
      %v2447 = vand.u32 %v1976, 4294901760
      %v2448 = vsub.f32 %v1976, %v2447
      %v2449 = vand.u32 %v2448, 4294901760
      %2450 = vmatpush1.msra.mxu0 %v2449
      %2451 = vmatprep.subr.mxu0 0.0
      %v2452 = vand.u32 %v1975, 4294901760
      %v2453 = vsub.f32 %v1975, %v2452
      %v2454 = vand.u32 %v2453, 4294901760
      %2455 = vmatpush1.msra.mxu0 %v2454
      %2456 = vmatprep.subr.mxu0 0.0
      %2457 = vmatpush2.msra.mxu0 0.0
      %2458 = vmatprep.subr.mxu0 0.0
      %2459 = vmatpush2.msra.mxu0 0.0
      %2460 = vmatprep.subr.mxu0 0.0
      %2461 = vmatpush2.msra.mxu0 0.0
      %2462 = vmatprep.subr.mxu0 0.0
      %2463 = vmatpush2.msra.mxu0 0.0
      %2464 = vmatprep.subr.mxu0 0.0
      %2465 = vmatpush2.msra.mxu0 0.0
      %2466 = vmatprep.subr.mxu0 0.0
      %2467 = vmatpush2.msra.mxu0 0.0
      %2468 = vmatprep.subr.mxu0 0.0
      %2469 = vmatpush2.msra.mxu0 0.0
      %2470 = vmatprep.subr.mxu0 0.0
      %2471 = vmatpush2.msra.mxu0 0.0
      %2472 = vmatprep.subr.mxu0 0.0
      %2473 = vmatpush2.msra.mxu0 0.0
      %2474 = vmatprep.subr.mxu0 0.0
      %2475 = vmatpush2.msra.mxu0 0.0
      %2476 = vmatprep.subr.mxu0 0.0
      %2477 = vmatpush2.msra.mxu0 0.0
      %2478 = vmatprep.subr.mxu0 0.0
      %2479 = vmatpush2.msra.mxu0 0.0
      %2480 = vmatprep.subr.mxu0 0.0
      %2481 = vmatpush2.msra.mxu0 0.0
      %2482 = vmatprep.subr.mxu0 0.0
      %2483 = vmatpush2.msra.mxu0 0.0
      %2484 = vmatprep.subr.mxu0 0.0
      %2485 = vmatpush2.msra.mxu0 0.0
      %2486 = vmatprep.subr.mxu0 0.0
      %2487 = vmatpush2.msra.mxu0 0.0
      %2488 = vmatprep.mubr.f32.mxu0 0.0
      %v2489 = vand.u32 %v1981, 4294901760
      %2490 = vmatmul.mubr.f32.gmra.mxu0 %v2489
      %v2491 = vpop.f32.mrf.mxu0
      %v2492 = vadd.f32 %v2385, %v2491
      %v2493 = vpop.f32.mrf.mxu0
      %2494 = vmatprep.mubr.f32.mxu0 0.0
      %v2495 = vand.u32 %v1984, 4294901760
      %2496 = vmatmul.mubr.f32.gmra.mxu0 %v2495
      %v2497 = vpop.f32.mrf.mxu0
      %v2498 = vadd.f32 %v2393, %v2497
      %v2499 = vpop.f32.mrf.mxu0
      %2500 = vmatprep.mubr.f32.mxu0 0.0
      %v2501 = vand.u32 %v1987, 4294901760
      %2502 = vmatmul.mubr.f32.gmra.mxu0 %v2501
      %v2503 = vpop.f32.mrf.mxu0
      %v2504 = vadd.f32 %v2401, %v2503
      %v2505 = vpop.f32.mrf.mxu0
      %2506 = vmatprep.mubr.f32.mxu0 0.0
      %v2507 = vand.u32 %v1990, 4294901760
      %2508 = vmatmul.mubr.f32.gmra.mxu0 %v2507
      %v2509 = vpop.f32.mrf.mxu0
      %v2510 = vadd.f32 %v2409, %v2509
      %v2511 = vpop.f32.mrf.mxu0
      %2512 = vdwg.mxu0
      %2513 = vmatprep.subr.mxu0 0.0
      %2514 = vmatpush1.msra.mxu0 0.0
      %2515 = vmatprep.subr.mxu0 0.0
      %2516 = vmatpush1.msra.mxu0 0.0
      %2517 = vmatprep.subr.mxu0 0.0
      %2518 = vmatpush1.msra.mxu0 0.0
      %2519 = vmatprep.subr.mxu0 0.0
      %2520 = vmatpush1.msra.mxu0 0.0
      %2521 = vmatprep.subr.mxu0 0.0
      %2522 = vmatpush1.msra.mxu0 0.0
      %2523 = vmatprep.subr.mxu0 0.0
      %2524 = vmatpush1.msra.mxu0 0.0
      %2525 = vmatprep.subr.mxu0 0.0
      %2526 = vmatpush1.msra.mxu0 0.0
      %2527 = vmatprep.subr.mxu0 0.0
      %2528 = vmatpush1.msra.mxu0 0.0
      %2529 = vmatprep.subr.mxu0 0.0
      %2530 = vmatpush1.msra.mxu0 0.0
      %2531 = vmatprep.subr.mxu0 0.0
      %2532 = vmatpush1.msra.mxu0 0.0
      %2533 = vmatprep.subr.mxu0 0.0
      %2534 = vmatpush1.msra.mxu0 0.0
      %2535 = vmatprep.subr.mxu0 0.0
      %2536 = vmatpush1.msra.mxu0 0.0
      %2537 = vmatprep.subr.mxu0 0.0
      %v2538 = vand.u32 %v1978, 4294901760
      %2539 = vmatpush1.msra.mxu0 %v2538
      %2540 = vmatprep.subr.mxu0 0.0
      %v2541 = vand.u32 %v1977, 4294901760
      %2542 = vmatpush1.msra.mxu0 %v2541
      %2543 = vmatprep.subr.mxu0 0.0
      %v2544 = vand.u32 %v1976, 4294901760
      %2545 = vmatpush1.msra.mxu0 %v2544
      %2546 = vmatprep.subr.mxu0 0.0
      %v2547 = vand.u32 %v1975, 4294901760
      %2548 = vmatpush1.msra.mxu0 %v2547
      %2549 = vmatprep.subr.mxu0 0.0
      %2550 = vmatpush2.msra.mxu0 0.0
      %2551 = vmatprep.subr.mxu0 0.0
      %2552 = vmatpush2.msra.mxu0 0.0
      %2553 = vmatprep.subr.mxu0 0.0
      %2554 = vmatpush2.msra.mxu0 0.0
      %2555 = vmatprep.subr.mxu0 0.0
      %2556 = vmatpush2.msra.mxu0 0.0
      %2557 = vmatprep.subr.mxu0 0.0
      %2558 = vmatpush2.msra.mxu0 0.0
      %2559 = vmatprep.subr.mxu0 0.0
      %2560 = vmatpush2.msra.mxu0 0.0
      %2561 = vmatprep.subr.mxu0 0.0
      %2562 = vmatpush2.msra.mxu0 0.0
      %2563 = vmatprep.subr.mxu0 0.0
      %2564 = vmatpush2.msra.mxu0 0.0
      %2565 = vmatprep.subr.mxu0 0.0
      %2566 = vmatpush2.msra.mxu0 0.0
      %2567 = vmatprep.subr.mxu0 0.0
      %2568 = vmatpush2.msra.mxu0 0.0
      %2569 = vmatprep.subr.mxu0 0.0
      %2570 = vmatpush2.msra.mxu0 0.0
      %2571 = vmatprep.subr.mxu0 0.0
      %2572 = vmatpush2.msra.mxu0 0.0
      %2573 = vmatprep.subr.mxu0 0.0
      %2574 = vmatpush2.msra.mxu0 0.0
      %2575 = vmatprep.subr.mxu0 0.0
      %2576 = vmatpush2.msra.mxu0 0.0
      %2577 = vmatprep.subr.mxu0 0.0
      %2578 = vmatpush2.msra.mxu0 0.0
      %2579 = vmatprep.subr.mxu0 0.0
      %2580 = vmatpush2.msra.mxu0 0.0
      %2581 = vmatprep.mubr.f32.mxu0 0.0
      %v2582 = vand.u32 %v1981, 4294901760
      %2583 = vmatmul.mubr.f32.gmra.mxu0 %v2582
      %v2584 = vpop.f32.mrf.mxu0
      %v2585 = vadd.f32 %v2492, %v2584
      %v2586 = vpop.f32.mrf.mxu0
      %2587 = vmatprep.mubr.f32.mxu0 0.0
      %v2588 = vand.u32 %v1984, 4294901760
      %2589 = vmatmul.mubr.f32.gmra.mxu0 %v2588
      %v2590 = vpop.f32.mrf.mxu0
      %v2591 = vadd.f32 %v2498, %v2590
      %v2592 = vpop.f32.mrf.mxu0
      %2593 = vmatprep.mubr.f32.mxu0 0.0
      %v2594 = vand.u32 %v1987, 4294901760
      %2595 = vmatmul.mubr.f32.gmra.mxu0 %v2594
      %v2596 = vpop.f32.mrf.mxu0
      %v2597 = vadd.f32 %v2504, %v2596
      %v2598 = vpop.f32.mrf.mxu0
      %2599 = vmatprep.mubr.f32.mxu0 0.0
      %v2600 = vand.u32 %v1990, 4294901760
      %2601 = vmatmul.mubr.f32.gmra.mxu0 %v2600
      %v2602 = vpop.f32.mrf.mxu0
      %v2603 = vadd.f32 %v2510, %v2602
      %v2604 = vpop.f32.mrf.mxu0
      %2605 = vdwg.mxu0
      %v2607 = vsel %vm1979, %v1939, 0
      %v2610 = vsel %vm1979, %v1940, 0
      %v2613 = vsel %vm1979, %v1941, 0
      %v2616 = vsel %vm1979, %v1942, 0
      %2618 = vmatprep.subr.mxu0 0.0
      %2619 = vmatpush1.msra.mxu0 0.0
      %2620 = vmatprep.subr.mxu0 0.0
      %2621 = vmatpush1.msra.mxu0 0.0
      %2622 = vmatprep.subr.mxu0 0.0
      %2623 = vmatpush1.msra.mxu0 0.0
      %2624 = vmatprep.subr.mxu0 0.0
      %2625 = vmatpush1.msra.mxu0 0.0
      %2626 = vmatprep.subr.mxu0 0.0
      %2627 = vmatpush1.msra.mxu0 0.0
      %2628 = vmatprep.subr.mxu0 0.0
      %2629 = vmatpush1.msra.mxu0 0.0
      %2630 = vmatprep.subr.mxu0 0.0
      %2631 = vmatpush1.msra.mxu0 0.0
      %2632 = vmatprep.subr.mxu0 0.0
      %2633 = vmatpush1.msra.mxu0 0.0
      %2634 = vmatprep.subr.mxu0 0.0
      %2635 = vmatpush1.msra.mxu0 0.0
      %2636 = vmatprep.subr.mxu0 0.0
      %2637 = vmatpush1.msra.mxu0 0.0
      %2638 = vmatprep.subr.mxu0 0.0
      %2639 = vmatpush1.msra.mxu0 0.0
      %2640 = vmatprep.subr.mxu0 0.0
      %2641 = vmatpush1.msra.mxu0 0.0
      %2642 = vmatprep.subr.mxu0 0.0
      %v2643 = vand.u32 %v1974, 4294901760
      %2644 = vmatpush1.msra.mxu0 %v2643
      %2645 = vmatprep.subr.mxu0 0.0
      %v2646 = vand.u32 %v1973, 4294901760
      %2647 = vmatpush1.msra.mxu0 %v2646
      %2648 = vmatprep.subr.mxu0 0.0
      %v2649 = vand.u32 %v1972, 4294901760
      %2650 = vmatpush1.msra.mxu0 %v2649
      %2651 = vmatprep.subr.mxu0 0.0
      %v2652 = vand.u32 %v1971, 4294901760
      %2653 = vmatpush1.msra.mxu0 %v2652
      %2654 = vmatprep.subr.mxu0 0.0
      %2655 = vmatpush2.msra.mxu0 0.0
      %2656 = vmatprep.subr.mxu0 0.0
      %2657 = vmatpush2.msra.mxu0 0.0
      %2658 = vmatprep.subr.mxu0 0.0
      %2659 = vmatpush2.msra.mxu0 0.0
      %2660 = vmatprep.subr.mxu0 0.0
      %2661 = vmatpush2.msra.mxu0 0.0
      %2662 = vmatprep.subr.mxu0 0.0
      %2663 = vmatpush2.msra.mxu0 0.0
      %2664 = vmatprep.subr.mxu0 0.0
      %2665 = vmatpush2.msra.mxu0 0.0
      %2666 = vmatprep.subr.mxu0 0.0
      %2667 = vmatpush2.msra.mxu0 0.0
      %2668 = vmatprep.subr.mxu0 0.0
      %2669 = vmatpush2.msra.mxu0 0.0
      %2670 = vmatprep.subr.mxu0 0.0
      %2671 = vmatpush2.msra.mxu0 0.0
      %2672 = vmatprep.subr.mxu0 0.0
      %2673 = vmatpush2.msra.mxu0 0.0
      %2674 = vmatprep.subr.mxu0 0.0
      %2675 = vmatpush2.msra.mxu0 0.0
      %2676 = vmatprep.subr.mxu0 0.0
      %2677 = vmatpush2.msra.mxu0 0.0
      %2678 = vmatprep.subr.mxu0 0.0
      %2679 = vmatpush2.msra.mxu0 0.0
      %2680 = vmatprep.subr.mxu0 0.0
      %2681 = vmatpush2.msra.mxu0 0.0
      %2682 = vmatprep.subr.mxu0 0.0
      %2683 = vmatpush2.msra.mxu0 0.0
      %2684 = vmatprep.subr.mxu0 0.0
      %2685 = vmatpush2.msra.mxu0 0.0
      %2686 = vmatprep.mubr.f32.mxu0 0.0
      %v2687 = vand.u32 %v2607, 4294901760
      %v2688 = vsub.f32 %v2607, %v2687
      %v2689 = vand.u32 %v2688, 4294901760
      %v2690 = vsub.f32 %v2688, %v2689
      %v2691 = vand.u32 %v2690, 4294901760
      %2692 = vmatmul.mubr.f32.gmra.mxu0 %v2691
      %v2693 = vpop.f32.mrf.mxu0
      %v2694 = vadd.f32 %v2585, %v2693
      %v2695 = vpop.f32.mrf.mxu0
      %2696 = vmatprep.mubr.f32.mxu0 0.0
      %v2697 = vand.u32 %v2610, 4294901760
      %v2698 = vsub.f32 %v2610, %v2697
      %v2699 = vand.u32 %v2698, 4294901760
      %v2700 = vsub.f32 %v2698, %v2699
      %v2701 = vand.u32 %v2700, 4294901760
      %2702 = vmatmul.mubr.f32.gmra.mxu0 %v2701
      %v2703 = vpop.f32.mrf.mxu0
      %v2704 = vadd.f32 %v2591, %v2703
      %v2705 = vpop.f32.mrf.mxu0
      %2706 = vmatprep.mubr.f32.mxu0 0.0
      %v2707 = vand.u32 %v2613, 4294901760
      %v2708 = vsub.f32 %v2613, %v2707
      %v2709 = vand.u32 %v2708, 4294901760
      %v2710 = vsub.f32 %v2708, %v2709
      %v2711 = vand.u32 %v2710, 4294901760
      %2712 = vmatmul.mubr.f32.gmra.mxu0 %v2711
      %v2713 = vpop.f32.mrf.mxu0
      %v2714 = vadd.f32 %v2597, %v2713
      %v2715 = vpop.f32.mrf.mxu0
      %2716 = vmatprep.mubr.f32.mxu0 0.0
      %v2717 = vand.u32 %v2616, 4294901760
      %v2718 = vsub.f32 %v2616, %v2717
      %v2719 = vand.u32 %v2718, 4294901760
      %v2720 = vsub.f32 %v2718, %v2719
      %v2721 = vand.u32 %v2720, 4294901760
      %2722 = vmatmul.mubr.f32.gmra.mxu0 %v2721
      %v2723 = vpop.f32.mrf.mxu0
      %v2724 = vadd.f32 %v2603, %v2723
      %v2725 = vpop.f32.mrf.mxu0
      %2726 = vdwg.mxu0
      %2727 = vmatprep.subr.mxu0 0.0
      %2728 = vmatpush1.msra.mxu0 0.0
      %2729 = vmatprep.subr.mxu0 0.0
      %2730 = vmatpush1.msra.mxu0 0.0
      %2731 = vmatprep.subr.mxu0 0.0
      %2732 = vmatpush1.msra.mxu0 0.0
      %2733 = vmatprep.subr.mxu0 0.0
      %2734 = vmatpush1.msra.mxu0 0.0
      %2735 = vmatprep.subr.mxu0 0.0
      %2736 = vmatpush1.msra.mxu0 0.0
      %2737 = vmatprep.subr.mxu0 0.0
      %2738 = vmatpush1.msra.mxu0 0.0
      %2739 = vmatprep.subr.mxu0 0.0
      %2740 = vmatpush1.msra.mxu0 0.0
      %2741 = vmatprep.subr.mxu0 0.0
      %2742 = vmatpush1.msra.mxu0 0.0
      %2743 = vmatprep.subr.mxu0 0.0
      %2744 = vmatpush1.msra.mxu0 0.0
      %2745 = vmatprep.subr.mxu0 0.0
      %2746 = vmatpush1.msra.mxu0 0.0
      %2747 = vmatprep.subr.mxu0 0.0
      %2748 = vmatpush1.msra.mxu0 0.0
      %2749 = vmatprep.subr.mxu0 0.0
      %2750 = vmatpush1.msra.mxu0 0.0
      %2751 = vmatprep.subr.mxu0 0.0
      %v2752 = vand.u32 %v1974, 4294901760
      %v2753 = vsub.f32 %v1974, %v2752
      %v2754 = vand.u32 %v2753, 4294901760
      %v2755 = vsub.f32 %v2753, %v2754
      %v2756 = vand.u32 %v2755, 4294901760
      %2757 = vmatpush1.msra.mxu0 %v2756
      %2758 = vmatprep.subr.mxu0 0.0
      %v2759 = vand.u32 %v1973, 4294901760
      %v2760 = vsub.f32 %v1973, %v2759
      %v2761 = vand.u32 %v2760, 4294901760
      %v2762 = vsub.f32 %v2760, %v2761
      %v2763 = vand.u32 %v2762, 4294901760
      %2764 = vmatpush1.msra.mxu0 %v2763
      %2765 = vmatprep.subr.mxu0 0.0
      %v2766 = vand.u32 %v1972, 4294901760
      %v2767 = vsub.f32 %v1972, %v2766
      %v2768 = vand.u32 %v2767, 4294901760
      %v2769 = vsub.f32 %v2767, %v2768
      %v2770 = vand.u32 %v2769, 4294901760
      %2771 = vmatpush1.msra.mxu0 %v2770
      %2772 = vmatprep.subr.mxu0 0.0
      %v2773 = vand.u32 %v1971, 4294901760
      %v2774 = vsub.f32 %v1971, %v2773
      %v2775 = vand.u32 %v2774, 4294901760
      %v2776 = vsub.f32 %v2774, %v2775
      %v2777 = vand.u32 %v2776, 4294901760
      %2778 = vmatpush1.msra.mxu0 %v2777
      %2779 = vmatprep.subr.mxu0 0.0
      %2780 = vmatpush2.msra.mxu0 0.0
      %2781 = vmatprep.subr.mxu0 0.0
      %2782 = vmatpush2.msra.mxu0 0.0
      %2783 = vmatprep.subr.mxu0 0.0
      %2784 = vmatpush2.msra.mxu0 0.0
      %2785 = vmatprep.subr.mxu0 0.0
      %2786 = vmatpush2.msra.mxu0 0.0
      %2787 = vmatprep.subr.mxu0 0.0
      %2788 = vmatpush2.msra.mxu0 0.0
      %2789 = vmatprep.subr.mxu0 0.0
      %2790 = vmatpush2.msra.mxu0 0.0
      %2791 = vmatprep.subr.mxu0 0.0
      %2792 = vmatpush2.msra.mxu0 0.0
      %2793 = vmatprep.subr.mxu0 0.0
      %2794 = vmatpush2.msra.mxu0 0.0
      %2795 = vmatprep.subr.mxu0 0.0
      %2796 = vmatpush2.msra.mxu0 0.0
      %2797 = vmatprep.subr.mxu0 0.0
      %2798 = vmatpush2.msra.mxu0 0.0
      %2799 = vmatprep.subr.mxu0 0.0
      %2800 = vmatpush2.msra.mxu0 0.0
      %2801 = vmatprep.subr.mxu0 0.0
      %2802 = vmatpush2.msra.mxu0 0.0
      %2803 = vmatprep.subr.mxu0 0.0
      %2804 = vmatpush2.msra.mxu0 0.0
      %2805 = vmatprep.subr.mxu0 0.0
      %2806 = vmatpush2.msra.mxu0 0.0
      %2807 = vmatprep.subr.mxu0 0.0
      %2808 = vmatpush2.msra.mxu0 0.0
      %2809 = vmatprep.subr.mxu0 0.0
      %2810 = vmatpush2.msra.mxu0 0.0
      %2811 = vmatprep.mubr.f32.mxu0 0.0
      %v2812 = vand.u32 %v2607, 4294901760
      %2813 = vmatmul.mubr.f32.gmra.mxu0 %v2812
      %v2814 = vpop.f32.mrf.mxu0
      %v2815 = vadd.f32 %v2694, %v2814
      %v2816 = vpop.f32.mrf.mxu0
      %2817 = vmatprep.mubr.f32.mxu0 0.0
      %v2818 = vand.u32 %v2610, 4294901760
      %2819 = vmatmul.mubr.f32.gmra.mxu0 %v2818
      %v2820 = vpop.f32.mrf.mxu0
      %v2821 = vadd.f32 %v2704, %v2820
      %v2822 = vpop.f32.mrf.mxu0
      %2823 = vmatprep.mubr.f32.mxu0 0.0
      %v2824 = vand.u32 %v2613, 4294901760
      %2825 = vmatmul.mubr.f32.gmra.mxu0 %v2824
      %v2826 = vpop.f32.mrf.mxu0
      %v2827 = vadd.f32 %v2714, %v2826
      %v2828 = vpop.f32.mrf.mxu0
      %2829 = vmatprep.mubr.f32.mxu0 0.0
      %v2830 = vand.u32 %v2616, 4294901760
      %2831 = vmatmul.mubr.f32.gmra.mxu0 %v2830
      %v2832 = vpop.f32.mrf.mxu0
      %v2833 = vadd.f32 %v2724, %v2832
      %v2834 = vpop.f32.mrf.mxu0
      %2835 = vdwg.mxu0
      %2836 = vmatprep.subr.mxu0 0.0
      %2837 = vmatpush1.msra.mxu0 0.0
      %2838 = vmatprep.subr.mxu0 0.0
      %2839 = vmatpush1.msra.mxu0 0.0
      %2840 = vmatprep.subr.mxu0 0.0
      %2841 = vmatpush1.msra.mxu0 0.0
      %2842 = vmatprep.subr.mxu0 0.0
      %2843 = vmatpush1.msra.mxu0 0.0
      %2844 = vmatprep.subr.mxu0 0.0
      %2845 = vmatpush1.msra.mxu0 0.0
      %2846 = vmatprep.subr.mxu0 0.0
      %2847 = vmatpush1.msra.mxu0 0.0
      %2848 = vmatprep.subr.mxu0 0.0
      %2849 = vmatpush1.msra.mxu0 0.0
      %2850 = vmatprep.subr.mxu0 0.0
      %2851 = vmatpush1.msra.mxu0 0.0
      %2852 = vmatprep.subr.mxu0 0.0
      %2853 = vmatpush1.msra.mxu0 0.0
      %2854 = vmatprep.subr.mxu0 0.0
      %2855 = vmatpush1.msra.mxu0 0.0
      %2856 = vmatprep.subr.mxu0 0.0
      %2857 = vmatpush1.msra.mxu0 0.0
      %2858 = vmatprep.subr.mxu0 0.0
      %2859 = vmatpush1.msra.mxu0 0.0
      %2860 = vmatprep.subr.mxu0 0.0
      %v2861 = vand.u32 %v1974, 4294901760
      %v2862 = vsub.f32 %v1974, %v2861
      %2863 = vmatpush1.msra.mxu0 %v2862
      %2864 = vmatprep.subr.mxu0 0.0
      %v2865 = vand.u32 %v1973, 4294901760
      %v2866 = vsub.f32 %v1973, %v2865
      %2867 = vmatpush1.msra.mxu0 %v2866
      %2868 = vmatprep.subr.mxu0 0.0
      %v2869 = vand.u32 %v1972, 4294901760
      %v2870 = vsub.f32 %v1972, %v2869
      %2871 = vmatpush1.msra.mxu0 %v2870
      %2872 = vmatprep.subr.mxu0 0.0
      %v2873 = vand.u32 %v1971, 4294901760
      %v2874 = vsub.f32 %v1971, %v2873
      %2875 = vmatpush1.msra.mxu0 %v2874
      %2876 = vmatprep.subr.mxu0 0.0
      %2877 = vmatpush2.msra.mxu0 0.0
      %2878 = vmatprep.subr.mxu0 0.0
      %2879 = vmatpush2.msra.mxu0 0.0
      %2880 = vmatprep.subr.mxu0 0.0
      %2881 = vmatpush2.msra.mxu0 0.0
      %2882 = vmatprep.subr.mxu0 0.0
      %2883 = vmatpush2.msra.mxu0 0.0
      %2884 = vmatprep.subr.mxu0 0.0
      %2885 = vmatpush2.msra.mxu0 0.0
      %2886 = vmatprep.subr.mxu0 0.0
      %2887 = vmatpush2.msra.mxu0 0.0
      %2888 = vmatprep.subr.mxu0 0.0
      %2889 = vmatpush2.msra.mxu0 0.0
      %2890 = vmatprep.subr.mxu0 0.0
      %2891 = vmatpush2.msra.mxu0 0.0
      %2892 = vmatprep.subr.mxu0 0.0
      %2893 = vmatpush2.msra.mxu0 0.0
      %2894 = vmatprep.subr.mxu0 0.0
      %2895 = vmatpush2.msra.mxu0 0.0
      %2896 = vmatprep.subr.mxu0 0.0
      %2897 = vmatpush2.msra.mxu0 0.0
      %2898 = vmatprep.subr.mxu0 0.0
      %2899 = vmatpush2.msra.mxu0 0.0
      %2900 = vmatprep.subr.mxu0 0.0
      %2901 = vmatpush2.msra.mxu0 0.0
      %2902 = vmatprep.subr.mxu0 0.0
      %2903 = vmatpush2.msra.mxu0 0.0
      %2904 = vmatprep.subr.mxu0 0.0
      %2905 = vmatpush2.msra.mxu0 0.0
      %2906 = vmatprep.subr.mxu0 0.0
      %2907 = vmatpush2.msra.mxu0 0.0
      %2908 = vmatprep.mubr.f32.mxu0 0.0
      %v2909 = vand.u32 %v2607, 4294901760
      %v2910 = vsub.f32 %v2607, %v2909
      %2911 = vmatmul.mubr.f32.gmra.mxu0 %v2910
      %v2912 = vpop.f32.mrf.mxu0
      %v2913 = vadd.f32 %v2815, %v2912
      %v2914 = vpop.f32.mrf.mxu0
      %2915 = vmatprep.mubr.f32.mxu0 0.0
      %v2916 = vand.u32 %v2610, 4294901760
      %v2917 = vsub.f32 %v2610, %v2916
      %2918 = vmatmul.mubr.f32.gmra.mxu0 %v2917
      %v2919 = vpop.f32.mrf.mxu0
      %v2920 = vadd.f32 %v2821, %v2919
      %v2921 = vpop.f32.mrf.mxu0
      %2922 = vmatprep.mubr.f32.mxu0 0.0
      %v2923 = vand.u32 %v2613, 4294901760
      %v2924 = vsub.f32 %v2613, %v2923
      %2925 = vmatmul.mubr.f32.gmra.mxu0 %v2924
      %v2926 = vpop.f32.mrf.mxu0
      %v2927 = vadd.f32 %v2827, %v2926
      %v2928 = vpop.f32.mrf.mxu0
      %2929 = vmatprep.mubr.f32.mxu0 0.0
      %v2930 = vand.u32 %v2616, 4294901760
      %v2931 = vsub.f32 %v2616, %v2930
      %2932 = vmatmul.mubr.f32.gmra.mxu0 %v2931
      %v2933 = vpop.f32.mrf.mxu0
      %v2934 = vadd.f32 %v2833, %v2933
      %v2935 = vpop.f32.mrf.mxu0
      %2936 = vdwg.mxu0
      %2937 = vmatprep.subr.mxu0 0.0
      %2938 = vmatpush1.msra.mxu0 0.0
      %2939 = vmatprep.subr.mxu0 0.0
      %2940 = vmatpush1.msra.mxu0 0.0
      %2941 = vmatprep.subr.mxu0 0.0
      %2942 = vmatpush1.msra.mxu0 0.0
      %2943 = vmatprep.subr.mxu0 0.0
      %2944 = vmatpush1.msra.mxu0 0.0
      %2945 = vmatprep.subr.mxu0 0.0
      %2946 = vmatpush1.msra.mxu0 0.0
      %2947 = vmatprep.subr.mxu0 0.0
      %2948 = vmatpush1.msra.mxu0 0.0
      %2949 = vmatprep.subr.mxu0 0.0
      %2950 = vmatpush1.msra.mxu0 0.0
      %2951 = vmatprep.subr.mxu0 0.0
      %2952 = vmatpush1.msra.mxu0 0.0
      %2953 = vmatprep.subr.mxu0 0.0
      %2954 = vmatpush1.msra.mxu0 0.0
      %2955 = vmatprep.subr.mxu0 0.0
      %2956 = vmatpush1.msra.mxu0 0.0
      %2957 = vmatprep.subr.mxu0 0.0
      %2958 = vmatpush1.msra.mxu0 0.0
      %2959 = vmatprep.subr.mxu0 0.0
      %2960 = vmatpush1.msra.mxu0 0.0
      %2961 = vmatprep.subr.mxu0 0.0
      %v2962 = vand.u32 %v1974, 4294901760
      %2963 = vmatpush1.msra.mxu0 %v2962
      %2964 = vmatprep.subr.mxu0 0.0
      %v2965 = vand.u32 %v1973, 4294901760
      %2966 = vmatpush1.msra.mxu0 %v2965
      %2967 = vmatprep.subr.mxu0 0.0
      %v2968 = vand.u32 %v1972, 4294901760
      %2969 = vmatpush1.msra.mxu0 %v2968
      %2970 = vmatprep.subr.mxu0 0.0
      %v2971 = vand.u32 %v1971, 4294901760
      %2972 = vmatpush1.msra.mxu0 %v2971
      %2973 = vmatprep.subr.mxu0 0.0
      %2974 = vmatpush2.msra.mxu0 0.0
      %2975 = vmatprep.subr.mxu0 0.0
      %2976 = vmatpush2.msra.mxu0 0.0
      %2977 = vmatprep.subr.mxu0 0.0
      %2978 = vmatpush2.msra.mxu0 0.0
      %2979 = vmatprep.subr.mxu0 0.0
      %2980 = vmatpush2.msra.mxu0 0.0
      %2981 = vmatprep.subr.mxu0 0.0
      %2982 = vmatpush2.msra.mxu0 0.0
      %2983 = vmatprep.subr.mxu0 0.0
      %2984 = vmatpush2.msra.mxu0 0.0
      %2985 = vmatprep.subr.mxu0 0.0
      %2986 = vmatpush2.msra.mxu0 0.0
      %2987 = vmatprep.subr.mxu0 0.0
      %2988 = vmatpush2.msra.mxu0 0.0
      %2989 = vmatprep.subr.mxu0 0.0
      %2990 = vmatpush2.msra.mxu0 0.0
      %2991 = vmatprep.subr.mxu0 0.0
      %2992 = vmatpush2.msra.mxu0 0.0
      %2993 = vmatprep.subr.mxu0 0.0
      %2994 = vmatpush2.msra.mxu0 0.0
      %2995 = vmatprep.subr.mxu0 0.0
      %2996 = vmatpush2.msra.mxu0 0.0
      %2997 = vmatprep.subr.mxu0 0.0
      %2998 = vmatpush2.msra.mxu0 0.0
      %2999 = vmatprep.subr.mxu0 0.0
      %3000 = vmatpush2.msra.mxu0 0.0
      %3001 = vmatprep.subr.mxu0 0.0
      %3002 = vmatpush2.msra.mxu0 0.0
      %3003 = vmatprep.subr.mxu0 0.0
      %3004 = vmatpush2.msra.mxu0 0.0
      %3005 = vmatprep.mubr.f32.mxu0 0.0
      %v3006 = vand.u32 %v2607, 4294901760
      %v3007 = vsub.f32 %v2607, %v3006
      %v3008 = vand.u32 %v3007, 4294901760
      %3009 = vmatmul.mubr.f32.gmra.mxu0 %v3008
      %v3010 = vpop.f32.mrf.mxu0
      %v3011 = vadd.f32 %v2913, %v3010
      %v3012 = vpop.f32.mrf.mxu0
      %3013 = vmatprep.mubr.f32.mxu0 0.0
      %v3014 = vand.u32 %v2610, 4294901760
      %v3015 = vsub.f32 %v2610, %v3014
      %v3016 = vand.u32 %v3015, 4294901760
      %3017 = vmatmul.mubr.f32.gmra.mxu0 %v3016
      %v3018 = vpop.f32.mrf.mxu0
      %v3019 = vadd.f32 %v2920, %v3018
      %v3020 = vpop.f32.mrf.mxu0
      %3021 = vmatprep.mubr.f32.mxu0 0.0
      %v3022 = vand.u32 %v2613, 4294901760
      %v3023 = vsub.f32 %v2613, %v3022
      %v3024 = vand.u32 %v3023, 4294901760
      %3025 = vmatmul.mubr.f32.gmra.mxu0 %v3024
      %v3026 = vpop.f32.mrf.mxu0
      %v3027 = vadd.f32 %v2927, %v3026
      %v3028 = vpop.f32.mrf.mxu0
      %3029 = vmatprep.mubr.f32.mxu0 0.0
      %v3030 = vand.u32 %v2616, 4294901760
      %v3031 = vsub.f32 %v2616, %v3030
      %v3032 = vand.u32 %v3031, 4294901760
      %3033 = vmatmul.mubr.f32.gmra.mxu0 %v3032
      %v3034 = vpop.f32.mrf.mxu0
      %v3035 = vadd.f32 %v2934, %v3034
      %v3036 = vpop.f32.mrf.mxu0
      %3037 = vdwg.mxu0
      %3038 = vmatprep.subr.mxu0 0.0
      %3039 = vmatpush1.msra.mxu0 0.0
      %3040 = vmatprep.subr.mxu0 0.0
      %3041 = vmatpush1.msra.mxu0 0.0
      %3042 = vmatprep.subr.mxu0 0.0
      %3043 = vmatpush1.msra.mxu0 0.0
      %3044 = vmatprep.subr.mxu0 0.0
      %3045 = vmatpush1.msra.mxu0 0.0
      %3046 = vmatprep.subr.mxu0 0.0
      %3047 = vmatpush1.msra.mxu0 0.0
      %3048 = vmatprep.subr.mxu0 0.0
      %3049 = vmatpush1.msra.mxu0 0.0
      %3050 = vmatprep.subr.mxu0 0.0
      %3051 = vmatpush1.msra.mxu0 0.0
      %3052 = vmatprep.subr.mxu0 0.0
      %3053 = vmatpush1.msra.mxu0 0.0
      %3054 = vmatprep.subr.mxu0 0.0
      %3055 = vmatpush1.msra.mxu0 0.0
      %3056 = vmatprep.subr.mxu0 0.0
      %3057 = vmatpush1.msra.mxu0 0.0
      %3058 = vmatprep.subr.mxu0 0.0
      %3059 = vmatpush1.msra.mxu0 0.0
      %3060 = vmatprep.subr.mxu0 0.0
      %3061 = vmatpush1.msra.mxu0 0.0
      %3062 = vmatprep.subr.mxu0 0.0
      %v3063 = vand.u32 %v1974, 4294901760
      %v3064 = vsub.f32 %v1974, %v3063
      %v3065 = vand.u32 %v3064, 4294901760
      %3066 = vmatpush1.msra.mxu0 %v3065
      %3067 = vmatprep.subr.mxu0 0.0
      %v3068 = vand.u32 %v1973, 4294901760
      %v3069 = vsub.f32 %v1973, %v3068
      %v3070 = vand.u32 %v3069, 4294901760
      %3071 = vmatpush1.msra.mxu0 %v3070
      %3072 = vmatprep.subr.mxu0 0.0
      %v3073 = vand.u32 %v1972, 4294901760
      %v3074 = vsub.f32 %v1972, %v3073
      %v3075 = vand.u32 %v3074, 4294901760
      %3076 = vmatpush1.msra.mxu0 %v3075
      %3077 = vmatprep.subr.mxu0 0.0
      %v3078 = vand.u32 %v1971, 4294901760
      %v3079 = vsub.f32 %v1971, %v3078
      %v3080 = vand.u32 %v3079, 4294901760
      %3081 = vmatpush1.msra.mxu0 %v3080
      %3082 = vmatprep.subr.mxu0 0.0
      %3083 = vmatpush2.msra.mxu0 0.0
      %3084 = vmatprep.subr.mxu0 0.0
      %3085 = vmatpush2.msra.mxu0 0.0
      %3086 = vmatprep.subr.mxu0 0.0
      %3087 = vmatpush2.msra.mxu0 0.0
      %3088 = vmatprep.subr.mxu0 0.0
      %3089 = vmatpush2.msra.mxu0 0.0
      %3090 = vmatprep.subr.mxu0 0.0
      %3091 = vmatpush2.msra.mxu0 0.0
      %3092 = vmatprep.subr.mxu0 0.0
      %3093 = vmatpush2.msra.mxu0 0.0
      %3094 = vmatprep.subr.mxu0 0.0
      %3095 = vmatpush2.msra.mxu0 0.0
      %3096 = vmatprep.subr.mxu0 0.0
      %3097 = vmatpush2.msra.mxu0 0.0
      %3098 = vmatprep.subr.mxu0 0.0
      %3099 = vmatpush2.msra.mxu0 0.0
      %3100 = vmatprep.subr.mxu0 0.0
      %3101 = vmatpush2.msra.mxu0 0.0
      %3102 = vmatprep.subr.mxu0 0.0
      %3103 = vmatpush2.msra.mxu0 0.0
      %3104 = vmatprep.subr.mxu0 0.0
      %3105 = vmatpush2.msra.mxu0 0.0
      %3106 = vmatprep.subr.mxu0 0.0
      %3107 = vmatpush2.msra.mxu0 0.0
      %3108 = vmatprep.subr.mxu0 0.0
      %3109 = vmatpush2.msra.mxu0 0.0
      %3110 = vmatprep.subr.mxu0 0.0
      %3111 = vmatpush2.msra.mxu0 0.0
      %3112 = vmatprep.subr.mxu0 0.0
      %3113 = vmatpush2.msra.mxu0 0.0
      %3114 = vmatprep.mubr.f32.mxu0 0.0
      %v3115 = vand.u32 %v2607, 4294901760
      %3116 = vmatmul.mubr.f32.gmra.mxu0 %v3115
      %v3117 = vpop.f32.mrf.mxu0
      %v3118 = vadd.f32 %v3011, %v3117
      %v3119 = vpop.f32.mrf.mxu0
      %3120 = vmatprep.mubr.f32.mxu0 0.0
      %v3121 = vand.u32 %v2610, 4294901760
      %3122 = vmatmul.mubr.f32.gmra.mxu0 %v3121
      %v3123 = vpop.f32.mrf.mxu0
      %v3124 = vadd.f32 %v3019, %v3123
      %v3125 = vpop.f32.mrf.mxu0
      %3126 = vmatprep.mubr.f32.mxu0 0.0
      %v3127 = vand.u32 %v2613, 4294901760
      %3128 = vmatmul.mubr.f32.gmra.mxu0 %v3127
      %v3129 = vpop.f32.mrf.mxu0
      %v3130 = vadd.f32 %v3027, %v3129
      %v3131 = vpop.f32.mrf.mxu0
      %3132 = vmatprep.mubr.f32.mxu0 0.0
      %v3133 = vand.u32 %v2616, 4294901760
      %3134 = vmatmul.mubr.f32.gmra.mxu0 %v3133
      %v3135 = vpop.f32.mrf.mxu0
      %v3136 = vadd.f32 %v3035, %v3135
      %v3137 = vpop.f32.mrf.mxu0
      %3138 = vdwg.mxu0
      %3139 = vmatprep.subr.mxu0 0.0
      %3140 = vmatpush1.msra.mxu0 0.0
      %3141 = vmatprep.subr.mxu0 0.0
      %3142 = vmatpush1.msra.mxu0 0.0
      %3143 = vmatprep.subr.mxu0 0.0
      %3144 = vmatpush1.msra.mxu0 0.0
      %3145 = vmatprep.subr.mxu0 0.0
      %3146 = vmatpush1.msra.mxu0 0.0
      %3147 = vmatprep.subr.mxu0 0.0
      %3148 = vmatpush1.msra.mxu0 0.0
      %3149 = vmatprep.subr.mxu0 0.0
      %3150 = vmatpush1.msra.mxu0 0.0
      %3151 = vmatprep.subr.mxu0 0.0
      %3152 = vmatpush1.msra.mxu0 0.0
      %3153 = vmatprep.subr.mxu0 0.0
      %3154 = vmatpush1.msra.mxu0 0.0
      %3155 = vmatprep.subr.mxu0 0.0
      %3156 = vmatpush1.msra.mxu0 0.0
      %3157 = vmatprep.subr.mxu0 0.0
      %3158 = vmatpush1.msra.mxu0 0.0
      %3159 = vmatprep.subr.mxu0 0.0
      %3160 = vmatpush1.msra.mxu0 0.0
      %3161 = vmatprep.subr.mxu0 0.0
      %3162 = vmatpush1.msra.mxu0 0.0
      %3163 = vmatprep.subr.mxu0 0.0
      %v3164 = vand.u32 %v1974, 4294901760
      %3165 = vmatpush1.msra.mxu0 %v3164
      %3166 = vmatprep.subr.mxu0 0.0
      %v3167 = vand.u32 %v1973, 4294901760
      %3168 = vmatpush1.msra.mxu0 %v3167
      %3169 = vmatprep.subr.mxu0 0.0
      %v3170 = vand.u32 %v1972, 4294901760
      %3171 = vmatpush1.msra.mxu0 %v3170
      %3172 = vmatprep.subr.mxu0 0.0
      %v3173 = vand.u32 %v1971, 4294901760
      %3174 = vmatpush1.msra.mxu0 %v3173
      %3175 = vmatprep.subr.mxu0 0.0
      %3176 = vmatpush2.msra.mxu0 0.0
      %3177 = vmatprep.subr.mxu0 0.0
      %3178 = vmatpush2.msra.mxu0 0.0
      %3179 = vmatprep.subr.mxu0 0.0
      %3180 = vmatpush2.msra.mxu0 0.0
      %3181 = vmatprep.subr.mxu0 0.0
      %3182 = vmatpush2.msra.mxu0 0.0
      %3183 = vmatprep.subr.mxu0 0.0
      %3184 = vmatpush2.msra.mxu0 0.0
      %3185 = vmatprep.subr.mxu0 0.0
      %3186 = vmatpush2.msra.mxu0 0.0
      %3187 = vmatprep.subr.mxu0 0.0
      %3188 = vmatpush2.msra.mxu0 0.0
      %3189 = vmatprep.subr.mxu0 0.0
      %3190 = vmatpush2.msra.mxu0 0.0
      %3191 = vmatprep.subr.mxu0 0.0
      %3192 = vmatpush2.msra.mxu0 0.0
      %3193 = vmatprep.subr.mxu0 0.0
      %3194 = vmatpush2.msra.mxu0 0.0
      %3195 = vmatprep.subr.mxu0 0.0
      %3196 = vmatpush2.msra.mxu0 0.0
      %3197 = vmatprep.subr.mxu0 0.0
      %3198 = vmatpush2.msra.mxu0 0.0
      %3199 = vmatprep.subr.mxu0 0.0
      %3200 = vmatpush2.msra.mxu0 0.0
      %3201 = vmatprep.subr.mxu0 0.0
      %3202 = vmatpush2.msra.mxu0 0.0
      %3203 = vmatprep.subr.mxu0 0.0
      %3204 = vmatpush2.msra.mxu0 0.0
      %3205 = vmatprep.subr.mxu0 0.0
      %3206 = vmatpush2.msra.mxu0 0.0
      %3207 = vmatprep.mubr.f32.mxu0 0.0
      %v3208 = vand.u32 %v2607, 4294901760
      %3209 = vmatmul.mubr.f32.gmra.mxu0 %v3208
      %v3210 = vpop.f32.mrf.mxu0
      %v3211 = vadd.f32 %v3118, %v3210
      %v3212 = vpop.f32.mrf.mxu0
      %3213 = vmatprep.mubr.f32.mxu0 0.0
      %v3214 = vand.u32 %v2610, 4294901760
      %3215 = vmatmul.mubr.f32.gmra.mxu0 %v3214
      %v3216 = vpop.f32.mrf.mxu0
      %v3217 = vadd.f32 %v3124, %v3216
      %v3218 = vpop.f32.mrf.mxu0
      %3219 = vmatprep.mubr.f32.mxu0 0.0
      %v3220 = vand.u32 %v2613, 4294901760
      %3221 = vmatmul.mubr.f32.gmra.mxu0 %v3220
      %v3222 = vpop.f32.mrf.mxu0
      %v3223 = vadd.f32 %v3130, %v3222
      %v3224 = vpop.f32.mrf.mxu0
      %3225 = vmatprep.mubr.f32.mxu0 0.0
      %v3226 = vand.u32 %v2616, 4294901760
      %3227 = vmatmul.mubr.f32.gmra.mxu0 %v3226
      %v3228 = vpop.f32.mrf.mxu0
      %v3229 = vadd.f32 %v3136, %v3228
      %v3230 = vpop.f32.mrf.mxu0
      %3231 = vdwg.mxu0
      %v3232 = vld [vmem:[%s5 + $0x40] sm:$0xff]
      %v3233 = vld [vmem:[%s5 + $0x48] sm:$0xff]
      %v3234 = vld [vmem:[%s5 + $0x50] sm:$0xff]
      %v3235 = vld [vmem:[%s5 + $0x58] sm:$0xff]
      %v3237 = vsel %vm1979, %v1909, 0
      %v3240 = vsel %vm1979, %v1910, 0
      %v3243 = vsel %vm1979, %v1911, 0
      %v3246 = vsel %vm1979, %v1912, 0
      %3248 = vmatprep.subr.mxu0 0.0
      %3249 = vmatpush1.msra.mxu0 0.0
      %3250 = vmatprep.subr.mxu0 0.0
      %3251 = vmatpush1.msra.mxu0 0.0
      %3252 = vmatprep.subr.mxu0 0.0
      %3253 = vmatpush1.msra.mxu0 0.0
      %3254 = vmatprep.subr.mxu0 0.0
      %3255 = vmatpush1.msra.mxu0 0.0
      %3256 = vmatprep.subr.mxu0 0.0
      %3257 = vmatpush1.msra.mxu0 0.0
      %3258 = vmatprep.subr.mxu0 0.0
      %3259 = vmatpush1.msra.mxu0 0.0
      %3260 = vmatprep.subr.mxu0 0.0
      %3261 = vmatpush1.msra.mxu0 0.0
      %3262 = vmatprep.subr.mxu0 0.0
      %3263 = vmatpush1.msra.mxu0 0.0
      %3264 = vmatprep.subr.mxu0 0.0
      %3265 = vmatpush1.msra.mxu0 0.0
      %3266 = vmatprep.subr.mxu0 0.0
      %3267 = vmatpush1.msra.mxu0 0.0
      %3268 = vmatprep.subr.mxu0 0.0
      %3269 = vmatpush1.msra.mxu0 0.0
      %3270 = vmatprep.subr.mxu0 0.0
      %3271 = vmatpush1.msra.mxu0 0.0
      %3272 = vmatprep.subr.mxu0 0.0
      %v3273 = vand.u32 %v3235, 4294901760
      %3274 = vmatpush1.msra.mxu0 %v3273
      %3275 = vmatprep.subr.mxu0 0.0
      %v3276 = vand.u32 %v3234, 4294901760
      %3277 = vmatpush1.msra.mxu0 %v3276
      %3278 = vmatprep.subr.mxu0 0.0
      %v3279 = vand.u32 %v3233, 4294901760
      %3280 = vmatpush1.msra.mxu0 %v3279
      %3281 = vmatprep.subr.mxu0 0.0
      %v3282 = vand.u32 %v3232, 4294901760
      %3283 = vmatpush1.msra.mxu0 %v3282
      %3284 = vmatprep.subr.mxu0 0.0
      %3285 = vmatpush2.msra.mxu0 0.0
      %3286 = vmatprep.subr.mxu0 0.0
      %3287 = vmatpush2.msra.mxu0 0.0
      %3288 = vmatprep.subr.mxu0 0.0
      %3289 = vmatpush2.msra.mxu0 0.0
      %3290 = vmatprep.subr.mxu0 0.0
      %3291 = vmatpush2.msra.mxu0 0.0
      %3292 = vmatprep.subr.mxu0 0.0
      %3293 = vmatpush2.msra.mxu0 0.0
      %3294 = vmatprep.subr.mxu0 0.0
      %3295 = vmatpush2.msra.mxu0 0.0
      %3296 = vmatprep.subr.mxu0 0.0
      %3297 = vmatpush2.msra.mxu0 0.0
      %3298 = vmatprep.subr.mxu0 0.0
      %3299 = vmatpush2.msra.mxu0 0.0
      %3300 = vmatprep.subr.mxu0 0.0
      %3301 = vmatpush2.msra.mxu0 0.0
      %3302 = vmatprep.subr.mxu0 0.0
      %3303 = vmatpush2.msra.mxu0 0.0
      %3304 = vmatprep.subr.mxu0 0.0
      %3305 = vmatpush2.msra.mxu0 0.0
      %3306 = vmatprep.subr.mxu0 0.0
      %3307 = vmatpush2.msra.mxu0 0.0
      %3308 = vmatprep.subr.mxu0 0.0
      %3309 = vmatpush2.msra.mxu0 0.0
      %3310 = vmatprep.subr.mxu0 0.0
      %3311 = vmatpush2.msra.mxu0 0.0
      %3312 = vmatprep.subr.mxu0 0.0
      %3313 = vmatpush2.msra.mxu0 0.0
      %3314 = vmatprep.subr.mxu0 0.0
      %3315 = vmatpush2.msra.mxu0 0.0
      %3316 = vmatprep.mubr.f32.mxu0 0.0
      %v3317 = vand.u32 %v3237, 4294901760
      %v3318 = vsub.f32 %v3237, %v3317
      %v3319 = vand.u32 %v3318, 4294901760
      %v3320 = vsub.f32 %v3318, %v3319
      %v3321 = vand.u32 %v3320, 4294901760
      %3322 = vmatmul.mubr.f32.gmra.mxu0 %v3321
      %v3323 = vpop.f32.mrf.mxu0
      %v3324 = vadd.f32 0.0, %v3323
      %v3325 = vpop.f32.mrf.mxu0
      %3326 = vmatprep.mubr.f32.mxu0 0.0
      %v3327 = vand.u32 %v3240, 4294901760
      %v3328 = vsub.f32 %v3240, %v3327
      %v3329 = vand.u32 %v3328, 4294901760
      %v3330 = vsub.f32 %v3328, %v3329
      %v3331 = vand.u32 %v3330, 4294901760
      %3332 = vmatmul.mubr.f32.gmra.mxu0 %v3331
      %v3333 = vpop.f32.mrf.mxu0
      %v3334 = vadd.f32 0.0, %v3333
      %v3335 = vpop.f32.mrf.mxu0
      %3336 = vmatprep.mubr.f32.mxu0 0.0
      %v3337 = vand.u32 %v3243, 4294901760
      %v3338 = vsub.f32 %v3243, %v3337
      %v3339 = vand.u32 %v3338, 4294901760
      %v3340 = vsub.f32 %v3338, %v3339
      %v3341 = vand.u32 %v3340, 4294901760
      %3342 = vmatmul.mubr.f32.gmra.mxu0 %v3341
      %v3343 = vpop.f32.mrf.mxu0
      %v3344 = vadd.f32 0.0, %v3343
      %v3345 = vpop.f32.mrf.mxu0
      %3346 = vmatprep.mubr.f32.mxu0 0.0
      %v3347 = vand.u32 %v3246, 4294901760
      %v3348 = vsub.f32 %v3246, %v3347
      %v3349 = vand.u32 %v3348, 4294901760
      %v3350 = vsub.f32 %v3348, %v3349
      %v3351 = vand.u32 %v3350, 4294901760
      %3352 = vmatmul.mubr.f32.gmra.mxu0 %v3351
      %v3353 = vpop.f32.mrf.mxu0
      %v3354 = vadd.f32 0.0, %v3353
      %v3355 = vpop.f32.mrf.mxu0
      %3356 = vdwg.mxu0
      %3357 = vmatprep.subr.mxu0 0.0
      %3358 = vmatpush1.msra.mxu0 0.0
      %3359 = vmatprep.subr.mxu0 0.0
      %3360 = vmatpush1.msra.mxu0 0.0
      %3361 = vmatprep.subr.mxu0 0.0
      %3362 = vmatpush1.msra.mxu0 0.0
      %3363 = vmatprep.subr.mxu0 0.0
      %3364 = vmatpush1.msra.mxu0 0.0
      %3365 = vmatprep.subr.mxu0 0.0
      %3366 = vmatpush1.msra.mxu0 0.0
      %3367 = vmatprep.subr.mxu0 0.0
      %3368 = vmatpush1.msra.mxu0 0.0
      %3369 = vmatprep.subr.mxu0 0.0
      %3370 = vmatpush1.msra.mxu0 0.0
      %3371 = vmatprep.subr.mxu0 0.0
      %3372 = vmatpush1.msra.mxu0 0.0
      %3373 = vmatprep.subr.mxu0 0.0
      %3374 = vmatpush1.msra.mxu0 0.0
      %3375 = vmatprep.subr.mxu0 0.0
      %3376 = vmatpush1.msra.mxu0 0.0
      %3377 = vmatprep.subr.mxu0 0.0
      %3378 = vmatpush1.msra.mxu0 0.0
      %3379 = vmatprep.subr.mxu0 0.0
      %3380 = vmatpush1.msra.mxu0 0.0
      %3381 = vmatprep.subr.mxu0 0.0
      %v3382 = vand.u32 %v3235, 4294901760
      %v3383 = vsub.f32 %v3235, %v3382
      %v3384 = vand.u32 %v3383, 4294901760
      %v3385 = vsub.f32 %v3383, %v3384
      %v3386 = vand.u32 %v3385, 4294901760
      %3387 = vmatpush1.msra.mxu0 %v3386
      %3388 = vmatprep.subr.mxu0 0.0
      %v3389 = vand.u32 %v3234, 4294901760
      %v3390 = vsub.f32 %v3234, %v3389
      %v3391 = vand.u32 %v3390, 4294901760
      %v3392 = vsub.f32 %v3390, %v3391
      %v3393 = vand.u32 %v3392, 4294901760
      %3394 = vmatpush1.msra.mxu0 %v3393
      %3395 = vmatprep.subr.mxu0 0.0
      %v3396 = vand.u32 %v3233, 4294901760
      %v3397 = vsub.f32 %v3233, %v3396
      %v3398 = vand.u32 %v3397, 4294901760
      %v3399 = vsub.f32 %v3397, %v3398
      %v3400 = vand.u32 %v3399, 4294901760
      %3401 = vmatpush1.msra.mxu0 %v3400
      %3402 = vmatprep.subr.mxu0 0.0
      %v3403 = vand.u32 %v3232, 4294901760
      %v3404 = vsub.f32 %v3232, %v3403
      %v3405 = vand.u32 %v3404, 4294901760
      %v3406 = vsub.f32 %v3404, %v3405
      %v3407 = vand.u32 %v3406, 4294901760
      %3408 = vmatpush1.msra.mxu0 %v3407
      %3409 = vmatprep.subr.mxu0 0.0
      %3410 = vmatpush2.msra.mxu0 0.0
      %3411 = vmatprep.subr.mxu0 0.0
      %3412 = vmatpush2.msra.mxu0 0.0
      %3413 = vmatprep.subr.mxu0 0.0
      %3414 = vmatpush2.msra.mxu0 0.0
      %3415 = vmatprep.subr.mxu0 0.0
      %3416 = vmatpush2.msra.mxu0 0.0
      %3417 = vmatprep.subr.mxu0 0.0
      %3418 = vmatpush2.msra.mxu0 0.0
      %3419 = vmatprep.subr.mxu0 0.0
      %3420 = vmatpush2.msra.mxu0 0.0
      %3421 = vmatprep.subr.mxu0 0.0
      %3422 = vmatpush2.msra.mxu0 0.0
      %3423 = vmatprep.subr.mxu0 0.0
      %3424 = vmatpush2.msra.mxu0 0.0
      %3425 = vmatprep.subr.mxu0 0.0
      %3426 = vmatpush2.msra.mxu0 0.0
      %3427 = vmatprep.subr.mxu0 0.0
      %3428 = vmatpush2.msra.mxu0 0.0
      %3429 = vmatprep.subr.mxu0 0.0
      %3430 = vmatpush2.msra.mxu0 0.0
      %3431 = vmatprep.subr.mxu0 0.0
      %3432 = vmatpush2.msra.mxu0 0.0
      %3433 = vmatprep.subr.mxu0 0.0
      %3434 = vmatpush2.msra.mxu0 0.0
      %3435 = vmatprep.subr.mxu0 0.0
      %3436 = vmatpush2.msra.mxu0 0.0
      %3437 = vmatprep.subr.mxu0 0.0
      %3438 = vmatpush2.msra.mxu0 0.0
      %3439 = vmatprep.subr.mxu0 0.0
      %3440 = vmatpush2.msra.mxu0 0.0
      %3441 = vmatprep.mubr.f32.mxu0 0.0
      %v3442 = vand.u32 %v3237, 4294901760
      %3443 = vmatmul.mubr.f32.gmra.mxu0 %v3442
      %v3444 = vpop.f32.mrf.mxu0
      %v3445 = vadd.f32 %v3324, %v3444
      %v3446 = vpop.f32.mrf.mxu0
      %3447 = vmatprep.mubr.f32.mxu0 0.0
      %v3448 = vand.u32 %v3240, 4294901760
      %3449 = vmatmul.mubr.f32.gmra.mxu0 %v3448
      %v3450 = vpop.f32.mrf.mxu0
      %v3451 = vadd.f32 %v3334, %v3450
      %v3452 = vpop.f32.mrf.mxu0
      %3453 = vmatprep.mubr.f32.mxu0 0.0
      %v3454 = vand.u32 %v3243, 4294901760
      %3455 = vmatmul.mubr.f32.gmra.mxu0 %v3454
      %v3456 = vpop.f32.mrf.mxu0
      %v3457 = vadd.f32 %v3344, %v3456
      %v3458 = vpop.f32.mrf.mxu0
      %3459 = vmatprep.mubr.f32.mxu0 0.0
      %v3460 = vand.u32 %v3246, 4294901760
      %3461 = vmatmul.mubr.f32.gmra.mxu0 %v3460
      %v3462 = vpop.f32.mrf.mxu0
      %v3463 = vadd.f32 %v3354, %v3462
      %v3464 = vpop.f32.mrf.mxu0
      %3465 = vdwg.mxu0
      %3466 = vmatprep.subr.mxu0 0.0
      %3467 = vmatpush1.msra.mxu0 0.0
      %3468 = vmatprep.subr.mxu0 0.0
      %3469 = vmatpush1.msra.mxu0 0.0
      %3470 = vmatprep.subr.mxu0 0.0
      %3471 = vmatpush1.msra.mxu0 0.0
      %3472 = vmatprep.subr.mxu0 0.0
      %3473 = vmatpush1.msra.mxu0 0.0
      %3474 = vmatprep.subr.mxu0 0.0
      %3475 = vmatpush1.msra.mxu0 0.0
      %3476 = vmatprep.subr.mxu0 0.0
      %3477 = vmatpush1.msra.mxu0 0.0
      %3478 = vmatprep.subr.mxu0 0.0
      %3479 = vmatpush1.msra.mxu0 0.0
      %3480 = vmatprep.subr.mxu0 0.0
      %3481 = vmatpush1.msra.mxu0 0.0
      %3482 = vmatprep.subr.mxu0 0.0
      %3483 = vmatpush1.msra.mxu0 0.0
      %3484 = vmatprep.subr.mxu0 0.0
      %3485 = vmatpush1.msra.mxu0 0.0
      %3486 = vmatprep.subr.mxu0 0.0
      %3487 = vmatpush1.msra.mxu0 0.0
      %3488 = vmatprep.subr.mxu0 0.0
      %3489 = vmatpush1.msra.mxu0 0.0
      %3490 = vmatprep.subr.mxu0 0.0
      %v3491 = vand.u32 %v3235, 4294901760
      %v3492 = vsub.f32 %v3235, %v3491
      %3493 = vmatpush1.msra.mxu0 %v3492
      %3494 = vmatprep.subr.mxu0 0.0
      %v3495 = vand.u32 %v3234, 4294901760
      %v3496 = vsub.f32 %v3234, %v3495
      %3497 = vmatpush1.msra.mxu0 %v3496
      %3498 = vmatprep.subr.mxu0 0.0
      %v3499 = vand.u32 %v3233, 4294901760
      %v3500 = vsub.f32 %v3233, %v3499
      %3501 = vmatpush1.msra.mxu0 %v3500
      %3502 = vmatprep.subr.mxu0 0.0
      %v3503 = vand.u32 %v3232, 4294901760
      %v3504 = vsub.f32 %v3232, %v3503
      %3505 = vmatpush1.msra.mxu0 %v3504
      %3506 = vmatprep.subr.mxu0 0.0
      %3507 = vmatpush2.msra.mxu0 0.0
      %3508 = vmatprep.subr.mxu0 0.0
      %3509 = vmatpush2.msra.mxu0 0.0
      %3510 = vmatprep.subr.mxu0 0.0
      %3511 = vmatpush2.msra.mxu0 0.0
      %3512 = vmatprep.subr.mxu0 0.0
      %3513 = vmatpush2.msra.mxu0 0.0
      %3514 = vmatprep.subr.mxu0 0.0
      %3515 = vmatpush2.msra.mxu0 0.0
      %3516 = vmatprep.subr.mxu0 0.0
      %3517 = vmatpush2.msra.mxu0 0.0
      %3518 = vmatprep.subr.mxu0 0.0
      %3519 = vmatpush2.msra.mxu0 0.0
      %3520 = vmatprep.subr.mxu0 0.0
      %3521 = vmatpush2.msra.mxu0 0.0
      %3522 = vmatprep.subr.mxu0 0.0
      %3523 = vmatpush2.msra.mxu0 0.0
      %3524 = vmatprep.subr.mxu0 0.0
      %3525 = vmatpush2.msra.mxu0 0.0
      %3526 = vmatprep.subr.mxu0 0.0
      %3527 = vmatpush2.msra.mxu0 0.0
      %3528 = vmatprep.subr.mxu0 0.0
      %3529 = vmatpush2.msra.mxu0 0.0
      %3530 = vmatprep.subr.mxu0 0.0
      %3531 = vmatpush2.msra.mxu0 0.0
      %3532 = vmatprep.subr.mxu0 0.0
      %3533 = vmatpush2.msra.mxu0 0.0
      %3534 = vmatprep.subr.mxu0 0.0
      %3535 = vmatpush2.msra.mxu0 0.0
      %3536 = vmatprep.subr.mxu0 0.0
      %3537 = vmatpush2.msra.mxu0 0.0
      %3538 = vmatprep.mubr.f32.mxu0 0.0
      %v3539 = vand.u32 %v3237, 4294901760
      %v3540 = vsub.f32 %v3237, %v3539
      %3541 = vmatmul.mubr.f32.gmra.mxu0 %v3540
      %v3542 = vpop.f32.mrf.mxu0
      %v3543 = vadd.f32 %v3445, %v3542
      %v3544 = vpop.f32.mrf.mxu0
      %3545 = vmatprep.mubr.f32.mxu0 0.0
      %v3546 = vand.u32 %v3240, 4294901760
      %v3547 = vsub.f32 %v3240, %v3546
      %3548 = vmatmul.mubr.f32.gmra.mxu0 %v3547
      %v3549 = vpop.f32.mrf.mxu0
      %v3550 = vadd.f32 %v3451, %v3549
      %v3551 = vpop.f32.mrf.mxu0
      %3552 = vmatprep.mubr.f32.mxu0 0.0
      %v3553 = vand.u32 %v3243, 4294901760
      %v3554 = vsub.f32 %v3243, %v3553
      %3555 = vmatmul.mubr.f32.gmra.mxu0 %v3554
      %v3556 = vpop.f32.mrf.mxu0
      %v3557 = vadd.f32 %v3457, %v3556
      %v3558 = vpop.f32.mrf.mxu0
      %3559 = vmatprep.mubr.f32.mxu0 0.0
      %v3560 = vand.u32 %v3246, 4294901760
      %v3561 = vsub.f32 %v3246, %v3560
      %3562 = vmatmul.mubr.f32.gmra.mxu0 %v3561
      %v3563 = vpop.f32.mrf.mxu0
      %v3564 = vadd.f32 %v3463, %v3563
      %v3565 = vpop.f32.mrf.mxu0
      %3566 = vdwg.mxu0
      %3567 = vmatprep.subr.mxu0 0.0
      %3568 = vmatpush1.msra.mxu0 0.0
      %3569 = vmatprep.subr.mxu0 0.0
      %3570 = vmatpush1.msra.mxu0 0.0
      %3571 = vmatprep.subr.mxu0 0.0
      %3572 = vmatpush1.msra.mxu0 0.0
      %3573 = vmatprep.subr.mxu0 0.0
      %3574 = vmatpush1.msra.mxu0 0.0
      %3575 = vmatprep.subr.mxu0 0.0
      %3576 = vmatpush1.msra.mxu0 0.0
      %3577 = vmatprep.subr.mxu0 0.0
      %3578 = vmatpush1.msra.mxu0 0.0
      %3579 = vmatprep.subr.mxu0 0.0
      %3580 = vmatpush1.msra.mxu0 0.0
      %3581 = vmatprep.subr.mxu0 0.0
      %3582 = vmatpush1.msra.mxu0 0.0
      %3583 = vmatprep.subr.mxu0 0.0
      %3584 = vmatpush1.msra.mxu0 0.0
      %3585 = vmatprep.subr.mxu0 0.0
      %3586 = vmatpush1.msra.mxu0 0.0
      %3587 = vmatprep.subr.mxu0 0.0
      %3588 = vmatpush1.msra.mxu0 0.0
      %3589 = vmatprep.subr.mxu0 0.0
      %3590 = vmatpush1.msra.mxu0 0.0
      %3591 = vmatprep.subr.mxu0 0.0
      %v3592 = vand.u32 %v3235, 4294901760
      %3593 = vmatpush1.msra.mxu0 %v3592
      %3594 = vmatprep.subr.mxu0 0.0
      %v3595 = vand.u32 %v3234, 4294901760
      %3596 = vmatpush1.msra.mxu0 %v3595
      %3597 = vmatprep.subr.mxu0 0.0
      %v3598 = vand.u32 %v3233, 4294901760
      %3599 = vmatpush1.msra.mxu0 %v3598
      %3600 = vmatprep.subr.mxu0 0.0
      %v3601 = vand.u32 %v3232, 4294901760
      %3602 = vmatpush1.msra.mxu0 %v3601
      %3603 = vmatprep.subr.mxu0 0.0
      %3604 = vmatpush2.msra.mxu0 0.0
      %3605 = vmatprep.subr.mxu0 0.0
      %3606 = vmatpush2.msra.mxu0 0.0
      %3607 = vmatprep.subr.mxu0 0.0
      %3608 = vmatpush2.msra.mxu0 0.0
      %3609 = vmatprep.subr.mxu0 0.0
      %3610 = vmatpush2.msra.mxu0 0.0
      %3611 = vmatprep.subr.mxu0 0.0
      %3612 = vmatpush2.msra.mxu0 0.0
      %3613 = vmatprep.subr.mxu0 0.0
      %3614 = vmatpush2.msra.mxu0 0.0
      %3615 = vmatprep.subr.mxu0 0.0
      %3616 = vmatpush2.msra.mxu0 0.0
      %3617 = vmatprep.subr.mxu0 0.0
      %3618 = vmatpush2.msra.mxu0 0.0
      %3619 = vmatprep.subr.mxu0 0.0
      %3620 = vmatpush2.msra.mxu0 0.0
      %3621 = vmatprep.subr.mxu0 0.0
      %3622 = vmatpush2.msra.mxu0 0.0
      %3623 = vmatprep.subr.mxu0 0.0
      %3624 = vmatpush2.msra.mxu0 0.0
      %3625 = vmatprep.subr.mxu0 0.0
      %3626 = vmatpush2.msra.mxu0 0.0
      %3627 = vmatprep.subr.mxu0 0.0
      %3628 = vmatpush2.msra.mxu0 0.0
      %3629 = vmatprep.subr.mxu0 0.0
      %3630 = vmatpush2.msra.mxu0 0.0
      %3631 = vmatprep.subr.mxu0 0.0
      %3632 = vmatpush2.msra.mxu0 0.0
      %3633 = vmatprep.subr.mxu0 0.0
      %3634 = vmatpush2.msra.mxu0 0.0
      %3635 = vmatprep.mubr.f32.mxu0 0.0
      %v3636 = vand.u32 %v3237, 4294901760
      %v3637 = vsub.f32 %v3237, %v3636
      %v3638 = vand.u32 %v3637, 4294901760
      %3639 = vmatmul.mubr.f32.gmra.mxu0 %v3638
      %v3640 = vpop.f32.mrf.mxu0
      %v3641 = vadd.f32 %v3543, %v3640
      %v3642 = vpop.f32.mrf.mxu0
      %3643 = vmatprep.mubr.f32.mxu0 0.0
      %v3644 = vand.u32 %v3240, 4294901760
      %v3645 = vsub.f32 %v3240, %v3644
      %v3646 = vand.u32 %v3645, 4294901760
      %3647 = vmatmul.mubr.f32.gmra.mxu0 %v3646
      %v3648 = vpop.f32.mrf.mxu0
      %v3649 = vadd.f32 %v3550, %v3648
      %v3650 = vpop.f32.mrf.mxu0
      %3651 = vmatprep.mubr.f32.mxu0 0.0
      %v3652 = vand.u32 %v3243, 4294901760
      %v3653 = vsub.f32 %v3243, %v3652
      %v3654 = vand.u32 %v3653, 4294901760
      %3655 = vmatmul.mubr.f32.gmra.mxu0 %v3654
      %v3656 = vpop.f32.mrf.mxu0
      %v3657 = vadd.f32 %v3557, %v3656
      %v3658 = vpop.f32.mrf.mxu0
      %3659 = vmatprep.mubr.f32.mxu0 0.0
      %v3660 = vand.u32 %v3246, 4294901760
      %v3661 = vsub.f32 %v3246, %v3660
      %v3662 = vand.u32 %v3661, 4294901760
      %3663 = vmatmul.mubr.f32.gmra.mxu0 %v3662
      %v3664 = vpop.f32.mrf.mxu0
      %v3665 = vadd.f32 %v3564, %v3664
      %v3666 = vpop.f32.mrf.mxu0
      %3667 = vdwg.mxu0
      %3668 = vmatprep.subr.mxu0 0.0
      %3669 = vmatpush1.msra.mxu0 0.0
      %3670 = vmatprep.subr.mxu0 0.0
      %3671 = vmatpush1.msra.mxu0 0.0
      %3672 = vmatprep.subr.mxu0 0.0
      %3673 = vmatpush1.msra.mxu0 0.0
      %3674 = vmatprep.subr.mxu0 0.0
      %3675 = vmatpush1.msra.mxu0 0.0
      %3676 = vmatprep.subr.mxu0 0.0
      %3677 = vmatpush1.msra.mxu0 0.0
      %3678 = vmatprep.subr.mxu0 0.0
      %3679 = vmatpush1.msra.mxu0 0.0
      %3680 = vmatprep.subr.mxu0 0.0
      %3681 = vmatpush1.msra.mxu0 0.0
      %3682 = vmatprep.subr.mxu0 0.0
      %3683 = vmatpush1.msra.mxu0 0.0
      %3684 = vmatprep.subr.mxu0 0.0
      %3685 = vmatpush1.msra.mxu0 0.0
      %3686 = vmatprep.subr.mxu0 0.0
      %3687 = vmatpush1.msra.mxu0 0.0
      %3688 = vmatprep.subr.mxu0 0.0
      %3689 = vmatpush1.msra.mxu0 0.0
      %3690 = vmatprep.subr.mxu0 0.0
      %3691 = vmatpush1.msra.mxu0 0.0
      %3692 = vmatprep.subr.mxu0 0.0
      %v3693 = vand.u32 %v3235, 4294901760
      %v3694 = vsub.f32 %v3235, %v3693
      %v3695 = vand.u32 %v3694, 4294901760
      %3696 = vmatpush1.msra.mxu0 %v3695
      %3697 = vmatprep.subr.mxu0 0.0
      %v3698 = vand.u32 %v3234, 4294901760
      %v3699 = vsub.f32 %v3234, %v3698
      %v3700 = vand.u32 %v3699, 4294901760
      %3701 = vmatpush1.msra.mxu0 %v3700
      %3702 = vmatprep.subr.mxu0 0.0
      %v3703 = vand.u32 %v3233, 4294901760
      %v3704 = vsub.f32 %v3233, %v3703
      %v3705 = vand.u32 %v3704, 4294901760
      %3706 = vmatpush1.msra.mxu0 %v3705
      %3707 = vmatprep.subr.mxu0 0.0
      %v3708 = vand.u32 %v3232, 4294901760
      %v3709 = vsub.f32 %v3232, %v3708
      %v3710 = vand.u32 %v3709, 4294901760
      %3711 = vmatpush1.msra.mxu0 %v3710
      %3712 = vmatprep.subr.mxu0 0.0
      %3713 = vmatpush2.msra.mxu0 0.0
      %3714 = vmatprep.subr.mxu0 0.0
      %3715 = vmatpush2.msra.mxu0 0.0
      %3716 = vmatprep.subr.mxu0 0.0
      %3717 = vmatpush2.msra.mxu0 0.0
      %3718 = vmatprep.subr.mxu0 0.0
      %3719 = vmatpush2.msra.mxu0 0.0
      %3720 = vmatprep.subr.mxu0 0.0
      %3721 = vmatpush2.msra.mxu0 0.0
      %3722 = vmatprep.subr.mxu0 0.0
      %3723 = vmatpush2.msra.mxu0 0.0
      %3724 = vmatprep.subr.mxu0 0.0
      %3725 = vmatpush2.msra.mxu0 0.0
      %3726 = vmatprep.subr.mxu0 0.0
      %3727 = vmatpush2.msra.mxu0 0.0
      %3728 = vmatprep.subr.mxu0 0.0
      %3729 = vmatpush2.msra.mxu0 0.0
      %3730 = vmatprep.subr.mxu0 0.0
      %3731 = vmatpush2.msra.mxu0 0.0
      %3732 = vmatprep.subr.mxu0 0.0
      %3733 = vmatpush2.msra.mxu0 0.0
      %3734 = vmatprep.subr.mxu0 0.0
      %3735 = vmatpush2.msra.mxu0 0.0
      %3736 = vmatprep.subr.mxu0 0.0
      %3737 = vmatpush2.msra.mxu0 0.0
      %3738 = vmatprep.subr.mxu0 0.0
      %3739 = vmatpush2.msra.mxu0 0.0
      %3740 = vmatprep.subr.mxu0 0.0
      %3741 = vmatpush2.msra.mxu0 0.0
      %3742 = vmatprep.subr.mxu0 0.0
      %3743 = vmatpush2.msra.mxu0 0.0
      %3744 = vmatprep.mubr.f32.mxu0 0.0
      %v3745 = vand.u32 %v3237, 4294901760
      %3746 = vmatmul.mubr.f32.gmra.mxu0 %v3745
      %v3747 = vpop.f32.mrf.mxu0
      %v3748 = vadd.f32 %v3641, %v3747
      %v3749 = vpop.f32.mrf.mxu0
      %3750 = vmatprep.mubr.f32.mxu0 0.0
      %v3751 = vand.u32 %v3240, 4294901760
      %3752 = vmatmul.mubr.f32.gmra.mxu0 %v3751
      %v3753 = vpop.f32.mrf.mxu0
      %v3754 = vadd.f32 %v3649, %v3753
      %v3755 = vpop.f32.mrf.mxu0
      %3756 = vmatprep.mubr.f32.mxu0 0.0
      %v3757 = vand.u32 %v3243, 4294901760
      %3758 = vmatmul.mubr.f32.gmra.mxu0 %v3757
      %v3759 = vpop.f32.mrf.mxu0
      %v3760 = vadd.f32 %v3657, %v3759
      %v3761 = vpop.f32.mrf.mxu0
      %3762 = vmatprep.mubr.f32.mxu0 0.0
      %v3763 = vand.u32 %v3246, 4294901760
      %3764 = vmatmul.mubr.f32.gmra.mxu0 %v3763
      %v3765 = vpop.f32.mrf.mxu0
      %v3766 = vadd.f32 %v3665, %v3765
      %v3767 = vpop.f32.mrf.mxu0
      %3768 = vdwg.mxu0
      %3769 = vmatprep.subr.mxu0 0.0
      %3770 = vmatpush1.msra.mxu0 0.0
      %3771 = vmatprep.subr.mxu0 0.0
      %3772 = vmatpush1.msra.mxu0 0.0
      %3773 = vmatprep.subr.mxu0 0.0
      %3774 = vmatpush1.msra.mxu0 0.0
      %3775 = vmatprep.subr.mxu0 0.0
      %3776 = vmatpush1.msra.mxu0 0.0
      %3777 = vmatprep.subr.mxu0 0.0
      %3778 = vmatpush1.msra.mxu0 0.0
      %3779 = vmatprep.subr.mxu0 0.0
      %3780 = vmatpush1.msra.mxu0 0.0
      %3781 = vmatprep.subr.mxu0 0.0
      %3782 = vmatpush1.msra.mxu0 0.0
      %3783 = vmatprep.subr.mxu0 0.0
      %3784 = vmatpush1.msra.mxu0 0.0
      %3785 = vmatprep.subr.mxu0 0.0
      %3786 = vmatpush1.msra.mxu0 0.0
      %3787 = vmatprep.subr.mxu0 0.0
      %3788 = vmatpush1.msra.mxu0 0.0
      %3789 = vmatprep.subr.mxu0 0.0
      %3790 = vmatpush1.msra.mxu0 0.0
      %3791 = vmatprep.subr.mxu0 0.0
      %3792 = vmatpush1.msra.mxu0 0.0
      %3793 = vmatprep.subr.mxu0 0.0
      %v3794 = vand.u32 %v3235, 4294901760
      %3795 = vmatpush1.msra.mxu0 %v3794
      %3796 = vmatprep.subr.mxu0 0.0
      %v3797 = vand.u32 %v3234, 4294901760
      %3798 = vmatpush1.msra.mxu0 %v3797
      %3799 = vmatprep.subr.mxu0 0.0
      %v3800 = vand.u32 %v3233, 4294901760
      %3801 = vmatpush1.msra.mxu0 %v3800
      %3802 = vmatprep.subr.mxu0 0.0
      %v3803 = vand.u32 %v3232, 4294901760
      %3804 = vmatpush1.msra.mxu0 %v3803
      %3805 = vmatprep.subr.mxu0 0.0
      %3806 = vmatpush2.msra.mxu0 0.0
      %3807 = vmatprep.subr.mxu0 0.0
      %3808 = vmatpush2.msra.mxu0 0.0
      %3809 = vmatprep.subr.mxu0 0.0
      %3810 = vmatpush2.msra.mxu0 0.0
      %3811 = vmatprep.subr.mxu0 0.0
      %3812 = vmatpush2.msra.mxu0 0.0
      %3813 = vmatprep.subr.mxu0 0.0
      %3814 = vmatpush2.msra.mxu0 0.0
      %3815 = vmatprep.subr.mxu0 0.0
      %3816 = vmatpush2.msra.mxu0 0.0
      %3817 = vmatprep.subr.mxu0 0.0
      %3818 = vmatpush2.msra.mxu0 0.0
      %3819 = vmatprep.subr.mxu0 0.0
      %3820 = vmatpush2.msra.mxu0 0.0
      %3821 = vmatprep.subr.mxu0 0.0
      %3822 = vmatpush2.msra.mxu0 0.0
      %3823 = vmatprep.subr.mxu0 0.0
      %3824 = vmatpush2.msra.mxu0 0.0
      %3825 = vmatprep.subr.mxu0 0.0
      %3826 = vmatpush2.msra.mxu0 0.0
      %3827 = vmatprep.subr.mxu0 0.0
      %3828 = vmatpush2.msra.mxu0 0.0
      %3829 = vmatprep.subr.mxu0 0.0
      %3830 = vmatpush2.msra.mxu0 0.0
      %3831 = vmatprep.subr.mxu0 0.0
      %3832 = vmatpush2.msra.mxu0 0.0
      %3833 = vmatprep.subr.mxu0 0.0
      %3834 = vmatpush2.msra.mxu0 0.0
      %3835 = vmatprep.subr.mxu0 0.0
      %3836 = vmatpush2.msra.mxu0 0.0
      %3837 = vmatprep.mubr.f32.mxu0 0.0
      %v3838 = vand.u32 %v3237, 4294901760
      %3839 = vmatmul.mubr.f32.gmra.mxu0 %v3838
      %v3840 = vpop.f32.mrf.mxu0
      %v3841 = vadd.f32 %v3748, %v3840
      %v3842 = vpop.f32.mrf.mxu0
      %3843 = vmatprep.mubr.f32.mxu0 0.0
      %v3844 = vand.u32 %v3240, 4294901760
      %3845 = vmatmul.mubr.f32.gmra.mxu0 %v3844
      %v3846 = vpop.f32.mrf.mxu0
      %v3847 = vadd.f32 %v3754, %v3846
      %v3848 = vpop.f32.mrf.mxu0
      %3849 = vmatprep.mubr.f32.mxu0 0.0
      %v3850 = vand.u32 %v3243, 4294901760
      %3851 = vmatmul.mubr.f32.gmra.mxu0 %v3850
      %v3852 = vpop.f32.mrf.mxu0
      %v3853 = vadd.f32 %v3760, %v3852
      %v3854 = vpop.f32.mrf.mxu0
      %3855 = vmatprep.mubr.f32.mxu0 0.0
      %v3856 = vand.u32 %v3246, 4294901760
      %3857 = vmatmul.mubr.f32.gmra.mxu0 %v3856
      %v3858 = vpop.f32.mrf.mxu0
      %v3859 = vadd.f32 %v3766, %v3858
      %v3860 = vpop.f32.mrf.mxu0
      %3861 = vdwg.mxu0
      %v3862 = vadd.f32 %v3211, %v3841
      %v3863 = vadd.f32 %v3217, %v3847
      %v3864 = vadd.f32 %v3223, %v3853
      %v3865 = vadd.f32 %v3229, %v3859
      %v3866 = vld [vmem:[%s6] sm:$0x1]
      %v3868 = vlaneseq
      %v3869 = vshrl.u32 %v3868, 7
      %v3870 = vsub.s32 0, %v3869
      %v3871 = vrot.slane %v3866, %v3870
      %v3873 = vadd.f32 %v3862, %v3871
      %v3874 = vadd.f32 %v3863, %v3871
      %v3875 = vadd.f32 %v3864, %v3871
      %v3876 = vadd.f32 %v3865, %v3871
      %v3877 = vmax.f32 %v3873, 0.0
      %v3878 = vmax.f32 %v3874, 0.0
      %v3879 = vmax.f32 %v3875, 0.0
      %v3880 = vmax.f32 %v3876, 0.0
      %v3881 = vld [vmem:[%s7] sm:$0xff]
      %v3882 = vld [vmem:[%s7 + $0x8] sm:$0xff]
      %v3883 = vld [vmem:[%s7 + $0x10] sm:$0xff]
      %v3884 = vld [vmem:[%s7 + $0x18] sm:$0xff]
      %v3885 = vld [vmem:[%s7 + $0x20] sm:$0xff]
      %v3886 = vld [vmem:[%s7 + $0x28] sm:$0xff]
      %v3887 = vld [vmem:[%s7 + $0x30] sm:$0xff]
      %v3888 = vld [vmem:[%s7 + $0x38] sm:$0xff]
      %v3889 = vld [vmem:[%s7 + $0x40] sm:$0xff]
      %v3890 = vld [vmem:[%s7 + $0x48] sm:$0xff]
      %v3891 = vld [vmem:[%s7 + $0x50] sm:$0xff]
      %v3892 = vld [vmem:[%s7 + $0x58] sm:$0xff]
      %v3893 = vld [vmem:[%s7 + $0x60] sm:$0xff]
      %v3894 = vld [vmem:[%s7 + $0x68] sm:$0xff]
      %v3895 = vld [vmem:[%s7 + $0x70] sm:$0xff]
      %v3896 = vld [vmem:[%s7 + $0x78] sm:$0xff]
      %v3897 = vld [vmem:[%s8] sm:$0x1]
      %v3899 = vlaneseq
      %v3900 = vshrl.u32 %v3899, 7
      %v3901 = vsub.s32 0, %v3900
      %v3902 = vrot.slane %v3897, %v3901
      %3904 = vmatprep.subr.mxu0 0.0
      %v3905 = vand.u32 %v3896, 4294901760
      %3906 = vmatpush1.msra.mxu0 %v3905
      %3907 = vmatprep.subr.mxu0 0.0
      %v3908 = vand.u32 %v3895, 4294901760
      %3909 = vmatpush1.msra.mxu0 %v3908
      %3910 = vmatprep.subr.mxu0 0.0
      %v3911 = vand.u32 %v3894, 4294901760
      %3912 = vmatpush1.msra.mxu0 %v3911
      %3913 = vmatprep.subr.mxu0 0.0
      %v3914 = vand.u32 %v3893, 4294901760
      %3915 = vmatpush1.msra.mxu0 %v3914
      %3916 = vmatprep.subr.mxu0 0.0
      %v3917 = vand.u32 %v3892, 4294901760
      %3918 = vmatpush1.msra.mxu0 %v3917
      %3919 = vmatprep.subr.mxu0 0.0
      %v3920 = vand.u32 %v3891, 4294901760
      %3921 = vmatpush1.msra.mxu0 %v3920
      %3922 = vmatprep.subr.mxu0 0.0
      %v3923 = vand.u32 %v3890, 4294901760
      %3924 = vmatpush1.msra.mxu0 %v3923
      %3925 = vmatprep.subr.mxu0 0.0
      %v3926 = vand.u32 %v3889, 4294901760
      %3927 = vmatpush1.msra.mxu0 %v3926
      %3928 = vmatprep.subr.mxu0 0.0
      %v3929 = vand.u32 %v3888, 4294901760
      %3930 = vmatpush1.msra.mxu0 %v3929
      %3931 = vmatprep.subr.mxu0 0.0
      %v3932 = vand.u32 %v3887, 4294901760
      %3933 = vmatpush1.msra.mxu0 %v3932
      %3934 = vmatprep.subr.mxu0 0.0
      %v3935 = vand.u32 %v3886, 4294901760
      %3936 = vmatpush1.msra.mxu0 %v3935
      %3937 = vmatprep.subr.mxu0 0.0
      %v3938 = vand.u32 %v3885, 4294901760
      %3939 = vmatpush1.msra.mxu0 %v3938
      %3940 = vmatprep.subr.mxu0 0.0
      %v3941 = vand.u32 %v3884, 4294901760
      %3942 = vmatpush1.msra.mxu0 %v3941
      %3943 = vmatprep.subr.mxu0 0.0
      %v3944 = vand.u32 %v3883, 4294901760
      %3945 = vmatpush1.msra.mxu0 %v3944
      %3946 = vmatprep.subr.mxu0 0.0
      %v3947 = vand.u32 %v3882, 4294901760
      %3948 = vmatpush1.msra.mxu0 %v3947
      %3949 = vmatprep.subr.mxu0 0.0
      %v3950 = vand.u32 %v3881, 4294901760
      %3951 = vmatpush1.msra.mxu0 %v3950
      %3952 = vmatprep.subr.mxu0 0.0
      %3953 = vmatpush2.msra.mxu0 0.0
      %3954 = vmatprep.subr.mxu0 0.0
      %3955 = vmatpush2.msra.mxu0 0.0
      %3956 = vmatprep.subr.mxu0 0.0
      %3957 = vmatpush2.msra.mxu0 0.0
      %3958 = vmatprep.subr.mxu0 0.0
      %3959 = vmatpush2.msra.mxu0 0.0
      %3960 = vmatprep.subr.mxu0 0.0
      %3961 = vmatpush2.msra.mxu0 0.0
      %3962 = vmatprep.subr.mxu0 0.0
      %3963 = vmatpush2.msra.mxu0 0.0
      %3964 = vmatprep.subr.mxu0 0.0
      %3965 = vmatpush2.msra.mxu0 0.0
      %3966 = vmatprep.subr.mxu0 0.0
      %3967 = vmatpush2.msra.mxu0 0.0
      %3968 = vmatprep.subr.mxu0 0.0
      %3969 = vmatpush2.msra.mxu0 0.0
      %3970 = vmatprep.subr.mxu0 0.0
      %3971 = vmatpush2.msra.mxu0 0.0
      %3972 = vmatprep.subr.mxu0 0.0
      %3973 = vmatpush2.msra.mxu0 0.0
      %3974 = vmatprep.subr.mxu0 0.0
      %3975 = vmatpush2.msra.mxu0 0.0
      %3976 = vmatprep.subr.mxu0 0.0
      %3977 = vmatpush2.msra.mxu0 0.0
      %3978 = vmatprep.subr.mxu0 0.0
      %3979 = vmatpush2.msra.mxu0 0.0
      %3980 = vmatprep.subr.mxu0 0.0
      %3981 = vmatpush2.msra.mxu0 0.0
      %3982 = vmatprep.subr.mxu0 0.0
      %3983 = vmatpush2.msra.mxu0 0.0
      %3984 = vmatprep.mubr.f32.mxu0 0.0
      %v3985 = vand.u32 %v3877, 4294901760
      %v3986 = vsub.f32 %v3877, %v3985
      %v3987 = vand.u32 %v3986, 4294901760
      %v3988 = vsub.f32 %v3986, %v3987
      %v3989 = vand.u32 %v3988, 4294901760
      %3990 = vmatmul.mubr.f32.gmra.mxu0 %v3989
      %v3991 = vpop.f32.mrf.mxu0
      %v3992 = vadd.f32 %v3902, %v3991
      %v3993 = vpop.f32.mrf.mxu0
      %3994 = vmatprep.mubr.f32.mxu0 0.0
      %v3995 = vand.u32 %v3878, 4294901760
      %v3996 = vsub.f32 %v3878, %v3995
      %v3997 = vand.u32 %v3996, 4294901760
      %v3998 = vsub.f32 %v3996, %v3997
      %v3999 = vand.u32 %v3998, 4294901760
      %4000 = vmatmul.mubr.f32.gmra.mxu0 %v3999
      %v4001 = vpop.f32.mrf.mxu0
      %v4002 = vadd.f32 %v3902, %v4001
      %v4003 = vpop.f32.mrf.mxu0
      %4004 = vmatprep.mubr.f32.mxu0 0.0
      %v4005 = vand.u32 %v3879, 4294901760
      %v4006 = vsub.f32 %v3879, %v4005
      %v4007 = vand.u32 %v4006, 4294901760
      %v4008 = vsub.f32 %v4006, %v4007
      %v4009 = vand.u32 %v4008, 4294901760
      %4010 = vmatmul.mubr.f32.gmra.mxu0 %v4009
      %v4011 = vpop.f32.mrf.mxu0
      %v4012 = vadd.f32 %v3902, %v4011
      %v4013 = vpop.f32.mrf.mxu0
      %4014 = vmatprep.mubr.f32.mxu0 0.0
      %v4015 = vand.u32 %v3880, 4294901760
      %v4016 = vsub.f32 %v3880, %v4015
      %v4017 = vand.u32 %v4016, 4294901760
      %v4018 = vsub.f32 %v4016, %v4017
      %v4019 = vand.u32 %v4018, 4294901760
      %4020 = vmatmul.mubr.f32.gmra.mxu0 %v4019
      %v4021 = vpop.f32.mrf.mxu0
      %v4022 = vadd.f32 %v3902, %v4021
      %v4023 = vpop.f32.mrf.mxu0
      %4024 = vdwg.mxu0
      %4025 = vmatprep.subr.mxu0 0.0
      %v4026 = vand.u32 %v3896, 4294901760
      %v4027 = vsub.f32 %v3896, %v4026
      %v4028 = vand.u32 %v4027, 4294901760
      %v4029 = vsub.f32 %v4027, %v4028
      %v4030 = vand.u32 %v4029, 4294901760
      %4031 = vmatpush1.msra.mxu0 %v4030
      %4032 = vmatprep.subr.mxu0 0.0
      %v4033 = vand.u32 %v3895, 4294901760
      %v4034 = vsub.f32 %v3895, %v4033
      %v4035 = vand.u32 %v4034, 4294901760
      %v4036 = vsub.f32 %v4034, %v4035
      %v4037 = vand.u32 %v4036, 4294901760
      %4038 = vmatpush1.msra.mxu0 %v4037
      %4039 = vmatprep.subr.mxu0 0.0
      %v4040 = vand.u32 %v3894, 4294901760
      %v4041 = vsub.f32 %v3894, %v4040
      %v4042 = vand.u32 %v4041, 4294901760
      %v4043 = vsub.f32 %v4041, %v4042
      %v4044 = vand.u32 %v4043, 4294901760
      %4045 = vmatpush1.msra.mxu0 %v4044
      %4046 = vmatprep.subr.mxu0 0.0
      %v4047 = vand.u32 %v3893, 4294901760
      %v4048 = vsub.f32 %v3893, %v4047
      %v4049 = vand.u32 %v4048, 4294901760
      %v4050 = vsub.f32 %v4048, %v4049
      %v4051 = vand.u32 %v4050, 4294901760
      %4052 = vmatpush1.msra.mxu0 %v4051
      %4053 = vmatprep.subr.mxu0 0.0
      %v4054 = vand.u32 %v3892, 4294901760
      %v4055 = vsub.f32 %v3892, %v4054
      %v4056 = vand.u32 %v4055, 4294901760
      %v4057 = vsub.f32 %v4055, %v4056
      %v4058 = vand.u32 %v4057, 4294901760
      %4059 = vmatpush1.msra.mxu0 %v4058
      %4060 = vmatprep.subr.mxu0 0.0
      %v4061 = vand.u32 %v3891, 4294901760
      %v4062 = vsub.f32 %v3891, %v4061
      %v4063 = vand.u32 %v4062, 4294901760
      %v4064 = vsub.f32 %v4062, %v4063
      %v4065 = vand.u32 %v4064, 4294901760
      %4066 = vmatpush1.msra.mxu0 %v4065
      %4067 = vmatprep.subr.mxu0 0.0
      %v4068 = vand.u32 %v3890, 4294901760
      %v4069 = vsub.f32 %v3890, %v4068
      %v4070 = vand.u32 %v4069, 4294901760
      %v4071 = vsub.f32 %v4069, %v4070
      %v4072 = vand.u32 %v4071, 4294901760
      %4073 = vmatpush1.msra.mxu0 %v4072
      %4074 = vmatprep.subr.mxu0 0.0
      %v4075 = vand.u32 %v3889, 4294901760
      %v4076 = vsub.f32 %v3889, %v4075
      %v4077 = vand.u32 %v4076, 4294901760
      %v4078 = vsub.f32 %v4076, %v4077
      %v4079 = vand.u32 %v4078, 4294901760
      %4080 = vmatpush1.msra.mxu0 %v4079
      %4081 = vmatprep.subr.mxu0 0.0
      %v4082 = vand.u32 %v3888, 4294901760
      %v4083 = vsub.f32 %v3888, %v4082
      %v4084 = vand.u32 %v4083, 4294901760
      %v4085 = vsub.f32 %v4083, %v4084
      %v4086 = vand.u32 %v4085, 4294901760
      %4087 = vmatpush1.msra.mxu0 %v4086
      %4088 = vmatprep.subr.mxu0 0.0
      %v4089 = vand.u32 %v3887, 4294901760
      %v4090 = vsub.f32 %v3887, %v4089
      %v4091 = vand.u32 %v4090, 4294901760
      %v4092 = vsub.f32 %v4090, %v4091
      %v4093 = vand.u32 %v4092, 4294901760
      %4094 = vmatpush1.msra.mxu0 %v4093
      %4095 = vmatprep.subr.mxu0 0.0
      %v4096 = vand.u32 %v3886, 4294901760
      %v4097 = vsub.f32 %v3886, %v4096
      %v4098 = vand.u32 %v4097, 4294901760
      %v4099 = vsub.f32 %v4097, %v4098
      %v4100 = vand.u32 %v4099, 4294901760
      %4101 = vmatpush1.msra.mxu0 %v4100
      %4102 = vmatprep.subr.mxu0 0.0
      %v4103 = vand.u32 %v3885, 4294901760
      %v4104 = vsub.f32 %v3885, %v4103
      %v4105 = vand.u32 %v4104, 4294901760
      %v4106 = vsub.f32 %v4104, %v4105
      %v4107 = vand.u32 %v4106, 4294901760
      %4108 = vmatpush1.msra.mxu0 %v4107
      %4109 = vmatprep.subr.mxu0 0.0
      %v4110 = vand.u32 %v3884, 4294901760
      %v4111 = vsub.f32 %v3884, %v4110
      %v4112 = vand.u32 %v4111, 4294901760
      %v4113 = vsub.f32 %v4111, %v4112
      %v4114 = vand.u32 %v4113, 4294901760
      %4115 = vmatpush1.msra.mxu0 %v4114
      %4116 = vmatprep.subr.mxu0 0.0
      %v4117 = vand.u32 %v3883, 4294901760
      %v4118 = vsub.f32 %v3883, %v4117
      %v4119 = vand.u32 %v4118, 4294901760
      %v4120 = vsub.f32 %v4118, %v4119
      %v4121 = vand.u32 %v4120, 4294901760
      %4122 = vmatpush1.msra.mxu0 %v4121
      %4123 = vmatprep.subr.mxu0 0.0
      %v4124 = vand.u32 %v3882, 4294901760
      %v4125 = vsub.f32 %v3882, %v4124
      %v4126 = vand.u32 %v4125, 4294901760
      %v4127 = vsub.f32 %v4125, %v4126
      %v4128 = vand.u32 %v4127, 4294901760
      %4129 = vmatpush1.msra.mxu0 %v4128
      %4130 = vmatprep.subr.mxu0 0.0
      %v4131 = vand.u32 %v3881, 4294901760
      %v4132 = vsub.f32 %v3881, %v4131
      %v4133 = vand.u32 %v4132, 4294901760
      %v4134 = vsub.f32 %v4132, %v4133
      %v4135 = vand.u32 %v4134, 4294901760
      %4136 = vmatpush1.msra.mxu0 %v4135
      %4137 = vmatprep.subr.mxu0 0.0
      %4138 = vmatpush2.msra.mxu0 0.0
      %4139 = vmatprep.subr.mxu0 0.0
      %4140 = vmatpush2.msra.mxu0 0.0
      %4141 = vmatprep.subr.mxu0 0.0
      %4142 = vmatpush2.msra.mxu0 0.0
      %4143 = vmatprep.subr.mxu0 0.0
      %4144 = vmatpush2.msra.mxu0 0.0
      %4145 = vmatprep.subr.mxu0 0.0
      %4146 = vmatpush2.msra.mxu0 0.0
      %4147 = vmatprep.subr.mxu0 0.0
      %4148 = vmatpush2.msra.mxu0 0.0
      %4149 = vmatprep.subr.mxu0 0.0
      %4150 = vmatpush2.msra.mxu0 0.0
      %4151 = vmatprep.subr.mxu0 0.0
      %4152 = vmatpush2.msra.mxu0 0.0
      %4153 = vmatprep.subr.mxu0 0.0
      %4154 = vmatpush2.msra.mxu0 0.0
      %4155 = vmatprep.subr.mxu0 0.0
      %4156 = vmatpush2.msra.mxu0 0.0
      %4157 = vmatprep.subr.mxu0 0.0
      %4158 = vmatpush2.msra.mxu0 0.0
      %4159 = vmatprep.subr.mxu0 0.0
      %4160 = vmatpush2.msra.mxu0 0.0
      %4161 = vmatprep.subr.mxu0 0.0
      %4162 = vmatpush2.msra.mxu0 0.0
      %4163 = vmatprep.subr.mxu0 0.0
      %4164 = vmatpush2.msra.mxu0 0.0
      %4165 = vmatprep.subr.mxu0 0.0
      %4166 = vmatpush2.msra.mxu0 0.0
      %4167 = vmatprep.subr.mxu0 0.0
      %4168 = vmatpush2.msra.mxu0 0.0
      %4169 = vmatprep.mubr.f32.mxu0 0.0
      %v4170 = vand.u32 %v3877, 4294901760
      %4171 = vmatmul.mubr.f32.gmra.mxu0 %v4170
      %v4172 = vpop.f32.mrf.mxu0
      %v4173 = vadd.f32 %v3992, %v4172
      %v4174 = vpop.f32.mrf.mxu0
      %4175 = vmatprep.mubr.f32.mxu0 0.0
      %v4176 = vand.u32 %v3878, 4294901760
      %4177 = vmatmul.mubr.f32.gmra.mxu0 %v4176
      %v4178 = vpop.f32.mrf.mxu0
      %v4179 = vadd.f32 %v4002, %v4178
      %v4180 = vpop.f32.mrf.mxu0
      %4181 = vmatprep.mubr.f32.mxu0 0.0
      %v4182 = vand.u32 %v3879, 4294901760
      %4183 = vmatmul.mubr.f32.gmra.mxu0 %v4182
      %v4184 = vpop.f32.mrf.mxu0
      %v4185 = vadd.f32 %v4012, %v4184
      %v4186 = vpop.f32.mrf.mxu0
      %4187 = vmatprep.mubr.f32.mxu0 0.0
      %v4188 = vand.u32 %v3880, 4294901760
      %4189 = vmatmul.mubr.f32.gmra.mxu0 %v4188
      %v4190 = vpop.f32.mrf.mxu0
      %v4191 = vadd.f32 %v4022, %v4190
      %v4192 = vpop.f32.mrf.mxu0
      %4193 = vdwg.mxu0
      %4194 = vmatprep.subr.mxu0 0.0
      %v4195 = vand.u32 %v3896, 4294901760
      %v4196 = vsub.f32 %v3896, %v4195
      %4197 = vmatpush1.msra.mxu0 %v4196
      %4198 = vmatprep.subr.mxu0 0.0
      %v4199 = vand.u32 %v3895, 4294901760
      %v4200 = vsub.f32 %v3895, %v4199
      %4201 = vmatpush1.msra.mxu0 %v4200
      %4202 = vmatprep.subr.mxu0 0.0
      %v4203 = vand.u32 %v3894, 4294901760
      %v4204 = vsub.f32 %v3894, %v4203
      %4205 = vmatpush1.msra.mxu0 %v4204
      %4206 = vmatprep.subr.mxu0 0.0
      %v4207 = vand.u32 %v3893, 4294901760
      %v4208 = vsub.f32 %v3893, %v4207
      %4209 = vmatpush1.msra.mxu0 %v4208
      %4210 = vmatprep.subr.mxu0 0.0
      %v4211 = vand.u32 %v3892, 4294901760
      %v4212 = vsub.f32 %v3892, %v4211
      %4213 = vmatpush1.msra.mxu0 %v4212
      %4214 = vmatprep.subr.mxu0 0.0
      %v4215 = vand.u32 %v3891, 4294901760
      %v4216 = vsub.f32 %v3891, %v4215
      %4217 = vmatpush1.msra.mxu0 %v4216
      %4218 = vmatprep.subr.mxu0 0.0
      %v4219 = vand.u32 %v3890, 4294901760
      %v4220 = vsub.f32 %v3890, %v4219
      %4221 = vmatpush1.msra.mxu0 %v4220
      %4222 = vmatprep.subr.mxu0 0.0
      %v4223 = vand.u32 %v3889, 4294901760
      %v4224 = vsub.f32 %v3889, %v4223
      %4225 = vmatpush1.msra.mxu0 %v4224
      %4226 = vmatprep.subr.mxu0 0.0
      %v4227 = vand.u32 %v3888, 4294901760
      %v4228 = vsub.f32 %v3888, %v4227
      %4229 = vmatpush1.msra.mxu0 %v4228
      %4230 = vmatprep.subr.mxu0 0.0
      %v4231 = vand.u32 %v3887, 4294901760
      %v4232 = vsub.f32 %v3887, %v4231
      %4233 = vmatpush1.msra.mxu0 %v4232
      %4234 = vmatprep.subr.mxu0 0.0
      %v4235 = vand.u32 %v3886, 4294901760
      %v4236 = vsub.f32 %v3886, %v4235
      %4237 = vmatpush1.msra.mxu0 %v4236
      %4238 = vmatprep.subr.mxu0 0.0
      %v4239 = vand.u32 %v3885, 4294901760
      %v4240 = vsub.f32 %v3885, %v4239
      %4241 = vmatpush1.msra.mxu0 %v4240
      %4242 = vmatprep.subr.mxu0 0.0
      %v4243 = vand.u32 %v3884, 4294901760
      %v4244 = vsub.f32 %v3884, %v4243
      %4245 = vmatpush1.msra.mxu0 %v4244
      %4246 = vmatprep.subr.mxu0 0.0
      %v4247 = vand.u32 %v3883, 4294901760
      %v4248 = vsub.f32 %v3883, %v4247
      %4249 = vmatpush1.msra.mxu0 %v4248
      %4250 = vmatprep.subr.mxu0 0.0
      %v4251 = vand.u32 %v3882, 4294901760
      %v4252 = vsub.f32 %v3882, %v4251
      %4253 = vmatpush1.msra.mxu0 %v4252
      %4254 = vmatprep.subr.mxu0 0.0
      %v4255 = vand.u32 %v3881, 4294901760
      %v4256 = vsub.f32 %v3881, %v4255
      %4257 = vmatpush1.msra.mxu0 %v4256
      %4258 = vmatprep.subr.mxu0 0.0
      %4259 = vmatpush2.msra.mxu0 0.0
      %4260 = vmatprep.subr.mxu0 0.0
      %4261 = vmatpush2.msra.mxu0 0.0
      %4262 = vmatprep.subr.mxu0 0.0
      %4263 = vmatpush2.msra.mxu0 0.0
      %4264 = vmatprep.subr.mxu0 0.0
      %4265 = vmatpush2.msra.mxu0 0.0
      %4266 = vmatprep.subr.mxu0 0.0
      %4267 = vmatpush2.msra.mxu0 0.0
      %4268 = vmatprep.subr.mxu0 0.0
      %4269 = vmatpush2.msra.mxu0 0.0
      %4270 = vmatprep.subr.mxu0 0.0
      %4271 = vmatpush2.msra.mxu0 0.0
      %4272 = vmatprep.subr.mxu0 0.0
      %4273 = vmatpush2.msra.mxu0 0.0
      %4274 = vmatprep.subr.mxu0 0.0
      %4275 = vmatpush2.msra.mxu0 0.0
      %4276 = vmatprep.subr.mxu0 0.0
      %4277 = vmatpush2.msra.mxu0 0.0
      %4278 = vmatprep.subr.mxu0 0.0
      %4279 = vmatpush2.msra.mxu0 0.0
      %4280 = vmatprep.subr.mxu0 0.0
      %4281 = vmatpush2.msra.mxu0 0.0
      %4282 = vmatprep.subr.mxu0 0.0
      %4283 = vmatpush2.msra.mxu0 0.0
      %4284 = vmatprep.subr.mxu0 0.0
      %4285 = vmatpush2.msra.mxu0 0.0
      %4286 = vmatprep.subr.mxu0 0.0
      %4287 = vmatpush2.msra.mxu0 0.0
      %4288 = vmatprep.subr.mxu0 0.0
      %4289 = vmatpush2.msra.mxu0 0.0
      %4290 = vmatprep.mubr.f32.mxu0 0.0
      %v4291 = vand.u32 %v3877, 4294901760
      %v4292 = vsub.f32 %v3877, %v4291
      %4293 = vmatmul.mubr.f32.gmra.mxu0 %v4292
      %v4294 = vpop.f32.mrf.mxu0
      %v4295 = vadd.f32 %v4173, %v4294
      %v4296 = vpop.f32.mrf.mxu0
      %4297 = vmatprep.mubr.f32.mxu0 0.0
      %v4298 = vand.u32 %v3878, 4294901760
      %v4299 = vsub.f32 %v3878, %v4298
      %4300 = vmatmul.mubr.f32.gmra.mxu0 %v4299
      %v4301 = vpop.f32.mrf.mxu0
      %v4302 = vadd.f32 %v4179, %v4301
      %v4303 = vpop.f32.mrf.mxu0
      %4304 = vmatprep.mubr.f32.mxu0 0.0
      %v4305 = vand.u32 %v3879, 4294901760
      %v4306 = vsub.f32 %v3879, %v4305
      %4307 = vmatmul.mubr.f32.gmra.mxu0 %v4306
      %v4308 = vpop.f32.mrf.mxu0
      %v4309 = vadd.f32 %v4185, %v4308
      %v4310 = vpop.f32.mrf.mxu0
      %4311 = vmatprep.mubr.f32.mxu0 0.0
      %v4312 = vand.u32 %v3880, 4294901760
      %v4313 = vsub.f32 %v3880, %v4312
      %4314 = vmatmul.mubr.f32.gmra.mxu0 %v4313
      %v4315 = vpop.f32.mrf.mxu0
      %v4316 = vadd.f32 %v4191, %v4315
      %v4317 = vpop.f32.mrf.mxu0
      %4318 = vdwg.mxu0
      %4319 = vmatprep.subr.mxu0 0.0
      %v4320 = vand.u32 %v3896, 4294901760
      %4321 = vmatpush1.msra.mxu0 %v4320
      %4322 = vmatprep.subr.mxu0 0.0
      %v4323 = vand.u32 %v3895, 4294901760
      %4324 = vmatpush1.msra.mxu0 %v4323
      %4325 = vmatprep.subr.mxu0 0.0
      %v4326 = vand.u32 %v3894, 4294901760
      %4327 = vmatpush1.msra.mxu0 %v4326
      %4328 = vmatprep.subr.mxu0 0.0
      %v4329 = vand.u32 %v3893, 4294901760
      %4330 = vmatpush1.msra.mxu0 %v4329
      %4331 = vmatprep.subr.mxu0 0.0
      %v4332 = vand.u32 %v3892, 4294901760
      %4333 = vmatpush1.msra.mxu0 %v4332
      %4334 = vmatprep.subr.mxu0 0.0
      %v4335 = vand.u32 %v3891, 4294901760
      %4336 = vmatpush1.msra.mxu0 %v4335
      %4337 = vmatprep.subr.mxu0 0.0
      %v4338 = vand.u32 %v3890, 4294901760
      %4339 = vmatpush1.msra.mxu0 %v4338
      %4340 = vmatprep.subr.mxu0 0.0
      %v4341 = vand.u32 %v3889, 4294901760
      %4342 = vmatpush1.msra.mxu0 %v4341
      %4343 = vmatprep.subr.mxu0 0.0
      %v4344 = vand.u32 %v3888, 4294901760
      %4345 = vmatpush1.msra.mxu0 %v4344
      %4346 = vmatprep.subr.mxu0 0.0
      %v4347 = vand.u32 %v3887, 4294901760
      %4348 = vmatpush1.msra.mxu0 %v4347
      %4349 = vmatprep.subr.mxu0 0.0
      %v4350 = vand.u32 %v3886, 4294901760
      %4351 = vmatpush1.msra.mxu0 %v4350
      %4352 = vmatprep.subr.mxu0 0.0
      %v4353 = vand.u32 %v3885, 4294901760
      %4354 = vmatpush1.msra.mxu0 %v4353
      %4355 = vmatprep.subr.mxu0 0.0
      %v4356 = vand.u32 %v3884, 4294901760
      %4357 = vmatpush1.msra.mxu0 %v4356
      %4358 = vmatprep.subr.mxu0 0.0
      %v4359 = vand.u32 %v3883, 4294901760
      %4360 = vmatpush1.msra.mxu0 %v4359
      %4361 = vmatprep.subr.mxu0 0.0
      %v4362 = vand.u32 %v3882, 4294901760
      %4363 = vmatpush1.msra.mxu0 %v4362
      %4364 = vmatprep.subr.mxu0 0.0
      %v4365 = vand.u32 %v3881, 4294901760
      %4366 = vmatpush1.msra.mxu0 %v4365
      %4367 = vmatprep.subr.mxu0 0.0
      %4368 = vmatpush2.msra.mxu0 0.0
      %4369 = vmatprep.subr.mxu0 0.0
      %4370 = vmatpush2.msra.mxu0 0.0
      %4371 = vmatprep.subr.mxu0 0.0
      %4372 = vmatpush2.msra.mxu0 0.0
      %4373 = vmatprep.subr.mxu0 0.0
      %4374 = vmatpush2.msra.mxu0 0.0
      %4375 = vmatprep.subr.mxu0 0.0
      %4376 = vmatpush2.msra.mxu0 0.0
      %4377 = vmatprep.subr.mxu0 0.0
      %4378 = vmatpush2.msra.mxu0 0.0
      %4379 = vmatprep.subr.mxu0 0.0
      %4380 = vmatpush2.msra.mxu0 0.0
      %4381 = vmatprep.subr.mxu0 0.0
      %4382 = vmatpush2.msra.mxu0 0.0
      %4383 = vmatprep.subr.mxu0 0.0
      %4384 = vmatpush2.msra.mxu0 0.0
      %4385 = vmatprep.subr.mxu0 0.0
      %4386 = vmatpush2.msra.mxu0 0.0
      %4387 = vmatprep.subr.mxu0 0.0
      %4388 = vmatpush2.msra.mxu0 0.0
      %4389 = vmatprep.subr.mxu0 0.0
      %4390 = vmatpush2.msra.mxu0 0.0
      %4391 = vmatprep.subr.mxu0 0.0
      %4392 = vmatpush2.msra.mxu0 0.0
      %4393 = vmatprep.subr.mxu0 0.0
      %4394 = vmatpush2.msra.mxu0 0.0
      %4395 = vmatprep.subr.mxu0 0.0
      %4396 = vmatpush2.msra.mxu0 0.0
      %4397 = vmatprep.subr.mxu0 0.0
      %4398 = vmatpush2.msra.mxu0 0.0
      %4399 = vmatprep.mubr.f32.mxu0 0.0
      %v4400 = vand.u32 %v3877, 4294901760
      %v4401 = vsub.f32 %v3877, %v4400
      %v4402 = vand.u32 %v4401, 4294901760
      %4403 = vmatmul.mubr.f32.gmra.mxu0 %v4402
      %v4404 = vpop.f32.mrf.mxu0
      %v4405 = vadd.f32 %v4295, %v4404
      %v4406 = vpop.f32.mrf.mxu0
      %4407 = vmatprep.mubr.f32.mxu0 0.0
      %v4408 = vand.u32 %v3878, 4294901760
      %v4409 = vsub.f32 %v3878, %v4408
      %v4410 = vand.u32 %v4409, 4294901760
      %4411 = vmatmul.mubr.f32.gmra.mxu0 %v4410
      %v4412 = vpop.f32.mrf.mxu0
      %v4413 = vadd.f32 %v4302, %v4412
      %v4414 = vpop.f32.mrf.mxu0
      %4415 = vmatprep.mubr.f32.mxu0 0.0
      %v4416 = vand.u32 %v3879, 4294901760
      %v4417 = vsub.f32 %v3879, %v4416
      %v4418 = vand.u32 %v4417, 4294901760
      %4419 = vmatmul.mubr.f32.gmra.mxu0 %v4418
      %v4420 = vpop.f32.mrf.mxu0
      %v4421 = vadd.f32 %v4309, %v4420
      %v4422 = vpop.f32.mrf.mxu0
      %4423 = vmatprep.mubr.f32.mxu0 0.0
      %v4424 = vand.u32 %v3880, 4294901760
      %v4425 = vsub.f32 %v3880, %v4424
      %v4426 = vand.u32 %v4425, 4294901760
      %4427 = vmatmul.mubr.f32.gmra.mxu0 %v4426
      %v4428 = vpop.f32.mrf.mxu0
      %v4429 = vadd.f32 %v4316, %v4428
      %v4430 = vpop.f32.mrf.mxu0
      %4431 = vdwg.mxu0
      %4432 = vmatprep.subr.mxu0 0.0
      %v4433 = vand.u32 %v3896, 4294901760
      %v4434 = vsub.f32 %v3896, %v4433
      %v4435 = vand.u32 %v4434, 4294901760
      %4436 = vmatpush1.msra.mxu0 %v4435
      %4437 = vmatprep.subr.mxu0 0.0
      %v4438 = vand.u32 %v3895, 4294901760
      %v4439 = vsub.f32 %v3895, %v4438
      %v4440 = vand.u32 %v4439, 4294901760
      %4441 = vmatpush1.msra.mxu0 %v4440
      %4442 = vmatprep.subr.mxu0 0.0
      %v4443 = vand.u32 %v3894, 4294901760
      %v4444 = vsub.f32 %v3894, %v4443
      %v4445 = vand.u32 %v4444, 4294901760
      %4446 = vmatpush1.msra.mxu0 %v4445
      %4447 = vmatprep.subr.mxu0 0.0
      %v4448 = vand.u32 %v3893, 4294901760
      %v4449 = vsub.f32 %v3893, %v4448
      %v4450 = vand.u32 %v4449, 4294901760
      %4451 = vmatpush1.msra.mxu0 %v4450
      %4452 = vmatprep.subr.mxu0 0.0
      %v4453 = vand.u32 %v3892, 4294901760
      %v4454 = vsub.f32 %v3892, %v4453
      %v4455 = vand.u32 %v4454, 4294901760
      %4456 = vmatpush1.msra.mxu0 %v4455
      %4457 = vmatprep.subr.mxu0 0.0
      %v4458 = vand.u32 %v3891, 4294901760
      %v4459 = vsub.f32 %v3891, %v4458
      %v4460 = vand.u32 %v4459, 4294901760
      %4461 = vmatpush1.msra.mxu0 %v4460
      %4462 = vmatprep.subr.mxu0 0.0
      %v4463 = vand.u32 %v3890, 4294901760
      %v4464 = vsub.f32 %v3890, %v4463
      %v4465 = vand.u32 %v4464, 4294901760
      %4466 = vmatpush1.msra.mxu0 %v4465
      %4467 = vmatprep.subr.mxu0 0.0
      %v4468 = vand.u32 %v3889, 4294901760
      %v4469 = vsub.f32 %v3889, %v4468
      %v4470 = vand.u32 %v4469, 4294901760
      %4471 = vmatpush1.msra.mxu0 %v4470
      %4472 = vmatprep.subr.mxu0 0.0
      %v4473 = vand.u32 %v3888, 4294901760
      %v4474 = vsub.f32 %v3888, %v4473
      %v4475 = vand.u32 %v4474, 4294901760
      %4476 = vmatpush1.msra.mxu0 %v4475
      %4477 = vmatprep.subr.mxu0 0.0
      %v4478 = vand.u32 %v3887, 4294901760
      %v4479 = vsub.f32 %v3887, %v4478
      %v4480 = vand.u32 %v4479, 4294901760
      %4481 = vmatpush1.msra.mxu0 %v4480
      %4482 = vmatprep.subr.mxu0 0.0
      %v4483 = vand.u32 %v3886, 4294901760
      %v4484 = vsub.f32 %v3886, %v4483
      %v4485 = vand.u32 %v4484, 4294901760
      %4486 = vmatpush1.msra.mxu0 %v4485
      %4487 = vmatprep.subr.mxu0 0.0
      %v4488 = vand.u32 %v3885, 4294901760
      %v4489 = vsub.f32 %v3885, %v4488
      %v4490 = vand.u32 %v4489, 4294901760
      %4491 = vmatpush1.msra.mxu0 %v4490
      %4492 = vmatprep.subr.mxu0 0.0
      %v4493 = vand.u32 %v3884, 4294901760
      %v4494 = vsub.f32 %v3884, %v4493
      %v4495 = vand.u32 %v4494, 4294901760
      %4496 = vmatpush1.msra.mxu0 %v4495
      %4497 = vmatprep.subr.mxu0 0.0
      %v4498 = vand.u32 %v3883, 4294901760
      %v4499 = vsub.f32 %v3883, %v4498
      %v4500 = vand.u32 %v4499, 4294901760
      %4501 = vmatpush1.msra.mxu0 %v4500
      %4502 = vmatprep.subr.mxu0 0.0
      %v4503 = vand.u32 %v3882, 4294901760
      %v4504 = vsub.f32 %v3882, %v4503
      %v4505 = vand.u32 %v4504, 4294901760
      %4506 = vmatpush1.msra.mxu0 %v4505
      %4507 = vmatprep.subr.mxu0 0.0
      %v4508 = vand.u32 %v3881, 4294901760
      %v4509 = vsub.f32 %v3881, %v4508
      %v4510 = vand.u32 %v4509, 4294901760
      %4511 = vmatpush1.msra.mxu0 %v4510
      %4512 = vmatprep.subr.mxu0 0.0
      %4513 = vmatpush2.msra.mxu0 0.0
      %4514 = vmatprep.subr.mxu0 0.0
      %4515 = vmatpush2.msra.mxu0 0.0
      %4516 = vmatprep.subr.mxu0 0.0
      %4517 = vmatpush2.msra.mxu0 0.0
      %4518 = vmatprep.subr.mxu0 0.0
      %4519 = vmatpush2.msra.mxu0 0.0
      %4520 = vmatprep.subr.mxu0 0.0
      %4521 = vmatpush2.msra.mxu0 0.0
      %4522 = vmatprep.subr.mxu0 0.0
      %4523 = vmatpush2.msra.mxu0 0.0
      %4524 = vmatprep.subr.mxu0 0.0
      %4525 = vmatpush2.msra.mxu0 0.0
      %4526 = vmatprep.subr.mxu0 0.0
      %4527 = vmatpush2.msra.mxu0 0.0
      %4528 = vmatprep.subr.mxu0 0.0
      %4529 = vmatpush2.msra.mxu0 0.0
      %4530 = vmatprep.subr.mxu0 0.0
      %4531 = vmatpush2.msra.mxu0 0.0
      %4532 = vmatprep.subr.mxu0 0.0
      %4533 = vmatpush2.msra.mxu0 0.0
      %4534 = vmatprep.subr.mxu0 0.0
      %4535 = vmatpush2.msra.mxu0 0.0
      %4536 = vmatprep.subr.mxu0 0.0
      %4537 = vmatpush2.msra.mxu0 0.0
      %4538 = vmatprep.subr.mxu0 0.0
      %4539 = vmatpush2.msra.mxu0 0.0
      %4540 = vmatprep.subr.mxu0 0.0
      %4541 = vmatpush2.msra.mxu0 0.0
      %4542 = vmatprep.subr.mxu0 0.0
      %4543 = vmatpush2.msra.mxu0 0.0
      %4544 = vmatprep.mubr.f32.mxu0 0.0
      %v4545 = vand.u32 %v3877, 4294901760
      %4546 = vmatmul.mubr.f32.gmra.mxu0 %v4545
      %v4547 = vpop.f32.mrf.mxu0
      %v4548 = vadd.f32 %v4405, %v4547
      %v4549 = vpop.f32.mrf.mxu0
      %4550 = vmatprep.mubr.f32.mxu0 0.0
      %v4551 = vand.u32 %v3878, 4294901760
      %4552 = vmatmul.mubr.f32.gmra.mxu0 %v4551
      %v4553 = vpop.f32.mrf.mxu0
      %v4554 = vadd.f32 %v4413, %v4553
      %v4555 = vpop.f32.mrf.mxu0
      %4556 = vmatprep.mubr.f32.mxu0 0.0
      %v4557 = vand.u32 %v3879, 4294901760
      %4558 = vmatmul.mubr.f32.gmra.mxu0 %v4557
      %v4559 = vpop.f32.mrf.mxu0
      %v4560 = vadd.f32 %v4421, %v4559
      %v4561 = vpop.f32.mrf.mxu0
      %4562 = vmatprep.mubr.f32.mxu0 0.0
      %v4563 = vand.u32 %v3880, 4294901760
      %4564 = vmatmul.mubr.f32.gmra.mxu0 %v4563
      %v4565 = vpop.f32.mrf.mxu0
      %v4566 = vadd.f32 %v4429, %v4565
      %v4567 = vpop.f32.mrf.mxu0
      %4568 = vdwg.mxu0
      %4569 = vmatprep.subr.mxu0 0.0
      %v4570 = vand.u32 %v3896, 4294901760
      %4571 = vmatpush1.msra.mxu0 %v4570
      %4572 = vmatprep.subr.mxu0 0.0
      %v4573 = vand.u32 %v3895, 4294901760
      %4574 = vmatpush1.msra.mxu0 %v4573
      %4575 = vmatprep.subr.mxu0 0.0
      %v4576 = vand.u32 %v3894, 4294901760
      %4577 = vmatpush1.msra.mxu0 %v4576
      %4578 = vmatprep.subr.mxu0 0.0
      %v4579 = vand.u32 %v3893, 4294901760
      %4580 = vmatpush1.msra.mxu0 %v4579
      %4581 = vmatprep.subr.mxu0 0.0
      %v4582 = vand.u32 %v3892, 4294901760
      %4583 = vmatpush1.msra.mxu0 %v4582
      %4584 = vmatprep.subr.mxu0 0.0
      %v4585 = vand.u32 %v3891, 4294901760
      %4586 = vmatpush1.msra.mxu0 %v4585
      %4587 = vmatprep.subr.mxu0 0.0
      %v4588 = vand.u32 %v3890, 4294901760
      %4589 = vmatpush1.msra.mxu0 %v4588
      %4590 = vmatprep.subr.mxu0 0.0
      %v4591 = vand.u32 %v3889, 4294901760
      %4592 = vmatpush1.msra.mxu0 %v4591
      %4593 = vmatprep.subr.mxu0 0.0
      %v4594 = vand.u32 %v3888, 4294901760
      %4595 = vmatpush1.msra.mxu0 %v4594
      %4596 = vmatprep.subr.mxu0 0.0
      %v4597 = vand.u32 %v3887, 4294901760
      %4598 = vmatpush1.msra.mxu0 %v4597
      %4599 = vmatprep.subr.mxu0 0.0
      %v4600 = vand.u32 %v3886, 4294901760
      %4601 = vmatpush1.msra.mxu0 %v4600
      %4602 = vmatprep.subr.mxu0 0.0
      %v4603 = vand.u32 %v3885, 4294901760
      %4604 = vmatpush1.msra.mxu0 %v4603
      %4605 = vmatprep.subr.mxu0 0.0
      %v4606 = vand.u32 %v3884, 4294901760
      %4607 = vmatpush1.msra.mxu0 %v4606
      %4608 = vmatprep.subr.mxu0 0.0
      %v4609 = vand.u32 %v3883, 4294901760
      %4610 = vmatpush1.msra.mxu0 %v4609
      %4611 = vmatprep.subr.mxu0 0.0
      %v4612 = vand.u32 %v3882, 4294901760
      %4613 = vmatpush1.msra.mxu0 %v4612
      %4614 = vmatprep.subr.mxu0 0.0
      %v4615 = vand.u32 %v3881, 4294901760
      %4616 = vmatpush1.msra.mxu0 %v4615
      %4617 = vmatprep.subr.mxu0 0.0
      %4618 = vmatpush2.msra.mxu0 0.0
      %4619 = vmatprep.subr.mxu0 0.0
      %4620 = vmatpush2.msra.mxu0 0.0
      %4621 = vmatprep.subr.mxu0 0.0
      %4622 = vmatpush2.msra.mxu0 0.0
      %4623 = vmatprep.subr.mxu0 0.0
      %4624 = vmatpush2.msra.mxu0 0.0
      %4625 = vmatprep.subr.mxu0 0.0
      %4626 = vmatpush2.msra.mxu0 0.0
      %4627 = vmatprep.subr.mxu0 0.0
      %4628 = vmatpush2.msra.mxu0 0.0
      %4629 = vmatprep.subr.mxu0 0.0
      %4630 = vmatpush2.msra.mxu0 0.0
      %4631 = vmatprep.subr.mxu0 0.0
      %4632 = vmatpush2.msra.mxu0 0.0
      %4633 = vmatprep.subr.mxu0 0.0
      %4634 = vmatpush2.msra.mxu0 0.0
      %4635 = vmatprep.subr.mxu0 0.0
      %4636 = vmatpush2.msra.mxu0 0.0
      %4637 = vmatprep.subr.mxu0 0.0
      %4638 = vmatpush2.msra.mxu0 0.0
      %4639 = vmatprep.subr.mxu0 0.0
      %4640 = vmatpush2.msra.mxu0 0.0
      %4641 = vmatprep.subr.mxu0 0.0
      %4642 = vmatpush2.msra.mxu0 0.0
      %4643 = vmatprep.subr.mxu0 0.0
      %4644 = vmatpush2.msra.mxu0 0.0
      %4645 = vmatprep.subr.mxu0 0.0
      %4646 = vmatpush2.msra.mxu0 0.0
      %4647 = vmatprep.subr.mxu0 0.0
      %4648 = vmatpush2.msra.mxu0 0.0
      %4649 = vmatprep.mubr.f32.mxu0 0.0
      %v4650 = vand.u32 %v3877, 4294901760
      %4651 = vmatmul.mubr.f32.gmra.mxu0 %v4650
      %v4652 = vpop.f32.mrf.mxu0
      %v4653 = vadd.f32 %v4548, %v4652
      %v4654 = vpop.f32.mrf.mxu0
      %4655 = vmatprep.mubr.f32.mxu0 0.0
      %v4656 = vand.u32 %v3878, 4294901760
      %4657 = vmatmul.mubr.f32.gmra.mxu0 %v4656
      %v4658 = vpop.f32.mrf.mxu0
      %v4659 = vadd.f32 %v4554, %v4658
      %v4660 = vpop.f32.mrf.mxu0
      %4661 = vmatprep.mubr.f32.mxu0 0.0
      %v4662 = vand.u32 %v3879, 4294901760
      %4663 = vmatmul.mubr.f32.gmra.mxu0 %v4662
      %v4664 = vpop.f32.mrf.mxu0
      %v4665 = vadd.f32 %v4560, %v4664
      %v4666 = vpop.f32.mrf.mxu0
      %4667 = vmatprep.mubr.f32.mxu0 0.0
      %v4668 = vand.u32 %v3880, 4294901760
      %4669 = vmatmul.mubr.f32.gmra.mxu0 %v4668
      %v4670 = vpop.f32.mrf.mxu0
      %v4671 = vadd.f32 %v4566, %v4670
      %v4672 = vpop.f32.mrf.mxu0
      %4673 = vdwg.mxu0
      %v4674 = vmax.f32 %v4653, 0.0
      %v4675 = vmax.f32 %v4659, 0.0
      %v4676 = vmax.f32 %v4665, 0.0
      %v4677 = vmax.f32 %v4671, 0.0
      %v4678 = vld [vmem:[%s9] sm:$0xff]
      %v4679 = vld [vmem:[%s9 + $0x8] sm:$0xff]
      %v4680 = vld [vmem:[%s9 + $0x10] sm:$0xff]
      %v4681 = vld [vmem:[%s9 + $0x18] sm:$0xff]
      %v4682 = vld [vmem:[%s9 + $0x20] sm:$0xff]
      %v4683 = vld [vmem:[%s9 + $0x28] sm:$0xff]
      %v4684 = vld [vmem:[%s9 + $0x30] sm:$0xff]
      %v4685 = vld [vmem:[%s9 + $0x38] sm:$0xff]
      %v4686 = vld [vmem:[%s10] sm:$0x1]
      %v4688 = vlaneseq
      %v4689 = vshrl.u32 %v4688, 7
      %v4690 = vsub.s32 0, %v4689
      %v4691 = vrot.slane %v4686, %v4690
      %vm4693 = vcmask 523264
      %v4695 = vsel %vm4693, %v4674, 0
      %v4698 = vsel %vm4693, %v4675, 0
      %v4701 = vsel %vm4693, %v4676, 0
      %v4704 = vsel %vm4693, %v4677, 0
      %4706 = vmatprep.subr.mxu0 0.0
      %4707 = vmatpush1.msra.mxu0 0.0
      %4708 = vmatprep.subr.mxu0 0.0
      %4709 = vmatpush1.msra.mxu0 0.0
      %4710 = vmatprep.subr.mxu0 0.0
      %4711 = vmatpush1.msra.mxu0 0.0
      %4712 = vmatprep.subr.mxu0 0.0
      %4713 = vmatpush1.msra.mxu0 0.0
      %4714 = vmatprep.subr.mxu0 0.0
      %4715 = vmatpush1.msra.mxu0 0.0
      %4716 = vmatprep.subr.mxu0 0.0
      %4717 = vmatpush1.msra.mxu0 0.0
      %4718 = vmatprep.subr.mxu0 0.0
      %4719 = vmatpush1.msra.mxu0 0.0
      %4720 = vmatprep.subr.mxu0 0.0
      %4721 = vmatpush1.msra.mxu0 0.0
      %4722 = vmatprep.subr.mxu0 0.0
      %v4723 = vand.u32 %v4685, 4294901760
      %4724 = vmatpush1.msra.mxu0 %v4723
      %4725 = vmatprep.subr.mxu0 0.0
      %v4726 = vand.u32 %v4684, 4294901760
      %4727 = vmatpush1.msra.mxu0 %v4726
      %4728 = vmatprep.subr.mxu0 0.0
      %v4729 = vand.u32 %v4683, 4294901760
      %4730 = vmatpush1.msra.mxu0 %v4729
      %4731 = vmatprep.subr.mxu0 0.0
      %v4732 = vand.u32 %v4682, 4294901760
      %4733 = vmatpush1.msra.mxu0 %v4732
      %4734 = vmatprep.subr.mxu0 0.0
      %v4735 = vand.u32 %v4681, 4294901760
      %4736 = vmatpush1.msra.mxu0 %v4735
      %4737 = vmatprep.subr.mxu0 0.0
      %v4738 = vand.u32 %v4680, 4294901760
      %4739 = vmatpush1.msra.mxu0 %v4738
      %4740 = vmatprep.subr.mxu0 0.0
      %v4741 = vand.u32 %v4679, 4294901760
      %4742 = vmatpush1.msra.mxu0 %v4741
      %4743 = vmatprep.subr.mxu0 0.0
      %v4744 = vand.u32 %v4678, 4294901760
      %4745 = vmatpush1.msra.mxu0 %v4744
      %4746 = vmatprep.subr.mxu0 0.0
      %4747 = vmatpush2.msra.mxu0 0.0
      %4748 = vmatprep.subr.mxu0 0.0
      %4749 = vmatpush2.msra.mxu0 0.0
      %4750 = vmatprep.subr.mxu0 0.0
      %4751 = vmatpush2.msra.mxu0 0.0
      %4752 = vmatprep.subr.mxu0 0.0
      %4753 = vmatpush2.msra.mxu0 0.0
      %4754 = vmatprep.subr.mxu0 0.0
      %4755 = vmatpush2.msra.mxu0 0.0
      %4756 = vmatprep.subr.mxu0 0.0
      %4757 = vmatpush2.msra.mxu0 0.0
      %4758 = vmatprep.subr.mxu0 0.0
      %4759 = vmatpush2.msra.mxu0 0.0
      %4760 = vmatprep.subr.mxu0 0.0
      %4761 = vmatpush2.msra.mxu0 0.0
      %4762 = vmatprep.subr.mxu0 0.0
      %4763 = vmatpush2.msra.mxu0 0.0
      %4764 = vmatprep.subr.mxu0 0.0
      %4765 = vmatpush2.msra.mxu0 0.0
      %4766 = vmatprep.subr.mxu0 0.0
      %4767 = vmatpush2.msra.mxu0 0.0
      %4768 = vmatprep.subr.mxu0 0.0
      %4769 = vmatpush2.msra.mxu0 0.0
      %4770 = vmatprep.subr.mxu0 0.0
      %4771 = vmatpush2.msra.mxu0 0.0
      %4772 = vmatprep.subr.mxu0 0.0
      %4773 = vmatpush2.msra.mxu0 0.0
      %4774 = vmatprep.subr.mxu0 0.0
      %4775 = vmatpush2.msra.mxu0 0.0
      %4776 = vmatprep.subr.mxu0 0.0
      %4777 = vmatpush2.msra.mxu0 0.0
      %4778 = vmatprep.mubr.f32.mxu0 0.0
      %v4779 = vand.u32 %v4695, 4294901760
      %v4780 = vsub.f32 %v4695, %v4779
      %v4781 = vand.u32 %v4780, 4294901760
      %v4782 = vsub.f32 %v4780, %v4781
      %v4783 = vand.u32 %v4782, 4294901760
      %4784 = vmatmul.mubr.f32.gmra.mxu0 %v4783
      %v4785 = vpop.f32.mrf.mxu0
      %v4786 = vadd.f32 %v4691, %v4785
      %v4787 = vpop.f32.mrf.mxu0
      %4788 = vmatprep.mubr.f32.mxu0 0.0
      %v4789 = vand.u32 %v4698, 4294901760
      %v4790 = vsub.f32 %v4698, %v4789
      %v4791 = vand.u32 %v4790, 4294901760
      %v4792 = vsub.f32 %v4790, %v4791
      %v4793 = vand.u32 %v4792, 4294901760
      %4794 = vmatmul.mubr.f32.gmra.mxu0 %v4793
      %v4795 = vpop.f32.mrf.mxu0
      %v4796 = vadd.f32 %v4691, %v4795
      %v4797 = vpop.f32.mrf.mxu0
      %4798 = vmatprep.mubr.f32.mxu0 0.0
      %v4799 = vand.u32 %v4701, 4294901760
      %v4800 = vsub.f32 %v4701, %v4799
      %v4801 = vand.u32 %v4800, 4294901760
      %v4802 = vsub.f32 %v4800, %v4801
      %v4803 = vand.u32 %v4802, 4294901760
      %4804 = vmatmul.mubr.f32.gmra.mxu0 %v4803
      %v4805 = vpop.f32.mrf.mxu0
      %v4806 = vadd.f32 %v4691, %v4805
      %v4807 = vpop.f32.mrf.mxu0
      %4808 = vmatprep.mubr.f32.mxu0 0.0
      %v4809 = vand.u32 %v4704, 4294901760
      %v4810 = vsub.f32 %v4704, %v4809
      %v4811 = vand.u32 %v4810, 4294901760
      %v4812 = vsub.f32 %v4810, %v4811
      %v4813 = vand.u32 %v4812, 4294901760
      %4814 = vmatmul.mubr.f32.gmra.mxu0 %v4813
      %v4815 = vpop.f32.mrf.mxu0
      %v4816 = vadd.f32 %v4691, %v4815
      %v4817 = vpop.f32.mrf.mxu0
      %4818 = vdwg.mxu0
      %4819 = vmatprep.subr.mxu0 0.0
      %4820 = vmatpush1.msra.mxu0 0.0
      %4821 = vmatprep.subr.mxu0 0.0
      %4822 = vmatpush1.msra.mxu0 0.0
      %4823 = vmatprep.subr.mxu0 0.0
      %4824 = vmatpush1.msra.mxu0 0.0
      %4825 = vmatprep.subr.mxu0 0.0
      %4826 = vmatpush1.msra.mxu0 0.0
      %4827 = vmatprep.subr.mxu0 0.0
      %4828 = vmatpush1.msra.mxu0 0.0
      %4829 = vmatprep.subr.mxu0 0.0
      %4830 = vmatpush1.msra.mxu0 0.0
      %4831 = vmatprep.subr.mxu0 0.0
      %4832 = vmatpush1.msra.mxu0 0.0
      %4833 = vmatprep.subr.mxu0 0.0
      %4834 = vmatpush1.msra.mxu0 0.0
      %4835 = vmatprep.subr.mxu0 0.0
      %v4836 = vand.u32 %v4685, 4294901760
      %v4837 = vsub.f32 %v4685, %v4836
      %v4838 = vand.u32 %v4837, 4294901760
      %v4839 = vsub.f32 %v4837, %v4838
      %v4840 = vand.u32 %v4839, 4294901760
      %4841 = vmatpush1.msra.mxu0 %v4840
      %4842 = vmatprep.subr.mxu0 0.0
      %v4843 = vand.u32 %v4684, 4294901760
      %v4844 = vsub.f32 %v4684, %v4843
      %v4845 = vand.u32 %v4844, 4294901760
      %v4846 = vsub.f32 %v4844, %v4845
      %v4847 = vand.u32 %v4846, 4294901760
      %4848 = vmatpush1.msra.mxu0 %v4847
      %4849 = vmatprep.subr.mxu0 0.0
      %v4850 = vand.u32 %v4683, 4294901760
      %v4851 = vsub.f32 %v4683, %v4850
      %v4852 = vand.u32 %v4851, 4294901760
      %v4853 = vsub.f32 %v4851, %v4852
      %v4854 = vand.u32 %v4853, 4294901760
      %4855 = vmatpush1.msra.mxu0 %v4854
      %4856 = vmatprep.subr.mxu0 0.0
      %v4857 = vand.u32 %v4682, 4294901760
      %v4858 = vsub.f32 %v4682, %v4857
      %v4859 = vand.u32 %v4858, 4294901760
      %v4860 = vsub.f32 %v4858, %v4859
      %v4861 = vand.u32 %v4860, 4294901760
      %4862 = vmatpush1.msra.mxu0 %v4861
      %4863 = vmatprep.subr.mxu0 0.0
      %v4864 = vand.u32 %v4681, 4294901760
      %v4865 = vsub.f32 %v4681, %v4864
      %v4866 = vand.u32 %v4865, 4294901760
      %v4867 = vsub.f32 %v4865, %v4866
      %v4868 = vand.u32 %v4867, 4294901760
      %4869 = vmatpush1.msra.mxu0 %v4868
      %4870 = vmatprep.subr.mxu0 0.0
      %v4871 = vand.u32 %v4680, 4294901760
      %v4872 = vsub.f32 %v4680, %v4871
      %v4873 = vand.u32 %v4872, 4294901760
      %v4874 = vsub.f32 %v4872, %v4873
      %v4875 = vand.u32 %v4874, 4294901760
      %4876 = vmatpush1.msra.mxu0 %v4875
      %4877 = vmatprep.subr.mxu0 0.0
      %v4878 = vand.u32 %v4679, 4294901760
      %v4879 = vsub.f32 %v4679, %v4878
      %v4880 = vand.u32 %v4879, 4294901760
      %v4881 = vsub.f32 %v4879, %v4880
      %v4882 = vand.u32 %v4881, 4294901760
      %4883 = vmatpush1.msra.mxu0 %v4882
      %4884 = vmatprep.subr.mxu0 0.0
      %v4885 = vand.u32 %v4678, 4294901760
      %v4886 = vsub.f32 %v4678, %v4885
      %v4887 = vand.u32 %v4886, 4294901760
      %v4888 = vsub.f32 %v4886, %v4887
      %v4889 = vand.u32 %v4888, 4294901760
      %4890 = vmatpush1.msra.mxu0 %v4889
      %4891 = vmatprep.subr.mxu0 0.0
      %4892 = vmatpush2.msra.mxu0 0.0
      %4893 = vmatprep.subr.mxu0 0.0
      %4894 = vmatpush2.msra.mxu0 0.0
      %4895 = vmatprep.subr.mxu0 0.0
      %4896 = vmatpush2.msra.mxu0 0.0
      %4897 = vmatprep.subr.mxu0 0.0
      %4898 = vmatpush2.msra.mxu0 0.0
      %4899 = vmatprep.subr.mxu0 0.0
      %4900 = vmatpush2.msra.mxu0 0.0
      %4901 = vmatprep.subr.mxu0 0.0
      %4902 = vmatpush2.msra.mxu0 0.0
      %4903 = vmatprep.subr.mxu0 0.0
      %4904 = vmatpush2.msra.mxu0 0.0
      %4905 = vmatprep.subr.mxu0 0.0
      %4906 = vmatpush2.msra.mxu0 0.0
      %4907 = vmatprep.subr.mxu0 0.0
      %4908 = vmatpush2.msra.mxu0 0.0
      %4909 = vmatprep.subr.mxu0 0.0
      %4910 = vmatpush2.msra.mxu0 0.0
      %4911 = vmatprep.subr.mxu0 0.0
      %4912 = vmatpush2.msra.mxu0 0.0
      %4913 = vmatprep.subr.mxu0 0.0
      %4914 = vmatpush2.msra.mxu0 0.0
      %4915 = vmatprep.subr.mxu0 0.0
      %4916 = vmatpush2.msra.mxu0 0.0
      %4917 = vmatprep.subr.mxu0 0.0
      %4918 = vmatpush2.msra.mxu0 0.0
      %4919 = vmatprep.subr.mxu0 0.0
      %4920 = vmatpush2.msra.mxu0 0.0
      %4921 = vmatprep.subr.mxu0 0.0
      %4922 = vmatpush2.msra.mxu0 0.0
      %4923 = vmatprep.mubr.f32.mxu0 0.0
      %v4924 = vand.u32 %v4695, 4294901760
      %4925 = vmatmul.mubr.f32.gmra.mxu0 %v4924
      %v4926 = vpop.f32.mrf.mxu0
      %v4927 = vadd.f32 %v4786, %v4926
      %v4928 = vpop.f32.mrf.mxu0
      %4929 = vmatprep.mubr.f32.mxu0 0.0
      %v4930 = vand.u32 %v4698, 4294901760
      %4931 = vmatmul.mubr.f32.gmra.mxu0 %v4930
      %v4932 = vpop.f32.mrf.mxu0
      %v4933 = vadd.f32 %v4796, %v4932
      %v4934 = vpop.f32.mrf.mxu0
      %4935 = vmatprep.mubr.f32.mxu0 0.0
      %v4936 = vand.u32 %v4701, 4294901760
      %4937 = vmatmul.mubr.f32.gmra.mxu0 %v4936
      %v4938 = vpop.f32.mrf.mxu0
      %v4939 = vadd.f32 %v4806, %v4938
      %v4940 = vpop.f32.mrf.mxu0
      %4941 = vmatprep.mubr.f32.mxu0 0.0
      %v4942 = vand.u32 %v4704, 4294901760
      %4943 = vmatmul.mubr.f32.gmra.mxu0 %v4942
      %v4944 = vpop.f32.mrf.mxu0
      %v4945 = vadd.f32 %v4816, %v4944
      %v4946 = vpop.f32.mrf.mxu0
      %4947 = vdwg.mxu0
      %4948 = vmatprep.subr.mxu0 0.0
      %4949 = vmatpush1.msra.mxu0 0.0
      %4950 = vmatprep.subr.mxu0 0.0
      %4951 = vmatpush1.msra.mxu0 0.0
      %4952 = vmatprep.subr.mxu0 0.0
      %4953 = vmatpush1.msra.mxu0 0.0
      %4954 = vmatprep.subr.mxu0 0.0
      %4955 = vmatpush1.msra.mxu0 0.0
      %4956 = vmatprep.subr.mxu0 0.0
      %4957 = vmatpush1.msra.mxu0 0.0
      %4958 = vmatprep.subr.mxu0 0.0
      %4959 = vmatpush1.msra.mxu0 0.0
      %4960 = vmatprep.subr.mxu0 0.0
      %4961 = vmatpush1.msra.mxu0 0.0
      %4962 = vmatprep.subr.mxu0 0.0
      %4963 = vmatpush1.msra.mxu0 0.0
      %4964 = vmatprep.subr.mxu0 0.0
      %v4965 = vand.u32 %v4685, 4294901760
      %v4966 = vsub.f32 %v4685, %v4965
      %4967 = vmatpush1.msra.mxu0 %v4966
      %4968 = vmatprep.subr.mxu0 0.0
      %v4969 = vand.u32 %v4684, 4294901760
      %v4970 = vsub.f32 %v4684, %v4969
      %4971 = vmatpush1.msra.mxu0 %v4970
      %4972 = vmatprep.subr.mxu0 0.0
      %v4973 = vand.u32 %v4683, 4294901760
      %v4974 = vsub.f32 %v4683, %v4973
      %4975 = vmatpush1.msra.mxu0 %v4974
      %4976 = vmatprep.subr.mxu0 0.0
      %v4977 = vand.u32 %v4682, 4294901760
      %v4978 = vsub.f32 %v4682, %v4977
      %4979 = vmatpush1.msra.mxu0 %v4978
      %4980 = vmatprep.subr.mxu0 0.0
      %v4981 = vand.u32 %v4681, 4294901760
      %v4982 = vsub.f32 %v4681, %v4981
      %4983 = vmatpush1.msra.mxu0 %v4982
      %4984 = vmatprep.subr.mxu0 0.0
      %v4985 = vand.u32 %v4680, 4294901760
      %v4986 = vsub.f32 %v4680, %v4985
      %4987 = vmatpush1.msra.mxu0 %v4986
      %4988 = vmatprep.subr.mxu0 0.0
      %v4989 = vand.u32 %v4679, 4294901760
      %v4990 = vsub.f32 %v4679, %v4989
      %4991 = vmatpush1.msra.mxu0 %v4990
      %4992 = vmatprep.subr.mxu0 0.0
      %v4993 = vand.u32 %v4678, 4294901760
      %v4994 = vsub.f32 %v4678, %v4993
      %4995 = vmatpush1.msra.mxu0 %v4994
      %4996 = vmatprep.subr.mxu0 0.0
      %4997 = vmatpush2.msra.mxu0 0.0
      %4998 = vmatprep.subr.mxu0 0.0
      %4999 = vmatpush2.msra.mxu0 0.0
      %5000 = vmatprep.subr.mxu0 0.0
      %5001 = vmatpush2.msra.mxu0 0.0
      %5002 = vmatprep.subr.mxu0 0.0
      %5003 = vmatpush2.msra.mxu0 0.0
      %5004 = vmatprep.subr.mxu0 0.0
      %5005 = vmatpush2.msra.mxu0 0.0
      %5006 = vmatprep.subr.mxu0 0.0
      %5007 = vmatpush2.msra.mxu0 0.0
      %5008 = vmatprep.subr.mxu0 0.0
      %5009 = vmatpush2.msra.mxu0 0.0
      %5010 = vmatprep.subr.mxu0 0.0
      %5011 = vmatpush2.msra.mxu0 0.0
      %5012 = vmatprep.subr.mxu0 0.0
      %5013 = vmatpush2.msra.mxu0 0.0
      %5014 = vmatprep.subr.mxu0 0.0
      %5015 = vmatpush2.msra.mxu0 0.0
      %5016 = vmatprep.subr.mxu0 0.0
      %5017 = vmatpush2.msra.mxu0 0.0
      %5018 = vmatprep.subr.mxu0 0.0
      %5019 = vmatpush2.msra.mxu0 0.0
      %5020 = vmatprep.subr.mxu0 0.0
      %5021 = vmatpush2.msra.mxu0 0.0
      %5022 = vmatprep.subr.mxu0 0.0
      %5023 = vmatpush2.msra.mxu0 0.0
      %5024 = vmatprep.subr.mxu0 0.0
      %5025 = vmatpush2.msra.mxu0 0.0
      %5026 = vmatprep.subr.mxu0 0.0
      %5027 = vmatpush2.msra.mxu0 0.0
      %5028 = vmatprep.mubr.f32.mxu0 0.0
      %v5029 = vand.u32 %v4695, 4294901760
      %v5030 = vsub.f32 %v4695, %v5029
      %5031 = vmatmul.mubr.f32.gmra.mxu0 %v5030
      %v5032 = vpop.f32.mrf.mxu0
      %v5033 = vadd.f32 %v4927, %v5032
      %v5034 = vpop.f32.mrf.mxu0
      %5035 = vmatprep.mubr.f32.mxu0 0.0
      %v5036 = vand.u32 %v4698, 4294901760
      %v5037 = vsub.f32 %v4698, %v5036
      %5038 = vmatmul.mubr.f32.gmra.mxu0 %v5037
      %v5039 = vpop.f32.mrf.mxu0
      %v5040 = vadd.f32 %v4933, %v5039
      %v5041 = vpop.f32.mrf.mxu0
      %5042 = vmatprep.mubr.f32.mxu0 0.0
      %v5043 = vand.u32 %v4701, 4294901760
      %v5044 = vsub.f32 %v4701, %v5043
      %5045 = vmatmul.mubr.f32.gmra.mxu0 %v5044
      %v5046 = vpop.f32.mrf.mxu0
      %v5047 = vadd.f32 %v4939, %v5046
      %v5048 = vpop.f32.mrf.mxu0
      %5049 = vmatprep.mubr.f32.mxu0 0.0
      %v5050 = vand.u32 %v4704, 4294901760
      %v5051 = vsub.f32 %v4704, %v5050
      %5052 = vmatmul.mubr.f32.gmra.mxu0 %v5051
      %v5053 = vpop.f32.mrf.mxu0
      %v5054 = vadd.f32 %v4945, %v5053
      %v5055 = vpop.f32.mrf.mxu0
      %5056 = vdwg.mxu0
      %5057 = vmatprep.subr.mxu0 0.0
      %5058 = vmatpush1.msra.mxu0 0.0
      %5059 = vmatprep.subr.mxu0 0.0
      %5060 = vmatpush1.msra.mxu0 0.0
      %5061 = vmatprep.subr.mxu0 0.0
      %5062 = vmatpush1.msra.mxu0 0.0
      %5063 = vmatprep.subr.mxu0 0.0
      %5064 = vmatpush1.msra.mxu0 0.0
      %5065 = vmatprep.subr.mxu0 0.0
      %5066 = vmatpush1.msra.mxu0 0.0
      %5067 = vmatprep.subr.mxu0 0.0
      %5068 = vmatpush1.msra.mxu0 0.0
      %5069 = vmatprep.subr.mxu0 0.0
      %5070 = vmatpush1.msra.mxu0 0.0
      %5071 = vmatprep.subr.mxu0 0.0
      %5072 = vmatpush1.msra.mxu0 0.0
      %5073 = vmatprep.subr.mxu0 0.0
      %v5074 = vand.u32 %v4685, 4294901760
      %5075 = vmatpush1.msra.mxu0 %v5074
      %5076 = vmatprep.subr.mxu0 0.0
      %v5077 = vand.u32 %v4684, 4294901760
      %5078 = vmatpush1.msra.mxu0 %v5077
      %5079 = vmatprep.subr.mxu0 0.0
      %v5080 = vand.u32 %v4683, 4294901760
      %5081 = vmatpush1.msra.mxu0 %v5080
      %5082 = vmatprep.subr.mxu0 0.0
      %v5083 = vand.u32 %v4682, 4294901760
      %5084 = vmatpush1.msra.mxu0 %v5083
      %5085 = vmatprep.subr.mxu0 0.0
      %v5086 = vand.u32 %v4681, 4294901760
      %5087 = vmatpush1.msra.mxu0 %v5086
      %5088 = vmatprep.subr.mxu0 0.0
      %v5089 = vand.u32 %v4680, 4294901760
      %5090 = vmatpush1.msra.mxu0 %v5089
      %5091 = vmatprep.subr.mxu0 0.0
      %v5092 = vand.u32 %v4679, 4294901760
      %5093 = vmatpush1.msra.mxu0 %v5092
      %5094 = vmatprep.subr.mxu0 0.0
      %v5095 = vand.u32 %v4678, 4294901760
      %5096 = vmatpush1.msra.mxu0 %v5095
      %5097 = vmatprep.subr.mxu0 0.0
      %5098 = vmatpush2.msra.mxu0 0.0
      %5099 = vmatprep.subr.mxu0 0.0
      %5100 = vmatpush2.msra.mxu0 0.0
      %5101 = vmatprep.subr.mxu0 0.0
      %5102 = vmatpush2.msra.mxu0 0.0
      %5103 = vmatprep.subr.mxu0 0.0
      %5104 = vmatpush2.msra.mxu0 0.0
      %5105 = vmatprep.subr.mxu0 0.0
      %5106 = vmatpush2.msra.mxu0 0.0
      %5107 = vmatprep.subr.mxu0 0.0
      %5108 = vmatpush2.msra.mxu0 0.0
      %5109 = vmatprep.subr.mxu0 0.0
      %5110 = vmatpush2.msra.mxu0 0.0
      %5111 = vmatprep.subr.mxu0 0.0
      %5112 = vmatpush2.msra.mxu0 0.0
      %5113 = vmatprep.subr.mxu0 0.0
      %5114 = vmatpush2.msra.mxu0 0.0
      %5115 = vmatprep.subr.mxu0 0.0
      %5116 = vmatpush2.msra.mxu0 0.0
      %5117 = vmatprep.subr.mxu0 0.0
      %5118 = vmatpush2.msra.mxu0 0.0
      %5119 = vmatprep.subr.mxu0 0.0
      %5120 = vmatpush2.msra.mxu0 0.0
      %5121 = vmatprep.subr.mxu0 0.0
      %5122 = vmatpush2.msra.mxu0 0.0
      %5123 = vmatprep.subr.mxu0 0.0
      %5124 = vmatpush2.msra.mxu0 0.0
      %5125 = vmatprep.subr.mxu0 0.0
      %5126 = vmatpush2.msra.mxu0 0.0
      %5127 = vmatprep.subr.mxu0 0.0
      %5128 = vmatpush2.msra.mxu0 0.0
      %5129 = vmatprep.mubr.f32.mxu0 0.0
      %v5130 = vand.u32 %v4695, 4294901760
      %v5131 = vsub.f32 %v4695, %v5130
      %v5132 = vand.u32 %v5131, 4294901760
      %5133 = vmatmul.mubr.f32.gmra.mxu0 %v5132
      %v5134 = vpop.f32.mrf.mxu0
      %v5135 = vadd.f32 %v5033, %v5134
      %v5136 = vpop.f32.mrf.mxu0
      %5137 = vmatprep.mubr.f32.mxu0 0.0
      %v5138 = vand.u32 %v4698, 4294901760
      %v5139 = vsub.f32 %v4698, %v5138
      %v5140 = vand.u32 %v5139, 4294901760
      %5141 = vmatmul.mubr.f32.gmra.mxu0 %v5140
      %v5142 = vpop.f32.mrf.mxu0
      %v5143 = vadd.f32 %v5040, %v5142
      %v5144 = vpop.f32.mrf.mxu0
      %5145 = vmatprep.mubr.f32.mxu0 0.0
      %v5146 = vand.u32 %v4701, 4294901760
      %v5147 = vsub.f32 %v4701, %v5146
      %v5148 = vand.u32 %v5147, 4294901760
      %5149 = vmatmul.mubr.f32.gmra.mxu0 %v5148
      %v5150 = vpop.f32.mrf.mxu0
      %v5151 = vadd.f32 %v5047, %v5150
      %v5152 = vpop.f32.mrf.mxu0
      %5153 = vmatprep.mubr.f32.mxu0 0.0
      %v5154 = vand.u32 %v4704, 4294901760
      %v5155 = vsub.f32 %v4704, %v5154
      %v5156 = vand.u32 %v5155, 4294901760
      %5157 = vmatmul.mubr.f32.gmra.mxu0 %v5156
      %v5158 = vpop.f32.mrf.mxu0
      %v5159 = vadd.f32 %v5054, %v5158
      %v5160 = vpop.f32.mrf.mxu0
      %5161 = vdwg.mxu0
      %5162 = vmatprep.subr.mxu0 0.0
      %5163 = vmatpush1.msra.mxu0 0.0
      %5164 = vmatprep.subr.mxu0 0.0
      %5165 = vmatpush1.msra.mxu0 0.0
      %5166 = vmatprep.subr.mxu0 0.0
      %5167 = vmatpush1.msra.mxu0 0.0
      %5168 = vmatprep.subr.mxu0 0.0
      %5169 = vmatpush1.msra.mxu0 0.0
      %5170 = vmatprep.subr.mxu0 0.0
      %5171 = vmatpush1.msra.mxu0 0.0
      %5172 = vmatprep.subr.mxu0 0.0
      %5173 = vmatpush1.msra.mxu0 0.0
      %5174 = vmatprep.subr.mxu0 0.0
      %5175 = vmatpush1.msra.mxu0 0.0
      %5176 = vmatprep.subr.mxu0 0.0
      %5177 = vmatpush1.msra.mxu0 0.0
      %5178 = vmatprep.subr.mxu0 0.0
      %v5179 = vand.u32 %v4685, 4294901760
      %v5180 = vsub.f32 %v4685, %v5179
      %v5181 = vand.u32 %v5180, 4294901760
      %5182 = vmatpush1.msra.mxu0 %v5181
      %5183 = vmatprep.subr.mxu0 0.0
      %v5184 = vand.u32 %v4684, 4294901760
      %v5185 = vsub.f32 %v4684, %v5184
      %v5186 = vand.u32 %v5185, 4294901760
      %5187 = vmatpush1.msra.mxu0 %v5186
      %5188 = vmatprep.subr.mxu0 0.0
      %v5189 = vand.u32 %v4683, 4294901760
      %v5190 = vsub.f32 %v4683, %v5189
      %v5191 = vand.u32 %v5190, 4294901760
      %5192 = vmatpush1.msra.mxu0 %v5191
      %5193 = vmatprep.subr.mxu0 0.0
      %v5194 = vand.u32 %v4682, 4294901760
      %v5195 = vsub.f32 %v4682, %v5194
      %v5196 = vand.u32 %v5195, 4294901760
      %5197 = vmatpush1.msra.mxu0 %v5196
      %5198 = vmatprep.subr.mxu0 0.0
      %v5199 = vand.u32 %v4681, 4294901760
      %v5200 = vsub.f32 %v4681, %v5199
      %v5201 = vand.u32 %v5200, 4294901760
      %5202 = vmatpush1.msra.mxu0 %v5201
      %5203 = vmatprep.subr.mxu0 0.0
      %v5204 = vand.u32 %v4680, 4294901760
      %v5205 = vsub.f32 %v4680, %v5204
      %v5206 = vand.u32 %v5205, 4294901760
      %5207 = vmatpush1.msra.mxu0 %v5206
      %5208 = vmatprep.subr.mxu0 0.0
      %v5209 = vand.u32 %v4679, 4294901760
      %v5210 = vsub.f32 %v4679, %v5209
      %v5211 = vand.u32 %v5210, 4294901760
      %5212 = vmatpush1.msra.mxu0 %v5211
      %5213 = vmatprep.subr.mxu0 0.0
      %v5214 = vand.u32 %v4678, 4294901760
      %v5215 = vsub.f32 %v4678, %v5214
      %v5216 = vand.u32 %v5215, 4294901760
      %5217 = vmatpush1.msra.mxu0 %v5216
      %5218 = vmatprep.subr.mxu0 0.0
      %5219 = vmatpush2.msra.mxu0 0.0
      %5220 = vmatprep.subr.mxu0 0.0
      %5221 = vmatpush2.msra.mxu0 0.0
      %5222 = vmatprep.subr.mxu0 0.0
      %5223 = vmatpush2.msra.mxu0 0.0
      %5224 = vmatprep.subr.mxu0 0.0
      %5225 = vmatpush2.msra.mxu0 0.0
      %5226 = vmatprep.subr.mxu0 0.0
      %5227 = vmatpush2.msra.mxu0 0.0
      %5228 = vmatprep.subr.mxu0 0.0
      %5229 = vmatpush2.msra.mxu0 0.0
      %5230 = vmatprep.subr.mxu0 0.0
      %5231 = vmatpush2.msra.mxu0 0.0
      %5232 = vmatprep.subr.mxu0 0.0
      %5233 = vmatpush2.msra.mxu0 0.0
      %5234 = vmatprep.subr.mxu0 0.0
      %5235 = vmatpush2.msra.mxu0 0.0
      %5236 = vmatprep.subr.mxu0 0.0
      %5237 = vmatpush2.msra.mxu0 0.0
      %5238 = vmatprep.subr.mxu0 0.0
      %5239 = vmatpush2.msra.mxu0 0.0
      %5240 = vmatprep.subr.mxu0 0.0
      %5241 = vmatpush2.msra.mxu0 0.0
      %5242 = vmatprep.subr.mxu0 0.0
      %5243 = vmatpush2.msra.mxu0 0.0
      %5244 = vmatprep.subr.mxu0 0.0
      %5245 = vmatpush2.msra.mxu0 0.0
      %5246 = vmatprep.subr.mxu0 0.0
      %5247 = vmatpush2.msra.mxu0 0.0
      %5248 = vmatprep.subr.mxu0 0.0
      %5249 = vmatpush2.msra.mxu0 0.0
      %5250 = vmatprep.mubr.f32.mxu0 0.0
      %v5251 = vand.u32 %v4695, 4294901760
      %5252 = vmatmul.mubr.f32.gmra.mxu0 %v5251
      %v5253 = vpop.f32.mrf.mxu0
      %v5254 = vadd.f32 %v5135, %v5253
      %v5255 = vpop.f32.mrf.mxu0
      %5256 = vmatprep.mubr.f32.mxu0 0.0
      %v5257 = vand.u32 %v4698, 4294901760
      %5258 = vmatmul.mubr.f32.gmra.mxu0 %v5257
      %v5259 = vpop.f32.mrf.mxu0
      %v5260 = vadd.f32 %v5143, %v5259
      %v5261 = vpop.f32.mrf.mxu0
      %5262 = vmatprep.mubr.f32.mxu0 0.0
      %v5263 = vand.u32 %v4701, 4294901760
      %5264 = vmatmul.mubr.f32.gmra.mxu0 %v5263
      %v5265 = vpop.f32.mrf.mxu0
      %v5266 = vadd.f32 %v5151, %v5265
      %v5267 = vpop.f32.mrf.mxu0
      %5268 = vmatprep.mubr.f32.mxu0 0.0
      %v5269 = vand.u32 %v4704, 4294901760
      %5270 = vmatmul.mubr.f32.gmra.mxu0 %v5269
      %v5271 = vpop.f32.mrf.mxu0
      %v5272 = vadd.f32 %v5159, %v5271
      %v5273 = vpop.f32.mrf.mxu0
      %5274 = vdwg.mxu0
      %5275 = vmatprep.subr.mxu0 0.0
      %5276 = vmatpush1.msra.mxu0 0.0
      %5277 = vmatprep.subr.mxu0 0.0
      %5278 = vmatpush1.msra.mxu0 0.0
      %5279 = vmatprep.subr.mxu0 0.0
      %5280 = vmatpush1.msra.mxu0 0.0
      %5281 = vmatprep.subr.mxu0 0.0
      %5282 = vmatpush1.msra.mxu0 0.0
      %5283 = vmatprep.subr.mxu0 0.0
      %5284 = vmatpush1.msra.mxu0 0.0
      %5285 = vmatprep.subr.mxu0 0.0
      %5286 = vmatpush1.msra.mxu0 0.0
      %5287 = vmatprep.subr.mxu0 0.0
      %5288 = vmatpush1.msra.mxu0 0.0
      %5289 = vmatprep.subr.mxu0 0.0
      %5290 = vmatpush1.msra.mxu0 0.0
      %5291 = vmatprep.subr.mxu0 0.0
      %v5292 = vand.u32 %v4685, 4294901760
      %5293 = vmatpush1.msra.mxu0 %v5292
      %5294 = vmatprep.subr.mxu0 0.0
      %v5295 = vand.u32 %v4684, 4294901760
      %5296 = vmatpush1.msra.mxu0 %v5295
      %5297 = vmatprep.subr.mxu0 0.0
      %v5298 = vand.u32 %v4683, 4294901760
      %5299 = vmatpush1.msra.mxu0 %v5298
      %5300 = vmatprep.subr.mxu0 0.0
      %v5301 = vand.u32 %v4682, 4294901760
      %5302 = vmatpush1.msra.mxu0 %v5301
      %5303 = vmatprep.subr.mxu0 0.0
      %v5304 = vand.u32 %v4681, 4294901760
      %5305 = vmatpush1.msra.mxu0 %v5304
      %5306 = vmatprep.subr.mxu0 0.0
      %v5307 = vand.u32 %v4680, 4294901760
      %5308 = vmatpush1.msra.mxu0 %v5307
      %5309 = vmatprep.subr.mxu0 0.0
      %v5310 = vand.u32 %v4679, 4294901760
      %5311 = vmatpush1.msra.mxu0 %v5310
      %5312 = vmatprep.subr.mxu0 0.0
      %v5313 = vand.u32 %v4678, 4294901760
      %5314 = vmatpush1.msra.mxu0 %v5313
      %5315 = vmatprep.subr.mxu0 0.0
      %5316 = vmatpush2.msra.mxu0 0.0
      %5317 = vmatprep.subr.mxu0 0.0
      %5318 = vmatpush2.msra.mxu0 0.0
      %5319 = vmatprep.subr.mxu0 0.0
      %5320 = vmatpush2.msra.mxu0 0.0
      %5321 = vmatprep.subr.mxu0 0.0
      %5322 = vmatpush2.msra.mxu0 0.0
      %5323 = vmatprep.subr.mxu0 0.0
      %5324 = vmatpush2.msra.mxu0 0.0
      %5325 = vmatprep.subr.mxu0 0.0
      %5326 = vmatpush2.msra.mxu0 0.0
      %5327 = vmatprep.subr.mxu0 0.0
      %5328 = vmatpush2.msra.mxu0 0.0
      %5329 = vmatprep.subr.mxu0 0.0
      %5330 = vmatpush2.msra.mxu0 0.0
      %5331 = vmatprep.subr.mxu0 0.0
      %5332 = vmatpush2.msra.mxu0 0.0
      %5333 = vmatprep.subr.mxu0 0.0
      %5334 = vmatpush2.msra.mxu0 0.0
      %5335 = vmatprep.subr.mxu0 0.0
      %5336 = vmatpush2.msra.mxu0 0.0
      %5337 = vmatprep.subr.mxu0 0.0
      %5338 = vmatpush2.msra.mxu0 0.0
      %5339 = vmatprep.subr.mxu0 0.0
      %5340 = vmatpush2.msra.mxu0 0.0
      %5341 = vmatprep.subr.mxu0 0.0
      %5342 = vmatpush2.msra.mxu0 0.0
      %5343 = vmatprep.subr.mxu0 0.0
      %5344 = vmatpush2.msra.mxu0 0.0
      %5345 = vmatprep.subr.mxu0 0.0
      %5346 = vmatpush2.msra.mxu0 0.0
      %5347 = vmatprep.mubr.f32.mxu0 0.0
      %v5348 = vand.u32 %v4695, 4294901760
      %5349 = vmatmul.mubr.f32.gmra.mxu0 %v5348
      %v5350 = vpop.f32.mrf.mxu0
      %v5351 = vadd.f32 %v5254, %v5350
      %v5352 = vpop.f32.mrf.mxu0
      %5353 = vmatprep.mubr.f32.mxu0 0.0
      %v5354 = vand.u32 %v4698, 4294901760
      %5355 = vmatmul.mubr.f32.gmra.mxu0 %v5354
      %v5356 = vpop.f32.mrf.mxu0
      %v5357 = vadd.f32 %v5260, %v5356
      %v5358 = vpop.f32.mrf.mxu0
      %5359 = vmatprep.mubr.f32.mxu0 0.0
      %v5360 = vand.u32 %v4701, 4294901760
      %5361 = vmatmul.mubr.f32.gmra.mxu0 %v5360
      %v5362 = vpop.f32.mrf.mxu0
      %v5363 = vadd.f32 %v5266, %v5362
      %v5364 = vpop.f32.mrf.mxu0
      %5365 = vmatprep.mubr.f32.mxu0 0.0
      %v5366 = vand.u32 %v4704, 4294901760
      %5367 = vmatmul.mubr.f32.gmra.mxu0 %v5366
      %v5368 = vpop.f32.mrf.mxu0
      %v5369 = vadd.f32 %v5272, %v5368
      %v5370 = vpop.f32.mrf.mxu0
      %5371 = vdwg.mxu0
      %v5372 = vadd.f32 %v1909, %v5351
      %v5373 = vadd.f32 %v1910, %v5357
      %v5374 = vadd.f32 %v1911, %v5363
      %v5375 = vadd.f32 %v1912, %v5369
      %5376 = vst.msk [vmem:[%s633] sm:$0xff] %vm1979, %v5372
      %5377 = vst.msk [vmem:[%s633 + $0x8] sm:$0xff] %vm1979, %v5373
      %5378 = vst.msk [vmem:[%s633 + $0x10] sm:$0xff] %vm1979, %v5374
      %5379 = vst.msk [vmem:[%s633 + $0x18] sm:$0xff] %vm1979, %v5375
      %v5380 = vlaneseq
      %v5381 = vshrl.u32 %v5380, 7
      %v5382 = vadd.s32 %v5381, 8
      %v5383 = vadd.s32 %v5381, 16
      %v5384 = vadd.s32 %v5381, 24
      %v5385 = vld [vmem:[%s628] sm:$0x1]
      %v5386 = vlaneseq
      %v5387 = vshrl.u32 %v5386, 7
      %v5388 = vsub.s32 0, %v5387
      %v5389 = vrot.slane %v5385, %v5388
      %vm5390 = vcmp.eq.s32.totalorder %v5389, %v5381
      %vm5391 = vcmp.eq.s32.totalorder %v5389, %v5382
      %vm5392 = vcmp.eq.s32.totalorder %v5389, %v5383
      %vm5393 = vcmp.eq.s32.totalorder %v5389, %v5384
      %v5394 = vsel %vm5390, 1, 0
      %v5395 = vsel %vm5391, 1, 0
      %v5396 = vsel %vm5392, 1, 0
      %v5397 = vsel %vm5393, 1, 0
      %v5398 = vcvt.s32.f32 %v5394
      %v5399 = vcvt.s32.f32 %v5395
      %v5400 = vcvt.s32.f32 %v5396
      %v5401 = vcvt.s32.f32 %v5397
      %v5402 = vld [vmem:[#allocation2] sm:$0xff]
      %v5403 = vld [vmem:[#allocation2 + $0x8] sm:$0xff]
      %v5404 = vld [vmem:[#allocation2 + $0x10] sm:$0xff]
      %v5405 = vld [vmem:[#allocation2 + $0x18] sm:$0xff]
      %v5407 = vsel %vm1979, %v5398, 0
      %v5410 = vsel %vm1979, %v5399, 0
      %v5413 = vsel %vm1979, %v5400, 0
      %v5416 = vsel %vm1979, %v5401, 0
      %5418 = vmatprep.subr.mxu0 0.0
      %5419 = vmatpush1.msra.mxu0 0.0
      %5420 = vmatprep.subr.mxu0 0.0
      %5421 = vmatpush1.msra.mxu0 0.0
      %5422 = vmatprep.subr.mxu0 0.0
      %5423 = vmatpush1.msra.mxu0 0.0
      %5424 = vmatprep.subr.mxu0 0.0
      %5425 = vmatpush1.msra.mxu0 0.0
      %5426 = vmatprep.subr.mxu0 0.0
      %5427 = vmatpush1.msra.mxu0 0.0
      %5428 = vmatprep.subr.mxu0 0.0
      %5429 = vmatpush1.msra.mxu0 0.0
      %5430 = vmatprep.subr.mxu0 0.0
      %5431 = vmatpush1.msra.mxu0 0.0
      %5432 = vmatprep.subr.mxu0 0.0
      %5433 = vmatpush1.msra.mxu0 0.0
      %5434 = vmatprep.subr.mxu0 0.0
      %5435 = vmatpush1.msra.mxu0 0.0
      %5436 = vmatprep.subr.mxu0 0.0
      %5437 = vmatpush1.msra.mxu0 0.0
      %5438 = vmatprep.subr.mxu0 0.0
      %5439 = vmatpush1.msra.mxu0 0.0
      %5440 = vmatprep.subr.mxu0 0.0
      %5441 = vmatpush1.msra.mxu0 0.0
      %5442 = vmatprep.subr.mxu0 0.0
      %v5443 = vand.u32 %v5369, 4294901760
      %5444 = vmatpush1.msra.mxu0 %v5443
      %5445 = vmatprep.subr.mxu0 0.0
      %v5446 = vand.u32 %v5363, 4294901760
      %5447 = vmatpush1.msra.mxu0 %v5446
      %5448 = vmatprep.subr.mxu0 0.0
      %v5449 = vand.u32 %v5357, 4294901760
      %5450 = vmatpush1.msra.mxu0 %v5449
      %5451 = vmatprep.subr.mxu0 0.0
      %v5452 = vand.u32 %v5351, 4294901760
      %5453 = vmatpush1.msra.mxu0 %v5452
      %5454 = vmatprep.subr.mxu0 0.0
      %5455 = vmatpush2.msra.mxu0 0.0
      %5456 = vmatprep.subr.mxu0 0.0
      %5457 = vmatpush2.msra.mxu0 0.0
      %5458 = vmatprep.subr.mxu0 0.0
      %5459 = vmatpush2.msra.mxu0 0.0
      %5460 = vmatprep.subr.mxu0 0.0
      %5461 = vmatpush2.msra.mxu0 0.0
      %5462 = vmatprep.subr.mxu0 0.0
      %5463 = vmatpush2.msra.mxu0 0.0
      %5464 = vmatprep.subr.mxu0 0.0
      %5465 = vmatpush2.msra.mxu0 0.0
      %5466 = vmatprep.subr.mxu0 0.0
      %5467 = vmatpush2.msra.mxu0 0.0
      %5468 = vmatprep.subr.mxu0 0.0
      %5469 = vmatpush2.msra.mxu0 0.0
      %5470 = vmatprep.subr.mxu0 0.0
      %5471 = vmatpush2.msra.mxu0 0.0
      %5472 = vmatprep.subr.mxu0 0.0
      %5473 = vmatpush2.msra.mxu0 0.0
      %5474 = vmatprep.subr.mxu0 0.0
      %5475 = vmatpush2.msra.mxu0 0.0
      %5476 = vmatprep.subr.mxu0 0.0
      %5477 = vmatpush2.msra.mxu0 0.0
      %5478 = vmatprep.subr.mxu0 0.0
      %5479 = vmatpush2.msra.mxu0 0.0
      %5480 = vmatprep.subr.mxu0 0.0
      %5481 = vmatpush2.msra.mxu0 0.0
      %5482 = vmatprep.subr.mxu0 0.0
      %5483 = vmatpush2.msra.mxu0 0.0
      %5484 = vmatprep.subr.mxu0 0.0
      %5485 = vmatpush2.msra.mxu0 0.0
      %5486 = vmatprep.mubr.f32.mxu0 0.0
      %v5487 = vand.u32 %v5407, 4294901760
      %v5488 = vsub.f32 %v5407, %v5487
      %v5489 = vand.u32 %v5488, 4294901760
      %v5490 = vsub.f32 %v5488, %v5489
      %v5491 = vand.u32 %v5490, 4294901760
      %5492 = vmatmul.mubr.f32.gmra.mxu0 %v5491
      %v5493 = vpop.f32.mrf.mxu0
      %v5494 = vadd.f32 0.0, %v5493
      %v5495 = vpop.f32.mrf.mxu0
      %5496 = vmatprep.mubr.f32.mxu0 0.0
      %v5497 = vand.u32 %v5410, 4294901760
      %v5498 = vsub.f32 %v5410, %v5497
      %v5499 = vand.u32 %v5498, 4294901760
      %v5500 = vsub.f32 %v5498, %v5499
      %v5501 = vand.u32 %v5500, 4294901760
      %5502 = vmatmul.mubr.f32.gmra.mxu0 %v5501
      %v5503 = vpop.f32.mrf.mxu0
      %v5504 = vadd.f32 0.0, %v5503
      %v5505 = vpop.f32.mrf.mxu0
      %5506 = vmatprep.mubr.f32.mxu0 0.0
      %v5507 = vand.u32 %v5413, 4294901760
      %v5508 = vsub.f32 %v5413, %v5507
      %v5509 = vand.u32 %v5508, 4294901760
      %v5510 = vsub.f32 %v5508, %v5509
      %v5511 = vand.u32 %v5510, 4294901760
      %5512 = vmatmul.mubr.f32.gmra.mxu0 %v5511
      %v5513 = vpop.f32.mrf.mxu0
      %v5514 = vadd.f32 0.0, %v5513
      %v5515 = vpop.f32.mrf.mxu0
      %5516 = vmatprep.mubr.f32.mxu0 0.0
      %v5517 = vand.u32 %v5416, 4294901760
      %v5518 = vsub.f32 %v5416, %v5517
      %v5519 = vand.u32 %v5518, 4294901760
      %v5520 = vsub.f32 %v5518, %v5519
      %v5521 = vand.u32 %v5520, 4294901760
      %5522 = vmatmul.mubr.f32.gmra.mxu0 %v5521
      %v5523 = vpop.f32.mrf.mxu0
      %v5524 = vadd.f32 0.0, %v5523
      %v5525 = vpop.f32.mrf.mxu0
      %5526 = vdwg.mxu0
      %5527 = vmatprep.subr.mxu0 0.0
      %5528 = vmatpush1.msra.mxu0 0.0
      %5529 = vmatprep.subr.mxu0 0.0
      %5530 = vmatpush1.msra.mxu0 0.0
      %5531 = vmatprep.subr.mxu0 0.0
      %5532 = vmatpush1.msra.mxu0 0.0
      %5533 = vmatprep.subr.mxu0 0.0
      %5534 = vmatpush1.msra.mxu0 0.0
      %5535 = vmatprep.subr.mxu0 0.0
      %5536 = vmatpush1.msra.mxu0 0.0
      %5537 = vmatprep.subr.mxu0 0.0
      %5538 = vmatpush1.msra.mxu0 0.0
      %5539 = vmatprep.subr.mxu0 0.0
      %5540 = vmatpush1.msra.mxu0 0.0
      %5541 = vmatprep.subr.mxu0 0.0
      %5542 = vmatpush1.msra.mxu0 0.0
      %5543 = vmatprep.subr.mxu0 0.0
      %5544 = vmatpush1.msra.mxu0 0.0
      %5545 = vmatprep.subr.mxu0 0.0
      %5546 = vmatpush1.msra.mxu0 0.0
      %5547 = vmatprep.subr.mxu0 0.0
      %5548 = vmatpush1.msra.mxu0 0.0
      %5549 = vmatprep.subr.mxu0 0.0
      %5550 = vmatpush1.msra.mxu0 0.0
      %5551 = vmatprep.subr.mxu0 0.0
      %v5552 = vand.u32 %v5369, 4294901760
      %v5553 = vsub.f32 %v5369, %v5552
      %v5554 = vand.u32 %v5553, 4294901760
      %v5555 = vsub.f32 %v5553, %v5554
      %v5556 = vand.u32 %v5555, 4294901760
      %5557 = vmatpush1.msra.mxu0 %v5556
      %5558 = vmatprep.subr.mxu0 0.0
      %v5559 = vand.u32 %v5363, 4294901760
      %v5560 = vsub.f32 %v5363, %v5559
      %v5561 = vand.u32 %v5560, 4294901760
      %v5562 = vsub.f32 %v5560, %v5561
      %v5563 = vand.u32 %v5562, 4294901760
      %5564 = vmatpush1.msra.mxu0 %v5563
      %5565 = vmatprep.subr.mxu0 0.0
      %v5566 = vand.u32 %v5357, 4294901760
      %v5567 = vsub.f32 %v5357, %v5566
      %v5568 = vand.u32 %v5567, 4294901760
      %v5569 = vsub.f32 %v5567, %v5568
      %v5570 = vand.u32 %v5569, 4294901760
      %5571 = vmatpush1.msra.mxu0 %v5570
      %5572 = vmatprep.subr.mxu0 0.0
      %v5573 = vand.u32 %v5351, 4294901760
      %v5574 = vsub.f32 %v5351, %v5573
      %v5575 = vand.u32 %v5574, 4294901760
      %v5576 = vsub.f32 %v5574, %v5575
      %v5577 = vand.u32 %v5576, 4294901760
      %5578 = vmatpush1.msra.mxu0 %v5577
      %5579 = vmatprep.subr.mxu0 0.0
      %5580 = vmatpush2.msra.mxu0 0.0
      %5581 = vmatprep.subr.mxu0 0.0
      %5582 = vmatpush2.msra.mxu0 0.0
      %5583 = vmatprep.subr.mxu0 0.0
      %5584 = vmatpush2.msra.mxu0 0.0
      %5585 = vmatprep.subr.mxu0 0.0
      %5586 = vmatpush2.msra.mxu0 0.0
      %5587 = vmatprep.subr.mxu0 0.0
      %5588 = vmatpush2.msra.mxu0 0.0
      %5589 = vmatprep.subr.mxu0 0.0
      %5590 = vmatpush2.msra.mxu0 0.0
      %5591 = vmatprep.subr.mxu0 0.0
      %5592 = vmatpush2.msra.mxu0 0.0
      %5593 = vmatprep.subr.mxu0 0.0
      %5594 = vmatpush2.msra.mxu0 0.0
      %5595 = vmatprep.subr.mxu0 0.0
      %5596 = vmatpush2.msra.mxu0 0.0
      %5597 = vmatprep.subr.mxu0 0.0
      %5598 = vmatpush2.msra.mxu0 0.0
      %5599 = vmatprep.subr.mxu0 0.0
      %5600 = vmatpush2.msra.mxu0 0.0
      %5601 = vmatprep.subr.mxu0 0.0
      %5602 = vmatpush2.msra.mxu0 0.0
      %5603 = vmatprep.subr.mxu0 0.0
      %5604 = vmatpush2.msra.mxu0 0.0
      %5605 = vmatprep.subr.mxu0 0.0
      %5606 = vmatpush2.msra.mxu0 0.0
      %5607 = vmatprep.subr.mxu0 0.0
      %5608 = vmatpush2.msra.mxu0 0.0
      %5609 = vmatprep.subr.mxu0 0.0
      %5610 = vmatpush2.msra.mxu0 0.0
      %5611 = vmatprep.mubr.f32.mxu0 0.0
      %v5612 = vand.u32 %v5407, 4294901760
      %5613 = vmatmul.mubr.f32.gmra.mxu0 %v5612
      %v5614 = vpop.f32.mrf.mxu0
      %v5615 = vadd.f32 %v5494, %v5614
      %v5616 = vpop.f32.mrf.mxu0
      %5617 = vmatprep.mubr.f32.mxu0 0.0
      %v5618 = vand.u32 %v5410, 4294901760
      %5619 = vmatmul.mubr.f32.gmra.mxu0 %v5618
      %v5620 = vpop.f32.mrf.mxu0
      %v5621 = vadd.f32 %v5504, %v5620
      %v5622 = vpop.f32.mrf.mxu0
      %5623 = vmatprep.mubr.f32.mxu0 0.0
      %v5624 = vand.u32 %v5413, 4294901760
      %5625 = vmatmul.mubr.f32.gmra.mxu0 %v5624
      %v5626 = vpop.f32.mrf.mxu0
      %v5627 = vadd.f32 %v5514, %v5626
      %v5628 = vpop.f32.mrf.mxu0
      %5629 = vmatprep.mubr.f32.mxu0 0.0
      %v5630 = vand.u32 %v5416, 4294901760
      %5631 = vmatmul.mubr.f32.gmra.mxu0 %v5630
      %v5632 = vpop.f32.mrf.mxu0
      %v5633 = vadd.f32 %v5524, %v5632
      %v5634 = vpop.f32.mrf.mxu0
      %5635 = vdwg.mxu0
      %5636 = vmatprep.subr.mxu0 0.0
      %5637 = vmatpush1.msra.mxu0 0.0
      %5638 = vmatprep.subr.mxu0 0.0
      %5639 = vmatpush1.msra.mxu0 0.0
      %5640 = vmatprep.subr.mxu0 0.0
      %5641 = vmatpush1.msra.mxu0 0.0
      %5642 = vmatprep.subr.mxu0 0.0
      %5643 = vmatpush1.msra.mxu0 0.0
      %5644 = vmatprep.subr.mxu0 0.0
      %5645 = vmatpush1.msra.mxu0 0.0
      %5646 = vmatprep.subr.mxu0 0.0
      %5647 = vmatpush1.msra.mxu0 0.0
      %5648 = vmatprep.subr.mxu0 0.0
      %5649 = vmatpush1.msra.mxu0 0.0
      %5650 = vmatprep.subr.mxu0 0.0
      %5651 = vmatpush1.msra.mxu0 0.0
      %5652 = vmatprep.subr.mxu0 0.0
      %5653 = vmatpush1.msra.mxu0 0.0
      %5654 = vmatprep.subr.mxu0 0.0
      %5655 = vmatpush1.msra.mxu0 0.0
      %5656 = vmatprep.subr.mxu0 0.0
      %5657 = vmatpush1.msra.mxu0 0.0
      %5658 = vmatprep.subr.mxu0 0.0
      %5659 = vmatpush1.msra.mxu0 0.0
      %5660 = vmatprep.subr.mxu0 0.0
      %v5661 = vand.u32 %v5369, 4294901760
      %v5662 = vsub.f32 %v5369, %v5661
      %5663 = vmatpush1.msra.mxu0 %v5662
      %5664 = vmatprep.subr.mxu0 0.0
      %v5665 = vand.u32 %v5363, 4294901760
      %v5666 = vsub.f32 %v5363, %v5665
      %5667 = vmatpush1.msra.mxu0 %v5666
      %5668 = vmatprep.subr.mxu0 0.0
      %v5669 = vand.u32 %v5357, 4294901760
      %v5670 = vsub.f32 %v5357, %v5669
      %5671 = vmatpush1.msra.mxu0 %v5670
      %5672 = vmatprep.subr.mxu0 0.0
      %v5673 = vand.u32 %v5351, 4294901760
      %v5674 = vsub.f32 %v5351, %v5673
      %5675 = vmatpush1.msra.mxu0 %v5674
      %5676 = vmatprep.subr.mxu0 0.0
      %5677 = vmatpush2.msra.mxu0 0.0
      %5678 = vmatprep.subr.mxu0 0.0
      %5679 = vmatpush2.msra.mxu0 0.0
      %5680 = vmatprep.subr.mxu0 0.0
      %5681 = vmatpush2.msra.mxu0 0.0
      %5682 = vmatprep.subr.mxu0 0.0
      %5683 = vmatpush2.msra.mxu0 0.0
      %5684 = vmatprep.subr.mxu0 0.0
      %5685 = vmatpush2.msra.mxu0 0.0
      %5686 = vmatprep.subr.mxu0 0.0
      %5687 = vmatpush2.msra.mxu0 0.0
      %5688 = vmatprep.subr.mxu0 0.0
      %5689 = vmatpush2.msra.mxu0 0.0
      %5690 = vmatprep.subr.mxu0 0.0
      %5691 = vmatpush2.msra.mxu0 0.0
      %5692 = vmatprep.subr.mxu0 0.0
      %5693 = vmatpush2.msra.mxu0 0.0
      %5694 = vmatprep.subr.mxu0 0.0
      %5695 = vmatpush2.msra.mxu0 0.0
      %5696 = vmatprep.subr.mxu0 0.0
      %5697 = vmatpush2.msra.mxu0 0.0
      %5698 = vmatprep.subr.mxu0 0.0
      %5699 = vmatpush2.msra.mxu0 0.0
      %5700 = vmatprep.subr.mxu0 0.0
      %5701 = vmatpush2.msra.mxu0 0.0
      %5702 = vmatprep.subr.mxu0 0.0
      %5703 = vmatpush2.msra.mxu0 0.0
      %5704 = vmatprep.subr.mxu0 0.0
      %5705 = vmatpush2.msra.mxu0 0.0
      %5706 = vmatprep.subr.mxu0 0.0
      %5707 = vmatpush2.msra.mxu0 0.0
      %5708 = vmatprep.mubr.f32.mxu0 0.0
      %v5709 = vand.u32 %v5407, 4294901760
      %v5710 = vsub.f32 %v5407, %v5709
      %5711 = vmatmul.mubr.f32.gmra.mxu0 %v5710
      %v5712 = vpop.f32.mrf.mxu0
      %v5713 = vadd.f32 %v5615, %v5712
      %v5714 = vpop.f32.mrf.mxu0
      %5715 = vmatprep.mubr.f32.mxu0 0.0
      %v5716 = vand.u32 %v5410, 4294901760
      %v5717 = vsub.f32 %v5410, %v5716
      %5718 = vmatmul.mubr.f32.gmra.mxu0 %v5717
      %v5719 = vpop.f32.mrf.mxu0
      %v5720 = vadd.f32 %v5621, %v5719
      %v5721 = vpop.f32.mrf.mxu0
      %5722 = vmatprep.mubr.f32.mxu0 0.0
      %v5723 = vand.u32 %v5413, 4294901760
      %v5724 = vsub.f32 %v5413, %v5723
      %5725 = vmatmul.mubr.f32.gmra.mxu0 %v5724
      %v5726 = vpop.f32.mrf.mxu0
      %v5727 = vadd.f32 %v5627, %v5726
      %v5728 = vpop.f32.mrf.mxu0
      %5729 = vmatprep.mubr.f32.mxu0 0.0
      %v5730 = vand.u32 %v5416, 4294901760
      %v5731 = vsub.f32 %v5416, %v5730
      %5732 = vmatmul.mubr.f32.gmra.mxu0 %v5731
      %v5733 = vpop.f32.mrf.mxu0
      %v5734 = vadd.f32 %v5633, %v5733
      %v5735 = vpop.f32.mrf.mxu0
      %5736 = vdwg.mxu0
      %5737 = vmatprep.subr.mxu0 0.0
      %5738 = vmatpush1.msra.mxu0 0.0
      %5739 = vmatprep.subr.mxu0 0.0
      %5740 = vmatpush1.msra.mxu0 0.0
      %5741 = vmatprep.subr.mxu0 0.0
      %5742 = vmatpush1.msra.mxu0 0.0
      %5743 = vmatprep.subr.mxu0 0.0
      %5744 = vmatpush1.msra.mxu0 0.0
      %5745 = vmatprep.subr.mxu0 0.0
      %5746 = vmatpush1.msra.mxu0 0.0
      %5747 = vmatprep.subr.mxu0 0.0
      %5748 = vmatpush1.msra.mxu0 0.0
      %5749 = vmatprep.subr.mxu0 0.0
      %5750 = vmatpush1.msra.mxu0 0.0
      %5751 = vmatprep.subr.mxu0 0.0
      %5752 = vmatpush1.msra.mxu0 0.0
      %5753 = vmatprep.subr.mxu0 0.0
      %5754 = vmatpush1.msra.mxu0 0.0
      %5755 = vmatprep.subr.mxu0 0.0
      %5756 = vmatpush1.msra.mxu0 0.0
      %5757 = vmatprep.subr.mxu0 0.0
      %5758 = vmatpush1.msra.mxu0 0.0
      %5759 = vmatprep.subr.mxu0 0.0
      %5760 = vmatpush1.msra.mxu0 0.0
      %5761 = vmatprep.subr.mxu0 0.0
      %v5762 = vand.u32 %v5369, 4294901760
      %5763 = vmatpush1.msra.mxu0 %v5762
      %5764 = vmatprep.subr.mxu0 0.0
      %v5765 = vand.u32 %v5363, 4294901760
      %5766 = vmatpush1.msra.mxu0 %v5765
      %5767 = vmatprep.subr.mxu0 0.0
      %v5768 = vand.u32 %v5357, 4294901760
      %5769 = vmatpush1.msra.mxu0 %v5768
      %5770 = vmatprep.subr.mxu0 0.0
      %v5771 = vand.u32 %v5351, 4294901760
      %5772 = vmatpush1.msra.mxu0 %v5771
      %5773 = vmatprep.subr.mxu0 0.0
      %5774 = vmatpush2.msra.mxu0 0.0
      %5775 = vmatprep.subr.mxu0 0.0
      %5776 = vmatpush2.msra.mxu0 0.0
      %5777 = vmatprep.subr.mxu0 0.0
      %5778 = vmatpush2.msra.mxu0 0.0
      %5779 = vmatprep.subr.mxu0 0.0
      %5780 = vmatpush2.msra.mxu0 0.0
      %5781 = vmatprep.subr.mxu0 0.0
      %5782 = vmatpush2.msra.mxu0 0.0
      %5783 = vmatprep.subr.mxu0 0.0
      %5784 = vmatpush2.msra.mxu0 0.0
      %5785 = vmatprep.subr.mxu0 0.0
      %5786 = vmatpush2.msra.mxu0 0.0
      %5787 = vmatprep.subr.mxu0 0.0
      %5788 = vmatpush2.msra.mxu0 0.0
      %5789 = vmatprep.subr.mxu0 0.0
      %5790 = vmatpush2.msra.mxu0 0.0
      %5791 = vmatprep.subr.mxu0 0.0
      %5792 = vmatpush2.msra.mxu0 0.0
      %5793 = vmatprep.subr.mxu0 0.0
      %5794 = vmatpush2.msra.mxu0 0.0
      %5795 = vmatprep.subr.mxu0 0.0
      %5796 = vmatpush2.msra.mxu0 0.0
      %5797 = vmatprep.subr.mxu0 0.0
      %5798 = vmatpush2.msra.mxu0 0.0
      %5799 = vmatprep.subr.mxu0 0.0
      %5800 = vmatpush2.msra.mxu0 0.0
      %5801 = vmatprep.subr.mxu0 0.0
      %5802 = vmatpush2.msra.mxu0 0.0
      %5803 = vmatprep.subr.mxu0 0.0
      %5804 = vmatpush2.msra.mxu0 0.0
      %5805 = vmatprep.mubr.f32.mxu0 0.0
      %v5806 = vand.u32 %v5407, 4294901760
      %v5807 = vsub.f32 %v5407, %v5806
      %v5808 = vand.u32 %v5807, 4294901760
      %5809 = vmatmul.mubr.f32.gmra.mxu0 %v5808
      %v5810 = vpop.f32.mrf.mxu0
      %v5811 = vadd.f32 %v5713, %v5810
      %v5812 = vpop.f32.mrf.mxu0
      %5813 = vmatprep.mubr.f32.mxu0 0.0
      %v5814 = vand.u32 %v5410, 4294901760
      %v5815 = vsub.f32 %v5410, %v5814
      %v5816 = vand.u32 %v5815, 4294901760
      %5817 = vmatmul.mubr.f32.gmra.mxu0 %v5816
      %v5818 = vpop.f32.mrf.mxu0
      %v5819 = vadd.f32 %v5720, %v5818
      %v5820 = vpop.f32.mrf.mxu0
      %5821 = vmatprep.mubr.f32.mxu0 0.0
      %v5822 = vand.u32 %v5413, 4294901760
      %v5823 = vsub.f32 %v5413, %v5822
      %v5824 = vand.u32 %v5823, 4294901760
      %5825 = vmatmul.mubr.f32.gmra.mxu0 %v5824
      %v5826 = vpop.f32.mrf.mxu0
      %v5827 = vadd.f32 %v5727, %v5826
      %v5828 = vpop.f32.mrf.mxu0
      %5829 = vmatprep.mubr.f32.mxu0 0.0
      %v5830 = vand.u32 %v5416, 4294901760
      %v5831 = vsub.f32 %v5416, %v5830
      %v5832 = vand.u32 %v5831, 4294901760
      %5833 = vmatmul.mubr.f32.gmra.mxu0 %v5832
      %v5834 = vpop.f32.mrf.mxu0
      %v5835 = vadd.f32 %v5734, %v5834
      %v5836 = vpop.f32.mrf.mxu0
      %5837 = vdwg.mxu0
      %5838 = vmatprep.subr.mxu0 0.0
      %5839 = vmatpush1.msra.mxu0 0.0
      %5840 = vmatprep.subr.mxu0 0.0
      %5841 = vmatpush1.msra.mxu0 0.0
      %5842 = vmatprep.subr.mxu0 0.0
      %5843 = vmatpush1.msra.mxu0 0.0
      %5844 = vmatprep.subr.mxu0 0.0
      %5845 = vmatpush1.msra.mxu0 0.0
      %5846 = vmatprep.subr.mxu0 0.0
      %5847 = vmatpush1.msra.mxu0 0.0
      %5848 = vmatprep.subr.mxu0 0.0
      %5849 = vmatpush1.msra.mxu0 0.0
      %5850 = vmatprep.subr.mxu0 0.0
      %5851 = vmatpush1.msra.mxu0 0.0
      %5852 = vmatprep.subr.mxu0 0.0
      %5853 = vmatpush1.msra.mxu0 0.0
      %5854 = vmatprep.subr.mxu0 0.0
      %5855 = vmatpush1.msra.mxu0 0.0
      %5856 = vmatprep.subr.mxu0 0.0
      %5857 = vmatpush1.msra.mxu0 0.0
      %5858 = vmatprep.subr.mxu0 0.0
      %5859 = vmatpush1.msra.mxu0 0.0
      %5860 = vmatprep.subr.mxu0 0.0
      %5861 = vmatpush1.msra.mxu0 0.0
      %5862 = vmatprep.subr.mxu0 0.0
      %v5863 = vand.u32 %v5369, 4294901760
      %v5864 = vsub.f32 %v5369, %v5863
      %v5865 = vand.u32 %v5864, 4294901760
      %5866 = vmatpush1.msra.mxu0 %v5865
      %5867 = vmatprep.subr.mxu0 0.0
      %v5868 = vand.u32 %v5363, 4294901760
      %v5869 = vsub.f32 %v5363, %v5868
      %v5870 = vand.u32 %v5869, 4294901760
      %5871 = vmatpush1.msra.mxu0 %v5870
      %5872 = vmatprep.subr.mxu0 0.0
      %v5873 = vand.u32 %v5357, 4294901760
      %v5874 = vsub.f32 %v5357, %v5873
      %v5875 = vand.u32 %v5874, 4294901760
      %5876 = vmatpush1.msra.mxu0 %v5875
      %5877 = vmatprep.subr.mxu0 0.0
      %v5878 = vand.u32 %v5351, 4294901760
      %v5879 = vsub.f32 %v5351, %v5878
      %v5880 = vand.u32 %v5879, 4294901760
      %5881 = vmatpush1.msra.mxu0 %v5880
      %5882 = vmatprep.subr.mxu0 0.0
      %5883 = vmatpush2.msra.mxu0 0.0
      %5884 = vmatprep.subr.mxu0 0.0
      %5885 = vmatpush2.msra.mxu0 0.0
      %5886 = vmatprep.subr.mxu0 0.0
      %5887 = vmatpush2.msra.mxu0 0.0
      %5888 = vmatprep.subr.mxu0 0.0
      %5889 = vmatpush2.msra.mxu0 0.0
      %5890 = vmatprep.subr.mxu0 0.0
      %5891 = vmatpush2.msra.mxu0 0.0
      %5892 = vmatprep.subr.mxu0 0.0
      %5893 = vmatpush2.msra.mxu0 0.0
      %5894 = vmatprep.subr.mxu0 0.0
      %5895 = vmatpush2.msra.mxu0 0.0
      %5896 = vmatprep.subr.mxu0 0.0
      %5897 = vmatpush2.msra.mxu0 0.0
      %5898 = vmatprep.subr.mxu0 0.0
      %5899 = vmatpush2.msra.mxu0 0.0
      %5900 = vmatprep.subr.mxu0 0.0
      %5901 = vmatpush2.msra.mxu0 0.0
      %5902 = vmatprep.subr.mxu0 0.0
      %5903 = vmatpush2.msra.mxu0 0.0
      %5904 = vmatprep.subr.mxu0 0.0
      %5905 = vmatpush2.msra.mxu0 0.0
      %5906 = vmatprep.subr.mxu0 0.0
      %5907 = vmatpush2.msra.mxu0 0.0
      %5908 = vmatprep.subr.mxu0 0.0
      %5909 = vmatpush2.msra.mxu0 0.0
      %5910 = vmatprep.subr.mxu0 0.0
      %5911 = vmatpush2.msra.mxu0 0.0
      %5912 = vmatprep.subr.mxu0 0.0
      %5913 = vmatpush2.msra.mxu0 0.0
      %5914 = vmatprep.mubr.f32.mxu0 0.0
      %v5915 = vand.u32 %v5407, 4294901760
      %5916 = vmatmul.mubr.f32.gmra.mxu0 %v5915
      %v5917 = vpop.f32.mrf.mxu0
      %v5918 = vadd.f32 %v5811, %v5917
      %v5919 = vpop.f32.mrf.mxu0
      %5920 = vmatprep.mubr.f32.mxu0 0.0
      %v5921 = vand.u32 %v5410, 4294901760
      %5922 = vmatmul.mubr.f32.gmra.mxu0 %v5921
      %v5923 = vpop.f32.mrf.mxu0
      %v5924 = vadd.f32 %v5819, %v5923
      %v5925 = vpop.f32.mrf.mxu0
      %5926 = vmatprep.mubr.f32.mxu0 0.0
      %v5927 = vand.u32 %v5413, 4294901760
      %5928 = vmatmul.mubr.f32.gmra.mxu0 %v5927
      %v5929 = vpop.f32.mrf.mxu0
      %v5930 = vadd.f32 %v5827, %v5929
      %v5931 = vpop.f32.mrf.mxu0
      %5932 = vmatprep.mubr.f32.mxu0 0.0
      %v5933 = vand.u32 %v5416, 4294901760
      %5934 = vmatmul.mubr.f32.gmra.mxu0 %v5933
      %v5935 = vpop.f32.mrf.mxu0
      %v5936 = vadd.f32 %v5835, %v5935
      %v5937 = vpop.f32.mrf.mxu0
      %5938 = vdwg.mxu0
      %5939 = vmatprep.subr.mxu0 0.0
      %5940 = vmatpush1.msra.mxu0 0.0
      %5941 = vmatprep.subr.mxu0 0.0
      %5942 = vmatpush1.msra.mxu0 0.0
      %5943 = vmatprep.subr.mxu0 0.0
      %5944 = vmatpush1.msra.mxu0 0.0
      %5945 = vmatprep.subr.mxu0 0.0
      %5946 = vmatpush1.msra.mxu0 0.0
      %5947 = vmatprep.subr.mxu0 0.0
      %5948 = vmatpush1.msra.mxu0 0.0
      %5949 = vmatprep.subr.mxu0 0.0
      %5950 = vmatpush1.msra.mxu0 0.0
      %5951 = vmatprep.subr.mxu0 0.0
      %5952 = vmatpush1.msra.mxu0 0.0
      %5953 = vmatprep.subr.mxu0 0.0
      %5954 = vmatpush1.msra.mxu0 0.0
      %5955 = vmatprep.subr.mxu0 0.0
      %5956 = vmatpush1.msra.mxu0 0.0
      %5957 = vmatprep.subr.mxu0 0.0
      %5958 = vmatpush1.msra.mxu0 0.0
      %5959 = vmatprep.subr.mxu0 0.0
      %5960 = vmatpush1.msra.mxu0 0.0
      %5961 = vmatprep.subr.mxu0 0.0
      %5962 = vmatpush1.msra.mxu0 0.0
      %5963 = vmatprep.subr.mxu0 0.0
      %v5964 = vand.u32 %v5369, 4294901760
      %5965 = vmatpush1.msra.mxu0 %v5964
      %5966 = vmatprep.subr.mxu0 0.0
      %v5967 = vand.u32 %v5363, 4294901760
      %5968 = vmatpush1.msra.mxu0 %v5967
      %5969 = vmatprep.subr.mxu0 0.0
      %v5970 = vand.u32 %v5357, 4294901760
      %5971 = vmatpush1.msra.mxu0 %v5970
      %5972 = vmatprep.subr.mxu0 0.0
      %v5973 = vand.u32 %v5351, 4294901760
      %5974 = vmatpush1.msra.mxu0 %v5973
      %5975 = vmatprep.subr.mxu0 0.0
      %5976 = vmatpush2.msra.mxu0 0.0
      %5977 = vmatprep.subr.mxu0 0.0
      %5978 = vmatpush2.msra.mxu0 0.0
      %5979 = vmatprep.subr.mxu0 0.0
      %5980 = vmatpush2.msra.mxu0 0.0
      %5981 = vmatprep.subr.mxu0 0.0
      %5982 = vmatpush2.msra.mxu0 0.0
      %5983 = vmatprep.subr.mxu0 0.0
      %5984 = vmatpush2.msra.mxu0 0.0
      %5985 = vmatprep.subr.mxu0 0.0
      %5986 = vmatpush2.msra.mxu0 0.0
      %5987 = vmatprep.subr.mxu0 0.0
      %5988 = vmatpush2.msra.mxu0 0.0
      %5989 = vmatprep.subr.mxu0 0.0
      %5990 = vmatpush2.msra.mxu0 0.0
      %5991 = vmatprep.subr.mxu0 0.0
      %5992 = vmatpush2.msra.mxu0 0.0
      %5993 = vmatprep.subr.mxu0 0.0
      %5994 = vmatpush2.msra.mxu0 0.0
      %5995 = vmatprep.subr.mxu0 0.0
      %5996 = vmatpush2.msra.mxu0 0.0
      %5997 = vmatprep.subr.mxu0 0.0
      %5998 = vmatpush2.msra.mxu0 0.0
      %5999 = vmatprep.subr.mxu0 0.0
      %6000 = vmatpush2.msra.mxu0 0.0
      %6001 = vmatprep.subr.mxu0 0.0
      %6002 = vmatpush2.msra.mxu0 0.0
      %6003 = vmatprep.subr.mxu0 0.0
      %6004 = vmatpush2.msra.mxu0 0.0
      %6005 = vmatprep.subr.mxu0 0.0
      %6006 = vmatpush2.msra.mxu0 0.0
      %6007 = vmatprep.mubr.f32.mxu0 0.0
      %v6008 = vand.u32 %v5407, 4294901760
      %6009 = vmatmul.mubr.f32.gmra.mxu0 %v6008
      %v6010 = vpop.f32.mrf.mxu0
      %v6011 = vadd.f32 %v5918, %v6010
      %v6012 = vpop.f32.mrf.mxu0
      %6013 = vmatprep.mubr.f32.mxu0 0.0
      %v6014 = vand.u32 %v5410, 4294901760
      %6015 = vmatmul.mubr.f32.gmra.mxu0 %v6014
      %v6016 = vpop.f32.mrf.mxu0
      %v6017 = vadd.f32 %v5924, %v6016
      %v6018 = vpop.f32.mrf.mxu0
      %6019 = vmatprep.mubr.f32.mxu0 0.0
      %v6020 = vand.u32 %v5413, 4294901760
      %6021 = vmatmul.mubr.f32.gmra.mxu0 %v6020
      %v6022 = vpop.f32.mrf.mxu0
      %v6023 = vadd.f32 %v5930, %v6022
      %v6024 = vpop.f32.mrf.mxu0
      %6025 = vmatprep.mubr.f32.mxu0 0.0
      %v6026 = vand.u32 %v5416, 4294901760
      %6027 = vmatmul.mubr.f32.gmra.mxu0 %v6026
      %v6028 = vpop.f32.mrf.mxu0
      %v6029 = vadd.f32 %v5936, %v6028
      %v6030 = vpop.f32.mrf.mxu0
      %6031 = vdwg.mxu0
      %v6032 = vadd.f32 %v5402, %v6011
      %v6033 = vadd.f32 %v5403, %v6017
      %v6034 = vadd.f32 %v5404, %v6023
      %v6035 = vadd.f32 %v5405, %v6029
      %6036 = vst.msk [vmem:[#allocation2] sm:$0xff] %vm1979, %v6032
      %6037 = vst.msk [vmem:[#allocation2 + $0x8] sm:$0xff] %vm1979, %v6033
      %6038 = vst.msk [vmem:[#allocation2 + $0x10] sm:$0xff] %vm1979, %v6034
      %6039 = vst.msk [vmem:[#allocation2 + $0x18] sm:$0xff] %vm1979, %v6035
      %v6040 = vld [vmem:[#allocation3] sm:$0xff]
      %v6041 = vld [vmem:[#allocation3 + $0x8] sm:$0xff]
      %v6042 = vld [vmem:[#allocation3 + $0x10] sm:$0xff]
      %v6043 = vld [vmem:[#allocation3 + $0x18] sm:$0xff]
      %v6044 = vsel %vm1979, %v5398, 0.0
      %6045 = vadd.xlane.f32.xlu0 %v6044
      %v6046 = vpop.xlane.xlu0 %6045
      %v6047 = vsel %vm1979, %v5399, 0.0
      %6048 = vadd.xlane.f32.xlu0 %v6047
      %v6049 = vpop.xlane.xlu0 %6048
      %v6050 = vsel %vm1979, %v5400, 0.0
      %6051 = vadd.xlane.f32.xlu0 %v6050
      %v6052 = vpop.xlane.xlu0 %6051
      %v6053 = vsel %vm1979, %v5401, 0.0
      %6054 = vadd.xlane.f32.xlu0 %v6053
      %v6055 = vpop.xlane.xlu0 %6054
      %v6056 = vadd.f32 %v6040, %v6046
      %v6057 = vadd.f32 %v6041, %v6049
      %v6058 = vadd.f32 %v6042, %v6052
      %v6059 = vadd.f32 %v6043, %v6055
      %vm6060 = vcmask 7168
      %6061 = vst.msk [vmem:[#allocation3] sm:$0xff] %vm6060, %v6056
      %6062 = vst.msk [vmem:[#allocation3 + $0x8] sm:$0xff] %vm6060, %v6057
      %6063 = vst.msk [vmem:[#allocation3 + $0x10] sm:$0xff] %vm6060, %v6058
      %6064 = vst.msk [vmem:[#allocation3 + $0x18] sm:$0xff] %vm6060, %v6059
      %p6065 = scmp.eq.s32.totalorder %s30, 2
      // Predicated region
      $region93: #{first_megnet_block.1} parent=87 // pred_check
        %p6066 = pneg %p6065
      $region94: #{first_megnet_block.1} parent=87 // pred_check_branch
        %6068 = sbr.rel (%p6066) target = $region96
      $region95: #{first_megnet_block.1} parent=87 // pred_region
        %v6069 = vld [vmem:[%s4] sm:$0xff]
        %v6070 = vld [vmem:[%s4 + $0x8] sm:$0xff]
        %v6071 = vld [vmem:[%s4 + $0x10] sm:$0xff]
        %v6072 = vld [vmem:[%s4 + $0x18] sm:$0xff]
        %v6073 = vld [vmem:[#allocation3] sm:$0xff]
        %v6074 = vld [vmem:[#allocation3 + $0x8] sm:$0xff]
        %v6075 = vld [vmem:[#allocation3 + $0x10] sm:$0xff]
        %v6076 = vld [vmem:[#allocation3 + $0x18] sm:$0xff]
        %v6077 = vmax.f32 %v6073, 1.0
        %v6078 = vmax.f32 %v6074, 1.0
        %v6079 = vmax.f32 %v6075, 1.0
        %v6080 = vmax.f32 %v6076, 1.0
        %v6081 = vld [vmem:[#allocation2] sm:$0xff]
        %v6082 = vld [vmem:[#allocation2 + $0x8] sm:$0xff]
        %v6083 = vld [vmem:[#allocation2 + $0x10] sm:$0xff]
        %v6084 = vld [vmem:[#allocation2 + $0x18] sm:$0xff]
        %6086 = vset.pattern.permute.xlu0 0
        %6087 = vperm.xlu0 %6086, %v6077
        %v6088 = vpop.permute.xlu0 %6087
        %6091 = vset.pattern.permute.xlu0 0
        %6092 = vperm.xlu0 %6091, %v6078
        %v6093 = vpop.permute.xlu0 %6092
        %6096 = vset.pattern.permute.xlu0 0
        %6097 = vperm.xlu0 %6096, %v6079
        %v6098 = vpop.permute.xlu0 %6097
        %6101 = vset.pattern.permute.xlu0 0
        %6102 = vperm.xlu0 %6101, %v6080
        %v6103 = vpop.permute.xlu0 %6102
        %v6105 = vrcp.pop %v6088
        %v6106 = vmul.f32 %v6081, %v6105
        %v6107 = vrcp.pop %v6093
        %v6108 = vmul.f32 %v6082, %v6107
        %v6109 = vrcp.pop %v6098
        %v6110 = vmul.f32 %v6083, %v6109
        %v6111 = vrcp.pop %v6103
        %v6112 = vmul.f32 %v6084, %v6111
        %v6113 = vld [vmem:[%s11] sm:$0xff]
        %v6114 = vld [vmem:[%s11 + $0x8] sm:$0xff]
        %v6115 = vld [vmem:[%s11 + $0x10] sm:$0xff]
        %v6116 = vld [vmem:[%s11 + $0x18] sm:$0xff]
        %v6117 = vld [vmem:[%s11 + $0x20] sm:$0xff]
        %v6118 = vld [vmem:[%s11 + $0x28] sm:$0xff]
        %v6119 = vld [vmem:[%s11 + $0x30] sm:$0xff]
        %v6120 = vld [vmem:[%s11 + $0x38] sm:$0xff]
        %v6122 = vsel %vm1979, %v6069, 0
        %v6125 = vsel %vm1979, %v6070, 0
        %v6128 = vsel %vm1979, %v6071, 0
        %v6131 = vsel %vm1979, %v6072, 0
        %6133 = vmatprep.subr.mxu0 0.0
        %6134 = vmatpush1.msra.mxu0 0.0
        %6135 = vmatprep.subr.mxu0 0.0
        %6136 = vmatpush1.msra.mxu0 0.0
        %6137 = vmatprep.subr.mxu0 0.0
        %6138 = vmatpush1.msra.mxu0 0.0
        %6139 = vmatprep.subr.mxu0 0.0
        %6140 = vmatpush1.msra.mxu0 0.0
        %6141 = vmatprep.subr.mxu0 0.0
        %6142 = vmatpush1.msra.mxu0 0.0
        %6143 = vmatprep.subr.mxu0 0.0
        %6144 = vmatpush1.msra.mxu0 0.0
        %6145 = vmatprep.subr.mxu0 0.0
        %6146 = vmatpush1.msra.mxu0 0.0
        %6147 = vmatprep.subr.mxu0 0.0
        %6148 = vmatpush1.msra.mxu0 0.0
        %6149 = vmatprep.subr.mxu0 0.0
        %6150 = vmatpush1.msra.mxu0 0.0
        %6151 = vmatprep.subr.mxu0 0.0
        %6152 = vmatpush1.msra.mxu0 0.0
        %6153 = vmatprep.subr.mxu0 0.0
        %6154 = vmatpush1.msra.mxu0 0.0
        %6155 = vmatprep.subr.mxu0 0.0
        %6156 = vmatpush1.msra.mxu0 0.0
        %6157 = vmatprep.subr.mxu0 0.0
        %v6158 = vand.u32 %v6120, 4294901760
        %6159 = vmatpush1.msra.mxu0 %v6158
        %6160 = vmatprep.subr.mxu0 0.0
        %v6161 = vand.u32 %v6119, 4294901760
        %6162 = vmatpush1.msra.mxu0 %v6161
        %6163 = vmatprep.subr.mxu0 0.0
        %v6164 = vand.u32 %v6118, 4294901760
        %6165 = vmatpush1.msra.mxu0 %v6164
        %6166 = vmatprep.subr.mxu0 0.0
        %v6167 = vand.u32 %v6117, 4294901760
        %6168 = vmatpush1.msra.mxu0 %v6167
        %6169 = vmatprep.subr.mxu0 0.0
        %6170 = vmatpush2.msra.mxu0 0.0
        %6171 = vmatprep.subr.mxu0 0.0
        %6172 = vmatpush2.msra.mxu0 0.0
        %6173 = vmatprep.subr.mxu0 0.0
        %6174 = vmatpush2.msra.mxu0 0.0
        %6175 = vmatprep.subr.mxu0 0.0
        %6176 = vmatpush2.msra.mxu0 0.0
        %6177 = vmatprep.subr.mxu0 0.0
        %6178 = vmatpush2.msra.mxu0 0.0
        %6179 = vmatprep.subr.mxu0 0.0
        %6180 = vmatpush2.msra.mxu0 0.0
        %6181 = vmatprep.subr.mxu0 0.0
        %6182 = vmatpush2.msra.mxu0 0.0
        %6183 = vmatprep.subr.mxu0 0.0
        %6184 = vmatpush2.msra.mxu0 0.0
        %6185 = vmatprep.subr.mxu0 0.0
        %6186 = vmatpush2.msra.mxu0 0.0
        %6187 = vmatprep.subr.mxu0 0.0
        %6188 = vmatpush2.msra.mxu0 0.0
        %6189 = vmatprep.subr.mxu0 0.0
        %6190 = vmatpush2.msra.mxu0 0.0
        %6191 = vmatprep.subr.mxu0 0.0
        %6192 = vmatpush2.msra.mxu0 0.0
        %6193 = vmatprep.subr.mxu0 0.0
        %6194 = vmatpush2.msra.mxu0 0.0
        %6195 = vmatprep.subr.mxu0 0.0
        %6196 = vmatpush2.msra.mxu0 0.0
        %6197 = vmatprep.subr.mxu0 0.0
        %6198 = vmatpush2.msra.mxu0 0.0
        %6199 = vmatprep.subr.mxu0 0.0
        %6200 = vmatpush2.msra.mxu0 0.0
        %6201 = vmatprep.mubr.f32.mxu0 0.0
        %v6202 = vand.u32 %v6122, 4294901760
        %v6203 = vsub.f32 %v6122, %v6202
        %v6204 = vand.u32 %v6203, 4294901760
        %v6205 = vsub.f32 %v6203, %v6204
        %v6206 = vand.u32 %v6205, 4294901760
        %6207 = vmatmul.mubr.f32.gmra.mxu0 %v6206
        %v6208 = vpop.f32.mrf.mxu0
        %v6209 = vadd.f32 0.0, %v6208
        %v6210 = vpop.f32.mrf.mxu0
        %6211 = vmatprep.mubr.f32.mxu0 0.0
        %v6212 = vand.u32 %v6125, 4294901760
        %v6213 = vsub.f32 %v6125, %v6212
        %v6214 = vand.u32 %v6213, 4294901760
        %v6215 = vsub.f32 %v6213, %v6214
        %v6216 = vand.u32 %v6215, 4294901760
        %6217 = vmatmul.mubr.f32.gmra.mxu0 %v6216
        %v6218 = vpop.f32.mrf.mxu0
        %v6219 = vadd.f32 0.0, %v6218
        %v6220 = vpop.f32.mrf.mxu0
        %6221 = vmatprep.mubr.f32.mxu0 0.0
        %v6222 = vand.u32 %v6128, 4294901760
        %v6223 = vsub.f32 %v6128, %v6222
        %v6224 = vand.u32 %v6223, 4294901760
        %v6225 = vsub.f32 %v6223, %v6224
        %v6226 = vand.u32 %v6225, 4294901760
        %6227 = vmatmul.mubr.f32.gmra.mxu0 %v6226
        %v6228 = vpop.f32.mrf.mxu0
        %v6229 = vadd.f32 0.0, %v6228
        %v6230 = vpop.f32.mrf.mxu0
        %6231 = vmatprep.mubr.f32.mxu0 0.0
        %v6232 = vand.u32 %v6131, 4294901760
        %v6233 = vsub.f32 %v6131, %v6232
        %v6234 = vand.u32 %v6233, 4294901760
        %v6235 = vsub.f32 %v6233, %v6234
        %v6236 = vand.u32 %v6235, 4294901760
        %6237 = vmatmul.mubr.f32.gmra.mxu0 %v6236
        %v6238 = vpop.f32.mrf.mxu0
        %v6239 = vadd.f32 0.0, %v6238
        %v6240 = vpop.f32.mrf.mxu0
        %6241 = vdwg.mxu0
        %6242 = vmatprep.subr.mxu0 0.0
        %6243 = vmatpush1.msra.mxu0 0.0
        %6244 = vmatprep.subr.mxu0 0.0
        %6245 = vmatpush1.msra.mxu0 0.0
        %6246 = vmatprep.subr.mxu0 0.0
        %6247 = vmatpush1.msra.mxu0 0.0
        %6248 = vmatprep.subr.mxu0 0.0
        %6249 = vmatpush1.msra.mxu0 0.0
        %6250 = vmatprep.subr.mxu0 0.0
        %6251 = vmatpush1.msra.mxu0 0.0
        %6252 = vmatprep.subr.mxu0 0.0
        %6253 = vmatpush1.msra.mxu0 0.0
        %6254 = vmatprep.subr.mxu0 0.0
        %6255 = vmatpush1.msra.mxu0 0.0
        %6256 = vmatprep.subr.mxu0 0.0
        %6257 = vmatpush1.msra.mxu0 0.0
        %6258 = vmatprep.subr.mxu0 0.0
        %6259 = vmatpush1.msra.mxu0 0.0
        %6260 = vmatprep.subr.mxu0 0.0
        %6261 = vmatpush1.msra.mxu0 0.0
        %6262 = vmatprep.subr.mxu0 0.0
        %6263 = vmatpush1.msra.mxu0 0.0
        %6264 = vmatprep.subr.mxu0 0.0
        %6265 = vmatpush1.msra.mxu0 0.0
        %6266 = vmatprep.subr.mxu0 0.0
        %v6267 = vand.u32 %v6120, 4294901760
        %v6268 = vsub.f32 %v6120, %v6267
        %v6269 = vand.u32 %v6268, 4294901760
        %v6270 = vsub.f32 %v6268, %v6269
        %v6271 = vand.u32 %v6270, 4294901760
        %6272 = vmatpush1.msra.mxu0 %v6271
        %6273 = vmatprep.subr.mxu0 0.0
        %v6274 = vand.u32 %v6119, 4294901760
        %v6275 = vsub.f32 %v6119, %v6274
        %v6276 = vand.u32 %v6275, 4294901760
        %v6277 = vsub.f32 %v6275, %v6276
        %v6278 = vand.u32 %v6277, 4294901760
        %6279 = vmatpush1.msra.mxu0 %v6278
        %6280 = vmatprep.subr.mxu0 0.0
        %v6281 = vand.u32 %v6118, 4294901760
        %v6282 = vsub.f32 %v6118, %v6281
        %v6283 = vand.u32 %v6282, 4294901760
        %v6284 = vsub.f32 %v6282, %v6283
        %v6285 = vand.u32 %v6284, 4294901760
        %6286 = vmatpush1.msra.mxu0 %v6285
        %6287 = vmatprep.subr.mxu0 0.0
        %v6288 = vand.u32 %v6117, 4294901760
        %v6289 = vsub.f32 %v6117, %v6288
        %v6290 = vand.u32 %v6289, 4294901760
        %v6291 = vsub.f32 %v6289, %v6290
        %v6292 = vand.u32 %v6291, 4294901760
        %6293 = vmatpush1.msra.mxu0 %v6292
        %6294 = vmatprep.subr.mxu0 0.0
        %6295 = vmatpush2.msra.mxu0 0.0
        %6296 = vmatprep.subr.mxu0 0.0
        %6297 = vmatpush2.msra.mxu0 0.0
        %6298 = vmatprep.subr.mxu0 0.0
        %6299 = vmatpush2.msra.mxu0 0.0
        %6300 = vmatprep.subr.mxu0 0.0
        %6301 = vmatpush2.msra.mxu0 0.0
        %6302 = vmatprep.subr.mxu0 0.0
        %6303 = vmatpush2.msra.mxu0 0.0
        %6304 = vmatprep.subr.mxu0 0.0
        %6305 = vmatpush2.msra.mxu0 0.0
        %6306 = vmatprep.subr.mxu0 0.0
        %6307 = vmatpush2.msra.mxu0 0.0
        %6308 = vmatprep.subr.mxu0 0.0
        %6309 = vmatpush2.msra.mxu0 0.0
        %6310 = vmatprep.subr.mxu0 0.0
        %6311 = vmatpush2.msra.mxu0 0.0
        %6312 = vmatprep.subr.mxu0 0.0
        %6313 = vmatpush2.msra.mxu0 0.0
        %6314 = vmatprep.subr.mxu0 0.0
        %6315 = vmatpush2.msra.mxu0 0.0
        %6316 = vmatprep.subr.mxu0 0.0
        %6317 = vmatpush2.msra.mxu0 0.0
        %6318 = vmatprep.subr.mxu0 0.0
        %6319 = vmatpush2.msra.mxu0 0.0
        %6320 = vmatprep.subr.mxu0 0.0
        %6321 = vmatpush2.msra.mxu0 0.0
        %6322 = vmatprep.subr.mxu0 0.0
        %6323 = vmatpush2.msra.mxu0 0.0
        %6324 = vmatprep.subr.mxu0 0.0
        %6325 = vmatpush2.msra.mxu0 0.0
        %6326 = vmatprep.mubr.f32.mxu0 0.0
        %v6327 = vand.u32 %v6122, 4294901760
        %6328 = vmatmul.mubr.f32.gmra.mxu0 %v6327
        %v6329 = vpop.f32.mrf.mxu0
        %v6330 = vadd.f32 %v6209, %v6329
        %v6331 = vpop.f32.mrf.mxu0
        %6332 = vmatprep.mubr.f32.mxu0 0.0
        %v6333 = vand.u32 %v6125, 4294901760
        %6334 = vmatmul.mubr.f32.gmra.mxu0 %v6333
        %v6335 = vpop.f32.mrf.mxu0
        %v6336 = vadd.f32 %v6219, %v6335
        %v6337 = vpop.f32.mrf.mxu0
        %6338 = vmatprep.mubr.f32.mxu0 0.0
        %v6339 = vand.u32 %v6128, 4294901760
        %6340 = vmatmul.mubr.f32.gmra.mxu0 %v6339
        %v6341 = vpop.f32.mrf.mxu0
        %v6342 = vadd.f32 %v6229, %v6341
        %v6343 = vpop.f32.mrf.mxu0
        %6344 = vmatprep.mubr.f32.mxu0 0.0
        %v6345 = vand.u32 %v6131, 4294901760
        %6346 = vmatmul.mubr.f32.gmra.mxu0 %v6345
        %v6347 = vpop.f32.mrf.mxu0
        %v6348 = vadd.f32 %v6239, %v6347
        %v6349 = vpop.f32.mrf.mxu0
        %6350 = vdwg.mxu0
        %6351 = vmatprep.subr.mxu0 0.0
        %6352 = vmatpush1.msra.mxu0 0.0
        %6353 = vmatprep.subr.mxu0 0.0
        %6354 = vmatpush1.msra.mxu0 0.0
        %6355 = vmatprep.subr.mxu0 0.0
        %6356 = vmatpush1.msra.mxu0 0.0
        %6357 = vmatprep.subr.mxu0 0.0
        %6358 = vmatpush1.msra.mxu0 0.0
        %6359 = vmatprep.subr.mxu0 0.0
        %6360 = vmatpush1.msra.mxu0 0.0
        %6361 = vmatprep.subr.mxu0 0.0
        %6362 = vmatpush1.msra.mxu0 0.0
        %6363 = vmatprep.subr.mxu0 0.0
        %6364 = vmatpush1.msra.mxu0 0.0
        %6365 = vmatprep.subr.mxu0 0.0
        %6366 = vmatpush1.msra.mxu0 0.0
        %6367 = vmatprep.subr.mxu0 0.0
        %6368 = vmatpush1.msra.mxu0 0.0
        %6369 = vmatprep.subr.mxu0 0.0
        %6370 = vmatpush1.msra.mxu0 0.0
        %6371 = vmatprep.subr.mxu0 0.0
        %6372 = vmatpush1.msra.mxu0 0.0
        %6373 = vmatprep.subr.mxu0 0.0
        %6374 = vmatpush1.msra.mxu0 0.0
        %6375 = vmatprep.subr.mxu0 0.0
        %v6376 = vand.u32 %v6120, 4294901760
        %v6377 = vsub.f32 %v6120, %v6376
        %6378 = vmatpush1.msra.mxu0 %v6377
        %6379 = vmatprep.subr.mxu0 0.0
        %v6380 = vand.u32 %v6119, 4294901760
        %v6381 = vsub.f32 %v6119, %v6380
        %6382 = vmatpush1.msra.mxu0 %v6381
        %6383 = vmatprep.subr.mxu0 0.0
        %v6384 = vand.u32 %v6118, 4294901760
        %v6385 = vsub.f32 %v6118, %v6384
        %6386 = vmatpush1.msra.mxu0 %v6385
        %6387 = vmatprep.subr.mxu0 0.0
        %v6388 = vand.u32 %v6117, 4294901760
        %v6389 = vsub.f32 %v6117, %v6388
        %6390 = vmatpush1.msra.mxu0 %v6389
        %6391 = vmatprep.subr.mxu0 0.0
        %6392 = vmatpush2.msra.mxu0 0.0
        %6393 = vmatprep.subr.mxu0 0.0
        %6394 = vmatpush2.msra.mxu0 0.0
        %6395 = vmatprep.subr.mxu0 0.0
        %6396 = vmatpush2.msra.mxu0 0.0
        %6397 = vmatprep.subr.mxu0 0.0
        %6398 = vmatpush2.msra.mxu0 0.0
        %6399 = vmatprep.subr.mxu0 0.0
        %6400 = vmatpush2.msra.mxu0 0.0
        %6401 = vmatprep.subr.mxu0 0.0
        %6402 = vmatpush2.msra.mxu0 0.0
        %6403 = vmatprep.subr.mxu0 0.0
        %6404 = vmatpush2.msra.mxu0 0.0
        %6405 = vmatprep.subr.mxu0 0.0
        %6406 = vmatpush2.msra.mxu0 0.0
        %6407 = vmatprep.subr.mxu0 0.0
        %6408 = vmatpush2.msra.mxu0 0.0
        %6409 = vmatprep.subr.mxu0 0.0
        %6410 = vmatpush2.msra.mxu0 0.0
        %6411 = vmatprep.subr.mxu0 0.0
        %6412 = vmatpush2.msra.mxu0 0.0
        %6413 = vmatprep.subr.mxu0 0.0
        %6414 = vmatpush2.msra.mxu0 0.0
        %6415 = vmatprep.subr.mxu0 0.0
        %6416 = vmatpush2.msra.mxu0 0.0
        %6417 = vmatprep.subr.mxu0 0.0
        %6418 = vmatpush2.msra.mxu0 0.0
        %6419 = vmatprep.subr.mxu0 0.0
        %6420 = vmatpush2.msra.mxu0 0.0
        %6421 = vmatprep.subr.mxu0 0.0
        %6422 = vmatpush2.msra.mxu0 0.0
        %6423 = vmatprep.mubr.f32.mxu0 0.0
        %v6424 = vand.u32 %v6122, 4294901760
        %v6425 = vsub.f32 %v6122, %v6424
        %6426 = vmatmul.mubr.f32.gmra.mxu0 %v6425
        %v6427 = vpop.f32.mrf.mxu0
        %v6428 = vadd.f32 %v6330, %v6427
        %v6429 = vpop.f32.mrf.mxu0
        %6430 = vmatprep.mubr.f32.mxu0 0.0
        %v6431 = vand.u32 %v6125, 4294901760
        %v6432 = vsub.f32 %v6125, %v6431
        %6433 = vmatmul.mubr.f32.gmra.mxu0 %v6432
        %v6434 = vpop.f32.mrf.mxu0
        %v6435 = vadd.f32 %v6336, %v6434
        %v6436 = vpop.f32.mrf.mxu0
        %6437 = vmatprep.mubr.f32.mxu0 0.0
        %v6438 = vand.u32 %v6128, 4294901760
        %v6439 = vsub.f32 %v6128, %v6438
        %6440 = vmatmul.mubr.f32.gmra.mxu0 %v6439
        %v6441 = vpop.f32.mrf.mxu0
        %v6442 = vadd.f32 %v6342, %v6441
        %v6443 = vpop.f32.mrf.mxu0
        %6444 = vmatprep.mubr.f32.mxu0 0.0
        %v6445 = vand.u32 %v6131, 4294901760
        %v6446 = vsub.f32 %v6131, %v6445
        %6447 = vmatmul.mubr.f32.gmra.mxu0 %v6446
        %v6448 = vpop.f32.mrf.mxu0
        %v6449 = vadd.f32 %v6348, %v6448
        %v6450 = vpop.f32.mrf.mxu0
        %6451 = vdwg.mxu0
        %6452 = vmatprep.subr.mxu0 0.0
        %6453 = vmatpush1.msra.mxu0 0.0
        %6454 = vmatprep.subr.mxu0 0.0
        %6455 = vmatpush1.msra.mxu0 0.0
        %6456 = vmatprep.subr.mxu0 0.0
        %6457 = vmatpush1.msra.mxu0 0.0
        %6458 = vmatprep.subr.mxu0 0.0
        %6459 = vmatpush1.msra.mxu0 0.0
        %6460 = vmatprep.subr.mxu0 0.0
        %6461 = vmatpush1.msra.mxu0 0.0
        %6462 = vmatprep.subr.mxu0 0.0
        %6463 = vmatpush1.msra.mxu0 0.0
        %6464 = vmatprep.subr.mxu0 0.0
        %6465 = vmatpush1.msra.mxu0 0.0
        %6466 = vmatprep.subr.mxu0 0.0
        %6467 = vmatpush1.msra.mxu0 0.0
        %6468 = vmatprep.subr.mxu0 0.0
        %6469 = vmatpush1.msra.mxu0 0.0
        %6470 = vmatprep.subr.mxu0 0.0
        %6471 = vmatpush1.msra.mxu0 0.0
        %6472 = vmatprep.subr.mxu0 0.0
        %6473 = vmatpush1.msra.mxu0 0.0
        %6474 = vmatprep.subr.mxu0 0.0
        %6475 = vmatpush1.msra.mxu0 0.0
        %6476 = vmatprep.subr.mxu0 0.0
        %v6477 = vand.u32 %v6120, 4294901760
        %6478 = vmatpush1.msra.mxu0 %v6477
        %6479 = vmatprep.subr.mxu0 0.0
        %v6480 = vand.u32 %v6119, 4294901760
        %6481 = vmatpush1.msra.mxu0 %v6480
        %6482 = vmatprep.subr.mxu0 0.0
        %v6483 = vand.u32 %v6118, 4294901760
        %6484 = vmatpush1.msra.mxu0 %v6483
        %6485 = vmatprep.subr.mxu0 0.0
        %v6486 = vand.u32 %v6117, 4294901760
        %6487 = vmatpush1.msra.mxu0 %v6486
        %6488 = vmatprep.subr.mxu0 0.0
        %6489 = vmatpush2.msra.mxu0 0.0
        %6490 = vmatprep.subr.mxu0 0.0
        %6491 = vmatpush2.msra.mxu0 0.0
        %6492 = vmatprep.subr.mxu0 0.0
        %6493 = vmatpush2.msra.mxu0 0.0
        %6494 = vmatprep.subr.mxu0 0.0
        %6495 = vmatpush2.msra.mxu0 0.0
        %6496 = vmatprep.subr.mxu0 0.0
        %6497 = vmatpush2.msra.mxu0 0.0
        %6498 = vmatprep.subr.mxu0 0.0
        %6499 = vmatpush2.msra.mxu0 0.0
        %6500 = vmatprep.subr.mxu0 0.0
        %6501 = vmatpush2.msra.mxu0 0.0
        %6502 = vmatprep.subr.mxu0 0.0
        %6503 = vmatpush2.msra.mxu0 0.0
        %6504 = vmatprep.subr.mxu0 0.0
        %6505 = vmatpush2.msra.mxu0 0.0
        %6506 = vmatprep.subr.mxu0 0.0
        %6507 = vmatpush2.msra.mxu0 0.0
        %6508 = vmatprep.subr.mxu0 0.0
        %6509 = vmatpush2.msra.mxu0 0.0
        %6510 = vmatprep.subr.mxu0 0.0
        %6511 = vmatpush2.msra.mxu0 0.0
        %6512 = vmatprep.subr.mxu0 0.0
        %6513 = vmatpush2.msra.mxu0 0.0
        %6514 = vmatprep.subr.mxu0 0.0
        %6515 = vmatpush2.msra.mxu0 0.0
        %6516 = vmatprep.subr.mxu0 0.0
        %6517 = vmatpush2.msra.mxu0 0.0
        %6518 = vmatprep.subr.mxu0 0.0
        %6519 = vmatpush2.msra.mxu0 0.0
        %6520 = vmatprep.mubr.f32.mxu0 0.0
        %v6521 = vand.u32 %v6122, 4294901760
        %v6522 = vsub.f32 %v6122, %v6521
        %v6523 = vand.u32 %v6522, 4294901760
        %6524 = vmatmul.mubr.f32.gmra.mxu0 %v6523
        %v6525 = vpop.f32.mrf.mxu0
        %v6526 = vadd.f32 %v6428, %v6525
        %v6527 = vpop.f32.mrf.mxu0
        %6528 = vmatprep.mubr.f32.mxu0 0.0
        %v6529 = vand.u32 %v6125, 4294901760
        %v6530 = vsub.f32 %v6125, %v6529
        %v6531 = vand.u32 %v6530, 4294901760
        %6532 = vmatmul.mubr.f32.gmra.mxu0 %v6531
        %v6533 = vpop.f32.mrf.mxu0
        %v6534 = vadd.f32 %v6435, %v6533
        %v6535 = vpop.f32.mrf.mxu0
        %6536 = vmatprep.mubr.f32.mxu0 0.0
        %v6537 = vand.u32 %v6128, 4294901760
        %v6538 = vsub.f32 %v6128, %v6537
        %v6539 = vand.u32 %v6538, 4294901760
        %6540 = vmatmul.mubr.f32.gmra.mxu0 %v6539
        %v6541 = vpop.f32.mrf.mxu0
        %v6542 = vadd.f32 %v6442, %v6541
        %v6543 = vpop.f32.mrf.mxu0
        %6544 = vmatprep.mubr.f32.mxu0 0.0
        %v6545 = vand.u32 %v6131, 4294901760
        %v6546 = vsub.f32 %v6131, %v6545
        %v6547 = vand.u32 %v6546, 4294901760
        %6548 = vmatmul.mubr.f32.gmra.mxu0 %v6547
        %v6549 = vpop.f32.mrf.mxu0
        %v6550 = vadd.f32 %v6449, %v6549
        %v6551 = vpop.f32.mrf.mxu0
        %6552 = vdwg.mxu0
        %6553 = vmatprep.subr.mxu0 0.0
        %6554 = vmatpush1.msra.mxu0 0.0
        %6555 = vmatprep.subr.mxu0 0.0
        %6556 = vmatpush1.msra.mxu0 0.0
        %6557 = vmatprep.subr.mxu0 0.0
        %6558 = vmatpush1.msra.mxu0 0.0
        %6559 = vmatprep.subr.mxu0 0.0
        %6560 = vmatpush1.msra.mxu0 0.0
        %6561 = vmatprep.subr.mxu0 0.0
        %6562 = vmatpush1.msra.mxu0 0.0
        %6563 = vmatprep.subr.mxu0 0.0
        %6564 = vmatpush1.msra.mxu0 0.0
        %6565 = vmatprep.subr.mxu0 0.0
        %6566 = vmatpush1.msra.mxu0 0.0
        %6567 = vmatprep.subr.mxu0 0.0
        %6568 = vmatpush1.msra.mxu0 0.0
        %6569 = vmatprep.subr.mxu0 0.0
        %6570 = vmatpush1.msra.mxu0 0.0
        %6571 = vmatprep.subr.mxu0 0.0
        %6572 = vmatpush1.msra.mxu0 0.0
        %6573 = vmatprep.subr.mxu0 0.0
        %6574 = vmatpush1.msra.mxu0 0.0
        %6575 = vmatprep.subr.mxu0 0.0
        %6576 = vmatpush1.msra.mxu0 0.0
        %6577 = vmatprep.subr.mxu0 0.0
        %v6578 = vand.u32 %v6120, 4294901760
        %v6579 = vsub.f32 %v6120, %v6578
        %v6580 = vand.u32 %v6579, 4294901760
        %6581 = vmatpush1.msra.mxu0 %v6580
        %6582 = vmatprep.subr.mxu0 0.0
        %v6583 = vand.u32 %v6119, 4294901760
        %v6584 = vsub.f32 %v6119, %v6583
        %v6585 = vand.u32 %v6584, 4294901760
        %6586 = vmatpush1.msra.mxu0 %v6585
        %6587 = vmatprep.subr.mxu0 0.0
        %v6588 = vand.u32 %v6118, 4294901760
        %v6589 = vsub.f32 %v6118, %v6588
        %v6590 = vand.u32 %v6589, 4294901760
        %6591 = vmatpush1.msra.mxu0 %v6590
        %6592 = vmatprep.subr.mxu0 0.0
        %v6593 = vand.u32 %v6117, 4294901760
        %v6594 = vsub.f32 %v6117, %v6593
        %v6595 = vand.u32 %v6594, 4294901760
        %6596 = vmatpush1.msra.mxu0 %v6595
        %6597 = vmatprep.subr.mxu0 0.0
        %6598 = vmatpush2.msra.mxu0 0.0
        %6599 = vmatprep.subr.mxu0 0.0
        %6600 = vmatpush2.msra.mxu0 0.0
        %6601 = vmatprep.subr.mxu0 0.0
        %6602 = vmatpush2.msra.mxu0 0.0
        %6603 = vmatprep.subr.mxu0 0.0
        %6604 = vmatpush2.msra.mxu0 0.0
        %6605 = vmatprep.subr.mxu0 0.0
        %6606 = vmatpush2.msra.mxu0 0.0
        %6607 = vmatprep.subr.mxu0 0.0
        %6608 = vmatpush2.msra.mxu0 0.0
        %6609 = vmatprep.subr.mxu0 0.0
        %6610 = vmatpush2.msra.mxu0 0.0
        %6611 = vmatprep.subr.mxu0 0.0
        %6612 = vmatpush2.msra.mxu0 0.0
        %6613 = vmatprep.subr.mxu0 0.0
        %6614 = vmatpush2.msra.mxu0 0.0
        %6615 = vmatprep.subr.mxu0 0.0
        %6616 = vmatpush2.msra.mxu0 0.0
        %6617 = vmatprep.subr.mxu0 0.0
        %6618 = vmatpush2.msra.mxu0 0.0
        %6619 = vmatprep.subr.mxu0 0.0
        %6620 = vmatpush2.msra.mxu0 0.0
        %6621 = vmatprep.subr.mxu0 0.0
        %6622 = vmatpush2.msra.mxu0 0.0
        %6623 = vmatprep.subr.mxu0 0.0
        %6624 = vmatpush2.msra.mxu0 0.0
        %6625 = vmatprep.subr.mxu0 0.0
        %6626 = vmatpush2.msra.mxu0 0.0
        %6627 = vmatprep.subr.mxu0 0.0
        %6628 = vmatpush2.msra.mxu0 0.0
        %6629 = vmatprep.mubr.f32.mxu0 0.0
        %v6630 = vand.u32 %v6122, 4294901760
        %6631 = vmatmul.mubr.f32.gmra.mxu0 %v6630
        %v6632 = vpop.f32.mrf.mxu0
        %v6633 = vadd.f32 %v6526, %v6632
        %v6634 = vpop.f32.mrf.mxu0
        %6635 = vmatprep.mubr.f32.mxu0 0.0
        %v6636 = vand.u32 %v6125, 4294901760
        %6637 = vmatmul.mubr.f32.gmra.mxu0 %v6636
        %v6638 = vpop.f32.mrf.mxu0
        %v6639 = vadd.f32 %v6534, %v6638
        %v6640 = vpop.f32.mrf.mxu0
        %6641 = vmatprep.mubr.f32.mxu0 0.0
        %v6642 = vand.u32 %v6128, 4294901760
        %6643 = vmatmul.mubr.f32.gmra.mxu0 %v6642
        %v6644 = vpop.f32.mrf.mxu0
        %v6645 = vadd.f32 %v6542, %v6644
        %v6646 = vpop.f32.mrf.mxu0
        %6647 = vmatprep.mubr.f32.mxu0 0.0
        %v6648 = vand.u32 %v6131, 4294901760
        %6649 = vmatmul.mubr.f32.gmra.mxu0 %v6648
        %v6650 = vpop.f32.mrf.mxu0
        %v6651 = vadd.f32 %v6550, %v6650
        %v6652 = vpop.f32.mrf.mxu0
        %6653 = vdwg.mxu0
        %6654 = vmatprep.subr.mxu0 0.0
        %6655 = vmatpush1.msra.mxu0 0.0
        %6656 = vmatprep.subr.mxu0 0.0
        %6657 = vmatpush1.msra.mxu0 0.0
        %6658 = vmatprep.subr.mxu0 0.0
        %6659 = vmatpush1.msra.mxu0 0.0
        %6660 = vmatprep.subr.mxu0 0.0
        %6661 = vmatpush1.msra.mxu0 0.0
        %6662 = vmatprep.subr.mxu0 0.0
        %6663 = vmatpush1.msra.mxu0 0.0
        %6664 = vmatprep.subr.mxu0 0.0
        %6665 = vmatpush1.msra.mxu0 0.0
        %6666 = vmatprep.subr.mxu0 0.0
        %6667 = vmatpush1.msra.mxu0 0.0
        %6668 = vmatprep.subr.mxu0 0.0
        %6669 = vmatpush1.msra.mxu0 0.0
        %6670 = vmatprep.subr.mxu0 0.0
        %6671 = vmatpush1.msra.mxu0 0.0
        %6672 = vmatprep.subr.mxu0 0.0
        %6673 = vmatpush1.msra.mxu0 0.0
        %6674 = vmatprep.subr.mxu0 0.0
        %6675 = vmatpush1.msra.mxu0 0.0
        %6676 = vmatprep.subr.mxu0 0.0
        %6677 = vmatpush1.msra.mxu0 0.0
        %6678 = vmatprep.subr.mxu0 0.0
        %v6679 = vand.u32 %v6120, 4294901760
        %6680 = vmatpush1.msra.mxu0 %v6679
        %6681 = vmatprep.subr.mxu0 0.0
        %v6682 = vand.u32 %v6119, 4294901760
        %6683 = vmatpush1.msra.mxu0 %v6682
        %6684 = vmatprep.subr.mxu0 0.0
        %v6685 = vand.u32 %v6118, 4294901760
        %6686 = vmatpush1.msra.mxu0 %v6685
        %6687 = vmatprep.subr.mxu0 0.0
        %v6688 = vand.u32 %v6117, 4294901760
        %6689 = vmatpush1.msra.mxu0 %v6688
        %6690 = vmatprep.subr.mxu0 0.0
        %6691 = vmatpush2.msra.mxu0 0.0
        %6692 = vmatprep.subr.mxu0 0.0
        %6693 = vmatpush2.msra.mxu0 0.0
        %6694 = vmatprep.subr.mxu0 0.0
        %6695 = vmatpush2.msra.mxu0 0.0
        %6696 = vmatprep.subr.mxu0 0.0
        %6697 = vmatpush2.msra.mxu0 0.0
        %6698 = vmatprep.subr.mxu0 0.0
        %6699 = vmatpush2.msra.mxu0 0.0
        %6700 = vmatprep.subr.mxu0 0.0
        %6701 = vmatpush2.msra.mxu0 0.0
        %6702 = vmatprep.subr.mxu0 0.0
        %6703 = vmatpush2.msra.mxu0 0.0
        %6704 = vmatprep.subr.mxu0 0.0
        %6705 = vmatpush2.msra.mxu0 0.0
        %6706 = vmatprep.subr.mxu0 0.0
        %6707 = vmatpush2.msra.mxu0 0.0
        %6708 = vmatprep.subr.mxu0 0.0
        %6709 = vmatpush2.msra.mxu0 0.0
        %6710 = vmatprep.subr.mxu0 0.0
        %6711 = vmatpush2.msra.mxu0 0.0
        %6712 = vmatprep.subr.mxu0 0.0
        %6713 = vmatpush2.msra.mxu0 0.0
        %6714 = vmatprep.subr.mxu0 0.0
        %6715 = vmatpush2.msra.mxu0 0.0
        %6716 = vmatprep.subr.mxu0 0.0
        %6717 = vmatpush2.msra.mxu0 0.0
        %6718 = vmatprep.subr.mxu0 0.0
        %6719 = vmatpush2.msra.mxu0 0.0
        %6720 = vmatprep.subr.mxu0 0.0
        %6721 = vmatpush2.msra.mxu0 0.0
        %6722 = vmatprep.mubr.f32.mxu0 0.0
        %v6723 = vand.u32 %v6122, 4294901760
        %6724 = vmatmul.mubr.f32.gmra.mxu0 %v6723
        %v6725 = vpop.f32.mrf.mxu0
        %v6726 = vadd.f32 %v6633, %v6725
        %v6727 = vpop.f32.mrf.mxu0
        %6728 = vmatprep.mubr.f32.mxu0 0.0
        %v6729 = vand.u32 %v6125, 4294901760
        %6730 = vmatmul.mubr.f32.gmra.mxu0 %v6729
        %v6731 = vpop.f32.mrf.mxu0
        %v6732 = vadd.f32 %v6639, %v6731
        %v6733 = vpop.f32.mrf.mxu0
        %6734 = vmatprep.mubr.f32.mxu0 0.0
        %v6735 = vand.u32 %v6128, 4294901760
        %6736 = vmatmul.mubr.f32.gmra.mxu0 %v6735
        %v6737 = vpop.f32.mrf.mxu0
        %v6738 = vadd.f32 %v6645, %v6737
        %v6739 = vpop.f32.mrf.mxu0
        %6740 = vmatprep.mubr.f32.mxu0 0.0
        %v6741 = vand.u32 %v6131, 4294901760
        %6742 = vmatmul.mubr.f32.gmra.mxu0 %v6741
        %v6743 = vpop.f32.mrf.mxu0
        %v6744 = vadd.f32 %v6651, %v6743
        %v6745 = vpop.f32.mrf.mxu0
        %6746 = vdwg.mxu0
        %v6748 = vsel %vm1979, %v6106, 0
        %v6751 = vsel %vm1979, %v6108, 0
        %v6754 = vsel %vm1979, %v6110, 0
        %v6757 = vsel %vm1979, %v6112, 0
        %6759 = vmatprep.subr.mxu0 0.0
        %6760 = vmatpush1.msra.mxu0 0.0
        %6761 = vmatprep.subr.mxu0 0.0
        %6762 = vmatpush1.msra.mxu0 0.0
        %6763 = vmatprep.subr.mxu0 0.0
        %6764 = vmatpush1.msra.mxu0 0.0
        %6765 = vmatprep.subr.mxu0 0.0
        %6766 = vmatpush1.msra.mxu0 0.0
        %6767 = vmatprep.subr.mxu0 0.0
        %6768 = vmatpush1.msra.mxu0 0.0
        %6769 = vmatprep.subr.mxu0 0.0
        %6770 = vmatpush1.msra.mxu0 0.0
        %6771 = vmatprep.subr.mxu0 0.0
        %6772 = vmatpush1.msra.mxu0 0.0
        %6773 = vmatprep.subr.mxu0 0.0
        %6774 = vmatpush1.msra.mxu0 0.0
        %6775 = vmatprep.subr.mxu0 0.0
        %6776 = vmatpush1.msra.mxu0 0.0
        %6777 = vmatprep.subr.mxu0 0.0
        %6778 = vmatpush1.msra.mxu0 0.0
        %6779 = vmatprep.subr.mxu0 0.0
        %6780 = vmatpush1.msra.mxu0 0.0
        %6781 = vmatprep.subr.mxu0 0.0
        %6782 = vmatpush1.msra.mxu0 0.0
        %6783 = vmatprep.subr.mxu0 0.0
        %v6784 = vand.u32 %v6116, 4294901760
        %6785 = vmatpush1.msra.mxu0 %v6784
        %6786 = vmatprep.subr.mxu0 0.0
        %v6787 = vand.u32 %v6115, 4294901760
        %6788 = vmatpush1.msra.mxu0 %v6787
        %6789 = vmatprep.subr.mxu0 0.0
        %v6790 = vand.u32 %v6114, 4294901760
        %6791 = vmatpush1.msra.mxu0 %v6790
        %6792 = vmatprep.subr.mxu0 0.0
        %v6793 = vand.u32 %v6113, 4294901760
        %6794 = vmatpush1.msra.mxu0 %v6793
        %6795 = vmatprep.subr.mxu0 0.0
        %6796 = vmatpush2.msra.mxu0 0.0
        %6797 = vmatprep.subr.mxu0 0.0
        %6798 = vmatpush2.msra.mxu0 0.0
        %6799 = vmatprep.subr.mxu0 0.0
        %6800 = vmatpush2.msra.mxu0 0.0
        %6801 = vmatprep.subr.mxu0 0.0
        %6802 = vmatpush2.msra.mxu0 0.0
        %6803 = vmatprep.subr.mxu0 0.0
        %6804 = vmatpush2.msra.mxu0 0.0
        %6805 = vmatprep.subr.mxu0 0.0
        %6806 = vmatpush2.msra.mxu0 0.0
        %6807 = vmatprep.subr.mxu0 0.0
        %6808 = vmatpush2.msra.mxu0 0.0
        %6809 = vmatprep.subr.mxu0 0.0
        %6810 = vmatpush2.msra.mxu0 0.0
        %6811 = vmatprep.subr.mxu0 0.0
        %6812 = vmatpush2.msra.mxu0 0.0
        %6813 = vmatprep.subr.mxu0 0.0
        %6814 = vmatpush2.msra.mxu0 0.0
        %6815 = vmatprep.subr.mxu0 0.0
        %6816 = vmatpush2.msra.mxu0 0.0
        %6817 = vmatprep.subr.mxu0 0.0
        %6818 = vmatpush2.msra.mxu0 0.0
        %6819 = vmatprep.subr.mxu0 0.0
        %6820 = vmatpush2.msra.mxu0 0.0
        %6821 = vmatprep.subr.mxu0 0.0
        %6822 = vmatpush2.msra.mxu0 0.0
        %6823 = vmatprep.subr.mxu0 0.0
        %6824 = vmatpush2.msra.mxu0 0.0
        %6825 = vmatprep.subr.mxu0 0.0
        %6826 = vmatpush2.msra.mxu0 0.0
        %6827 = vmatprep.mubr.f32.mxu0 0.0
        %v6828 = vand.u32 %v6748, 4294901760
        %v6829 = vsub.f32 %v6748, %v6828
        %v6830 = vand.u32 %v6829, 4294901760
        %v6831 = vsub.f32 %v6829, %v6830
        %v6832 = vand.u32 %v6831, 4294901760
        %6833 = vmatmul.mubr.f32.gmra.mxu0 %v6832
        %v6834 = vpop.f32.mrf.mxu0
        %v6835 = vadd.f32 %v6726, %v6834
        %v6836 = vpop.f32.mrf.mxu0
        %6837 = vmatprep.mubr.f32.mxu0 0.0
        %v6838 = vand.u32 %v6751, 4294901760
        %v6839 = vsub.f32 %v6751, %v6838
        %v6840 = vand.u32 %v6839, 4294901760
        %v6841 = vsub.f32 %v6839, %v6840
        %v6842 = vand.u32 %v6841, 4294901760
        %6843 = vmatmul.mubr.f32.gmra.mxu0 %v6842
        %v6844 = vpop.f32.mrf.mxu0
        %v6845 = vadd.f32 %v6732, %v6844
        %v6846 = vpop.f32.mrf.mxu0
        %6847 = vmatprep.mubr.f32.mxu0 0.0
        %v6848 = vand.u32 %v6754, 4294901760
        %v6849 = vsub.f32 %v6754, %v6848
        %v6850 = vand.u32 %v6849, 4294901760
        %v6851 = vsub.f32 %v6849, %v6850
        %v6852 = vand.u32 %v6851, 4294901760
        %6853 = vmatmul.mubr.f32.gmra.mxu0 %v6852
        %v6854 = vpop.f32.mrf.mxu0
        %v6855 = vadd.f32 %v6738, %v6854
        %v6856 = vpop.f32.mrf.mxu0
        %6857 = vmatprep.mubr.f32.mxu0 0.0
        %v6858 = vand.u32 %v6757, 4294901760
        %v6859 = vsub.f32 %v6757, %v6858
        %v6860 = vand.u32 %v6859, 4294901760
        %v6861 = vsub.f32 %v6859, %v6860
        %v6862 = vand.u32 %v6861, 4294901760
        %6863 = vmatmul.mubr.f32.gmra.mxu0 %v6862
        %v6864 = vpop.f32.mrf.mxu0
        %v6865 = vadd.f32 %v6744, %v6864
        %v6866 = vpop.f32.mrf.mxu0
        %6867 = vdwg.mxu0
        %6868 = vmatprep.subr.mxu0 0.0
        %6869 = vmatpush1.msra.mxu0 0.0
        %6870 = vmatprep.subr.mxu0 0.0
        %6871 = vmatpush1.msra.mxu0 0.0
        %6872 = vmatprep.subr.mxu0 0.0
        %6873 = vmatpush1.msra.mxu0 0.0
        %6874 = vmatprep.subr.mxu0 0.0
        %6875 = vmatpush1.msra.mxu0 0.0
        %6876 = vmatprep.subr.mxu0 0.0
        %6877 = vmatpush1.msra.mxu0 0.0
        %6878 = vmatprep.subr.mxu0 0.0
        %6879 = vmatpush1.msra.mxu0 0.0
        %6880 = vmatprep.subr.mxu0 0.0
        %6881 = vmatpush1.msra.mxu0 0.0
        %6882 = vmatprep.subr.mxu0 0.0
        %6883 = vmatpush1.msra.mxu0 0.0
        %6884 = vmatprep.subr.mxu0 0.0
        %6885 = vmatpush1.msra.mxu0 0.0
        %6886 = vmatprep.subr.mxu0 0.0
        %6887 = vmatpush1.msra.mxu0 0.0
        %6888 = vmatprep.subr.mxu0 0.0
        %6889 = vmatpush1.msra.mxu0 0.0
        %6890 = vmatprep.subr.mxu0 0.0
        %6891 = vmatpush1.msra.mxu0 0.0
        %6892 = vmatprep.subr.mxu0 0.0
        %v6893 = vand.u32 %v6116, 4294901760
        %v6894 = vsub.f32 %v6116, %v6893
        %v6895 = vand.u32 %v6894, 4294901760
        %v6896 = vsub.f32 %v6894, %v6895
        %v6897 = vand.u32 %v6896, 4294901760
        %6898 = vmatpush1.msra.mxu0 %v6897
        %6899 = vmatprep.subr.mxu0 0.0
        %v6900 = vand.u32 %v6115, 4294901760
        %v6901 = vsub.f32 %v6115, %v6900
        %v6902 = vand.u32 %v6901, 4294901760
        %v6903 = vsub.f32 %v6901, %v6902
        %v6904 = vand.u32 %v6903, 4294901760
        %6905 = vmatpush1.msra.mxu0 %v6904
        %6906 = vmatprep.subr.mxu0 0.0
        %v6907 = vand.u32 %v6114, 4294901760
        %v6908 = vsub.f32 %v6114, %v6907
        %v6909 = vand.u32 %v6908, 4294901760
        %v6910 = vsub.f32 %v6908, %v6909
        %v6911 = vand.u32 %v6910, 4294901760
        %6912 = vmatpush1.msra.mxu0 %v6911
        %6913 = vmatprep.subr.mxu0 0.0
        %v6914 = vand.u32 %v6113, 4294901760
        %v6915 = vsub.f32 %v6113, %v6914
        %v6916 = vand.u32 %v6915, 4294901760
        %v6917 = vsub.f32 %v6915, %v6916
        %v6918 = vand.u32 %v6917, 4294901760
        %6919 = vmatpush1.msra.mxu0 %v6918
        %6920 = vmatprep.subr.mxu0 0.0
        %6921 = vmatpush2.msra.mxu0 0.0
        %6922 = vmatprep.subr.mxu0 0.0
        %6923 = vmatpush2.msra.mxu0 0.0
        %6924 = vmatprep.subr.mxu0 0.0
        %6925 = vmatpush2.msra.mxu0 0.0
        %6926 = vmatprep.subr.mxu0 0.0
        %6927 = vmatpush2.msra.mxu0 0.0
        %6928 = vmatprep.subr.mxu0 0.0
        %6929 = vmatpush2.msra.mxu0 0.0
        %6930 = vmatprep.subr.mxu0 0.0
        %6931 = vmatpush2.msra.mxu0 0.0
        %6932 = vmatprep.subr.mxu0 0.0
        %6933 = vmatpush2.msra.mxu0 0.0
        %6934 = vmatprep.subr.mxu0 0.0
        %6935 = vmatpush2.msra.mxu0 0.0
        %6936 = vmatprep.subr.mxu0 0.0
        %6937 = vmatpush2.msra.mxu0 0.0
        %6938 = vmatprep.subr.mxu0 0.0
        %6939 = vmatpush2.msra.mxu0 0.0
        %6940 = vmatprep.subr.mxu0 0.0
        %6941 = vmatpush2.msra.mxu0 0.0
        %6942 = vmatprep.subr.mxu0 0.0
        %6943 = vmatpush2.msra.mxu0 0.0
        %6944 = vmatprep.subr.mxu0 0.0
        %6945 = vmatpush2.msra.mxu0 0.0
        %6946 = vmatprep.subr.mxu0 0.0
        %6947 = vmatpush2.msra.mxu0 0.0
        %6948 = vmatprep.subr.mxu0 0.0
        %6949 = vmatpush2.msra.mxu0 0.0
        %6950 = vmatprep.subr.mxu0 0.0
        %6951 = vmatpush2.msra.mxu0 0.0
        %6952 = vmatprep.mubr.f32.mxu0 0.0
        %v6953 = vand.u32 %v6748, 4294901760
        %6954 = vmatmul.mubr.f32.gmra.mxu0 %v6953
        %v6955 = vpop.f32.mrf.mxu0
        %v6956 = vadd.f32 %v6835, %v6955
        %v6957 = vpop.f32.mrf.mxu0
        %6958 = vmatprep.mubr.f32.mxu0 0.0
        %v6959 = vand.u32 %v6751, 4294901760
        %6960 = vmatmul.mubr.f32.gmra.mxu0 %v6959
        %v6961 = vpop.f32.mrf.mxu0
        %v6962 = vadd.f32 %v6845, %v6961
        %v6963 = vpop.f32.mrf.mxu0
        %6964 = vmatprep.mubr.f32.mxu0 0.0
        %v6965 = vand.u32 %v6754, 4294901760
        %6966 = vmatmul.mubr.f32.gmra.mxu0 %v6965
        %v6967 = vpop.f32.mrf.mxu0
        %v6968 = vadd.f32 %v6855, %v6967
        %v6969 = vpop.f32.mrf.mxu0
        %6970 = vmatprep.mubr.f32.mxu0 0.0
        %v6971 = vand.u32 %v6757, 4294901760
        %6972 = vmatmul.mubr.f32.gmra.mxu0 %v6971
        %v6973 = vpop.f32.mrf.mxu0
        %v6974 = vadd.f32 %v6865, %v6973
        %v6975 = vpop.f32.mrf.mxu0
        %6976 = vdwg.mxu0
        %6977 = vmatprep.subr.mxu0 0.0
        %6978 = vmatpush1.msra.mxu0 0.0
        %6979 = vmatprep.subr.mxu0 0.0
        %6980 = vmatpush1.msra.mxu0 0.0
        %6981 = vmatprep.subr.mxu0 0.0
        %6982 = vmatpush1.msra.mxu0 0.0
        %6983 = vmatprep.subr.mxu0 0.0
        %6984 = vmatpush1.msra.mxu0 0.0
        %6985 = vmatprep.subr.mxu0 0.0
        %6986 = vmatpush1.msra.mxu0 0.0
        %6987 = vmatprep.subr.mxu0 0.0
        %6988 = vmatpush1.msra.mxu0 0.0
        %6989 = vmatprep.subr.mxu0 0.0
        %6990 = vmatpush1.msra.mxu0 0.0
        %6991 = vmatprep.subr.mxu0 0.0
        %6992 = vmatpush1.msra.mxu0 0.0
        %6993 = vmatprep.subr.mxu0 0.0
        %6994 = vmatpush1.msra.mxu0 0.0
        %6995 = vmatprep.subr.mxu0 0.0
        %6996 = vmatpush1.msra.mxu0 0.0
        %6997 = vmatprep.subr.mxu0 0.0
        %6998 = vmatpush1.msra.mxu0 0.0
        %6999 = vmatprep.subr.mxu0 0.0
        %7000 = vmatpush1.msra.mxu0 0.0
        %7001 = vmatprep.subr.mxu0 0.0
        %v7002 = vand.u32 %v6116, 4294901760
        %v7003 = vsub.f32 %v6116, %v7002
        %7004 = vmatpush1.msra.mxu0 %v7003
        %7005 = vmatprep.subr.mxu0 0.0
        %v7006 = vand.u32 %v6115, 4294901760
        %v7007 = vsub.f32 %v6115, %v7006
        %7008 = vmatpush1.msra.mxu0 %v7007
        %7009 = vmatprep.subr.mxu0 0.0
        %v7010 = vand.u32 %v6114, 4294901760
        %v7011 = vsub.f32 %v6114, %v7010
        %7012 = vmatpush1.msra.mxu0 %v7011
        %7013 = vmatprep.subr.mxu0 0.0
        %v7014 = vand.u32 %v6113, 4294901760
        %v7015 = vsub.f32 %v6113, %v7014
        %7016 = vmatpush1.msra.mxu0 %v7015
        %7017 = vmatprep.subr.mxu0 0.0
        %7018 = vmatpush2.msra.mxu0 0.0
        %7019 = vmatprep.subr.mxu0 0.0
        %7020 = vmatpush2.msra.mxu0 0.0
        %7021 = vmatprep.subr.mxu0 0.0
        %7022 = vmatpush2.msra.mxu0 0.0
        %7023 = vmatprep.subr.mxu0 0.0
        %7024 = vmatpush2.msra.mxu0 0.0
        %7025 = vmatprep.subr.mxu0 0.0
        %7026 = vmatpush2.msra.mxu0 0.0
        %7027 = vmatprep.subr.mxu0 0.0
        %7028 = vmatpush2.msra.mxu0 0.0
        %7029 = vmatprep.subr.mxu0 0.0
        %7030 = vmatpush2.msra.mxu0 0.0
        %7031 = vmatprep.subr.mxu0 0.0
        %7032 = vmatpush2.msra.mxu0 0.0
        %7033 = vmatprep.subr.mxu0 0.0
        %7034 = vmatpush2.msra.mxu0 0.0
        %7035 = vmatprep.subr.mxu0 0.0
        %7036 = vmatpush2.msra.mxu0 0.0
        %7037 = vmatprep.subr.mxu0 0.0
        %7038 = vmatpush2.msra.mxu0 0.0
        %7039 = vmatprep.subr.mxu0 0.0
        %7040 = vmatpush2.msra.mxu0 0.0
        %7041 = vmatprep.subr.mxu0 0.0
        %7042 = vmatpush2.msra.mxu0 0.0
        %7043 = vmatprep.subr.mxu0 0.0
        %7044 = vmatpush2.msra.mxu0 0.0
        %7045 = vmatprep.subr.mxu0 0.0
        %7046 = vmatpush2.msra.mxu0 0.0
        %7047 = vmatprep.subr.mxu0 0.0
        %7048 = vmatpush2.msra.mxu0 0.0
        %7049 = vmatprep.mubr.f32.mxu0 0.0
        %v7050 = vand.u32 %v6748, 4294901760
        %v7051 = vsub.f32 %v6748, %v7050
        %7052 = vmatmul.mubr.f32.gmra.mxu0 %v7051
        %v7053 = vpop.f32.mrf.mxu0
        %v7054 = vadd.f32 %v6956, %v7053
        %v7055 = vpop.f32.mrf.mxu0
        %7056 = vmatprep.mubr.f32.mxu0 0.0
        %v7057 = vand.u32 %v6751, 4294901760
        %v7058 = vsub.f32 %v6751, %v7057
        %7059 = vmatmul.mubr.f32.gmra.mxu0 %v7058
        %v7060 = vpop.f32.mrf.mxu0
        %v7061 = vadd.f32 %v6962, %v7060
        %v7062 = vpop.f32.mrf.mxu0
        %7063 = vmatprep.mubr.f32.mxu0 0.0
        %v7064 = vand.u32 %v6754, 4294901760
        %v7065 = vsub.f32 %v6754, %v7064
        %7066 = vmatmul.mubr.f32.gmra.mxu0 %v7065
        %v7067 = vpop.f32.mrf.mxu0
        %v7068 = vadd.f32 %v6968, %v7067
        %v7069 = vpop.f32.mrf.mxu0
        %7070 = vmatprep.mubr.f32.mxu0 0.0
        %v7071 = vand.u32 %v6757, 4294901760
        %v7072 = vsub.f32 %v6757, %v7071
        %7073 = vmatmul.mubr.f32.gmra.mxu0 %v7072
        %v7074 = vpop.f32.mrf.mxu0
        %v7075 = vadd.f32 %v6974, %v7074
        %v7076 = vpop.f32.mrf.mxu0
        %7077 = vdwg.mxu0
        %7078 = vmatprep.subr.mxu0 0.0
        %7079 = vmatpush1.msra.mxu0 0.0
        %7080 = vmatprep.subr.mxu0 0.0
        %7081 = vmatpush1.msra.mxu0 0.0
        %7082 = vmatprep.subr.mxu0 0.0
        %7083 = vmatpush1.msra.mxu0 0.0
        %7084 = vmatprep.subr.mxu0 0.0
        %7085 = vmatpush1.msra.mxu0 0.0
        %7086 = vmatprep.subr.mxu0 0.0
        %7087 = vmatpush1.msra.mxu0 0.0
        %7088 = vmatprep.subr.mxu0 0.0
        %7089 = vmatpush1.msra.mxu0 0.0
        %7090 = vmatprep.subr.mxu0 0.0
        %7091 = vmatpush1.msra.mxu0 0.0
        %7092 = vmatprep.subr.mxu0 0.0
        %7093 = vmatpush1.msra.mxu0 0.0
        %7094 = vmatprep.subr.mxu0 0.0
        %7095 = vmatpush1.msra.mxu0 0.0
        %7096 = vmatprep.subr.mxu0 0.0
        %7097 = vmatpush1.msra.mxu0 0.0
        %7098 = vmatprep.subr.mxu0 0.0
        %7099 = vmatpush1.msra.mxu0 0.0
        %7100 = vmatprep.subr.mxu0 0.0
        %7101 = vmatpush1.msra.mxu0 0.0
        %7102 = vmatprep.subr.mxu0 0.0
        %v7103 = vand.u32 %v6116, 4294901760
        %7104 = vmatpush1.msra.mxu0 %v7103
        %7105 = vmatprep.subr.mxu0 0.0
        %v7106 = vand.u32 %v6115, 4294901760
        %7107 = vmatpush1.msra.mxu0 %v7106
        %7108 = vmatprep.subr.mxu0 0.0
        %v7109 = vand.u32 %v6114, 4294901760
        %7110 = vmatpush1.msra.mxu0 %v7109
        %7111 = vmatprep.subr.mxu0 0.0
        %v7112 = vand.u32 %v6113, 4294901760
        %7113 = vmatpush1.msra.mxu0 %v7112
        %7114 = vmatprep.subr.mxu0 0.0
        %7115 = vmatpush2.msra.mxu0 0.0
        %7116 = vmatprep.subr.mxu0 0.0
        %7117 = vmatpush2.msra.mxu0 0.0
        %7118 = vmatprep.subr.mxu0 0.0
        %7119 = vmatpush2.msra.mxu0 0.0
        %7120 = vmatprep.subr.mxu0 0.0
        %7121 = vmatpush2.msra.mxu0 0.0
        %7122 = vmatprep.subr.mxu0 0.0
        %7123 = vmatpush2.msra.mxu0 0.0
        %7124 = vmatprep.subr.mxu0 0.0
        %7125 = vmatpush2.msra.mxu0 0.0
        %7126 = vmatprep.subr.mxu0 0.0
        %7127 = vmatpush2.msra.mxu0 0.0
        %7128 = vmatprep.subr.mxu0 0.0
        %7129 = vmatpush2.msra.mxu0 0.0
        %7130 = vmatprep.subr.mxu0 0.0
        %7131 = vmatpush2.msra.mxu0 0.0
        %7132 = vmatprep.subr.mxu0 0.0
        %7133 = vmatpush2.msra.mxu0 0.0
        %7134 = vmatprep.subr.mxu0 0.0
        %7135 = vmatpush2.msra.mxu0 0.0
        %7136 = vmatprep.subr.mxu0 0.0
        %7137 = vmatpush2.msra.mxu0 0.0
        %7138 = vmatprep.subr.mxu0 0.0
        %7139 = vmatpush2.msra.mxu0 0.0
        %7140 = vmatprep.subr.mxu0 0.0
        %7141 = vmatpush2.msra.mxu0 0.0
        %7142 = vmatprep.subr.mxu0 0.0
        %7143 = vmatpush2.msra.mxu0 0.0
        %7144 = vmatprep.subr.mxu0 0.0
        %7145 = vmatpush2.msra.mxu0 0.0
        %7146 = vmatprep.mubr.f32.mxu0 0.0
        %v7147 = vand.u32 %v6748, 4294901760
        %v7148 = vsub.f32 %v6748, %v7147
        %v7149 = vand.u32 %v7148, 4294901760
        %7150 = vmatmul.mubr.f32.gmra.mxu0 %v7149
        %v7151 = vpop.f32.mrf.mxu0
        %v7152 = vadd.f32 %v7054, %v7151
        %v7153 = vpop.f32.mrf.mxu0
        %7154 = vmatprep.mubr.f32.mxu0 0.0
        %v7155 = vand.u32 %v6751, 4294901760
        %v7156 = vsub.f32 %v6751, %v7155
        %v7157 = vand.u32 %v7156, 4294901760
        %7158 = vmatmul.mubr.f32.gmra.mxu0 %v7157
        %v7159 = vpop.f32.mrf.mxu0
        %v7160 = vadd.f32 %v7061, %v7159
        %v7161 = vpop.f32.mrf.mxu0
        %7162 = vmatprep.mubr.f32.mxu0 0.0
        %v7163 = vand.u32 %v6754, 4294901760
        %v7164 = vsub.f32 %v6754, %v7163
        %v7165 = vand.u32 %v7164, 4294901760
        %7166 = vmatmul.mubr.f32.gmra.mxu0 %v7165
        %v7167 = vpop.f32.mrf.mxu0
        %v7168 = vadd.f32 %v7068, %v7167
        %v7169 = vpop.f32.mrf.mxu0
        %7170 = vmatprep.mubr.f32.mxu0 0.0
        %v7171 = vand.u32 %v6757, 4294901760
        %v7172 = vsub.f32 %v6757, %v7171
        %v7173 = vand.u32 %v7172, 4294901760
        %7174 = vmatmul.mubr.f32.gmra.mxu0 %v7173
        %v7175 = vpop.f32.mrf.mxu0
        %v7176 = vadd.f32 %v7075, %v7175
        %v7177 = vpop.f32.mrf.mxu0
        %7178 = vdwg.mxu0
        %7179 = vmatprep.subr.mxu0 0.0
        %7180 = vmatpush1.msra.mxu0 0.0
        %7181 = vmatprep.subr.mxu0 0.0
        %7182 = vmatpush1.msra.mxu0 0.0
        %7183 = vmatprep.subr.mxu0 0.0
        %7184 = vmatpush1.msra.mxu0 0.0
        %7185 = vmatprep.subr.mxu0 0.0
        %7186 = vmatpush1.msra.mxu0 0.0
        %7187 = vmatprep.subr.mxu0 0.0
        %7188 = vmatpush1.msra.mxu0 0.0
        %7189 = vmatprep.subr.mxu0 0.0
        %7190 = vmatpush1.msra.mxu0 0.0
        %7191 = vmatprep.subr.mxu0 0.0
        %7192 = vmatpush1.msra.mxu0 0.0
        %7193 = vmatprep.subr.mxu0 0.0
        %7194 = vmatpush1.msra.mxu0 0.0
        %7195 = vmatprep.subr.mxu0 0.0
        %7196 = vmatpush1.msra.mxu0 0.0
        %7197 = vmatprep.subr.mxu0 0.0
        %7198 = vmatpush1.msra.mxu0 0.0
        %7199 = vmatprep.subr.mxu0 0.0
        %7200 = vmatpush1.msra.mxu0 0.0
        %7201 = vmatprep.subr.mxu0 0.0
        %7202 = vmatpush1.msra.mxu0 0.0
        %7203 = vmatprep.subr.mxu0 0.0
        %v7204 = vand.u32 %v6116, 4294901760
        %v7205 = vsub.f32 %v6116, %v7204
        %v7206 = vand.u32 %v7205, 4294901760
        %7207 = vmatpush1.msra.mxu0 %v7206
        %7208 = vmatprep.subr.mxu0 0.0
        %v7209 = vand.u32 %v6115, 4294901760
        %v7210 = vsub.f32 %v6115, %v7209
        %v7211 = vand.u32 %v7210, 4294901760
        %7212 = vmatpush1.msra.mxu0 %v7211
        %7213 = vmatprep.subr.mxu0 0.0
        %v7214 = vand.u32 %v6114, 4294901760
        %v7215 = vsub.f32 %v6114, %v7214
        %v7216 = vand.u32 %v7215, 4294901760
        %7217 = vmatpush1.msra.mxu0 %v7216
        %7218 = vmatprep.subr.mxu0 0.0
        %v7219 = vand.u32 %v6113, 4294901760
        %v7220 = vsub.f32 %v6113, %v7219
        %v7221 = vand.u32 %v7220, 4294901760
        %7222 = vmatpush1.msra.mxu0 %v7221
        %7223 = vmatprep.subr.mxu0 0.0
        %7224 = vmatpush2.msra.mxu0 0.0
        %7225 = vmatprep.subr.mxu0 0.0
        %7226 = vmatpush2.msra.mxu0 0.0
        %7227 = vmatprep.subr.mxu0 0.0
        %7228 = vmatpush2.msra.mxu0 0.0
        %7229 = vmatprep.subr.mxu0 0.0
        %7230 = vmatpush2.msra.mxu0 0.0
        %7231 = vmatprep.subr.mxu0 0.0
        %7232 = vmatpush2.msra.mxu0 0.0
        %7233 = vmatprep.subr.mxu0 0.0
        %7234 = vmatpush2.msra.mxu0 0.0
        %7235 = vmatprep.subr.mxu0 0.0
        %7236 = vmatpush2.msra.mxu0 0.0
        %7237 = vmatprep.subr.mxu0 0.0
        %7238 = vmatpush2.msra.mxu0 0.0
        %7239 = vmatprep.subr.mxu0 0.0
        %7240 = vmatpush2.msra.mxu0 0.0
        %7241 = vmatprep.subr.mxu0 0.0
        %7242 = vmatpush2.msra.mxu0 0.0
        %7243 = vmatprep.subr.mxu0 0.0
        %7244 = vmatpush2.msra.mxu0 0.0
        %7245 = vmatprep.subr.mxu0 0.0
        %7246 = vmatpush2.msra.mxu0 0.0
        %7247 = vmatprep.subr.mxu0 0.0
        %7248 = vmatpush2.msra.mxu0 0.0
        %7249 = vmatprep.subr.mxu0 0.0
        %7250 = vmatpush2.msra.mxu0 0.0
        %7251 = vmatprep.subr.mxu0 0.0
        %7252 = vmatpush2.msra.mxu0 0.0
        %7253 = vmatprep.subr.mxu0 0.0
        %7254 = vmatpush2.msra.mxu0 0.0
        %7255 = vmatprep.mubr.f32.mxu0 0.0
        %v7256 = vand.u32 %v6748, 4294901760
        %7257 = vmatmul.mubr.f32.gmra.mxu0 %v7256
        %v7258 = vpop.f32.mrf.mxu0
        %v7259 = vadd.f32 %v7152, %v7258
        %v7260 = vpop.f32.mrf.mxu0
        %7261 = vmatprep.mubr.f32.mxu0 0.0
        %v7262 = vand.u32 %v6751, 4294901760
        %7263 = vmatmul.mubr.f32.gmra.mxu0 %v7262
        %v7264 = vpop.f32.mrf.mxu0
        %v7265 = vadd.f32 %v7160, %v7264
        %v7266 = vpop.f32.mrf.mxu0
        %7267 = vmatprep.mubr.f32.mxu0 0.0
        %v7268 = vand.u32 %v6754, 4294901760
        %7269 = vmatmul.mubr.f32.gmra.mxu0 %v7268
        %v7270 = vpop.f32.mrf.mxu0
        %v7271 = vadd.f32 %v7168, %v7270
        %v7272 = vpop.f32.mrf.mxu0
        %7273 = vmatprep.mubr.f32.mxu0 0.0
        %v7274 = vand.u32 %v6757, 4294901760
        %7275 = vmatmul.mubr.f32.gmra.mxu0 %v7274
        %v7276 = vpop.f32.mrf.mxu0
        %v7277 = vadd.f32 %v7176, %v7276
        %v7278 = vpop.f32.mrf.mxu0
        %7279 = vdwg.mxu0
        %7280 = vmatprep.subr.mxu0 0.0
        %7281 = vmatpush1.msra.mxu0 0.0
        %7282 = vmatprep.subr.mxu0 0.0
        %7283 = vmatpush1.msra.mxu0 0.0
        %7284 = vmatprep.subr.mxu0 0.0
        %7285 = vmatpush1.msra.mxu0 0.0
        %7286 = vmatprep.subr.mxu0 0.0
        %7287 = vmatpush1.msra.mxu0 0.0
        %7288 = vmatprep.subr.mxu0 0.0
        %7289 = vmatpush1.msra.mxu0 0.0
        %7290 = vmatprep.subr.mxu0 0.0
        %7291 = vmatpush1.msra.mxu0 0.0
        %7292 = vmatprep.subr.mxu0 0.0
        %7293 = vmatpush1.msra.mxu0 0.0
        %7294 = vmatprep.subr.mxu0 0.0
        %7295 = vmatpush1.msra.mxu0 0.0
        %7296 = vmatprep.subr.mxu0 0.0
        %7297 = vmatpush1.msra.mxu0 0.0
        %7298 = vmatprep.subr.mxu0 0.0
        %7299 = vmatpush1.msra.mxu0 0.0
        %7300 = vmatprep.subr.mxu0 0.0
        %7301 = vmatpush1.msra.mxu0 0.0
        %7302 = vmatprep.subr.mxu0 0.0
        %7303 = vmatpush1.msra.mxu0 0.0
        %7304 = vmatprep.subr.mxu0 0.0
        %v7305 = vand.u32 %v6116, 4294901760
        %7306 = vmatpush1.msra.mxu0 %v7305
        %7307 = vmatprep.subr.mxu0 0.0
        %v7308 = vand.u32 %v6115, 4294901760
        %7309 = vmatpush1.msra.mxu0 %v7308
        %7310 = vmatprep.subr.mxu0 0.0
        %v7311 = vand.u32 %v6114, 4294901760
        %7312 = vmatpush1.msra.mxu0 %v7311
        %7313 = vmatprep.subr.mxu0 0.0
        %v7314 = vand.u32 %v6113, 4294901760
        %7315 = vmatpush1.msra.mxu0 %v7314
        %7316 = vmatprep.subr.mxu0 0.0
        %7317 = vmatpush2.msra.mxu0 0.0
        %7318 = vmatprep.subr.mxu0 0.0
        %7319 = vmatpush2.msra.mxu0 0.0
        %7320 = vmatprep.subr.mxu0 0.0
        %7321 = vmatpush2.msra.mxu0 0.0
        %7322 = vmatprep.subr.mxu0 0.0
        %7323 = vmatpush2.msra.mxu0 0.0
        %7324 = vmatprep.subr.mxu0 0.0
        %7325 = vmatpush2.msra.mxu0 0.0
        %7326 = vmatprep.subr.mxu0 0.0
        %7327 = vmatpush2.msra.mxu0 0.0
        %7328 = vmatprep.subr.mxu0 0.0
        %7329 = vmatpush2.msra.mxu0 0.0
        %7330 = vmatprep.subr.mxu0 0.0
        %7331 = vmatpush2.msra.mxu0 0.0
        %7332 = vmatprep.subr.mxu0 0.0
        %7333 = vmatpush2.msra.mxu0 0.0
        %7334 = vmatprep.subr.mxu0 0.0
        %7335 = vmatpush2.msra.mxu0 0.0
        %7336 = vmatprep.subr.mxu0 0.0
        %7337 = vmatpush2.msra.mxu0 0.0
        %7338 = vmatprep.subr.mxu0 0.0
        %7339 = vmatpush2.msra.mxu0 0.0
        %7340 = vmatprep.subr.mxu0 0.0
        %7341 = vmatpush2.msra.mxu0 0.0
        %7342 = vmatprep.subr.mxu0 0.0
        %7343 = vmatpush2.msra.mxu0 0.0
        %7344 = vmatprep.subr.mxu0 0.0
        %7345 = vmatpush2.msra.mxu0 0.0
        %7346 = vmatprep.subr.mxu0 0.0
        %7347 = vmatpush2.msra.mxu0 0.0
        %7348 = vmatprep.mubr.f32.mxu0 0.0
        %v7349 = vand.u32 %v6748, 4294901760
        %7350 = vmatmul.mubr.f32.gmra.mxu0 %v7349
        %v7351 = vpop.f32.mrf.mxu0
        %v7352 = vadd.f32 %v7259, %v7351
        %v7353 = vpop.f32.mrf.mxu0
        %7354 = vmatprep.mubr.f32.mxu0 0.0
        %v7355 = vand.u32 %v6751, 4294901760
        %7356 = vmatmul.mubr.f32.gmra.mxu0 %v7355
        %v7357 = vpop.f32.mrf.mxu0
        %v7358 = vadd.f32 %v7265, %v7357
        %v7359 = vpop.f32.mrf.mxu0
        %7360 = vmatprep.mubr.f32.mxu0 0.0
        %v7361 = vand.u32 %v6754, 4294901760
        %7362 = vmatmul.mubr.f32.gmra.mxu0 %v7361
        %v7363 = vpop.f32.mrf.mxu0
        %v7364 = vadd.f32 %v7271, %v7363
        %v7365 = vpop.f32.mrf.mxu0
        %7366 = vmatprep.mubr.f32.mxu0 0.0
        %v7367 = vand.u32 %v6757, 4294901760
        %7368 = vmatmul.mubr.f32.gmra.mxu0 %v7367
        %v7369 = vpop.f32.mrf.mxu0
        %v7370 = vadd.f32 %v7277, %v7369
        %v7371 = vpop.f32.mrf.mxu0
        %7372 = vdwg.mxu0
        %v7373 = vld [vmem:[%s12] sm:$0x1]
        %v7375 = vlaneseq
        %v7376 = vshrl.u32 %v7375, 7
        %v7377 = vsub.s32 0, %v7376
        %v7378 = vrot.slane %v7373, %v7377
        %v7380 = vadd.f32 %v7352, %v7378
        %v7381 = vadd.f32 %v7358, %v7378
        %v7382 = vadd.f32 %v7364, %v7378
        %v7383 = vadd.f32 %v7370, %v7378
        %v7384 = vmax.f32 %v7380, 0.0
        %v7385 = vmax.f32 %v7381, 0.0
        %v7386 = vmax.f32 %v7382, 0.0
        %v7387 = vmax.f32 %v7383, 0.0
        %v7388 = vld [vmem:[%s13] sm:$0xff]
        %v7389 = vld [vmem:[%s13 + $0x8] sm:$0xff]
        %v7390 = vld [vmem:[%s13 + $0x10] sm:$0xff]
        %v7391 = vld [vmem:[%s13 + $0x18] sm:$0xff]
        %v7392 = vld [vmem:[%s13 + $0x20] sm:$0xff]
        %v7393 = vld [vmem:[%s13 + $0x28] sm:$0xff]
        %v7394 = vld [vmem:[%s13 + $0x30] sm:$0xff]
        %v7395 = vld [vmem:[%s13 + $0x38] sm:$0xff]
        %v7396 = vld [vmem:[%s13 + $0x40] sm:$0xff]
        %v7397 = vld [vmem:[%s13 + $0x48] sm:$0xff]
        %v7398 = vld [vmem:[%s13 + $0x50] sm:$0xff]
        %v7399 = vld [vmem:[%s13 + $0x58] sm:$0xff]
        %v7400 = vld [vmem:[%s13 + $0x60] sm:$0xff]
        %v7401 = vld [vmem:[%s13 + $0x68] sm:$0xff]
        %v7402 = vld [vmem:[%s13 + $0x70] sm:$0xff]
        %v7403 = vld [vmem:[%s13 + $0x78] sm:$0xff]
        %v7404 = vld [vmem:[%s14] sm:$0x1]
        %v7406 = vlaneseq
        %v7407 = vshrl.u32 %v7406, 7
        %v7408 = vsub.s32 0, %v7407
        %v7409 = vrot.slane %v7404, %v7408
        %7411 = vmatprep.subr.mxu0 0.0
        %v7412 = vand.u32 %v7403, 4294901760
        %7413 = vmatpush1.msra.mxu0 %v7412
        %7414 = vmatprep.subr.mxu0 0.0
        %v7415 = vand.u32 %v7402, 4294901760
        %7416 = vmatpush1.msra.mxu0 %v7415
        %7417 = vmatprep.subr.mxu0 0.0
        %v7418 = vand.u32 %v7401, 4294901760
        %7419 = vmatpush1.msra.mxu0 %v7418
        %7420 = vmatprep.subr.mxu0 0.0
        %v7421 = vand.u32 %v7400, 4294901760
        %7422 = vmatpush1.msra.mxu0 %v7421
        %7423 = vmatprep.subr.mxu0 0.0
        %v7424 = vand.u32 %v7399, 4294901760
        %7425 = vmatpush1.msra.mxu0 %v7424
        %7426 = vmatprep.subr.mxu0 0.0
        %v7427 = vand.u32 %v7398, 4294901760
        %7428 = vmatpush1.msra.mxu0 %v7427
        %7429 = vmatprep.subr.mxu0 0.0
        %v7430 = vand.u32 %v7397, 4294901760
        %7431 = vmatpush1.msra.mxu0 %v7430
        %7432 = vmatprep.subr.mxu0 0.0
        %v7433 = vand.u32 %v7396, 4294901760
        %7434 = vmatpush1.msra.mxu0 %v7433
        %7435 = vmatprep.subr.mxu0 0.0
        %v7436 = vand.u32 %v7395, 4294901760
        %7437 = vmatpush1.msra.mxu0 %v7436
        %7438 = vmatprep.subr.mxu0 0.0
        %v7439 = vand.u32 %v7394, 4294901760
        %7440 = vmatpush1.msra.mxu0 %v7439
        %7441 = vmatprep.subr.mxu0 0.0
        %v7442 = vand.u32 %v7393, 4294901760
        %7443 = vmatpush1.msra.mxu0 %v7442
        %7444 = vmatprep.subr.mxu0 0.0
        %v7445 = vand.u32 %v7392, 4294901760
        %7446 = vmatpush1.msra.mxu0 %v7445
        %7447 = vmatprep.subr.mxu0 0.0
        %v7448 = vand.u32 %v7391, 4294901760
        %7449 = vmatpush1.msra.mxu0 %v7448
        %7450 = vmatprep.subr.mxu0 0.0
        %v7451 = vand.u32 %v7390, 4294901760
        %7452 = vmatpush1.msra.mxu0 %v7451
        %7453 = vmatprep.subr.mxu0 0.0
        %v7454 = vand.u32 %v7389, 4294901760
        %7455 = vmatpush1.msra.mxu0 %v7454
        %7456 = vmatprep.subr.mxu0 0.0
        %v7457 = vand.u32 %v7388, 4294901760
        %7458 = vmatpush1.msra.mxu0 %v7457
        %7459 = vmatprep.subr.mxu0 0.0
        %7460 = vmatpush2.msra.mxu0 0.0
        %7461 = vmatprep.subr.mxu0 0.0
        %7462 = vmatpush2.msra.mxu0 0.0
        %7463 = vmatprep.subr.mxu0 0.0
        %7464 = vmatpush2.msra.mxu0 0.0
        %7465 = vmatprep.subr.mxu0 0.0
        %7466 = vmatpush2.msra.mxu0 0.0
        %7467 = vmatprep.subr.mxu0 0.0
        %7468 = vmatpush2.msra.mxu0 0.0
        %7469 = vmatprep.subr.mxu0 0.0
        %7470 = vmatpush2.msra.mxu0 0.0
        %7471 = vmatprep.subr.mxu0 0.0
        %7472 = vmatpush2.msra.mxu0 0.0
        %7473 = vmatprep.subr.mxu0 0.0
        %7474 = vmatpush2.msra.mxu0 0.0
        %7475 = vmatprep.subr.mxu0 0.0
        %7476 = vmatpush2.msra.mxu0 0.0
        %7477 = vmatprep.subr.mxu0 0.0
        %7478 = vmatpush2.msra.mxu0 0.0
        %7479 = vmatprep.subr.mxu0 0.0
        %7480 = vmatpush2.msra.mxu0 0.0
        %7481 = vmatprep.subr.mxu0 0.0
        %7482 = vmatpush2.msra.mxu0 0.0
        %7483 = vmatprep.subr.mxu0 0.0
        %7484 = vmatpush2.msra.mxu0 0.0
        %7485 = vmatprep.subr.mxu0 0.0
        %7486 = vmatpush2.msra.mxu0 0.0
        %7487 = vmatprep.subr.mxu0 0.0
        %7488 = vmatpush2.msra.mxu0 0.0
        %7489 = vmatprep.subr.mxu0 0.0
        %7490 = vmatpush2.msra.mxu0 0.0
        %7491 = vmatprep.mubr.f32.mxu0 0.0
        %v7492 = vand.u32 %v7384, 4294901760
        %v7493 = vsub.f32 %v7384, %v7492
        %v7494 = vand.u32 %v7493, 4294901760
        %v7495 = vsub.f32 %v7493, %v7494
        %v7496 = vand.u32 %v7495, 4294901760
        %7497 = vmatmul.mubr.f32.gmra.mxu0 %v7496
        %v7498 = vpop.f32.mrf.mxu0
        %v7499 = vadd.f32 %v7409, %v7498
        %v7500 = vpop.f32.mrf.mxu0
        %7501 = vmatprep.mubr.f32.mxu0 0.0
        %v7502 = vand.u32 %v7385, 4294901760
        %v7503 = vsub.f32 %v7385, %v7502
        %v7504 = vand.u32 %v7503, 4294901760
        %v7505 = vsub.f32 %v7503, %v7504
        %v7506 = vand.u32 %v7505, 4294901760
        %7507 = vmatmul.mubr.f32.gmra.mxu0 %v7506
        %v7508 = vpop.f32.mrf.mxu0
        %v7509 = vadd.f32 %v7409, %v7508
        %v7510 = vpop.f32.mrf.mxu0
        %7511 = vmatprep.mubr.f32.mxu0 0.0
        %v7512 = vand.u32 %v7386, 4294901760
        %v7513 = vsub.f32 %v7386, %v7512
        %v7514 = vand.u32 %v7513, 4294901760
        %v7515 = vsub.f32 %v7513, %v7514
        %v7516 = vand.u32 %v7515, 4294901760
        %7517 = vmatmul.mubr.f32.gmra.mxu0 %v7516
        %v7518 = vpop.f32.mrf.mxu0
        %v7519 = vadd.f32 %v7409, %v7518
        %v7520 = vpop.f32.mrf.mxu0
        %7521 = vmatprep.mubr.f32.mxu0 0.0
        %v7522 = vand.u32 %v7387, 4294901760
        %v7523 = vsub.f32 %v7387, %v7522
        %v7524 = vand.u32 %v7523, 4294901760
        %v7525 = vsub.f32 %v7523, %v7524
        %v7526 = vand.u32 %v7525, 4294901760
        %7527 = vmatmul.mubr.f32.gmra.mxu0 %v7526
        %v7528 = vpop.f32.mrf.mxu0
        %v7529 = vadd.f32 %v7409, %v7528
        %v7530 = vpop.f32.mrf.mxu0
        %7531 = vdwg.mxu0
        %7532 = vmatprep.subr.mxu0 0.0
        %v7533 = vand.u32 %v7403, 4294901760
        %v7534 = vsub.f32 %v7403, %v7533
        %v7535 = vand.u32 %v7534, 4294901760
        %v7536 = vsub.f32 %v7534, %v7535
        %v7537 = vand.u32 %v7536, 4294901760
        %7538 = vmatpush1.msra.mxu0 %v7537
        %7539 = vmatprep.subr.mxu0 0.0
        %v7540 = vand.u32 %v7402, 4294901760
        %v7541 = vsub.f32 %v7402, %v7540
        %v7542 = vand.u32 %v7541, 4294901760
        %v7543 = vsub.f32 %v7541, %v7542
        %v7544 = vand.u32 %v7543, 4294901760
        %7545 = vmatpush1.msra.mxu0 %v7544
        %7546 = vmatprep.subr.mxu0 0.0
        %v7547 = vand.u32 %v7401, 4294901760
        %v7548 = vsub.f32 %v7401, %v7547
        %v7549 = vand.u32 %v7548, 4294901760
        %v7550 = vsub.f32 %v7548, %v7549
        %v7551 = vand.u32 %v7550, 4294901760
        %7552 = vmatpush1.msra.mxu0 %v7551
        %7553 = vmatprep.subr.mxu0 0.0
        %v7554 = vand.u32 %v7400, 4294901760
        %v7555 = vsub.f32 %v7400, %v7554
        %v7556 = vand.u32 %v7555, 4294901760
        %v7557 = vsub.f32 %v7555, %v7556
        %v7558 = vand.u32 %v7557, 4294901760
        %7559 = vmatpush1.msra.mxu0 %v7558
        %7560 = vmatprep.subr.mxu0 0.0
        %v7561 = vand.u32 %v7399, 4294901760
        %v7562 = vsub.f32 %v7399, %v7561
        %v7563 = vand.u32 %v7562, 4294901760
        %v7564 = vsub.f32 %v7562, %v7563
        %v7565 = vand.u32 %v7564, 4294901760
        %7566 = vmatpush1.msra.mxu0 %v7565
        %7567 = vmatprep.subr.mxu0 0.0
        %v7568 = vand.u32 %v7398, 4294901760
        %v7569 = vsub.f32 %v7398, %v7568
        %v7570 = vand.u32 %v7569, 4294901760
        %v7571 = vsub.f32 %v7569, %v7570
        %v7572 = vand.u32 %v7571, 4294901760
        %7573 = vmatpush1.msra.mxu0 %v7572
        %7574 = vmatprep.subr.mxu0 0.0
        %v7575 = vand.u32 %v7397, 4294901760
        %v7576 = vsub.f32 %v7397, %v7575
        %v7577 = vand.u32 %v7576, 4294901760
        %v7578 = vsub.f32 %v7576, %v7577
        %v7579 = vand.u32 %v7578, 4294901760
        %7580 = vmatpush1.msra.mxu0 %v7579
        %7581 = vmatprep.subr.mxu0 0.0
        %v7582 = vand.u32 %v7396, 4294901760
        %v7583 = vsub.f32 %v7396, %v7582
        %v7584 = vand.u32 %v7583, 4294901760
        %v7585 = vsub.f32 %v7583, %v7584
        %v7586 = vand.u32 %v7585, 4294901760
        %7587 = vmatpush1.msra.mxu0 %v7586
        %7588 = vmatprep.subr.mxu0 0.0
        %v7589 = vand.u32 %v7395, 4294901760
        %v7590 = vsub.f32 %v7395, %v7589
        %v7591 = vand.u32 %v7590, 4294901760
        %v7592 = vsub.f32 %v7590, %v7591
        %v7593 = vand.u32 %v7592, 4294901760
        %7594 = vmatpush1.msra.mxu0 %v7593
        %7595 = vmatprep.subr.mxu0 0.0
        %v7596 = vand.u32 %v7394, 4294901760
        %v7597 = vsub.f32 %v7394, %v7596
        %v7598 = vand.u32 %v7597, 4294901760
        %v7599 = vsub.f32 %v7597, %v7598
        %v7600 = vand.u32 %v7599, 4294901760
        %7601 = vmatpush1.msra.mxu0 %v7600
        %7602 = vmatprep.subr.mxu0 0.0
        %v7603 = vand.u32 %v7393, 4294901760
        %v7604 = vsub.f32 %v7393, %v7603
        %v7605 = vand.u32 %v7604, 4294901760
        %v7606 = vsub.f32 %v7604, %v7605
        %v7607 = vand.u32 %v7606, 4294901760
        %7608 = vmatpush1.msra.mxu0 %v7607
        %7609 = vmatprep.subr.mxu0 0.0
        %v7610 = vand.u32 %v7392, 4294901760
        %v7611 = vsub.f32 %v7392, %v7610
        %v7612 = vand.u32 %v7611, 4294901760
        %v7613 = vsub.f32 %v7611, %v7612
        %v7614 = vand.u32 %v7613, 4294901760
        %7615 = vmatpush1.msra.mxu0 %v7614
        %7616 = vmatprep.subr.mxu0 0.0
        %v7617 = vand.u32 %v7391, 4294901760
        %v7618 = vsub.f32 %v7391, %v7617
        %v7619 = vand.u32 %v7618, 4294901760
        %v7620 = vsub.f32 %v7618, %v7619
        %v7621 = vand.u32 %v7620, 4294901760
        %7622 = vmatpush1.msra.mxu0 %v7621
        %7623 = vmatprep.subr.mxu0 0.0
        %v7624 = vand.u32 %v7390, 4294901760
        %v7625 = vsub.f32 %v7390, %v7624
        %v7626 = vand.u32 %v7625, 4294901760
        %v7627 = vsub.f32 %v7625, %v7626
        %v7628 = vand.u32 %v7627, 4294901760
        %7629 = vmatpush1.msra.mxu0 %v7628
        %7630 = vmatprep.subr.mxu0 0.0
        %v7631 = vand.u32 %v7389, 4294901760
        %v7632 = vsub.f32 %v7389, %v7631
        %v7633 = vand.u32 %v7632, 4294901760
        %v7634 = vsub.f32 %v7632, %v7633
        %v7635 = vand.u32 %v7634, 4294901760
        %7636 = vmatpush1.msra.mxu0 %v7635
        %7637 = vmatprep.subr.mxu0 0.0
        %v7638 = vand.u32 %v7388, 4294901760
        %v7639 = vsub.f32 %v7388, %v7638
        %v7640 = vand.u32 %v7639, 4294901760
        %v7641 = vsub.f32 %v7639, %v7640
        %v7642 = vand.u32 %v7641, 4294901760
        %7643 = vmatpush1.msra.mxu0 %v7642
        %7644 = vmatprep.subr.mxu0 0.0
        %7645 = vmatpush2.msra.mxu0 0.0
        %7646 = vmatprep.subr.mxu0 0.0
        %7647 = vmatpush2.msra.mxu0 0.0
        %7648 = vmatprep.subr.mxu0 0.0
        %7649 = vmatpush2.msra.mxu0 0.0
        %7650 = vmatprep.subr.mxu0 0.0
        %7651 = vmatpush2.msra.mxu0 0.0
        %7652 = vmatprep.subr.mxu0 0.0
        %7653 = vmatpush2.msra.mxu0 0.0
        %7654 = vmatprep.subr.mxu0 0.0
        %7655 = vmatpush2.msra.mxu0 0.0
        %7656 = vmatprep.subr.mxu0 0.0
        %7657 = vmatpush2.msra.mxu0 0.0
        %7658 = vmatprep.subr.mxu0 0.0
        %7659 = vmatpush2.msra.mxu0 0.0
        %7660 = vmatprep.subr.mxu0 0.0
        %7661 = vmatpush2.msra.mxu0 0.0
        %7662 = vmatprep.subr.mxu0 0.0
        %7663 = vmatpush2.msra.mxu0 0.0
        %7664 = vmatprep.subr.mxu0 0.0
        %7665 = vmatpush2.msra.mxu0 0.0
        %7666 = vmatprep.subr.mxu0 0.0
        %7667 = vmatpush2.msra.mxu0 0.0
        %7668 = vmatprep.subr.mxu0 0.0
        %7669 = vmatpush2.msra.mxu0 0.0
        %7670 = vmatprep.subr.mxu0 0.0
        %7671 = vmatpush2.msra.mxu0 0.0
        %7672 = vmatprep.subr.mxu0 0.0
        %7673 = vmatpush2.msra.mxu0 0.0
        %7674 = vmatprep.subr.mxu0 0.0
        %7675 = vmatpush2.msra.mxu0 0.0
        %7676 = vmatprep.mubr.f32.mxu0 0.0
        %v7677 = vand.u32 %v7384, 4294901760
        %7678 = vmatmul.mubr.f32.gmra.mxu0 %v7677
        %v7679 = vpop.f32.mrf.mxu0
        %v7680 = vadd.f32 %v7499, %v7679
        %v7681 = vpop.f32.mrf.mxu0
        %7682 = vmatprep.mubr.f32.mxu0 0.0
        %v7683 = vand.u32 %v7385, 4294901760
        %7684 = vmatmul.mubr.f32.gmra.mxu0 %v7683
        %v7685 = vpop.f32.mrf.mxu0
        %v7686 = vadd.f32 %v7509, %v7685
        %v7687 = vpop.f32.mrf.mxu0
        %7688 = vmatprep.mubr.f32.mxu0 0.0
        %v7689 = vand.u32 %v7386, 4294901760
        %7690 = vmatmul.mubr.f32.gmra.mxu0 %v7689
        %v7691 = vpop.f32.mrf.mxu0
        %v7692 = vadd.f32 %v7519, %v7691
        %v7693 = vpop.f32.mrf.mxu0
        %7694 = vmatprep.mubr.f32.mxu0 0.0
        %v7695 = vand.u32 %v7387, 4294901760
        %7696 = vmatmul.mubr.f32.gmra.mxu0 %v7695
        %v7697 = vpop.f32.mrf.mxu0
        %v7698 = vadd.f32 %v7529, %v7697
        %v7699 = vpop.f32.mrf.mxu0
        %7700 = vdwg.mxu0
        %7701 = vmatprep.subr.mxu0 0.0
        %v7702 = vand.u32 %v7403, 4294901760
        %v7703 = vsub.f32 %v7403, %v7702
        %7704 = vmatpush1.msra.mxu0 %v7703
        %7705 = vmatprep.subr.mxu0 0.0
        %v7706 = vand.u32 %v7402, 4294901760
        %v7707 = vsub.f32 %v7402, %v7706
        %7708 = vmatpush1.msra.mxu0 %v7707
        %7709 = vmatprep.subr.mxu0 0.0
        %v7710 = vand.u32 %v7401, 4294901760
        %v7711 = vsub.f32 %v7401, %v7710
        %7712 = vmatpush1.msra.mxu0 %v7711
        %7713 = vmatprep.subr.mxu0 0.0
        %v7714 = vand.u32 %v7400, 4294901760
        %v7715 = vsub.f32 %v7400, %v7714
        %7716 = vmatpush1.msra.mxu0 %v7715
        %7717 = vmatprep.subr.mxu0 0.0
        %v7718 = vand.u32 %v7399, 4294901760
        %v7719 = vsub.f32 %v7399, %v7718
        %7720 = vmatpush1.msra.mxu0 %v7719
        %7721 = vmatprep.subr.mxu0 0.0
        %v7722 = vand.u32 %v7398, 4294901760
        %v7723 = vsub.f32 %v7398, %v7722
        %7724 = vmatpush1.msra.mxu0 %v7723
        %7725 = vmatprep.subr.mxu0 0.0
        %v7726 = vand.u32 %v7397, 4294901760
        %v7727 = vsub.f32 %v7397, %v7726
        %7728 = vmatpush1.msra.mxu0 %v7727
        %7729 = vmatprep.subr.mxu0 0.0
        %v7730 = vand.u32 %v7396, 4294901760
        %v7731 = vsub.f32 %v7396, %v7730
        %7732 = vmatpush1.msra.mxu0 %v7731
        %7733 = vmatprep.subr.mxu0 0.0
        %v7734 = vand.u32 %v7395, 4294901760
        %v7735 = vsub.f32 %v7395, %v7734
        %7736 = vmatpush1.msra.mxu0 %v7735
        %7737 = vmatprep.subr.mxu0 0.0
        %v7738 = vand.u32 %v7394, 4294901760
        %v7739 = vsub.f32 %v7394, %v7738
        %7740 = vmatpush1.msra.mxu0 %v7739
        %7741 = vmatprep.subr.mxu0 0.0
        %v7742 = vand.u32 %v7393, 4294901760
        %v7743 = vsub.f32 %v7393, %v7742
        %7744 = vmatpush1.msra.mxu0 %v7743
        %7745 = vmatprep.subr.mxu0 0.0
        %v7746 = vand.u32 %v7392, 4294901760
        %v7747 = vsub.f32 %v7392, %v7746
        %7748 = vmatpush1.msra.mxu0 %v7747
        %7749 = vmatprep.subr.mxu0 0.0
        %v7750 = vand.u32 %v7391, 4294901760
        %v7751 = vsub.f32 %v7391, %v7750
        %7752 = vmatpush1.msra.mxu0 %v7751
        %7753 = vmatprep.subr.mxu0 0.0
        %v7754 = vand.u32 %v7390, 4294901760
        %v7755 = vsub.f32 %v7390, %v7754
        %7756 = vmatpush1.msra.mxu0 %v7755
        %7757 = vmatprep.subr.mxu0 0.0
        %v7758 = vand.u32 %v7389, 4294901760
        %v7759 = vsub.f32 %v7389, %v7758
        %7760 = vmatpush1.msra.mxu0 %v7759
        %7761 = vmatprep.subr.mxu0 0.0
        %v7762 = vand.u32 %v7388, 4294901760
        %v7763 = vsub.f32 %v7388, %v7762
        %7764 = vmatpush1.msra.mxu0 %v7763
        %7765 = vmatprep.subr.mxu0 0.0
        %7766 = vmatpush2.msra.mxu0 0.0
        %7767 = vmatprep.subr.mxu0 0.0
        %7768 = vmatpush2.msra.mxu0 0.0
        %7769 = vmatprep.subr.mxu0 0.0
        %7770 = vmatpush2.msra.mxu0 0.0
        %7771 = vmatprep.subr.mxu0 0.0
        %7772 = vmatpush2.msra.mxu0 0.0
        %7773 = vmatprep.subr.mxu0 0.0
        %7774 = vmatpush2.msra.mxu0 0.0
        %7775 = vmatprep.subr.mxu0 0.0
        %7776 = vmatpush2.msra.mxu0 0.0
        %7777 = vmatprep.subr.mxu0 0.0
        %7778 = vmatpush2.msra.mxu0 0.0
        %7779 = vmatprep.subr.mxu0 0.0
        %7780 = vmatpush2.msra.mxu0 0.0
        %7781 = vmatprep.subr.mxu0 0.0
        %7782 = vmatpush2.msra.mxu0 0.0
        %7783 = vmatprep.subr.mxu0 0.0
        %7784 = vmatpush2.msra.mxu0 0.0
        %7785 = vmatprep.subr.mxu0 0.0
        %7786 = vmatpush2.msra.mxu0 0.0
        %7787 = vmatprep.subr.mxu0 0.0
        %7788 = vmatpush2.msra.mxu0 0.0
        %7789 = vmatprep.subr.mxu0 0.0
        %7790 = vmatpush2.msra.mxu0 0.0
        %7791 = vmatprep.subr.mxu0 0.0
        %7792 = vmatpush2.msra.mxu0 0.0
        %7793 = vmatprep.subr.mxu0 0.0
        %7794 = vmatpush2.msra.mxu0 0.0
        %7795 = vmatprep.subr.mxu0 0.0
        %7796 = vmatpush2.msra.mxu0 0.0
        %7797 = vmatprep.mubr.f32.mxu0 0.0
        %v7798 = vand.u32 %v7384, 4294901760
        %v7799 = vsub.f32 %v7384, %v7798
        %7800 = vmatmul.mubr.f32.gmra.mxu0 %v7799
        %v7801 = vpop.f32.mrf.mxu0
        %v7802 = vadd.f32 %v7680, %v7801
        %v7803 = vpop.f32.mrf.mxu0
        %7804 = vmatprep.mubr.f32.mxu0 0.0
        %v7805 = vand.u32 %v7385, 4294901760
        %v7806 = vsub.f32 %v7385, %v7805
        %7807 = vmatmul.mubr.f32.gmra.mxu0 %v7806
        %v7808 = vpop.f32.mrf.mxu0
        %v7809 = vadd.f32 %v7686, %v7808
        %v7810 = vpop.f32.mrf.mxu0
        %7811 = vmatprep.mubr.f32.mxu0 0.0
        %v7812 = vand.u32 %v7386, 4294901760
        %v7813 = vsub.f32 %v7386, %v7812
        %7814 = vmatmul.mubr.f32.gmra.mxu0 %v7813
        %v7815 = vpop.f32.mrf.mxu0
        %v7816 = vadd.f32 %v7692, %v7815
        %v7817 = vpop.f32.mrf.mxu0
        %7818 = vmatprep.mubr.f32.mxu0 0.0
        %v7819 = vand.u32 %v7387, 4294901760
        %v7820 = vsub.f32 %v7387, %v7819
        %7821 = vmatmul.mubr.f32.gmra.mxu0 %v7820
        %v7822 = vpop.f32.mrf.mxu0
        %v7823 = vadd.f32 %v7698, %v7822
        %v7824 = vpop.f32.mrf.mxu0
        %7825 = vdwg.mxu0
        %7826 = vmatprep.subr.mxu0 0.0
        %v7827 = vand.u32 %v7403, 4294901760
        %7828 = vmatpush1.msra.mxu0 %v7827
        %7829 = vmatprep.subr.mxu0 0.0
        %v7830 = vand.u32 %v7402, 4294901760
        %7831 = vmatpush1.msra.mxu0 %v7830
        %7832 = vmatprep.subr.mxu0 0.0
        %v7833 = vand.u32 %v7401, 4294901760
        %7834 = vmatpush1.msra.mxu0 %v7833
        %7835 = vmatprep.subr.mxu0 0.0
        %v7836 = vand.u32 %v7400, 4294901760
        %7837 = vmatpush1.msra.mxu0 %v7836
        %7838 = vmatprep.subr.mxu0 0.0
        %v7839 = vand.u32 %v7399, 4294901760
        %7840 = vmatpush1.msra.mxu0 %v7839
        %7841 = vmatprep.subr.mxu0 0.0
        %v7842 = vand.u32 %v7398, 4294901760
        %7843 = vmatpush1.msra.mxu0 %v7842
        %7844 = vmatprep.subr.mxu0 0.0
        %v7845 = vand.u32 %v7397, 4294901760
        %7846 = vmatpush1.msra.mxu0 %v7845
        %7847 = vmatprep.subr.mxu0 0.0
        %v7848 = vand.u32 %v7396, 4294901760
        %7849 = vmatpush1.msra.mxu0 %v7848
        %7850 = vmatprep.subr.mxu0 0.0
        %v7851 = vand.u32 %v7395, 4294901760
        %7852 = vmatpush1.msra.mxu0 %v7851
        %7853 = vmatprep.subr.mxu0 0.0
        %v7854 = vand.u32 %v7394, 4294901760
        %7855 = vmatpush1.msra.mxu0 %v7854
        %7856 = vmatprep.subr.mxu0 0.0
        %v7857 = vand.u32 %v7393, 4294901760
        %7858 = vmatpush1.msra.mxu0 %v7857
        %7859 = vmatprep.subr.mxu0 0.0
        %v7860 = vand.u32 %v7392, 4294901760
        %7861 = vmatpush1.msra.mxu0 %v7860
        %7862 = vmatprep.subr.mxu0 0.0
        %v7863 = vand.u32 %v7391, 4294901760
        %7864 = vmatpush1.msra.mxu0 %v7863
        %7865 = vmatprep.subr.mxu0 0.0
        %v7866 = vand.u32 %v7390, 4294901760
        %7867 = vmatpush1.msra.mxu0 %v7866
        %7868 = vmatprep.subr.mxu0 0.0
        %v7869 = vand.u32 %v7389, 4294901760
        %7870 = vmatpush1.msra.mxu0 %v7869
        %7871 = vmatprep.subr.mxu0 0.0
        %v7872 = vand.u32 %v7388, 4294901760
        %7873 = vmatpush1.msra.mxu0 %v7872
        %7874 = vmatprep.subr.mxu0 0.0
        %7875 = vmatpush2.msra.mxu0 0.0
        %7876 = vmatprep.subr.mxu0 0.0
        %7877 = vmatpush2.msra.mxu0 0.0
        %7878 = vmatprep.subr.mxu0 0.0
        %7879 = vmatpush2.msra.mxu0 0.0
        %7880 = vmatprep.subr.mxu0 0.0
        %7881 = vmatpush2.msra.mxu0 0.0
        %7882 = vmatprep.subr.mxu0 0.0
        %7883 = vmatpush2.msra.mxu0 0.0
        %7884 = vmatprep.subr.mxu0 0.0
        %7885 = vmatpush2.msra.mxu0 0.0
        %7886 = vmatprep.subr.mxu0 0.0
        %7887 = vmatpush2.msra.mxu0 0.0
        %7888 = vmatprep.subr.mxu0 0.0
        %7889 = vmatpush2.msra.mxu0 0.0
        %7890 = vmatprep.subr.mxu0 0.0
        %7891 = vmatpush2.msra.mxu0 0.0
        %7892 = vmatprep.subr.mxu0 0.0
        %7893 = vmatpush2.msra.mxu0 0.0
        %7894 = vmatprep.subr.mxu0 0.0
        %7895 = vmatpush2.msra.mxu0 0.0
        %7896 = vmatprep.subr.mxu0 0.0
        %7897 = vmatpush2.msra.mxu0 0.0
        %7898 = vmatprep.subr.mxu0 0.0
        %7899 = vmatpush2.msra.mxu0 0.0
        %7900 = vmatprep.subr.mxu0 0.0
        %7901 = vmatpush2.msra.mxu0 0.0
        %7902 = vmatprep.subr.mxu0 0.0
        %7903 = vmatpush2.msra.mxu0 0.0
        %7904 = vmatprep.subr.mxu0 0.0
        %7905 = vmatpush2.msra.mxu0 0.0
        %7906 = vmatprep.mubr.f32.mxu0 0.0
        %v7907 = vand.u32 %v7384, 4294901760
        %v7908 = vsub.f32 %v7384, %v7907
        %v7909 = vand.u32 %v7908, 4294901760
        %7910 = vmatmul.mubr.f32.gmra.mxu0 %v7909
        %v7911 = vpop.f32.mrf.mxu0
        %v7912 = vadd.f32 %v7802, %v7911
        %v7913 = vpop.f32.mrf.mxu0
        %7914 = vmatprep.mubr.f32.mxu0 0.0
        %v7915 = vand.u32 %v7385, 4294901760
        %v7916 = vsub.f32 %v7385, %v7915
        %v7917 = vand.u32 %v7916, 4294901760
        %7918 = vmatmul.mubr.f32.gmra.mxu0 %v7917
        %v7919 = vpop.f32.mrf.mxu0
        %v7920 = vadd.f32 %v7809, %v7919
        %v7921 = vpop.f32.mrf.mxu0
        %7922 = vmatprep.mubr.f32.mxu0 0.0
        %v7923 = vand.u32 %v7386, 4294901760
        %v7924 = vsub.f32 %v7386, %v7923
        %v7925 = vand.u32 %v7924, 4294901760
        %7926 = vmatmul.mubr.f32.gmra.mxu0 %v7925
        %v7927 = vpop.f32.mrf.mxu0
        %v7928 = vadd.f32 %v7816, %v7927
        %v7929 = vpop.f32.mrf.mxu0
        %7930 = vmatprep.mubr.f32.mxu0 0.0
        %v7931 = vand.u32 %v7387, 4294901760
        %v7932 = vsub.f32 %v7387, %v7931
        %v7933 = vand.u32 %v7932, 4294901760
        %7934 = vmatmul.mubr.f32.gmra.mxu0 %v7933
        %v7935 = vpop.f32.mrf.mxu0
        %v7936 = vadd.f32 %v7823, %v7935
        %v7937 = vpop.f32.mrf.mxu0
        %7938 = vdwg.mxu0
        %7939 = vmatprep.subr.mxu0 0.0
        %v7940 = vand.u32 %v7403, 4294901760
        %v7941 = vsub.f32 %v7403, %v7940
        %v7942 = vand.u32 %v7941, 4294901760
        %7943 = vmatpush1.msra.mxu0 %v7942
        %7944 = vmatprep.subr.mxu0 0.0
        %v7945 = vand.u32 %v7402, 4294901760
        %v7946 = vsub.f32 %v7402, %v7945
        %v7947 = vand.u32 %v7946, 4294901760
        %7948 = vmatpush1.msra.mxu0 %v7947
        %7949 = vmatprep.subr.mxu0 0.0
        %v7950 = vand.u32 %v7401, 4294901760
        %v7951 = vsub.f32 %v7401, %v7950
        %v7952 = vand.u32 %v7951, 4294901760
        %7953 = vmatpush1.msra.mxu0 %v7952
        %7954 = vmatprep.subr.mxu0 0.0
        %v7955 = vand.u32 %v7400, 4294901760
        %v7956 = vsub.f32 %v7400, %v7955
        %v7957 = vand.u32 %v7956, 4294901760
        %7958 = vmatpush1.msra.mxu0 %v7957
        %7959 = vmatprep.subr.mxu0 0.0
        %v7960 = vand.u32 %v7399, 4294901760
        %v7961 = vsub.f32 %v7399, %v7960
        %v7962 = vand.u32 %v7961, 4294901760
        %7963 = vmatpush1.msra.mxu0 %v7962
        %7964 = vmatprep.subr.mxu0 0.0
        %v7965 = vand.u32 %v7398, 4294901760
        %v7966 = vsub.f32 %v7398, %v7965
        %v7967 = vand.u32 %v7966, 4294901760
        %7968 = vmatpush1.msra.mxu0 %v7967
        %7969 = vmatprep.subr.mxu0 0.0
        %v7970 = vand.u32 %v7397, 4294901760
        %v7971 = vsub.f32 %v7397, %v7970
        %v7972 = vand.u32 %v7971, 4294901760
        %7973 = vmatpush1.msra.mxu0 %v7972
        %7974 = vmatprep.subr.mxu0 0.0
        %v7975 = vand.u32 %v7396, 4294901760
        %v7976 = vsub.f32 %v7396, %v7975
        %v7977 = vand.u32 %v7976, 4294901760
        %7978 = vmatpush1.msra.mxu0 %v7977
        %7979 = vmatprep.subr.mxu0 0.0
        %v7980 = vand.u32 %v7395, 4294901760
        %v7981 = vsub.f32 %v7395, %v7980
        %v7982 = vand.u32 %v7981, 4294901760
        %7983 = vmatpush1.msra.mxu0 %v7982
        %7984 = vmatprep.subr.mxu0 0.0
        %v7985 = vand.u32 %v7394, 4294901760
        %v7986 = vsub.f32 %v7394, %v7985
        %v7987 = vand.u32 %v7986, 4294901760
        %7988 = vmatpush1.msra.mxu0 %v7987
        %7989 = vmatprep.subr.mxu0 0.0
        %v7990 = vand.u32 %v7393, 4294901760
        %v7991 = vsub.f32 %v7393, %v7990
        %v7992 = vand.u32 %v7991, 4294901760
        %7993 = vmatpush1.msra.mxu0 %v7992
        %7994 = vmatprep.subr.mxu0 0.0
        %v7995 = vand.u32 %v7392, 4294901760
        %v7996 = vsub.f32 %v7392, %v7995
        %v7997 = vand.u32 %v7996, 4294901760
        %7998 = vmatpush1.msra.mxu0 %v7997
        %7999 = vmatprep.subr.mxu0 0.0
        %v8000 = vand.u32 %v7391, 4294901760
        %v8001 = vsub.f32 %v7391, %v8000
        %v8002 = vand.u32 %v8001, 4294901760
        %8003 = vmatpush1.msra.mxu0 %v8002
        %8004 = vmatprep.subr.mxu0 0.0
        %v8005 = vand.u32 %v7390, 4294901760
        %v8006 = vsub.f32 %v7390, %v8005
        %v8007 = vand.u32 %v8006, 4294901760
        %8008 = vmatpush1.msra.mxu0 %v8007
        %8009 = vmatprep.subr.mxu0 0.0
        %v8010 = vand.u32 %v7389, 4294901760
        %v8011 = vsub.f32 %v7389, %v8010
        %v8012 = vand.u32 %v8011, 4294901760
        %8013 = vmatpush1.msra.mxu0 %v8012
        %8014 = vmatprep.subr.mxu0 0.0
        %v8015 = vand.u32 %v7388, 4294901760
        %v8016 = vsub.f32 %v7388, %v8015
        %v8017 = vand.u32 %v8016, 4294901760
        %8018 = vmatpush1.msra.mxu0 %v8017
        %8019 = vmatprep.subr.mxu0 0.0
        %8020 = vmatpush2.msra.mxu0 0.0
        %8021 = vmatprep.subr.mxu0 0.0
        %8022 = vmatpush2.msra.mxu0 0.0
        %8023 = vmatprep.subr.mxu0 0.0
        %8024 = vmatpush2.msra.mxu0 0.0
        %8025 = vmatprep.subr.mxu0 0.0
        %8026 = vmatpush2.msra.mxu0 0.0
        %8027 = vmatprep.subr.mxu0 0.0
        %8028 = vmatpush2.msra.mxu0 0.0
        %8029 = vmatprep.subr.mxu0 0.0
        %8030 = vmatpush2.msra.mxu0 0.0
        %8031 = vmatprep.subr.mxu0 0.0
        %8032 = vmatpush2.msra.mxu0 0.0
        %8033 = vmatprep.subr.mxu0 0.0
        %8034 = vmatpush2.msra.mxu0 0.0
        %8035 = vmatprep.subr.mxu0 0.0
        %8036 = vmatpush2.msra.mxu0 0.0
        %8037 = vmatprep.subr.mxu0 0.0
        %8038 = vmatpush2.msra.mxu0 0.0
        %8039 = vmatprep.subr.mxu0 0.0
        %8040 = vmatpush2.msra.mxu0 0.0
        %8041 = vmatprep.subr.mxu0 0.0
        %8042 = vmatpush2.msra.mxu0 0.0
        %8043 = vmatprep.subr.mxu0 0.0
        %8044 = vmatpush2.msra.mxu0 0.0
        %8045 = vmatprep.subr.mxu0 0.0
        %8046 = vmatpush2.msra.mxu0 0.0
        %8047 = vmatprep.subr.mxu0 0.0
        %8048 = vmatpush2.msra.mxu0 0.0
        %8049 = vmatprep.subr.mxu0 0.0
        %8050 = vmatpush2.msra.mxu0 0.0
        %8051 = vmatprep.mubr.f32.mxu0 0.0
        %v8052 = vand.u32 %v7384, 4294901760
        %8053 = vmatmul.mubr.f32.gmra.mxu0 %v8052
        %v8054 = vpop.f32.mrf.mxu0
        %v8055 = vadd.f32 %v7912, %v8054
        %v8056 = vpop.f32.mrf.mxu0
        %8057 = vmatprep.mubr.f32.mxu0 0.0
        %v8058 = vand.u32 %v7385, 4294901760
        %8059 = vmatmul.mubr.f32.gmra.mxu0 %v8058
        %v8060 = vpop.f32.mrf.mxu0
        %v8061 = vadd.f32 %v7920, %v8060
        %v8062 = vpop.f32.mrf.mxu0
        %8063 = vmatprep.mubr.f32.mxu0 0.0
        %v8064 = vand.u32 %v7386, 4294901760
        %8065 = vmatmul.mubr.f32.gmra.mxu0 %v8064
        %v8066 = vpop.f32.mrf.mxu0
        %v8067 = vadd.f32 %v7928, %v8066
        %v8068 = vpop.f32.mrf.mxu0
        %8069 = vmatprep.mubr.f32.mxu0 0.0
        %v8070 = vand.u32 %v7387, 4294901760
        %8071 = vmatmul.mubr.f32.gmra.mxu0 %v8070
        %v8072 = vpop.f32.mrf.mxu0
        %v8073 = vadd.f32 %v7936, %v8072
        %v8074 = vpop.f32.mrf.mxu0
        %8075 = vdwg.mxu0
        %8076 = vmatprep.subr.mxu0 0.0
        %v8077 = vand.u32 %v7403, 4294901760
        %8078 = vmatpush1.msra.mxu0 %v8077
        %8079 = vmatprep.subr.mxu0 0.0
        %v8080 = vand.u32 %v7402, 4294901760
        %8081 = vmatpush1.msra.mxu0 %v8080
        %8082 = vmatprep.subr.mxu0 0.0
        %v8083 = vand.u32 %v7401, 4294901760
        %8084 = vmatpush1.msra.mxu0 %v8083
        %8085 = vmatprep.subr.mxu0 0.0
        %v8086 = vand.u32 %v7400, 4294901760
        %8087 = vmatpush1.msra.mxu0 %v8086
        %8088 = vmatprep.subr.mxu0 0.0
        %v8089 = vand.u32 %v7399, 4294901760
        %8090 = vmatpush1.msra.mxu0 %v8089
        %8091 = vmatprep.subr.mxu0 0.0
        %v8092 = vand.u32 %v7398, 4294901760
        %8093 = vmatpush1.msra.mxu0 %v8092
        %8094 = vmatprep.subr.mxu0 0.0
        %v8095 = vand.u32 %v7397, 4294901760
        %8096 = vmatpush1.msra.mxu0 %v8095
        %8097 = vmatprep.subr.mxu0 0.0
        %v8098 = vand.u32 %v7396, 4294901760
        %8099 = vmatpush1.msra.mxu0 %v8098
        %8100 = vmatprep.subr.mxu0 0.0
        %v8101 = vand.u32 %v7395, 4294901760
        %8102 = vmatpush1.msra.mxu0 %v8101
        %8103 = vmatprep.subr.mxu0 0.0
        %v8104 = vand.u32 %v7394, 4294901760
        %8105 = vmatpush1.msra.mxu0 %v8104
        %8106 = vmatprep.subr.mxu0 0.0
        %v8107 = vand.u32 %v7393, 4294901760
        %8108 = vmatpush1.msra.mxu0 %v8107
        %8109 = vmatprep.subr.mxu0 0.0
        %v8110 = vand.u32 %v7392, 4294901760
        %8111 = vmatpush1.msra.mxu0 %v8110
        %8112 = vmatprep.subr.mxu0 0.0
        %v8113 = vand.u32 %v7391, 4294901760
        %8114 = vmatpush1.msra.mxu0 %v8113
        %8115 = vmatprep.subr.mxu0 0.0
        %v8116 = vand.u32 %v7390, 4294901760
        %8117 = vmatpush1.msra.mxu0 %v8116
        %8118 = vmatprep.subr.mxu0 0.0
        %v8119 = vand.u32 %v7389, 4294901760
        %8120 = vmatpush1.msra.mxu0 %v8119
        %8121 = vmatprep.subr.mxu0 0.0
        %v8122 = vand.u32 %v7388, 4294901760
        %8123 = vmatpush1.msra.mxu0 %v8122
        %8124 = vmatprep.subr.mxu0 0.0
        %8125 = vmatpush2.msra.mxu0 0.0
        %8126 = vmatprep.subr.mxu0 0.0
        %8127 = vmatpush2.msra.mxu0 0.0
        %8128 = vmatprep.subr.mxu0 0.0
        %8129 = vmatpush2.msra.mxu0 0.0
        %8130 = vmatprep.subr.mxu0 0.0
        %8131 = vmatpush2.msra.mxu0 0.0
        %8132 = vmatprep.subr.mxu0 0.0
        %8133 = vmatpush2.msra.mxu0 0.0
        %8134 = vmatprep.subr.mxu0 0.0
        %8135 = vmatpush2.msra.mxu0 0.0
        %8136 = vmatprep.subr.mxu0 0.0
        %8137 = vmatpush2.msra.mxu0 0.0
        %8138 = vmatprep.subr.mxu0 0.0
        %8139 = vmatpush2.msra.mxu0 0.0
        %8140 = vmatprep.subr.mxu0 0.0
        %8141 = vmatpush2.msra.mxu0 0.0
        %8142 = vmatprep.subr.mxu0 0.0
        %8143 = vmatpush2.msra.mxu0 0.0
        %8144 = vmatprep.subr.mxu0 0.0
        %8145 = vmatpush2.msra.mxu0 0.0
        %8146 = vmatprep.subr.mxu0 0.0
        %8147 = vmatpush2.msra.mxu0 0.0
        %8148 = vmatprep.subr.mxu0 0.0
        %8149 = vmatpush2.msra.mxu0 0.0
        %8150 = vmatprep.subr.mxu0 0.0
        %8151 = vmatpush2.msra.mxu0 0.0
        %8152 = vmatprep.subr.mxu0 0.0
        %8153 = vmatpush2.msra.mxu0 0.0
        %8154 = vmatprep.subr.mxu0 0.0
        %8155 = vmatpush2.msra.mxu0 0.0
        %8156 = vmatprep.mubr.f32.mxu0 0.0
        %v8157 = vand.u32 %v7384, 4294901760
        %8158 = vmatmul.mubr.f32.gmra.mxu0 %v8157
        %v8159 = vpop.f32.mrf.mxu0
        %v8160 = vadd.f32 %v8055, %v8159
        %v8161 = vpop.f32.mrf.mxu0
        %8162 = vmatprep.mubr.f32.mxu0 0.0
        %v8163 = vand.u32 %v7385, 4294901760
        %8164 = vmatmul.mubr.f32.gmra.mxu0 %v8163
        %v8165 = vpop.f32.mrf.mxu0
        %v8166 = vadd.f32 %v8061, %v8165
        %v8167 = vpop.f32.mrf.mxu0
        %8168 = vmatprep.mubr.f32.mxu0 0.0
        %v8169 = vand.u32 %v7386, 4294901760
        %8170 = vmatmul.mubr.f32.gmra.mxu0 %v8169
        %v8171 = vpop.f32.mrf.mxu0
        %v8172 = vadd.f32 %v8067, %v8171
        %v8173 = vpop.f32.mrf.mxu0
        %8174 = vmatprep.mubr.f32.mxu0 0.0
        %v8175 = vand.u32 %v7387, 4294901760
        %8176 = vmatmul.mubr.f32.gmra.mxu0 %v8175
        %v8177 = vpop.f32.mrf.mxu0
        %v8178 = vadd.f32 %v8073, %v8177
        %v8179 = vpop.f32.mrf.mxu0
        %8180 = vdwg.mxu0
        %v8181 = vmax.f32 %v8160, 0.0
        %v8182 = vmax.f32 %v8166, 0.0
        %v8183 = vmax.f32 %v8172, 0.0
        %v8184 = vmax.f32 %v8178, 0.0
        %v8185 = vld [vmem:[%s15] sm:$0xff]
        %v8186 = vld [vmem:[%s15 + $0x8] sm:$0xff]
        %v8187 = vld [vmem:[%s15 + $0x10] sm:$0xff]
        %v8188 = vld [vmem:[%s15 + $0x18] sm:$0xff]
        %v8189 = vld [vmem:[%s15 + $0x20] sm:$0xff]
        %v8190 = vld [vmem:[%s15 + $0x28] sm:$0xff]
        %v8191 = vld [vmem:[%s15 + $0x30] sm:$0xff]
        %v8192 = vld [vmem:[%s15 + $0x38] sm:$0xff]
        %v8193 = vld [vmem:[%s16] sm:$0x1]
        %v8195 = vlaneseq
        %v8196 = vshrl.u32 %v8195, 7
        %v8197 = vsub.s32 0, %v8196
        %v8198 = vrot.slane %v8193, %v8197
        %v8201 = vsel %vm4693, %v8181, 0
        %v8204 = vsel %vm4693, %v8182, 0
        %v8207 = vsel %vm4693, %v8183, 0
        %v8210 = vsel %vm4693, %v8184, 0
        %8212 = vmatprep.subr.mxu0 0.0
        %8213 = vmatpush1.msra.mxu0 0.0
        %8214 = vmatprep.subr.mxu0 0.0
        %8215 = vmatpush1.msra.mxu0 0.0
        %8216 = vmatprep.subr.mxu0 0.0
        %8217 = vmatpush1.msra.mxu0 0.0
        %8218 = vmatprep.subr.mxu0 0.0
        %8219 = vmatpush1.msra.mxu0 0.0
        %8220 = vmatprep.subr.mxu0 0.0
        %8221 = vmatpush1.msra.mxu0 0.0
        %8222 = vmatprep.subr.mxu0 0.0
        %8223 = vmatpush1.msra.mxu0 0.0
        %8224 = vmatprep.subr.mxu0 0.0
        %8225 = vmatpush1.msra.mxu0 0.0
        %8226 = vmatprep.subr.mxu0 0.0
        %8227 = vmatpush1.msra.mxu0 0.0
        %8228 = vmatprep.subr.mxu0 0.0
        %v8229 = vand.u32 %v8192, 4294901760
        %8230 = vmatpush1.msra.mxu0 %v8229
        %8231 = vmatprep.subr.mxu0 0.0
        %v8232 = vand.u32 %v8191, 4294901760
        %8233 = vmatpush1.msra.mxu0 %v8232
        %8234 = vmatprep.subr.mxu0 0.0
        %v8235 = vand.u32 %v8190, 4294901760
        %8236 = vmatpush1.msra.mxu0 %v8235
        %8237 = vmatprep.subr.mxu0 0.0
        %v8238 = vand.u32 %v8189, 4294901760
        %8239 = vmatpush1.msra.mxu0 %v8238
        %8240 = vmatprep.subr.mxu0 0.0
        %v8241 = vand.u32 %v8188, 4294901760
        %8242 = vmatpush1.msra.mxu0 %v8241
        %8243 = vmatprep.subr.mxu0 0.0
        %v8244 = vand.u32 %v8187, 4294901760
        %8245 = vmatpush1.msra.mxu0 %v8244
        %8246 = vmatprep.subr.mxu0 0.0
        %v8247 = vand.u32 %v8186, 4294901760
        %8248 = vmatpush1.msra.mxu0 %v8247
        %8249 = vmatprep.subr.mxu0 0.0
        %v8250 = vand.u32 %v8185, 4294901760
        %8251 = vmatpush1.msra.mxu0 %v8250
        %8252 = vmatprep.subr.mxu0 0.0
        %8253 = vmatpush2.msra.mxu0 0.0
        %8254 = vmatprep.subr.mxu0 0.0
        %8255 = vmatpush2.msra.mxu0 0.0
        %8256 = vmatprep.subr.mxu0 0.0
        %8257 = vmatpush2.msra.mxu0 0.0
        %8258 = vmatprep.subr.mxu0 0.0
        %8259 = vmatpush2.msra.mxu0 0.0
        %8260 = vmatprep.subr.mxu0 0.0
        %8261 = vmatpush2.msra.mxu0 0.0
        %8262 = vmatprep.subr.mxu0 0.0
        %8263 = vmatpush2.msra.mxu0 0.0
        %8264 = vmatprep.subr.mxu0 0.0
        %8265 = vmatpush2.msra.mxu0 0.0
        %8266 = vmatprep.subr.mxu0 0.0
        %8267 = vmatpush2.msra.mxu0 0.0
        %8268 = vmatprep.subr.mxu0 0.0
        %8269 = vmatpush2.msra.mxu0 0.0
        %8270 = vmatprep.subr.mxu0 0.0
        %8271 = vmatpush2.msra.mxu0 0.0
        %8272 = vmatprep.subr.mxu0 0.0
        %8273 = vmatpush2.msra.mxu0 0.0
        %8274 = vmatprep.subr.mxu0 0.0
        %8275 = vmatpush2.msra.mxu0 0.0
        %8276 = vmatprep.subr.mxu0 0.0
        %8277 = vmatpush2.msra.mxu0 0.0
        %8278 = vmatprep.subr.mxu0 0.0
        %8279 = vmatpush2.msra.mxu0 0.0
        %8280 = vmatprep.subr.mxu0 0.0
        %8281 = vmatpush2.msra.mxu0 0.0
        %8282 = vmatprep.subr.mxu0 0.0
        %8283 = vmatpush2.msra.mxu0 0.0
        %8284 = vmatprep.mubr.f32.mxu0 0.0
        %v8285 = vand.u32 %v8201, 4294901760
        %v8286 = vsub.f32 %v8201, %v8285
        %v8287 = vand.u32 %v8286, 4294901760
        %v8288 = vsub.f32 %v8286, %v8287
        %v8289 = vand.u32 %v8288, 4294901760
        %8290 = vmatmul.mubr.f32.gmra.mxu0 %v8289
        %v8291 = vpop.f32.mrf.mxu0
        %v8292 = vadd.f32 %v8198, %v8291
        %v8293 = vpop.f32.mrf.mxu0
        %8294 = vmatprep.mubr.f32.mxu0 0.0
        %v8295 = vand.u32 %v8204, 4294901760
        %v8296 = vsub.f32 %v8204, %v8295
        %v8297 = vand.u32 %v8296, 4294901760
        %v8298 = vsub.f32 %v8296, %v8297
        %v8299 = vand.u32 %v8298, 4294901760
        %8300 = vmatmul.mubr.f32.gmra.mxu0 %v8299
        %v8301 = vpop.f32.mrf.mxu0
        %v8302 = vadd.f32 %v8198, %v8301
        %v8303 = vpop.f32.mrf.mxu0
        %8304 = vmatprep.mubr.f32.mxu0 0.0
        %v8305 = vand.u32 %v8207, 4294901760
        %v8306 = vsub.f32 %v8207, %v8305
        %v8307 = vand.u32 %v8306, 4294901760
        %v8308 = vsub.f32 %v8306, %v8307
        %v8309 = vand.u32 %v8308, 4294901760
        %8310 = vmatmul.mubr.f32.gmra.mxu0 %v8309
        %v8311 = vpop.f32.mrf.mxu0
        %v8312 = vadd.f32 %v8198, %v8311
        %v8313 = vpop.f32.mrf.mxu0
        %8314 = vmatprep.mubr.f32.mxu0 0.0
        %v8315 = vand.u32 %v8210, 4294901760
        %v8316 = vsub.f32 %v8210, %v8315
        %v8317 = vand.u32 %v8316, 4294901760
        %v8318 = vsub.f32 %v8316, %v8317
        %v8319 = vand.u32 %v8318, 4294901760
        %8320 = vmatmul.mubr.f32.gmra.mxu0 %v8319
        %v8321 = vpop.f32.mrf.mxu0
        %v8322 = vadd.f32 %v8198, %v8321
        %v8323 = vpop.f32.mrf.mxu0
        %8324 = vdwg.mxu0
        %8325 = vmatprep.subr.mxu0 0.0
        %8326 = vmatpush1.msra.mxu0 0.0
        %8327 = vmatprep.subr.mxu0 0.0
        %8328 = vmatpush1.msra.mxu0 0.0
        %8329 = vmatprep.subr.mxu0 0.0
        %8330 = vmatpush1.msra.mxu0 0.0
        %8331 = vmatprep.subr.mxu0 0.0
        %8332 = vmatpush1.msra.mxu0 0.0
        %8333 = vmatprep.subr.mxu0 0.0
        %8334 = vmatpush1.msra.mxu0 0.0
        %8335 = vmatprep.subr.mxu0 0.0
        %8336 = vmatpush1.msra.mxu0 0.0
        %8337 = vmatprep.subr.mxu0 0.0
        %8338 = vmatpush1.msra.mxu0 0.0
        %8339 = vmatprep.subr.mxu0 0.0
        %8340 = vmatpush1.msra.mxu0 0.0
        %8341 = vmatprep.subr.mxu0 0.0
        %v8342 = vand.u32 %v8192, 4294901760
        %v8343 = vsub.f32 %v8192, %v8342
        %v8344 = vand.u32 %v8343, 4294901760
        %v8345 = vsub.f32 %v8343, %v8344
        %v8346 = vand.u32 %v8345, 4294901760
        %8347 = vmatpush1.msra.mxu0 %v8346
        %8348 = vmatprep.subr.mxu0 0.0
        %v8349 = vand.u32 %v8191, 4294901760
        %v8350 = vsub.f32 %v8191, %v8349
        %v8351 = vand.u32 %v8350, 4294901760
        %v8352 = vsub.f32 %v8350, %v8351
        %v8353 = vand.u32 %v8352, 4294901760
        %8354 = vmatpush1.msra.mxu0 %v8353
        %8355 = vmatprep.subr.mxu0 0.0
        %v8356 = vand.u32 %v8190, 4294901760
        %v8357 = vsub.f32 %v8190, %v8356
        %v8358 = vand.u32 %v8357, 4294901760
        %v8359 = vsub.f32 %v8357, %v8358
        %v8360 = vand.u32 %v8359, 4294901760
        %8361 = vmatpush1.msra.mxu0 %v8360
        %8362 = vmatprep.subr.mxu0 0.0
        %v8363 = vand.u32 %v8189, 4294901760
        %v8364 = vsub.f32 %v8189, %v8363
        %v8365 = vand.u32 %v8364, 4294901760
        %v8366 = vsub.f32 %v8364, %v8365
        %v8367 = vand.u32 %v8366, 4294901760
        %8368 = vmatpush1.msra.mxu0 %v8367
        %8369 = vmatprep.subr.mxu0 0.0
        %v8370 = vand.u32 %v8188, 4294901760
        %v8371 = vsub.f32 %v8188, %v8370
        %v8372 = vand.u32 %v8371, 4294901760
        %v8373 = vsub.f32 %v8371, %v8372
        %v8374 = vand.u32 %v8373, 4294901760
        %8375 = vmatpush1.msra.mxu0 %v8374
        %8376 = vmatprep.subr.mxu0 0.0
        %v8377 = vand.u32 %v8187, 4294901760
        %v8378 = vsub.f32 %v8187, %v8377
        %v8379 = vand.u32 %v8378, 4294901760
        %v8380 = vsub.f32 %v8378, %v8379
        %v8381 = vand.u32 %v8380, 4294901760
        %8382 = vmatpush1.msra.mxu0 %v8381
        %8383 = vmatprep.subr.mxu0 0.0
        %v8384 = vand.u32 %v8186, 4294901760
        %v8385 = vsub.f32 %v8186, %v8384
        %v8386 = vand.u32 %v8385, 4294901760
        %v8387 = vsub.f32 %v8385, %v8386
        %v8388 = vand.u32 %v8387, 4294901760
        %8389 = vmatpush1.msra.mxu0 %v8388
        %8390 = vmatprep.subr.mxu0 0.0
        %v8391 = vand.u32 %v8185, 4294901760
        %v8392 = vsub.f32 %v8185, %v8391
        %v8393 = vand.u32 %v8392, 4294901760
        %v8394 = vsub.f32 %v8392, %v8393
        %v8395 = vand.u32 %v8394, 4294901760
        %8396 = vmatpush1.msra.mxu0 %v8395
        %8397 = vmatprep.subr.mxu0 0.0
        %8398 = vmatpush2.msra.mxu0 0.0
        %8399 = vmatprep.subr.mxu0 0.0
        %8400 = vmatpush2.msra.mxu0 0.0
        %8401 = vmatprep.subr.mxu0 0.0
        %8402 = vmatpush2.msra.mxu0 0.0
        %8403 = vmatprep.subr.mxu0 0.0
        %8404 = vmatpush2.msra.mxu0 0.0
        %8405 = vmatprep.subr.mxu0 0.0
        %8406 = vmatpush2.msra.mxu0 0.0
        %8407 = vmatprep.subr.mxu0 0.0
        %8408 = vmatpush2.msra.mxu0 0.0
        %8409 = vmatprep.subr.mxu0 0.0
        %8410 = vmatpush2.msra.mxu0 0.0
        %8411 = vmatprep.subr.mxu0 0.0
        %8412 = vmatpush2.msra.mxu0 0.0
        %8413 = vmatprep.subr.mxu0 0.0
        %8414 = vmatpush2.msra.mxu0 0.0
        %8415 = vmatprep.subr.mxu0 0.0
        %8416 = vmatpush2.msra.mxu0 0.0
        %8417 = vmatprep.subr.mxu0 0.0
        %8418 = vmatpush2.msra.mxu0 0.0
        %8419 = vmatprep.subr.mxu0 0.0
        %8420 = vmatpush2.msra.mxu0 0.0
        %8421 = vmatprep.subr.mxu0 0.0
        %8422 = vmatpush2.msra.mxu0 0.0
        %8423 = vmatprep.subr.mxu0 0.0
        %8424 = vmatpush2.msra.mxu0 0.0
        %8425 = vmatprep.subr.mxu0 0.0
        %8426 = vmatpush2.msra.mxu0 0.0
        %8427 = vmatprep.subr.mxu0 0.0
        %8428 = vmatpush2.msra.mxu0 0.0
        %8429 = vmatprep.mubr.f32.mxu0 0.0
        %v8430 = vand.u32 %v8201, 4294901760
        %8431 = vmatmul.mubr.f32.gmra.mxu0 %v8430
        %v8432 = vpop.f32.mrf.mxu0
        %v8433 = vadd.f32 %v8292, %v8432
        %v8434 = vpop.f32.mrf.mxu0
        %8435 = vmatprep.mubr.f32.mxu0 0.0
        %v8436 = vand.u32 %v8204, 4294901760
        %8437 = vmatmul.mubr.f32.gmra.mxu0 %v8436
        %v8438 = vpop.f32.mrf.mxu0
        %v8439 = vadd.f32 %v8302, %v8438
        %v8440 = vpop.f32.mrf.mxu0
        %8441 = vmatprep.mubr.f32.mxu0 0.0
        %v8442 = vand.u32 %v8207, 4294901760
        %8443 = vmatmul.mubr.f32.gmra.mxu0 %v8442
        %v8444 = vpop.f32.mrf.mxu0
        %v8445 = vadd.f32 %v8312, %v8444
        %v8446 = vpop.f32.mrf.mxu0
        %8447 = vmatprep.mubr.f32.mxu0 0.0
        %v8448 = vand.u32 %v8210, 4294901760
        %8449 = vmatmul.mubr.f32.gmra.mxu0 %v8448
        %v8450 = vpop.f32.mrf.mxu0
        %v8451 = vadd.f32 %v8322, %v8450
        %v8452 = vpop.f32.mrf.mxu0
        %8453 = vdwg.mxu0
        %8454 = vmatprep.subr.mxu0 0.0
        %8455 = vmatpush1.msra.mxu0 0.0
        %8456 = vmatprep.subr.mxu0 0.0
        %8457 = vmatpush1.msra.mxu0 0.0
        %8458 = vmatprep.subr.mxu0 0.0
        %8459 = vmatpush1.msra.mxu0 0.0
        %8460 = vmatprep.subr.mxu0 0.0
        %8461 = vmatpush1.msra.mxu0 0.0
        %8462 = vmatprep.subr.mxu0 0.0
        %8463 = vmatpush1.msra.mxu0 0.0
        %8464 = vmatprep.subr.mxu0 0.0
        %8465 = vmatpush1.msra.mxu0 0.0
        %8466 = vmatprep.subr.mxu0 0.0
        %8467 = vmatpush1.msra.mxu0 0.0
        %8468 = vmatprep.subr.mxu0 0.0
        %8469 = vmatpush1.msra.mxu0 0.0
        %8470 = vmatprep.subr.mxu0 0.0
        %v8471 = vand.u32 %v8192, 4294901760
        %v8472 = vsub.f32 %v8192, %v8471
        %8473 = vmatpush1.msra.mxu0 %v8472
        %8474 = vmatprep.subr.mxu0 0.0
        %v8475 = vand.u32 %v8191, 4294901760
        %v8476 = vsub.f32 %v8191, %v8475
        %8477 = vmatpush1.msra.mxu0 %v8476
        %8478 = vmatprep.subr.mxu0 0.0
        %v8479 = vand.u32 %v8190, 4294901760
        %v8480 = vsub.f32 %v8190, %v8479
        %8481 = vmatpush1.msra.mxu0 %v8480
        %8482 = vmatprep.subr.mxu0 0.0
        %v8483 = vand.u32 %v8189, 4294901760
        %v8484 = vsub.f32 %v8189, %v8483
        %8485 = vmatpush1.msra.mxu0 %v8484
        %8486 = vmatprep.subr.mxu0 0.0
        %v8487 = vand.u32 %v8188, 4294901760
        %v8488 = vsub.f32 %v8188, %v8487
        %8489 = vmatpush1.msra.mxu0 %v8488
        %8490 = vmatprep.subr.mxu0 0.0
        %v8491 = vand.u32 %v8187, 4294901760
        %v8492 = vsub.f32 %v8187, %v8491
        %8493 = vmatpush1.msra.mxu0 %v8492
        %8494 = vmatprep.subr.mxu0 0.0
        %v8495 = vand.u32 %v8186, 4294901760
        %v8496 = vsub.f32 %v8186, %v8495
        %8497 = vmatpush1.msra.mxu0 %v8496
        %8498 = vmatprep.subr.mxu0 0.0
        %v8499 = vand.u32 %v8185, 4294901760
        %v8500 = vsub.f32 %v8185, %v8499
        %8501 = vmatpush1.msra.mxu0 %v8500
        %8502 = vmatprep.subr.mxu0 0.0
        %8503 = vmatpush2.msra.mxu0 0.0
        %8504 = vmatprep.subr.mxu0 0.0
        %8505 = vmatpush2.msra.mxu0 0.0
        %8506 = vmatprep.subr.mxu0 0.0
        %8507 = vmatpush2.msra.mxu0 0.0
        %8508 = vmatprep.subr.mxu0 0.0
        %8509 = vmatpush2.msra.mxu0 0.0
        %8510 = vmatprep.subr.mxu0 0.0
        %8511 = vmatpush2.msra.mxu0 0.0
        %8512 = vmatprep.subr.mxu0 0.0
        %8513 = vmatpush2.msra.mxu0 0.0
        %8514 = vmatprep.subr.mxu0 0.0
        %8515 = vmatpush2.msra.mxu0 0.0
        %8516 = vmatprep.subr.mxu0 0.0
        %8517 = vmatpush2.msra.mxu0 0.0
        %8518 = vmatprep.subr.mxu0 0.0
        %8519 = vmatpush2.msra.mxu0 0.0
        %8520 = vmatprep.subr.mxu0 0.0
        %8521 = vmatpush2.msra.mxu0 0.0
        %8522 = vmatprep.subr.mxu0 0.0
        %8523 = vmatpush2.msra.mxu0 0.0
        %8524 = vmatprep.subr.mxu0 0.0
        %8525 = vmatpush2.msra.mxu0 0.0
        %8526 = vmatprep.subr.mxu0 0.0
        %8527 = vmatpush2.msra.mxu0 0.0
        %8528 = vmatprep.subr.mxu0 0.0
        %8529 = vmatpush2.msra.mxu0 0.0
        %8530 = vmatprep.subr.mxu0 0.0
        %8531 = vmatpush2.msra.mxu0 0.0
        %8532 = vmatprep.subr.mxu0 0.0
        %8533 = vmatpush2.msra.mxu0 0.0
        %8534 = vmatprep.mubr.f32.mxu0 0.0
        %v8535 = vand.u32 %v8201, 4294901760
        %v8536 = vsub.f32 %v8201, %v8535
        %8537 = vmatmul.mubr.f32.gmra.mxu0 %v8536
        %v8538 = vpop.f32.mrf.mxu0
        %v8539 = vadd.f32 %v8433, %v8538
        %v8540 = vpop.f32.mrf.mxu0
        %8541 = vmatprep.mubr.f32.mxu0 0.0
        %v8542 = vand.u32 %v8204, 4294901760
        %v8543 = vsub.f32 %v8204, %v8542
        %8544 = vmatmul.mubr.f32.gmra.mxu0 %v8543
        %v8545 = vpop.f32.mrf.mxu0
        %v8546 = vadd.f32 %v8439, %v8545
        %v8547 = vpop.f32.mrf.mxu0
        %8548 = vmatprep.mubr.f32.mxu0 0.0
        %v8549 = vand.u32 %v8207, 4294901760
        %v8550 = vsub.f32 %v8207, %v8549
        %8551 = vmatmul.mubr.f32.gmra.mxu0 %v8550
        %v8552 = vpop.f32.mrf.mxu0
        %v8553 = vadd.f32 %v8445, %v8552
        %v8554 = vpop.f32.mrf.mxu0
        %8555 = vmatprep.mubr.f32.mxu0 0.0
        %v8556 = vand.u32 %v8210, 4294901760
        %v8557 = vsub.f32 %v8210, %v8556
        %8558 = vmatmul.mubr.f32.gmra.mxu0 %v8557
        %v8559 = vpop.f32.mrf.mxu0
        %v8560 = vadd.f32 %v8451, %v8559
        %v8561 = vpop.f32.mrf.mxu0
        %8562 = vdwg.mxu0
        %8563 = vmatprep.subr.mxu0 0.0
        %8564 = vmatpush1.msra.mxu0 0.0
        %8565 = vmatprep.subr.mxu0 0.0
        %8566 = vmatpush1.msra.mxu0 0.0
        %8567 = vmatprep.subr.mxu0 0.0
        %8568 = vmatpush1.msra.mxu0 0.0
        %8569 = vmatprep.subr.mxu0 0.0
        %8570 = vmatpush1.msra.mxu0 0.0
        %8571 = vmatprep.subr.mxu0 0.0
        %8572 = vmatpush1.msra.mxu0 0.0
        %8573 = vmatprep.subr.mxu0 0.0
        %8574 = vmatpush1.msra.mxu0 0.0
        %8575 = vmatprep.subr.mxu0 0.0
        %8576 = vmatpush1.msra.mxu0 0.0
        %8577 = vmatprep.subr.mxu0 0.0
        %8578 = vmatpush1.msra.mxu0 0.0
        %8579 = vmatprep.subr.mxu0 0.0
        %v8580 = vand.u32 %v8192, 4294901760
        %8581 = vmatpush1.msra.mxu0 %v8580
        %8582 = vmatprep.subr.mxu0 0.0
        %v8583 = vand.u32 %v8191, 4294901760
        %8584 = vmatpush1.msra.mxu0 %v8583
        %8585 = vmatprep.subr.mxu0 0.0
        %v8586 = vand.u32 %v8190, 4294901760
        %8587 = vmatpush1.msra.mxu0 %v8586
        %8588 = vmatprep.subr.mxu0 0.0
        %v8589 = vand.u32 %v8189, 4294901760
        %8590 = vmatpush1.msra.mxu0 %v8589
        %8591 = vmatprep.subr.mxu0 0.0
        %v8592 = vand.u32 %v8188, 4294901760
        %8593 = vmatpush1.msra.mxu0 %v8592
        %8594 = vmatprep.subr.mxu0 0.0
        %v8595 = vand.u32 %v8187, 4294901760
        %8596 = vmatpush1.msra.mxu0 %v8595
        %8597 = vmatprep.subr.mxu0 0.0
        %v8598 = vand.u32 %v8186, 4294901760
        %8599 = vmatpush1.msra.mxu0 %v8598
        %8600 = vmatprep.subr.mxu0 0.0
        %v8601 = vand.u32 %v8185, 4294901760
        %8602 = vmatpush1.msra.mxu0 %v8601
        %8603 = vmatprep.subr.mxu0 0.0
        %8604 = vmatpush2.msra.mxu0 0.0
        %8605 = vmatprep.subr.mxu0 0.0
        %8606 = vmatpush2.msra.mxu0 0.0
        %8607 = vmatprep.subr.mxu0 0.0
        %8608 = vmatpush2.msra.mxu0 0.0
        %8609 = vmatprep.subr.mxu0 0.0
        %8610 = vmatpush2.msra.mxu0 0.0
        %8611 = vmatprep.subr.mxu0 0.0
        %8612 = vmatpush2.msra.mxu0 0.0
        %8613 = vmatprep.subr.mxu0 0.0
        %8614 = vmatpush2.msra.mxu0 0.0
        %8615 = vmatprep.subr.mxu0 0.0
        %8616 = vmatpush2.msra.mxu0 0.0
        %8617 = vmatprep.subr.mxu0 0.0
        %8618 = vmatpush2.msra.mxu0 0.0
        %8619 = vmatprep.subr.mxu0 0.0
        %8620 = vmatpush2.msra.mxu0 0.0
        %8621 = vmatprep.subr.mxu0 0.0
        %8622 = vmatpush2.msra.mxu0 0.0
        %8623 = vmatprep.subr.mxu0 0.0
        %8624 = vmatpush2.msra.mxu0 0.0
        %8625 = vmatprep.subr.mxu0 0.0
        %8626 = vmatpush2.msra.mxu0 0.0
        %8627 = vmatprep.subr.mxu0 0.0
        %8628 = vmatpush2.msra.mxu0 0.0
        %8629 = vmatprep.subr.mxu0 0.0
        %8630 = vmatpush2.msra.mxu0 0.0
        %8631 = vmatprep.subr.mxu0 0.0
        %8632 = vmatpush2.msra.mxu0 0.0
        %8633 = vmatprep.subr.mxu0 0.0
        %8634 = vmatpush2.msra.mxu0 0.0
        %8635 = vmatprep.mubr.f32.mxu0 0.0
        %v8636 = vand.u32 %v8201, 4294901760
        %v8637 = vsub.f32 %v8201, %v8636
        %v8638 = vand.u32 %v8637, 4294901760
        %8639 = vmatmul.mubr.f32.gmra.mxu0 %v8638
        %v8640 = vpop.f32.mrf.mxu0
        %v8641 = vadd.f32 %v8539, %v8640
        %v8642 = vpop.f32.mrf.mxu0
        %8643 = vmatprep.mubr.f32.mxu0 0.0
        %v8644 = vand.u32 %v8204, 4294901760
        %v8645 = vsub.f32 %v8204, %v8644
        %v8646 = vand.u32 %v8645, 4294901760
        %8647 = vmatmul.mubr.f32.gmra.mxu0 %v8646
        %v8648 = vpop.f32.mrf.mxu0
        %v8649 = vadd.f32 %v8546, %v8648
        %v8650 = vpop.f32.mrf.mxu0
        %8651 = vmatprep.mubr.f32.mxu0 0.0
        %v8652 = vand.u32 %v8207, 4294901760
        %v8653 = vsub.f32 %v8207, %v8652
        %v8654 = vand.u32 %v8653, 4294901760
        %8655 = vmatmul.mubr.f32.gmra.mxu0 %v8654
        %v8656 = vpop.f32.mrf.mxu0
        %v8657 = vadd.f32 %v8553, %v8656
        %v8658 = vpop.f32.mrf.mxu0
        %8659 = vmatprep.mubr.f32.mxu0 0.0
        %v8660 = vand.u32 %v8210, 4294901760
        %v8661 = vsub.f32 %v8210, %v8660
        %v8662 = vand.u32 %v8661, 4294901760
        %8663 = vmatmul.mubr.f32.gmra.mxu0 %v8662
        %v8664 = vpop.f32.mrf.mxu0
        %v8665 = vadd.f32 %v8560, %v8664
        %v8666 = vpop.f32.mrf.mxu0
        %8667 = vdwg.mxu0
        %8668 = vmatprep.subr.mxu0 0.0
        %8669 = vmatpush1.msra.mxu0 0.0
        %8670 = vmatprep.subr.mxu0 0.0
        %8671 = vmatpush1.msra.mxu0 0.0
        %8672 = vmatprep.subr.mxu0 0.0
        %8673 = vmatpush1.msra.mxu0 0.0
        %8674 = vmatprep.subr.mxu0 0.0
        %8675 = vmatpush1.msra.mxu0 0.0
        %8676 = vmatprep.subr.mxu0 0.0
        %8677 = vmatpush1.msra.mxu0 0.0
        %8678 = vmatprep.subr.mxu0 0.0
        %8679 = vmatpush1.msra.mxu0 0.0
        %8680 = vmatprep.subr.mxu0 0.0
        %8681 = vmatpush1.msra.mxu0 0.0
        %8682 = vmatprep.subr.mxu0 0.0
        %8683 = vmatpush1.msra.mxu0 0.0
        %8684 = vmatprep.subr.mxu0 0.0
        %v8685 = vand.u32 %v8192, 4294901760
        %v8686 = vsub.f32 %v8192, %v8685
        %v8687 = vand.u32 %v8686, 4294901760
        %8688 = vmatpush1.msra.mxu0 %v8687
        %8689 = vmatprep.subr.mxu0 0.0
        %v8690 = vand.u32 %v8191, 4294901760
        %v8691 = vsub.f32 %v8191, %v8690
        %v8692 = vand.u32 %v8691, 4294901760
        %8693 = vmatpush1.msra.mxu0 %v8692
        %8694 = vmatprep.subr.mxu0 0.0
        %v8695 = vand.u32 %v8190, 4294901760
        %v8696 = vsub.f32 %v8190, %v8695
        %v8697 = vand.u32 %v8696, 4294901760
        %8698 = vmatpush1.msra.mxu0 %v8697
        %8699 = vmatprep.subr.mxu0 0.0
        %v8700 = vand.u32 %v8189, 4294901760
        %v8701 = vsub.f32 %v8189, %v8700
        %v8702 = vand.u32 %v8701, 4294901760
        %8703 = vmatpush1.msra.mxu0 %v8702
        %8704 = vmatprep.subr.mxu0 0.0
        %v8705 = vand.u32 %v8188, 4294901760
        %v8706 = vsub.f32 %v8188, %v8705
        %v8707 = vand.u32 %v8706, 4294901760
        %8708 = vmatpush1.msra.mxu0 %v8707
        %8709 = vmatprep.subr.mxu0 0.0
        %v8710 = vand.u32 %v8187, 4294901760
        %v8711 = vsub.f32 %v8187, %v8710
        %v8712 = vand.u32 %v8711, 4294901760
        %8713 = vmatpush1.msra.mxu0 %v8712
        %8714 = vmatprep.subr.mxu0 0.0
        %v8715 = vand.u32 %v8186, 4294901760
        %v8716 = vsub.f32 %v8186, %v8715
        %v8717 = vand.u32 %v8716, 4294901760
        %8718 = vmatpush1.msra.mxu0 %v8717
        %8719 = vmatprep.subr.mxu0 0.0
        %v8720 = vand.u32 %v8185, 4294901760
        %v8721 = vsub.f32 %v8185, %v8720
        %v8722 = vand.u32 %v8721, 4294901760
        %8723 = vmatpush1.msra.mxu0 %v8722
        %8724 = vmatprep.subr.mxu0 0.0
        %8725 = vmatpush2.msra.mxu0 0.0
        %8726 = vmatprep.subr.mxu0 0.0
        %8727 = vmatpush2.msra.mxu0 0.0
        %8728 = vmatprep.subr.mxu0 0.0
        %8729 = vmatpush2.msra.mxu0 0.0
        %8730 = vmatprep.subr.mxu0 0.0
        %8731 = vmatpush2.msra.mxu0 0.0
        %8732 = vmatprep.subr.mxu0 0.0
        %8733 = vmatpush2.msra.mxu0 0.0
        %8734 = vmatprep.subr.mxu0 0.0
        %8735 = vmatpush2.msra.mxu0 0.0
        %8736 = vmatprep.subr.mxu0 0.0
        %8737 = vmatpush2.msra.mxu0 0.0
        %8738 = vmatprep.subr.mxu0 0.0
        %8739 = vmatpush2.msra.mxu0 0.0
        %8740 = vmatprep.subr.mxu0 0.0
        %8741 = vmatpush2.msra.mxu0 0.0
        %8742 = vmatprep.subr.mxu0 0.0
        %8743 = vmatpush2.msra.mxu0 0.0
        %8744 = vmatprep.subr.mxu0 0.0
        %8745 = vmatpush2.msra.mxu0 0.0
        %8746 = vmatprep.subr.mxu0 0.0
        %8747 = vmatpush2.msra.mxu0 0.0
        %8748 = vmatprep.subr.mxu0 0.0
        %8749 = vmatpush2.msra.mxu0 0.0
        %8750 = vmatprep.subr.mxu0 0.0
        %8751 = vmatpush2.msra.mxu0 0.0
        %8752 = vmatprep.subr.mxu0 0.0
        %8753 = vmatpush2.msra.mxu0 0.0
        %8754 = vmatprep.subr.mxu0 0.0
        %8755 = vmatpush2.msra.mxu0 0.0
        %8756 = vmatprep.mubr.f32.mxu0 0.0
        %v8757 = vand.u32 %v8201, 4294901760
        %8758 = vmatmul.mubr.f32.gmra.mxu0 %v8757
        %v8759 = vpop.f32.mrf.mxu0
        %v8760 = vadd.f32 %v8641, %v8759
        %v8761 = vpop.f32.mrf.mxu0
        %8762 = vmatprep.mubr.f32.mxu0 0.0
        %v8763 = vand.u32 %v8204, 4294901760
        %8764 = vmatmul.mubr.f32.gmra.mxu0 %v8763
        %v8765 = vpop.f32.mrf.mxu0
        %v8766 = vadd.f32 %v8649, %v8765
        %v8767 = vpop.f32.mrf.mxu0
        %8768 = vmatprep.mubr.f32.mxu0 0.0
        %v8769 = vand.u32 %v8207, 4294901760
        %8770 = vmatmul.mubr.f32.gmra.mxu0 %v8769
        %v8771 = vpop.f32.mrf.mxu0
        %v8772 = vadd.f32 %v8657, %v8771
        %v8773 = vpop.f32.mrf.mxu0
        %8774 = vmatprep.mubr.f32.mxu0 0.0
        %v8775 = vand.u32 %v8210, 4294901760
        %8776 = vmatmul.mubr.f32.gmra.mxu0 %v8775
        %v8777 = vpop.f32.mrf.mxu0
        %v8778 = vadd.f32 %v8665, %v8777
        %v8779 = vpop.f32.mrf.mxu0
        %8780 = vdwg.mxu0
        %8781 = vmatprep.subr.mxu0 0.0
        %8782 = vmatpush1.msra.mxu0 0.0
        %8783 = vmatprep.subr.mxu0 0.0
        %8784 = vmatpush1.msra.mxu0 0.0
        %8785 = vmatprep.subr.mxu0 0.0
        %8786 = vmatpush1.msra.mxu0 0.0
        %8787 = vmatprep.subr.mxu0 0.0
        %8788 = vmatpush1.msra.mxu0 0.0
        %8789 = vmatprep.subr.mxu0 0.0
        %8790 = vmatpush1.msra.mxu0 0.0
        %8791 = vmatprep.subr.mxu0 0.0
        %8792 = vmatpush1.msra.mxu0 0.0
        %8793 = vmatprep.subr.mxu0 0.0
        %8794 = vmatpush1.msra.mxu0 0.0
        %8795 = vmatprep.subr.mxu0 0.0
        %8796 = vmatpush1.msra.mxu0 0.0
        %8797 = vmatprep.subr.mxu0 0.0
        %v8798 = vand.u32 %v8192, 4294901760
        %8799 = vmatpush1.msra.mxu0 %v8798
        %8800 = vmatprep.subr.mxu0 0.0
        %v8801 = vand.u32 %v8191, 4294901760
        %8802 = vmatpush1.msra.mxu0 %v8801
        %8803 = vmatprep.subr.mxu0 0.0
        %v8804 = vand.u32 %v8190, 4294901760
        %8805 = vmatpush1.msra.mxu0 %v8804
        %8806 = vmatprep.subr.mxu0 0.0
        %v8807 = vand.u32 %v8189, 4294901760
        %8808 = vmatpush1.msra.mxu0 %v8807
        %8809 = vmatprep.subr.mxu0 0.0
        %v8810 = vand.u32 %v8188, 4294901760
        %8811 = vmatpush1.msra.mxu0 %v8810
        %8812 = vmatprep.subr.mxu0 0.0
        %v8813 = vand.u32 %v8187, 4294901760
        %8814 = vmatpush1.msra.mxu0 %v8813
        %8815 = vmatprep.subr.mxu0 0.0
        %v8816 = vand.u32 %v8186, 4294901760
        %8817 = vmatpush1.msra.mxu0 %v8816
        %8818 = vmatprep.subr.mxu0 0.0
        %v8819 = vand.u32 %v8185, 4294901760
        %8820 = vmatpush1.msra.mxu0 %v8819
        %8821 = vmatprep.subr.mxu0 0.0
        %8822 = vmatpush2.msra.mxu0 0.0
        %8823 = vmatprep.subr.mxu0 0.0
        %8824 = vmatpush2.msra.mxu0 0.0
        %8825 = vmatprep.subr.mxu0 0.0
        %8826 = vmatpush2.msra.mxu0 0.0
        %8827 = vmatprep.subr.mxu0 0.0
        %8828 = vmatpush2.msra.mxu0 0.0
        %8829 = vmatprep.subr.mxu0 0.0
        %8830 = vmatpush2.msra.mxu0 0.0
        %8831 = vmatprep.subr.mxu0 0.0
        %8832 = vmatpush2.msra.mxu0 0.0
        %8833 = vmatprep.subr.mxu0 0.0
        %8834 = vmatpush2.msra.mxu0 0.0
        %8835 = vmatprep.subr.mxu0 0.0
        %8836 = vmatpush2.msra.mxu0 0.0
        %8837 = vmatprep.subr.mxu0 0.0
        %8838 = vmatpush2.msra.mxu0 0.0
        %8839 = vmatprep.subr.mxu0 0.0
        %8840 = vmatpush2.msra.mxu0 0.0
        %8841 = vmatprep.subr.mxu0 0.0
        %8842 = vmatpush2.msra.mxu0 0.0
        %8843 = vmatprep.subr.mxu0 0.0
        %8844 = vmatpush2.msra.mxu0 0.0
        %8845 = vmatprep.subr.mxu0 0.0
        %8846 = vmatpush2.msra.mxu0 0.0
        %8847 = vmatprep.subr.mxu0 0.0
        %8848 = vmatpush2.msra.mxu0 0.0
        %8849 = vmatprep.subr.mxu0 0.0
        %8850 = vmatpush2.msra.mxu0 0.0
        %8851 = vmatprep.subr.mxu0 0.0
        %8852 = vmatpush2.msra.mxu0 0.0
        %8853 = vmatprep.mubr.f32.mxu0 0.0
        %v8854 = vand.u32 %v8201, 4294901760
        %8855 = vmatmul.mubr.f32.gmra.mxu0 %v8854
        %v8856 = vpop.f32.mrf.mxu0
        %v8857 = vadd.f32 %v8760, %v8856
        %v8858 = vpop.f32.mrf.mxu0
        %8859 = vmatprep.mubr.f32.mxu0 0.0
        %v8860 = vand.u32 %v8204, 4294901760
        %8861 = vmatmul.mubr.f32.gmra.mxu0 %v8860
        %v8862 = vpop.f32.mrf.mxu0
        %v8863 = vadd.f32 %v8766, %v8862
        %v8864 = vpop.f32.mrf.mxu0
        %8865 = vmatprep.mubr.f32.mxu0 0.0
        %v8866 = vand.u32 %v8207, 4294901760
        %8867 = vmatmul.mubr.f32.gmra.mxu0 %v8866
        %v8868 = vpop.f32.mrf.mxu0
        %v8869 = vadd.f32 %v8772, %v8868
        %v8870 = vpop.f32.mrf.mxu0
        %8871 = vmatprep.mubr.f32.mxu0 0.0
        %v8872 = vand.u32 %v8210, 4294901760
        %8873 = vmatmul.mubr.f32.gmra.mxu0 %v8872
        %v8874 = vpop.f32.mrf.mxu0
        %v8875 = vadd.f32 %v8778, %v8874
        %v8876 = vpop.f32.mrf.mxu0
        %8877 = vdwg.mxu0
        %v8878 = vadd.f32 %v6069, %v8857
        %v8879 = vadd.f32 %v6070, %v8863
        %v8880 = vadd.f32 %v6071, %v8869
        %v8881 = vadd.f32 %v6072, %v8875
        %8882 = vst.msk [vmem:[%s17] sm:$0xff] %vm1979, %v8878
        %8883 = vst.msk [vmem:[%s17 + $0x8] sm:$0xff] %vm1979, %v8879
        %8884 = vst.msk [vmem:[%s17 + $0x10] sm:$0xff] %vm1979, %v8880
        %8885 = vst.msk [vmem:[%s17 + $0x18] sm:$0xff] %vm1979, %v8881
      $region96: #{first_megnet_block.1} parent=87 // pred_fallthru
        _
      %s8886 = smul.u32 4, %s30
      %p8887 = scmp.lt.s32.totalorder %s8886, 11
      %s8888 = scalar_select %p8887, %s8886, 11
      %s8889 = smul.addr %s8888, 8
      %s8890 = scalar_lea.vmem %s18, %s8889
      // Predicated region
      $region97: #{first_megnet_block.1} parent=87 // pred_check
        %p8891 = pneg %p420
      $region98: #{first_megnet_block.1} parent=87 // pred_check_branch
        %8893 = sbr.rel (%p8891) target = $region100
      $region99: #{first_megnet_block.1} parent=87 // pred_region
        _
      $region100: #{first_megnet_block.1} parent=87 // pred_fallthru
        _
      // Predicated region
      $region101: #{first_megnet_block.1} parent=87 // pred_check
        %p8894 = pneg %p446
      $region102: #{first_megnet_block.1} parent=87 // pred_check_branch
        %8896 = sbr.rel (%p8894) target = $region104
      $region103: #{first_megnet_block.1} parent=87 // pred_region
        %s8897 = smul.u32 4, %s30
      $region104: #{first_megnet_block.1} parent=87 // pred_fallthru
        _
      // Predicated region
      $region105: #{first_megnet_block.1} parent=87 // pred_check
        %p8898 = pneg %p420
      $region106: #{first_megnet_block.1} parent=87 // pred_check_branch
        %8900 = sbr.rel (%p8898) target = $region108
      $region107: #{first_megnet_block.1} parent=87 // pred_region
        _
      $region108: #{first_megnet_block.1} parent=87 // pred_fallthru
        _
    $region88: #{first_megnet_block.1} parent=5 // pred_fallthru
      _
    %p8901 = scmp.le.s32.totalorder 2, %s25
    // Predicated region
    $region109: #{first_megnet_block.1} parent=5 // pred_check
      %p8902 = pneg %p8901
    $region110: #{first_megnet_block.1} parent=5 // pred_check_branch
      %8904 = sbr.rel (%p8902) target = $region112
    $region111: #{first_megnet_block.1} parent=5 // pred_region
      %s8905 = ssub.s32 %s25, 2
      // Predicated region
      $region113: #{first_megnet_block.1} parent=111 // pred_check
        %p8906 = pneg %p452
      $region114: #{first_megnet_block.1} parent=111 // pred_check_branch
        %8908 = sbr.rel (%p8906) target = $region116
      $region115: #{first_megnet_block.1} parent=111 // pred_region
        %s8909 = smul.u32 4, %s31
        %p8910 = scmp.lt.s32.totalorder %s8909, 11
        %s8911 = scalar_select %p8910, %s8909, 11
        %s8912 = smul.addr %s8911, 8
        %s8913 = scalar_lea.vmem %s18, %s8912
      $region116: #{first_megnet_block.1} parent=111 // pred_fallthru
        _
    $region112: #{first_megnet_block.1} parent=5 // pred_fallthru
      _
  $region6: #{first_megnet_block.1} parent=0 // loop_footer
    %s29 = sadd.s32 1, %s25
  $region7: #{first_megnet_block.1} parent=0 // loop_footer_branch
    %24 = sbr.rel target = $region3
  $region8: #{first_megnet_block.1} parent=0 // loop_exit
    _

</llo_original>
